<compile_context>
chip_gen: v7x
topology: tpu7x:2x2x1
jax: 0.10.0
libtpu: 0.0.40
codegen_flags: <defaults>
</compile_context>

<pallas_src>
import jax
import jax.numpy as jnp
from jax.experimental import pallas as pl
from jax.experimental.pallas import tpu as pltpu

# ---- small but hardware-tile-aligned config ----
BATCH = 4
B_BLK = 2                               # batch elements fused per grid step
SEQ = 128
HIDDEN = 128
NUM_HEADS = 2
HEAD_DIM = HIDDEN // NUM_HEADS          # 64 (matches real CLIP head_dim)
INTERMEDIATE = 4 * HIDDEN               # 512
SCALE = HEAD_DIM ** -0.5                # 0.125 (exact power of two)
LN_EPS = 1e-5
MM_DTYPE = jnp.bfloat16                 # matmul-input dtype (f32 accumulation on MXU)
NEG_BIG = -1e30                         # finite mask value (safe with jnp.where)


def _layer_norm(h, w, b):
    mu = jnp.mean(h, axis=-1, keepdims=True)
    var = jnp.mean((h - mu) ** 2, axis=-1, keepdims=True)
    return (h - mu) * jax.lax.rsqrt(var + LN_EPS) * w + b


def clip_block_kernel(x_ref,
                      ln1_w_ref, ln1_b_ref,
                      qkv_w_ref, qkv_b_ref,
                      o_w_ref, o_b_ref,
                      ln2_w_ref, ln2_b_ref,
                      fc1_w_ref, fc1_b_ref,
                      fc2_w_ref, fc2_b_ref,
                      out_ref):
    BS = B_BLK * SEQ
    # (B_BLK, S, H) -> (B_BLK*S, H): merges leading dims only (lane dim untouched) -> cheap.
    x = x_ref[...].reshape(BS, HIDDEN)                     # (256, 128) f32

    # causal keep-mask built in-kernel as a bool comparison (no (S,S) f32 tensor, no HBM DMA)
    row = jax.lax.broadcasted_iota(jnp.int32, (SEQ, SEQ), 0)
    col = jax.lax.broadcasted_iota(jnp.int32, (SEQ, SEQ), 1)
    keep = col <= row

    # ---- self-attention branch ----
    h = _layer_norm(x, ln1_w_ref[...], ln1_b_ref[...])

    # one fused QKV matmul over all B_BLK*S rows; cast result to bf16 right away
    qkv = jnp.dot(h.astype(MM_DTYPE), qkv_w_ref[...],
                  preferred_element_type=jnp.float32) + qkv_b_ref[...]
    qkv = qkv.astype(MM_DTYPE)                             # (256, 384) bf16

    # per-batch-element, per-head attention (tiny static loop); heads concatenated along lanes
    ctx_rows = []
    for b in range(B_BLK):
        r0 = b * SEQ
        head_outs = []
        for hh in range(NUM_HEADS):
            c0 = hh * HEAD_DIM
            qh = qkv[r0:r0 + SEQ, 0 * HIDDEN + c0: 0 * HIDDEN + c0 + HEAD_DIM]   # (S, 64) bf16
            kh = qkv[r0:r0 + SEQ, 1 * HIDDEN + c0: 1 * HIDDEN + c0 + HEAD_DIM]
            vh = qkv[r0:r0 + SEQ, 2 * HIDDEN + c0: 2 * HIDDEN + c0 + HEAD_DIM]

            s = jnp.einsum("qd,kd->qk", qh, kh,
                           preferred_element_type=jnp.float32) * SCALE           # (S, S) f32
            s = jnp.where(keep, s, NEG_BIG)
            s = s - jnp.max(s, axis=-1, keepdims=True)
            p = jnp.exp(s)
            p = p * pl.reciprocal(jnp.sum(p, axis=-1, keepdims=True), approx=True)

            head_outs.append(jnp.dot(p.astype(MM_DTYPE), vh,
                                     preferred_element_type=jnp.float32))         # (S, 64)
        ctx_rows.append(jnp.concatenate(head_outs, axis=-1))   # (S, H) lane concat (XLU slot)
    ctx = jnp.concatenate(ctx_rows, axis=0)                    # (B_BLK*S, H) f32

    # single full-K output projection over all rows
    h1 = x + jnp.dot(ctx.astype(MM_DTYPE), o_w_ref[...],
                     preferred_element_type=jnp.float32) + o_b_ref[...]

    # ---- MLP branch ----
    h2 = _layer_norm(h1, ln2_w_ref[...], ln2_b_ref[...])
    f = jnp.dot(h2.astype(MM_DTYPE), fc1_w_ref[...],
                preferred_element_type=jnp.float32) + fc1_b_ref[...]
    f = f * jax.nn.sigmoid(1.702 * f)                          # quick_gelu, f32 (v5e-safe)
    f = jnp.dot(f.astype(MM_DTYPE), fc2_w_ref[...],
                preferred_element_type=jnp.float32) + fc2_b_ref[...]

    out_ref[...] = (h1 + f).reshape(B_BLK, SEQ, HIDDEN)


def clip_block(x, params):
    B, S, H = x.shape
    assert B % B_BLK == 0

    param_keys = ["ln1_w", "ln1_b", "qkv_w", "qkv_b", "o_w", "o_b",
                  "ln2_w", "ln2_b", "fc1_w", "fc1_b", "fc2_w", "fc2_b"]
    param_list = [params[k] for k in param_keys]

    def const_spec(arr):
        nd = arr.ndim
        # grid-invariant block -> single buffer (default double buffer is wasted VMEM)
        return pl.BlockSpec(arr.shape, lambda b, _nd=nd: (0,) * _nd,
                            pipeline_mode=pl.Buffered(1))

    x_spec = pl.BlockSpec((B_BLK, S, H), lambda b: (b, 0, 0))
    in_specs = [x_spec] + [const_spec(p) for p in param_list]
    out_spec = pl.BlockSpec((B_BLK, S, H), lambda b: (b, 0, 0))

    return pl.pallas_call(
        clip_block_kernel,
        out_shape=jax.ShapeDtypeStruct((B, S, H), jnp.float32),
        grid_spec=pltpu.PrefetchScalarGridSpec(
            num_scalar_prefetch=0,
            grid=(B // B_BLK,),
            in_specs=in_specs,
            out_specs=out_spec,
        ),
        compiler_params=pltpu.CompilerParams(
            dimension_semantics=("parallel",),
            vmem_limit_bytes=32 * 1024 * 1024),
    )(x, *param_list)


# -------------------- pure-JAX reference (mirrors the kernel's bf16 casts) --------------------
def clip_block_ref(x, p):
    def ln(h, w, b):
        mu = jnp.mean(h, axis=-1, keepdims=True)
        var = jnp.mean((h - mu) ** 2, axis=-1, keepdims=True)
        return (h - mu) * jax.lax.rsqrt(var + LN_EPS) * w + b

    def mm(a, w, b):
        return jnp.einsum("bsk,kn->bsn", a.astype(MM_DTYPE), w,
                          preferred_element_type=jnp.float32) + b

    B, S, H = x.shape
    i = jnp.arange(S)[:, None]
    j = jnp.arange(S)[None, :]
    keep = j <= i

    h = ln(x, p["ln1_w"], p["ln1_b"])
    qkv = mm(h, p["qkv_w"], p["qkv_b"]).astype(MM_DTYPE)
    q = qkv[..., 0 * H:1 * H].reshape(B, S, NUM_HEADS, HEAD_DIM).transpose(0, 2, 1, 3)
    k = qkv[..., 1 * H:2 * H].reshape(B, S, NUM_HEADS, HEAD_DIM).transpose(0, 2, 1, 3)
    v = qkv[..., 2 * H:3 * H].reshape(B, S, NUM_HEADS, HEAD_DIM).transpose(0, 2, 1, 3)
    s = jnp.einsum("bhqd,bhkd->bhqk", q, k,
                   preferred_element_type=jnp.float32) * SCALE
    s = jnp.where(keep, s, NEG_BIG)
    s = s - jnp.max(s, axis=-1, keepdims=True)
    prob = jnp.exp(s)
    prob = prob / jnp.sum(prob, axis=-1, keepdims=True)
    o = jnp.einsum("bhqk,bhkd->bhqd", prob.astype(MM_DTYPE), v,
                   preferred_element_type=jnp.float32)
    attn = o.transpose(0, 2, 1, 3).reshape(B, S, H)
    h1 = x + mm(attn, p["o_w"], p["o_b"])
    h2 = ln(h1, p["ln2_w"], p["ln2_b"])
    f = mm(h2, p["fc1_w"], p["fc1_b"])
    f = f * jax.nn.sigmoid(1.702 * f)
    f = mm(f, p["fc2_w"], p["fc2_b"])
    return h1 + f


def make_params(key):
    ks = jax.random.split(key, 12)
    wscl = 0.05

    def wgt(k, shape):   # bf16 matmul weight, pre-transposed [in, out]
        return (wscl * jax.random.normal(k, shape, jnp.float32)).astype(MM_DTYPE)

    def bias(k, shape):  # f32 bias
        return 0.02 * jax.random.normal(k, shape, jnp.float32)

    return {
        "ln1_w": 1.0 + 0.1 * jax.random.normal(ks[0], (1, HIDDEN), jnp.float32),
        "ln1_b": 0.05 * jax.random.normal(ks[1], (1, HIDDEN), jnp.float32),
        "qkv_w": wgt(ks[2], (HIDDEN, 3 * HIDDEN)),   # concat of [W_q | W_k | W_v]
        "qkv_b": bias(ks[3], (1, 3 * HIDDEN)),
        "o_w": wgt(ks[4], (HIDDEN, HIDDEN)),
        "o_b": bias(ks[5], (1, HIDDEN)),
        "ln2_w": 1.0 + 0.1 * jax.random.normal(ks[6], (1, HIDDEN), jnp.float32),
        "ln2_b": 0.05 * jax.random.normal(ks[7], (1, HIDDEN), jnp.float32),
        "fc1_w": wgt(ks[8], (HIDDEN, INTERMEDIATE)),
        "fc1_b": bias(ks[9], (1, INTERMEDIATE)),
        "fc2_w": wgt(ks[10], (INTERMEDIATE, HIDDEN)),
        "fc2_b": bias(ks[11], (1, HIDDEN)),
    }


if __name__ == "__main__":
    key = jax.random.PRNGKey(0)
    kx, kp = jax.random.split(key)
    x = jax.random.normal(kx, (BATCH, SEQ, HIDDEN), jnp.float32)
    params = make_params(kp)

    out = clip_block(x, params)
    out = jax.block_until_ready(out)
    assert out.shape == (BATCH, SEQ, HIDDEN)

    ref = clip_block_ref(x, params)
    # tolerance covers approx-reciprocal softmax normalization + MXU accumulation order
    assert jnp.allclose(out, ref, atol=5e-3, rtol=5e-3), "mismatch vs JAX reference"
    print("KERNEL_OK")
</pallas_src>

<mosaic_0001>
module attributes {stable_mosaic.version = 11 : i64} {
  func.func @clip_block_kernel(%arg0: i32, %arg1: memref<2x128x128xf32, #tpu.memory_space<vmem>>, %arg2: memref<1x128xf32, #tpu.memory_space<vmem>>, %arg3: memref<1x128xf32, #tpu.memory_space<vmem>>, %arg4: memref<128x384xbf16, #tpu.memory_space<vmem>>, %arg5: memref<1x384xf32, #tpu.memory_space<vmem>>, %arg6: memref<128x128xbf16, #tpu.memory_space<vmem>>, %arg7: memref<1x128xf32, #tpu.memory_space<vmem>>, %arg8: memref<1x128xf32, #tpu.memory_space<vmem>>, %arg9: memref<1x128xf32, #tpu.memory_space<vmem>>, %arg10: memref<128x512xbf16, #tpu.memory_space<vmem>>, %arg11: memref<1x512xf32, #tpu.memory_space<vmem>>, %arg12: memref<512x128xbf16, #tpu.memory_space<vmem>>, %arg13: memref<1x128xf32, #tpu.memory_space<vmem>>, %arg14: memref<2x128x128xf32, #tpu.memory_space<vmem>>) attributes {dimension_semantics = [#tpu.dimension_semantics<parallel>], iteration_bounds = array<i64: 2>, scalar_prefetch = 0 : i64, scratch_operands = 0 : i64, tpu.core_type = #tpu.core_type<tc>, window_params = [{transform_indices = @transform_0, window_bounds = array<i64: 2, 128, 128>}, {pipeline_mode = #tpu.pipeline_mode<synchronous>, transform_indices = @transform_1, window_bounds = array<i64: 1, 128>}, {pipeline_mode = #tpu.pipeline_mode<synchronous>, transform_indices = @transform_2, window_bounds = array<i64: 1, 128>}, {pipeline_mode = #tpu.pipeline_mode<synchronous>, transform_indices = @transform_3, window_bounds = array<i64: 128, 384>}, {pipeline_mode = #tpu.pipeline_mode<synchronous>, transform_indices = @transform_4, window_bounds = array<i64: 1, 384>}, {pipeline_mode = #tpu.pipeline_mode<synchronous>, transform_indices = @transform_5, window_bounds = array<i64: 128, 128>}, {pipeline_mode = #tpu.pipeline_mode<synchronous>, transform_indices = @transform_6, window_bounds = array<i64: 1, 128>}, {pipeline_mode = #tpu.pipeline_mode<synchronous>, transform_indices = @transform_7, window_bounds = array<i64: 1, 128>}, {pipeline_mode = #tpu.pipeline_mode<synchronous>, transform_indices = @transform_8, window_bounds = array<i64: 1, 128>}, {pipeline_mode = #tpu.pipeline_mode<synchronous>, transform_indices = @transform_9, window_bounds = array<i64: 128, 512>}, {pipeline_mode = #tpu.pipeline_mode<synchronous>, transform_indices = @transform_10, window_bounds = array<i64: 1, 512>}, {pipeline_mode = #tpu.pipeline_mode<synchronous>, transform_indices = @transform_11, window_bounds = array<i64: 512, 128>}, {pipeline_mode = #tpu.pipeline_mode<synchronous>, transform_indices = @transform_12, window_bounds = array<i64: 1, 128>}, {transform_indices = @transform_13, window_bounds = array<i64: 2, 128, 128>}]} {
    %c0 = arith.constant 0 : index
    %c0_0 = arith.constant 0 : index
    %c0_1 = arith.constant 0 : index
    %0 = vector.load %arg1[%c0, %c0_0, %c0_1] : memref<2x128x128xf32, #tpu.memory_space<vmem>>, vector<2x128x128xf32>
    %1 = vector.shape_cast %0 : vector<2x128x128xf32> to vector<256x128xf32>
    %2 = tpu.iota {dimensions = array<i32: 0>} : vector<128x128xi32>
    %3 = tpu.iota {dimensions = array<i32: 1>} : vector<128x128xi32>
    %4 = arith.cmpi sle, %3, %2 : vector<128x128xi32>
    %c0_2 = arith.constant 0 : index
    %c0_3 = arith.constant 0 : index
    %5 = vector.load %arg2[%c0_2, %c0_3] : memref<1x128xf32, #tpu.memory_space<vmem>>, vector<1x128xf32>
    %c0_4 = arith.constant 0 : index
    %c0_5 = arith.constant 0 : index
    %6 = vector.load %arg3[%c0_4, %c0_5] : memref<1x128xf32, #tpu.memory_space<vmem>>, vector<1x128xf32>
    %cst = arith.constant dense<0.000000e+00> : vector<256xf32>
    %7 = vector.multi_reduction <add>, %1, %cst [1] : vector<256x128xf32> to vector<256xf32>
    %8 = vector.shape_cast %7 : vector<256xf32> to vector<256x1xf32>
    %cst_6 = arith.constant 1.280000e+02 : f32
    %9 = vector.broadcast %cst_6 : f32 to vector<256x1xf32>
    %10 = arith.divf %8, %9 : vector<256x1xf32>
    %11 = vector.broadcast %10 : vector<256x1xf32> to vector<256x128xf32>
    %12 = arith.subf %1, %11 : vector<256x128xf32>
    %13 = arith.mulf %12, %12 : vector<256x128xf32>
    %cst_7 = arith.constant dense<0.000000e+00> : vector<256xf32>
    %14 = vector.multi_reduction <add>, %13, %cst_7 [1] : vector<256x128xf32> to vector<256xf32>
    %15 = vector.shape_cast %14 : vector<256xf32> to vector<256x1xf32>
    %cst_8 = arith.constant 1.280000e+02 : f32
    %16 = vector.broadcast %cst_8 : f32 to vector<256x1xf32>
    %17 = arith.divf %15, %16 : vector<256x1xf32>
    %18 = vector.broadcast %10 : vector<256x1xf32> to vector<256x128xf32>
    %19 = arith.subf %1, %18 : vector<256x128xf32>
    %cst_9 = arith.constant 9.99999974E-6 : f32
    %20 = vector.broadcast %cst_9 : f32 to vector<256x1xf32>
    %21 = arith.addf %17, %20 : vector<256x1xf32>
    %22 = math.rsqrt %21 : vector<256x1xf32>
    %23 = vector.broadcast %22 : vector<256x1xf32> to vector<256x128xf32>
    %24 = arith.mulf %19, %23 : vector<256x128xf32>
    %25 = vector.broadcast %5 : vector<1x128xf32> to vector<256x128xf32>
    %26 = arith.mulf %24, %25 : vector<256x128xf32>
    %27 = vector.broadcast %6 : vector<1x128xf32> to vector<256x128xf32>
    %28 = arith.addf %26, %27 : vector<256x128xf32>
    %29 = arith.truncf %28 : vector<256x128xf32> to vector<256x128xbf16>
    %c0_10 = arith.constant 0 : index
    %c0_11 = arith.constant 0 : index
    %30 = vector.load %arg4[%c0_10, %c0_11] : memref<128x384xbf16, #tpu.memory_space<vmem>>, vector<128x384xbf16>
    %cst_12 = arith.constant dense<0.000000e+00> : vector<256x384xf32>
    %31 = tpu.matmul %29, %30, %cst_12 {dimension_numbers = #tpu.dot_dimension_numbers<[1], [0], [0], [1], [0, 0, 1, 1], [], []>} : vector<256x128xbf16>, vector<128x384xbf16>, vector<256x384xf32> -> vector<256x384xf32>
    %c0_13 = arith.constant 0 : index
    %c0_14 = arith.constant 0 : index
    %32 = vector.load %arg5[%c0_13, %c0_14] : memref<1x384xf32, #tpu.memory_space<vmem>>, vector<1x384xf32>
    %33 = vector.broadcast %32 : vector<1x384xf32> to vector<256x384xf32>
    %34 = arith.addf %31, %33 : vector<256x384xf32>
    %35 = arith.truncf %34 : vector<256x384xf32> to vector<256x384xbf16>
    %36 = vector.extract_strided_slice %35 {offsets = [0, 0], sizes = [128, 64], strides = [1, 1]} : vector<256x384xbf16> to vector<128x64xbf16>
    %37 = vector.extract_strided_slice %35 {offsets = [0, 128], sizes = [128, 64], strides = [1, 1]} : vector<256x384xbf16> to vector<128x64xbf16>
    %38 = vector.extract_strided_slice %35 {offsets = [0, 256], sizes = [128, 64], strides = [1, 1]} : vector<256x384xbf16> to vector<128x64xbf16>
    "tpu.trace_start"() <{level = 10 : i32, message = "qd,kd->qk"}> : () -> ()
    %cst_15 = arith.constant dense<0.000000e+00> : vector<128x128xf32>
    %39 = tpu.matmul %36, %37, %cst_15 {dimension_numbers = #tpu.dot_dimension_numbers<[1], [1], [0], [0], [0, 0, 1, 0], [], []>} : vector<128x64xbf16>, vector<128x64xbf16>, vector<128x128xf32> -> vector<128x128xf32>
    "tpu.trace_stop"() : () -> ()
    %cst_16 = arith.constant 1.250000e-01 : f32
    %40 = vector.broadcast %cst_16 : f32 to vector<128x128xf32>
    %41 = arith.mulf %39, %40 : vector<128x128xf32>
    %cst_17 = arith.constant -1.000000e+30 : f32
    %42 = vector.broadcast %cst_17 : f32 to vector<128x128xf32>
    %43 = arith.select %4, %41, %42 : vector<128x128xi1>, vector<128x128xf32>
    %cst_18 = arith.constant dense<0xFF800000> : vector<128xf32>
    %44 = vector.multi_reduction <maximumf>, %43, %cst_18 [1] : vector<128x128xf32> to vector<128xf32>
    %45 = vector.shape_cast %44 : vector<128xf32> to vector<128x1xf32>
    %46 = vector.broadcast %45 : vector<128x1xf32> to vector<128x128xf32>
    %47 = arith.subf %43, %46 : vector<128x128xf32>
    %48 = math.exp %47 : vector<128x128xf32>
    %cst_19 = arith.constant dense<0.000000e+00> : vector<128xf32>
    %49 = vector.multi_reduction <add>, %48, %cst_19 [1] : vector<128x128xf32> to vector<128xf32>
    %50 = vector.shape_cast %49 : vector<128xf32> to vector<128x1xf32>
    %51 = tpu.reciprocal %50 {approx = true} : vector<128x1xf32> -> vector<128x1xf32>
    %52 = vector.broadcast %51 : vector<128x1xf32> to vector<128x128xf32>
    %53 = arith.mulf %48, %52 : vector<128x128xf32>
    %54 = arith.truncf %53 : vector<128x128xf32> to vector<128x128xbf16>
    %cst_20 = arith.constant dense<0.000000e+00> : vector<128x64xf32>
    %55 = tpu.matmul %54, %38, %cst_20 {dimension_numbers = #tpu.dot_dimension_numbers<[1], [0], [0], [1], [0, 0, 1, 1], [], []>} : vector<128x128xbf16>, vector<128x64xbf16>, vector<128x64xf32> -> vector<128x64xf32>
    %56 = vector.extract_strided_slice %35 {offsets = [0, 64], sizes = [128, 64], strides = [1, 1]} : vector<256x384xbf16> to vector<128x64xbf16>
    %57 = vector.extract_strided_slice %35 {offsets = [0, 192], sizes = [128, 64], strides = [1, 1]} : vector<256x384xbf16> to vector<128x64xbf16>
    %58 = vector.extract_strided_slice %35 {offsets = [0, 320], sizes = [128, 64], strides = [1, 1]} : vector<256x384xbf16> to vector<128x64xbf16>
    "tpu.trace_start"() <{level = 10 : i32, message = "qd,kd->qk"}> : () -> ()
    %cst_21 = arith.constant dense<0.000000e+00> : vector<128x128xf32>
    %59 = tpu.matmul %56, %57, %cst_21 {dimension_numbers = #tpu.dot_dimension_numbers<[1], [1], [0], [0], [0, 0, 1, 0], [], []>} : vector<128x64xbf16>, vector<128x64xbf16>, vector<128x128xf32> -> vector<128x128xf32>
    "tpu.trace_stop"() : () -> ()
    %cst_22 = arith.constant 1.250000e-01 : f32
    %60 = vector.broadcast %cst_22 : f32 to vector<128x128xf32>
    %61 = arith.mulf %59, %60 : vector<128x128xf32>
    %cst_23 = arith.constant -1.000000e+30 : f32
    %62 = vector.broadcast %cst_23 : f32 to vector<128x128xf32>
    %63 = arith.select %4, %61, %62 : vector<128x128xi1>, vector<128x128xf32>
    %cst_24 = arith.constant dense<0xFF800000> : vector<128xf32>
    %64 = vector.multi_reduction <maximumf>, %63, %cst_24 [1] : vector<128x128xf32> to vector<128xf32>
    %65 = vector.shape_cast %64 : vector<128xf32> to vector<128x1xf32>
    %66 = vector.broadcast %65 : vector<128x1xf32> to vector<128x128xf32>
    %67 = arith.subf %63, %66 : vector<128x128xf32>
    %68 = math.exp %67 : vector<128x128xf32>
    %cst_25 = arith.constant dense<0.000000e+00> : vector<128xf32>
    %69 = vector.multi_reduction <add>, %68, %cst_25 [1] : vector<128x128xf32> to vector<128xf32>
    %70 = vector.shape_cast %69 : vector<128xf32> to vector<128x1xf32>
    %71 = tpu.reciprocal %70 {approx = true} : vector<128x1xf32> -> vector<128x1xf32>
    %72 = vector.broadcast %71 : vector<128x1xf32> to vector<128x128xf32>
    %73 = arith.mulf %68, %72 : vector<128x128xf32>
    %74 = arith.truncf %73 : vector<128x128xf32> to vector<128x128xbf16>
    %cst_26 = arith.constant dense<0.000000e+00> : vector<128x64xf32>
    %75 = tpu.matmul %74, %58, %cst_26 {dimension_numbers = #tpu.dot_dimension_numbers<[1], [0], [0], [1], [0, 0, 1, 1], [], []>} : vector<128x128xbf16>, vector<128x64xbf16>, vector<128x64xf32> -> vector<128x64xf32>
    %76 = tpu.concatenate %55, %75 in 1 : vector<128x64xf32>, vector<128x64xf32> -> vector<128x128xf32>
    %77 = vector.extract_strided_slice %35 {offsets = [128, 0], sizes = [128, 64], strides = [1, 1]} : vector<256x384xbf16> to vector<128x64xbf16>
    %78 = vector.extract_strided_slice %35 {offsets = [128, 128], sizes = [128, 64], strides = [1, 1]} : vector<256x384xbf16> to vector<128x64xbf16>
    %79 = vector.extract_strided_slice %35 {offsets = [128, 256], sizes = [128, 64], strides = [1, 1]} : vector<256x384xbf16> to vector<128x64xbf16>
    "tpu.trace_start"() <{level = 10 : i32, message = "qd,kd->qk"}> : () -> ()
    %cst_27 = arith.constant dense<0.000000e+00> : vector<128x128xf32>
    %80 = tpu.matmul %77, %78, %cst_27 {dimension_numbers = #tpu.dot_dimension_numbers<[1], [1], [0], [0], [0, 0, 1, 0], [], []>} : vector<128x64xbf16>, vector<128x64xbf16>, vector<128x128xf32> -> vector<128x128xf32>
    "tpu.trace_stop"() : () -> ()
    %cst_28 = arith.constant 1.250000e-01 : f32
    %81 = vector.broadcast %cst_28 : f32 to vector<128x128xf32>
    %82 = arith.mulf %80, %81 : vector<128x128xf32>
    %cst_29 = arith.constant -1.000000e+30 : f32
    %83 = vector.broadcast %cst_29 : f32 to vector<128x128xf32>
    %84 = arith.select %4, %82, %83 : vector<128x128xi1>, vector<128x128xf32>
    %cst_30 = arith.constant dense<0xFF800000> : vector<128xf32>
    %85 = vector.multi_reduction <maximumf>, %84, %cst_30 [1] : vector<128x128xf32> to vector<128xf32>
    %86 = vector.shape_cast %85 : vector<128xf32> to vector<128x1xf32>
    %87 = vector.broadcast %86 : vector<128x1xf32> to vector<128x128xf32>
    %88 = arith.subf %84, %87 : vector<128x128xf32>
    %89 = math.exp %88 : vector<128x128xf32>
    %cst_31 = arith.constant dense<0.000000e+00> : vector<128xf32>
    %90 = vector.multi_reduction <add>, %89, %cst_31 [1] : vector<128x128xf32> to vector<128xf32>
    %91 = vector.shape_cast %90 : vector<128xf32> to vector<128x1xf32>
    %92 = tpu.reciprocal %91 {approx = true} : vector<128x1xf32> -> vector<128x1xf32>
    %93 = vector.broadcast %92 : vector<128x1xf32> to vector<128x128xf32>
    %94 = arith.mulf %89, %93 : vector<128x128xf32>
    %95 = arith.truncf %94 : vector<128x128xf32> to vector<128x128xbf16>
    %cst_32 = arith.constant dense<0.000000e+00> : vector<128x64xf32>
    %96 = tpu.matmul %95, %79, %cst_32 {dimension_numbers = #tpu.dot_dimension_numbers<[1], [0], [0], [1], [0, 0, 1, 1], [], []>} : vector<128x128xbf16>, vector<128x64xbf16>, vector<128x64xf32> -> vector<128x64xf32>
    %97 = vector.extract_strided_slice %35 {offsets = [128, 64], sizes = [128, 64], strides = [1, 1]} : vector<256x384xbf16> to vector<128x64xbf16>
    %98 = vector.extract_strided_slice %35 {offsets = [128, 192], sizes = [128, 64], strides = [1, 1]} : vector<256x384xbf16> to vector<128x64xbf16>
    %99 = vector.extract_strided_slice %35 {offsets = [128, 320], sizes = [128, 64], strides = [1, 1]} : vector<256x384xbf16> to vector<128x64xbf16>
    "tpu.trace_start"() <{level = 10 : i32, message = "qd,kd->qk"}> : () -> ()
    %cst_33 = arith.constant dense<0.000000e+00> : vector<128x128xf32>
    %100 = tpu.matmul %97, %98, %cst_33 {dimension_numbers = #tpu.dot_dimension_numbers<[1], [1], [0], [0], [0, 0, 1, 0], [], []>} : vector<128x64xbf16>, vector<128x64xbf16>, vector<128x128xf32> -> vector<128x128xf32>
    "tpu.trace_stop"() : () -> ()
    %cst_34 = arith.constant 1.250000e-01 : f32
    %101 = vector.broadcast %cst_34 : f32 to vector<128x128xf32>
    %102 = arith.mulf %100, %101 : vector<128x128xf32>
    %cst_35 = arith.constant -1.000000e+30 : f32
    %103 = vector.broadcast %cst_35 : f32 to vector<128x128xf32>
    %104 = arith.select %4, %102, %103 : vector<128x128xi1>, vector<128x128xf32>
    %cst_36 = arith.constant dense<0xFF800000> : vector<128xf32>
    %105 = vector.multi_reduction <maximumf>, %104, %cst_36 [1] : vector<128x128xf32> to vector<128xf32>
    %106 = vector.shape_cast %105 : vector<128xf32> to vector<128x1xf32>
    %107 = vector.broadcast %106 : vector<128x1xf32> to vector<128x128xf32>
    %108 = arith.subf %104, %107 : vector<128x128xf32>
    %109 = math.exp %108 : vector<128x128xf32>
    %cst_37 = arith.constant dense<0.000000e+00> : vector<128xf32>
    %110 = vector.multi_reduction <add>, %109, %cst_37 [1] : vector<128x128xf32> to vector<128xf32>
    %111 = vector.shape_cast %110 : vector<128xf32> to vector<128x1xf32>
    %112 = tpu.reciprocal %111 {approx = true} : vector<128x1xf32> -> vector<128x1xf32>
    %113 = vector.broadcast %112 : vector<128x1xf32> to vector<128x128xf32>
    %114 = arith.mulf %109, %113 : vector<128x128xf32>
    %115 = arith.truncf %114 : vector<128x128xf32> to vector<128x128xbf16>
    %cst_38 = arith.constant dense<0.000000e+00> : vector<128x64xf32>
    %116 = tpu.matmul %115, %99, %cst_38 {dimension_numbers = #tpu.dot_dimension_numbers<[1], [0], [0], [1], [0, 0, 1, 1], [], []>} : vector<128x128xbf16>, vector<128x64xbf16>, vector<128x64xf32> -> vector<128x64xf32>
    %117 = tpu.concatenate %96, %116 in 1 : vector<128x64xf32>, vector<128x64xf32> -> vector<128x128xf32>
    %118 = tpu.concatenate %76, %117 in 0 : vector<128x128xf32>, vector<128x128xf32> -> vector<256x128xf32>
    %119 = arith.truncf %118 : vector<256x128xf32> to vector<256x128xbf16>
    %c0_39 = arith.constant 0 : index
    %c0_40 = arith.constant 0 : index
    %120 = vector.load %arg6[%c0_39, %c0_40] : memref<128x128xbf16, #tpu.memory_space<vmem>>, vector<128x128xbf16>
    %cst_41 = arith.constant dense<0.000000e+00> : vector<256x128xf32>
    %121 = tpu.matmul %119, %120, %cst_41 {dimension_numbers = #tpu.dot_dimension_numbers<[1], [0], [0], [1], [0, 0, 1, 1], [], []>} : vector<256x128xbf16>, vector<128x128xbf16>, vector<256x128xf32> -> vector<256x128xf32>
    %122 = arith.addf %1, %121 : vector<256x128xf32>
    %c0_42 = arith.constant 0 : index
    %c0_43 = arith.constant 0 : index
    %123 = vector.load %arg7[%c0_42, %c0_43] : memref<1x128xf32, #tpu.memory_space<vmem>>, vector<1x128xf32>
    %124 = vector.broadcast %123 : vector<1x128xf32> to vector<256x128xf32>
    %125 = arith.addf %122, %124 : vector<256x128xf32>
    %c0_44 = arith.constant 0 : index
    %c0_45 = arith.constant 0 : index
    %126 = vector.load %arg8[%c0_44, %c0_45] : memref<1x128xf32, #tpu.memory_space<vmem>>, vector<1x128xf32>
    %c0_46 = arith.constant 0 : index
    %c0_47 = arith.constant 0 : index
    %127 = vector.load %arg9[%c0_46, %c0_47] : memref<1x128xf32, #tpu.memory_space<vmem>>, vector<1x128xf32>
    %cst_48 = arith.constant dense<0.000000e+00> : vector<256xf32>
    %128 = vector.multi_reduction <add>, %125, %cst_48 [1] : vector<256x128xf32> to vector<256xf32>
    %129 = vector.shape_cast %128 : vector<256xf32> to vector<256x1xf32>
    %cst_49 = arith.constant 1.280000e+02 : f32
    %130 = vector.broadcast %cst_49 : f32 to vector<256x1xf32>
    %131 = arith.divf %129, %130 : vector<256x1xf32>
    %132 = vector.broadcast %131 : vector<256x1xf32> to vector<256x128xf32>
    %133 = arith.subf %125, %132 : vector<256x128xf32>
    %134 = arith.mulf %133, %133 : vector<256x128xf32>
    %cst_50 = arith.constant dense<0.000000e+00> : vector<256xf32>
    %135 = vector.multi_reduction <add>, %134, %cst_50 [1] : vector<256x128xf32> to vector<256xf32>
    %136 = vector.shape_cast %135 : vector<256xf32> to vector<256x1xf32>
    %cst_51 = arith.constant 1.280000e+02 : f32
    %137 = vector.broadcast %cst_51 : f32 to vector<256x1xf32>
    %138 = arith.divf %136, %137 : vector<256x1xf32>
    %139 = vector.broadcast %131 : vector<256x1xf32> to vector<256x128xf32>
    %140 = arith.subf %125, %139 : vector<256x128xf32>
    %cst_52 = arith.constant 9.99999974E-6 : f32
    %141 = vector.broadcast %cst_52 : f32 to vector<256x1xf32>
    %142 = arith.addf %138, %141 : vector<256x1xf32>
    %143 = math.rsqrt %142 : vector<256x1xf32>
    %144 = vector.broadcast %143 : vector<256x1xf32> to vector<256x128xf32>
    %145 = arith.mulf %140, %144 : vector<256x128xf32>
    %146 = vector.broadcast %126 : vector<1x128xf32> to vector<256x128xf32>
    %147 = arith.mulf %145, %146 : vector<256x128xf32>
    %148 = vector.broadcast %127 : vector<1x128xf32> to vector<256x128xf32>
    %149 = arith.addf %147, %148 : vector<256x128xf32>
    %150 = arith.truncf %149 : vector<256x128xf32> to vector<256x128xbf16>
    %c0_53 = arith.constant 0 : index
    %c0_54 = arith.constant 0 : index
    %151 = vector.load %arg10[%c0_53, %c0_54] : memref<128x512xbf16, #tpu.memory_space<vmem>>, vector<128x512xbf16>
    %cst_55 = arith.constant dense<0.000000e+00> : vector<256x512xf32>
    %152 = tpu.matmul %150, %151, %cst_55 {dimension_numbers = #tpu.dot_dimension_numbers<[1], [0], [0], [1], [0, 0, 1, 1], [], []>} : vector<256x128xbf16>, vector<128x512xbf16>, vector<256x512xf32> -> vector<256x512xf32>
    %c0_56 = arith.constant 0 : index
    %c0_57 = arith.constant 0 : index
    %153 = vector.load %arg11[%c0_56, %c0_57] : memref<1x512xf32, #tpu.memory_space<vmem>>, vector<1x512xf32>
    %154 = vector.broadcast %153 : vector<1x512xf32> to vector<256x512xf32>
    %155 = arith.addf %152, %154 : vector<256x512xf32>
    %cst_58 = arith.constant 1.702000e+00 : f32
    %156 = vector.broadcast %cst_58 : f32 to vector<256x512xf32>
    %157 = arith.mulf %156, %155 : vector<256x512xf32>
    %158 = arith.negf %157 : vector<256x512xf32>
    %159 = math.exp %158 : vector<256x512xf32>
    %cst_59 = arith.constant 1.000000e+00 : f32
    %160 = vector.broadcast %cst_59 : f32 to vector<256x512xf32>
    %161 = arith.addf %160, %159 : vector<256x512xf32>
    %162 = arith.divf %160, %161 : vector<256x512xf32>
    %163 = arith.mulf %155, %162 : vector<256x512xf32>
    %164 = arith.truncf %163 : vector<256x512xf32> to vector<256x512xbf16>
    %c0_60 = arith.constant 0 : index
    %c0_61 = arith.constant 0 : index
    %165 = vector.load %arg12[%c0_60, %c0_61] : memref<512x128xbf16, #tpu.memory_space<vmem>>, vector<512x128xbf16>
    %cst_62 = arith.constant dense<0.000000e+00> : vector<256x128xf32>
    %166 = tpu.matmul %164, %165, %cst_62 {dimension_numbers = #tpu.dot_dimension_numbers<[1], [0], [0], [1], [0, 0, 1, 1], [], []>} : vector<256x512xbf16>, vector<512x128xbf16>, vector<256x128xf32> -> vector<256x128xf32>
    %c0_63 = arith.constant 0 : index
    %c0_64 = arith.constant 0 : index
    %167 = vector.load %arg13[%c0_63, %c0_64] : memref<1x128xf32, #tpu.memory_space<vmem>>, vector<1x128xf32>
    %168 = vector.broadcast %167 : vector<1x128xf32> to vector<256x128xf32>
    %169 = arith.addf %166, %168 : vector<256x128xf32>
    %170 = arith.addf %125, %169 : vector<256x128xf32>
    %171 = vector.shape_cast %170 : vector<256x128xf32> to vector<2x128x128xf32>
    %c0_65 = arith.constant 0 : index
    %c0_66 = arith.constant 0 : index
    %c0_67 = arith.constant 0 : index
    %172 = vector.load %arg14[%c0_65, %c0_66, %c0_67] : memref<2x128x128xf32, #tpu.memory_space<vmem>>, vector<2x128x128xf32>
    tpu.vector_store %arg14[%c0_65, %c0_66, %c0_67], %171 {strides = array<i32>} : memref<2x128x128xf32, #tpu.memory_space<vmem>>, vector<2x128x128xf32>,
    return
  }
  func.func @transform_0(%arg0: i32) -> (i32, i32, i32) {
    %c0_i32 = arith.constant 0 : i32
    %c0_i32_0 = arith.constant 0 : i32
    %c0_i32_1 = arith.constant 0 : i32
    return %arg0, %c0_i32, %c0_i32_0 : i32, i32, i32
  }
  func.func @transform_1(%arg0: i32) -> (i32, i32) {
    %c0_i32 = arith.constant 0 : i32
    %c0_i32_0 = arith.constant 0 : i32
    %c0_i32_1 = arith.constant 0 : i32
    return %c0_i32, %c0_i32_0 : i32, i32
  }
  func.func @transform_2(%arg0: i32) -> (i32, i32) {
    %c0_i32 = arith.constant 0 : i32
    %c0_i32_0 = arith.constant 0 : i32
    %c0_i32_1 = arith.constant 0 : i32
    return %c0_i32, %c0_i32_0 : i32, i32
  }
  func.func @transform_3(%arg0: i32) -> (i32, i32) {
    %c0_i32 = arith.constant 0 : i32
    %c0_i32_0 = arith.constant 0 : i32
    %c0_i32_1 = arith.constant 0 : i32
    return %c0_i32, %c0_i32_0 : i32, i32
  }
  func.func @transform_4(%arg0: i32) -> (i32, i32) {
    %c0_i32 = arith.constant 0 : i32
    %c0_i32_0 = arith.constant 0 : i32
    %c0_i32_1 = arith.constant 0 : i32
    return %c0_i32, %c0_i32_0 : i32, i32
  }
  func.func @transform_5(%arg0: i32) -> (i32, i32) {
    %c0_i32 = arith.constant 0 : i32
    %c0_i32_0 = arith.constant 0 : i32
    %c0_i32_1 = arith.constant 0 : i32
    return %c0_i32, %c0_i32_0 : i32, i32
  }
  func.func @transform_6(%arg0: i32) -> (i32, i32) {
    %c0_i32 = arith.constant 0 : i32
    %c0_i32_0 = arith.constant 0 : i32
    %c0_i32_1 = arith.constant 0 : i32
    return %c0_i32, %c0_i32_0 : i32, i32
  }
  func.func @transform_7(%arg0: i32) -> (i32, i32) {
    %c0_i32 = arith.constant 0 : i32
    %c0_i32_0 = arith.constant 0 : i32
    %c0_i32_1 = arith.constant 0 : i32
    return %c0_i32, %c0_i32_0 : i32, i32
  }
  func.func @transform_8(%arg0: i32) -> (i32, i32) {
    %c0_i32 = arith.constant 0 : i32
    %c0_i32_0 = arith.constant 0 : i32
    %c0_i32_1 = arith.constant 0 : i32
    return %c0_i32, %c0_i32_0 : i32, i32
  }
  func.func @transform_9(%arg0: i32) -> (i32, i32) {
    %c0_i32 = arith.constant 0 : i32
    %c0_i32_0 = arith.constant 0 : i32
    %c0_i32_1 = arith.constant 0 : i32
    return %c0_i32, %c0_i32_0 : i32, i32
  }
  func.func @transform_10(%arg0: i32) -> (i32, i32) {
    %c0_i32 = arith.constant 0 : i32
    %c0_i32_0 = arith.constant 0 : i32
    %c0_i32_1 = arith.constant 0 : i32
    return %c0_i32, %c0_i32_0 : i32, i32
  }
  func.func @transform_11(%arg0: i32) -> (i32, i32) {
    %c0_i32 = arith.constant 0 : i32
    %c0_i32_0 = arith.constant 0 : i32
    %c0_i32_1 = arith.constant 0 : i32
    return %c0_i32, %c0_i32_0 : i32, i32
  }
  func.func @transform_12(%arg0: i32) -> (i32, i32) {
    %c0_i32 = arith.constant 0 : i32
    %c0_i32_0 = arith.constant 0 : i32
    %c0_i32_1 = arith.constant 0 : i32
    return %c0_i32, %c0_i32_0 : i32, i32
  }
  func.func @transform_13(%arg0: i32) -> (i32, i32, i32) {
    %c0_i32 = arith.constant 0 : i32
    %c0_i32_0 = arith.constant 0 : i32
    %c0_i32_1 = arith.constant 0 : i32
    return %arg0, %c0_i32, %c0_i32_0 : i32, i32, i32
  }
}

</mosaic_0001>

<llo_original>
// kernel: tpu_custom_call.1
$region0: #{tpu_custom_call.1}
  #allocation0 [shape = 'u32[]', space=smem, size = 0x4, offset = 0x4, fixed_abs, tag = 'smem constant byte address 0x4 - core index']
  #allocation1 [shape = 'u32[144,128]{1,0:T(1,128)}', space=vmem, size = 0x12000, scoped, tag = 'internal scratch']
  %s0 = inlined_call_operand.hbm [shape: f32[4,128,128], index: 0, kind: input, shape index: {}]
  %s1 = inlined_call_operand.hbm [shape: f32[1,128], index: 1, kind: input, shape index: {}]
  %s2 = inlined_call_operand.hbm [shape: f32[1,128], index: 2, kind: input, shape index: {}]
  %s3 = inlined_call_operand.hbm [shape: bf16[128,384], index: 3, kind: input, shape index: {}]
  %s4 = inlined_call_operand.vmem [shape: f32[1,384], index: 4, kind: input, shape index: {}]
  %s5 = inlined_call_operand.hbm [shape: bf16[128,128], index: 5, kind: input, shape index: {}]
  %s6 = inlined_call_operand.vmem [shape: f32[1,128], index: 6, kind: input, shape index: {}]
  %s7 = inlined_call_operand.vmem [shape: f32[1,128], index: 7, kind: input, shape index: {}]
  %s8 = inlined_call_operand.vmem [shape: f32[1,128], index: 8, kind: input, shape index: {}]
  %s9 = inlined_call_operand.hbm [shape: bf16[128,512], index: 9, kind: input, shape index: {}]
  %s10 = inlined_call_operand.vmem [shape: f32[1,512], index: 10, kind: input, shape index: {}]
  %s11 = inlined_call_operand.hbm [shape: bf16[512,128], index: 11, kind: input, shape index: {}]
  %s12 = inlined_call_operand.vmem [shape: f32[1,128], index: 12, kind: input, shape index: {}]
  %s13 = inlined_call_operand.hbm [shape: f32[4,128,128], index: 13, kind: output, shape index: {}]
  %s14 = sld [smem:[#allocation0]]
  $region113: #{tpu_custom_call.1} parent=0
    _
  %s16 = ssub.s32 1, %s14
  %s17 = scalar_select 0, %s16, %s14
  $region1: #{tpu_custom_call.1} parent=0
    #allocation2 [shape = 'u8[262144]{0}', space=vmem, size = 0x40000, scoped, tag = 'input window, operand 0']
    #allocation3 [shape = 's32[2]{0}', space=sflag, size = 0x8, scoped, tag = 'scoped memory for tpu_custom_call.1']
    #allocation4 [shape = 's32[2]{0}', space=sflag, size = 0x8, scoped, tag = 'scoped memory for tpu_custom_call.1']
    #allocation5 [shape = 'u8[512]{0}', space=vmem, size = 0x400, scoped, tag = 'input window, operand 1, single buffered']
    #allocation6 [shape = 's32[1]{0}', space=sflag, size = 0x4, scoped, tag = 'scoped memory for tpu_custom_call.1']
    #allocation7 [shape = 'u8[512]{0}', space=vmem, size = 0x400, scoped, tag = 'input window, operand 2, single buffered']
    #allocation8 [shape = 'u8[98304]{0}', space=vmem, size = 0x18000, scoped, tag = 'input window, operand 3, single buffered']
    #allocation9 [shape = 's32[1]{0}', space=sflag, size = 0x4, scoped, tag = 'scoped memory for tpu_custom_call.1']
    #allocation10 [shape = 'u8[32768]{0}', space=vmem, size = 0x8000, scoped, tag = 'input window, operand 5, single buffered']
    #allocation11 [shape = 'u8[131072]{0}', space=vmem, size = 0x20000, scoped, tag = 'input window, operand 9, single buffered']
    #allocation12 [shape = 's32[1]{0}', space=sflag, size = 0x4, scoped, tag = 'scoped memory for tpu_custom_call.1']
    #allocation13 [shape = 'u8[131072]{0}', space=vmem, size = 0x20000, scoped, tag = 'input window, operand 11, single buffered']
    #allocation14 [shape = 'u8[262144]{0}', space=vmem, size = 0x40000, scoped, tag = 'output window, operand 0']
    %18 = vsyncpa [#allocation3], 0
    %s19 = scalar_lea.sflag [#allocation3], 1
    %20 = vsyncpa %s19, 0
    %21 = vsyncpa [#allocation6], 0
    %22 = vsyncpa [#allocation9], 0
    %23 = vsyncpa [#allocation12], 0
    %24 = vsyncpa [#allocation4], 0
    %s25 = scalar_lea.sflag [#allocation4], 1
    %26 = vsyncpa %s25, 0
    loop: start=0, step=1, limit=4
    $region2: #{tpu_custom_call.1} parent=1 // loop_pre_header
      _
    $region3: #{tpu_custom_call.1} parent=1 // loop_header
      %s28 = sphi 0, %s32
      %p29 = scmp.ge.s32.totalorder %s28, 4
      %s38 = sphi 0, %s40
      %s41 = sphi 0, %s38
      %s42 = sphi 0, %s41
      %s58 = sphi 0, %s42
      %s62 = sphi 0, %s62
      %s64 = sphi 0, %s62
      %s65 = sphi 0, %s64
      %s79 = sphi 0, %s65
      %s83 = sphi 0, %s83
      %s85 = sphi 0, %s83
      %s86 = sphi 0, %s85
      %s100 = sphi 0, %s86
      %s104 = sphi 0, %s104
      %s106 = sphi 0, %s104
      %s107 = sphi 0, %s106
      %s121 = sphi 0, %s107
      %s125 = sphi 0, %s125
      %s127 = sphi 0, %s125
      %s128 = sphi 0, %s127
      %s142 = sphi 0, %s128
      %s146 = sphi 0, %s146
      %s148 = sphi 0, %s146
      %s149 = sphi 0, %s148
      %s163 = sphi 0, %s149
      %s167 = sphi 0, %s167
      %s169 = sphi 0, %s167
      %s170 = sphi 0, %s169
      %s184 = sphi 0, %s170
      %s188 = sphi 0, %s188
      %s190 = sphi 0, %s188
      %s191 = sphi 0, %s190
      %s205 = sphi 0, %s191
      %s209 = sphi 0, %s209
      %s211 = sphi 0, %s209
      %s212 = sphi 0, %s211
      %s226 = sphi 0, %s212
      %s230 = sphi 0, %s230
      %s232 = sphi 0, %s230
      %s233 = sphi 0, %s232
      %s247 = sphi 0, %s233
      %s251 = sphi 0, %s251
      %s253 = sphi 0, %s251
      %s254 = sphi 0, %s253
      %s268 = sphi 0, %s254
      %s272 = sphi 0, %s272
      %s274 = sphi 0, %s272
      %s275 = sphi 0, %s274
      %s289 = sphi 0, %s275
      %s293 = sphi 0, %s293
      %s295 = sphi 0, %s293
      %s296 = sphi 0, %s295
      %s310 = sphi 0, %s296
      %s316 = sphi 0, %s318
      %s319 = sphi 0, %s316
      %s320 = sphi 0, %s319
      %s336 = sphi 0, %s320
    $region4: #{tpu_custom_call.1} parent=1 // loop_header_branch
      %31 = sbr.rel (%p29) target = $region8
    $region5: #{tpu_custom_call.1} parent=1 // loop_body
      %s33 = ssub.s32 %s28, 1
      %s34 = ssub.s32 %s28, 2
      %s35 = sadd.s32 %s28, 1
      %s36 = ssub.s32 %s28, %s35
      %p37 = scmp.eq.s32.totalorder %s36, 0
      %s39 = sadd.s32 %s38, 1
      %s40 = scalar_select %p37, %s38, %s39
      %p43 = pneg %p37
      %p44 = scmp.eq.s32.totalorder %s28, 1
      %p45 = por %p43, %p44
      %p46 = scmp.ne.s32.totalorder %s38, %s41
      %p47 = scmp.eq.s32.totalorder %s28, 0
      %p48 = por %p46, %p47
      %p49 = scmp.ne.s32.totalorder %s38, %s41
      %p50 = scmp.eq.s32.totalorder %s33, 1
      %p51 = por %p49, %p50
      %p52 = scmp.ne.s32.totalorder %s41, %s42
      %p53 = scmp.eq.s32.totalorder %s33, 0
      %p54 = por %p52, %p53
      %p55 = scmp.ne.s32.totalorder %s41, %s42
      %p56 = scmp.eq.s32.totalorder %s34, 1
      %p57 = por %p55, %p56
      %p59 = scmp.ne.s32.totalorder %s42, %s58
      %p60 = scmp.eq.s32.totalorder %s34, 0
      %p61 = por %p59, %p60
      %s63 = sadd.s32 %s62, 1
      %p66 = scmp.eq.s32.totalorder %s28, 1
      %p67 = scmp.ne.s32.totalorder %s62, %s64
      %p68 = scmp.eq.s32.totalorder %s28, 0
      %p69 = por %p67, %p68
      %p70 = scmp.ne.s32.totalorder %s62, %s64
      %p71 = scmp.eq.s32.totalorder %s33, 1
      %p72 = por %p70, %p71
      %p73 = scmp.ne.s32.totalorder %s64, %s65
      %p74 = scmp.eq.s32.totalorder %s33, 0
      %p75 = por %p73, %p74
      %p76 = scmp.ne.s32.totalorder %s64, %s65
      %p77 = scmp.eq.s32.totalorder %s34, 1
      %p78 = por %p76, %p77
      %p80 = scmp.ne.s32.totalorder %s65, %s79
      %p81 = scmp.eq.s32.totalorder %s34, 0
      %p82 = por %p80, %p81
      %s84 = sadd.s32 %s83, 1
      %p87 = scmp.eq.s32.totalorder %s28, 1
      %p88 = scmp.ne.s32.totalorder %s83, %s85
      %p89 = scmp.eq.s32.totalorder %s28, 0
      %p90 = por %p88, %p89
      %p91 = scmp.ne.s32.totalorder %s83, %s85
      %p92 = scmp.eq.s32.totalorder %s33, 1
      %p93 = por %p91, %p92
      %p94 = scmp.ne.s32.totalorder %s85, %s86
      %p95 = scmp.eq.s32.totalorder %s33, 0
      %p96 = por %p94, %p95
      %p97 = scmp.ne.s32.totalorder %s85, %s86
      %p98 = scmp.eq.s32.totalorder %s34, 1
      %p99 = por %p97, %p98
      %p101 = scmp.ne.s32.totalorder %s86, %s100
      %p102 = scmp.eq.s32.totalorder %s34, 0
      %p103 = por %p101, %p102
      %s105 = sadd.s32 %s104, 1
      %p108 = scmp.eq.s32.totalorder %s28, 1
      %p109 = scmp.ne.s32.totalorder %s104, %s106
      %p110 = scmp.eq.s32.totalorder %s28, 0
      %p111 = por %p109, %p110
      %p112 = scmp.ne.s32.totalorder %s104, %s106
      %p113 = scmp.eq.s32.totalorder %s33, 1
      %p114 = por %p112, %p113
      %p115 = scmp.ne.s32.totalorder %s106, %s107
      %p116 = scmp.eq.s32.totalorder %s33, 0
      %p117 = por %p115, %p116
      %p118 = scmp.ne.s32.totalorder %s106, %s107
      %p119 = scmp.eq.s32.totalorder %s34, 1
      %p120 = por %p118, %p119
      %p122 = scmp.ne.s32.totalorder %s107, %s121
      %p123 = scmp.eq.s32.totalorder %s34, 0
      %p124 = por %p122, %p123
      %s126 = sadd.s32 %s125, 1
      %p129 = scmp.eq.s32.totalorder %s28, 1
      %p130 = scmp.ne.s32.totalorder %s125, %s127
      %p131 = scmp.eq.s32.totalorder %s28, 0
      %p132 = por %p130, %p131
      %p133 = scmp.ne.s32.totalorder %s125, %s127
      %p134 = scmp.eq.s32.totalorder %s33, 1
      %p135 = por %p133, %p134
      %p136 = scmp.ne.s32.totalorder %s127, %s128
      %p137 = scmp.eq.s32.totalorder %s33, 0
      %p138 = por %p136, %p137
      %p139 = scmp.ne.s32.totalorder %s127, %s128
      %p140 = scmp.eq.s32.totalorder %s34, 1
      %p141 = por %p139, %p140
      %p143 = scmp.ne.s32.totalorder %s128, %s142
      %p144 = scmp.eq.s32.totalorder %s34, 0
      %p145 = por %p143, %p144
      %s147 = sadd.s32 %s146, 1
      %p150 = scmp.eq.s32.totalorder %s28, 1
      %p151 = scmp.ne.s32.totalorder %s146, %s148
      %p152 = scmp.eq.s32.totalorder %s28, 0
      %p153 = por %p151, %p152
      %p154 = scmp.ne.s32.totalorder %s146, %s148
      %p155 = scmp.eq.s32.totalorder %s33, 1
      %p156 = por %p154, %p155
      %p157 = scmp.ne.s32.totalorder %s148, %s149
      %p158 = scmp.eq.s32.totalorder %s33, 0
      %p159 = por %p157, %p158
      %p160 = scmp.ne.s32.totalorder %s148, %s149
      %p161 = scmp.eq.s32.totalorder %s34, 1
      %p162 = por %p160, %p161
      %p164 = scmp.ne.s32.totalorder %s149, %s163
      %p165 = scmp.eq.s32.totalorder %s34, 0
      %p166 = por %p164, %p165
      %s168 = sadd.s32 %s167, 1
      %p171 = scmp.eq.s32.totalorder %s28, 1
      %p172 = scmp.ne.s32.totalorder %s167, %s169
      %p173 = scmp.eq.s32.totalorder %s28, 0
      %p174 = por %p172, %p173
      %p175 = scmp.ne.s32.totalorder %s167, %s169
      %p176 = scmp.eq.s32.totalorder %s33, 1
      %p177 = por %p175, %p176
      %p178 = scmp.ne.s32.totalorder %s169, %s170
      %p179 = scmp.eq.s32.totalorder %s33, 0
      %p180 = por %p178, %p179
      %p181 = scmp.ne.s32.totalorder %s169, %s170
      %p182 = scmp.eq.s32.totalorder %s34, 1
      %p183 = por %p181, %p182
      %p185 = scmp.ne.s32.totalorder %s170, %s184
      %p186 = scmp.eq.s32.totalorder %s34, 0
      %p187 = por %p185, %p186
      %s189 = sadd.s32 %s188, 1
      %p192 = scmp.eq.s32.totalorder %s28, 1
      %p193 = scmp.ne.s32.totalorder %s188, %s190
      %p194 = scmp.eq.s32.totalorder %s28, 0
      %p195 = por %p193, %p194
      %p196 = scmp.ne.s32.totalorder %s188, %s190
      %p197 = scmp.eq.s32.totalorder %s33, 1
      %p198 = por %p196, %p197
      %p199 = scmp.ne.s32.totalorder %s190, %s191
      %p200 = scmp.eq.s32.totalorder %s33, 0
      %p201 = por %p199, %p200
      %p202 = scmp.ne.s32.totalorder %s190, %s191
      %p203 = scmp.eq.s32.totalorder %s34, 1
      %p204 = por %p202, %p203
      %p206 = scmp.ne.s32.totalorder %s191, %s205
      %p207 = scmp.eq.s32.totalorder %s34, 0
      %p208 = por %p206, %p207
      %s210 = sadd.s32 %s209, 1
      %p213 = scmp.eq.s32.totalorder %s28, 1
      %p214 = scmp.ne.s32.totalorder %s209, %s211
      %p215 = scmp.eq.s32.totalorder %s28, 0
      %p216 = por %p214, %p215
      %p217 = scmp.ne.s32.totalorder %s209, %s211
      %p218 = scmp.eq.s32.totalorder %s33, 1
      %p219 = por %p217, %p218
      %p220 = scmp.ne.s32.totalorder %s211, %s212
      %p221 = scmp.eq.s32.totalorder %s33, 0
      %p222 = por %p220, %p221
      %p223 = scmp.ne.s32.totalorder %s211, %s212
      %p224 = scmp.eq.s32.totalorder %s34, 1
      %p225 = por %p223, %p224
      %p227 = scmp.ne.s32.totalorder %s212, %s226
      %p228 = scmp.eq.s32.totalorder %s34, 0
      %p229 = por %p227, %p228
      %s231 = sadd.s32 %s230, 1
      %p234 = scmp.eq.s32.totalorder %s28, 1
      %p235 = scmp.ne.s32.totalorder %s230, %s232
      %p236 = scmp.eq.s32.totalorder %s28, 0
      %p237 = por %p235, %p236
      %p238 = scmp.ne.s32.totalorder %s230, %s232
      %p239 = scmp.eq.s32.totalorder %s33, 1
      %p240 = por %p238, %p239
      %p241 = scmp.ne.s32.totalorder %s232, %s233
      %p242 = scmp.eq.s32.totalorder %s33, 0
      %p243 = por %p241, %p242
      %p244 = scmp.ne.s32.totalorder %s232, %s233
      %p245 = scmp.eq.s32.totalorder %s34, 1
      %p246 = por %p244, %p245
      %p248 = scmp.ne.s32.totalorder %s233, %s247
      %p249 = scmp.eq.s32.totalorder %s34, 0
      %p250 = por %p248, %p249
      %s252 = sadd.s32 %s251, 1
      %p255 = scmp.eq.s32.totalorder %s28, 1
      %p256 = scmp.ne.s32.totalorder %s251, %s253
      %p257 = scmp.eq.s32.totalorder %s28, 0
      %p258 = por %p256, %p257
      %p259 = scmp.ne.s32.totalorder %s251, %s253
      %p260 = scmp.eq.s32.totalorder %s33, 1
      %p261 = por %p259, %p260
      %p262 = scmp.ne.s32.totalorder %s253, %s254
      %p263 = scmp.eq.s32.totalorder %s33, 0
      %p264 = por %p262, %p263
      %p265 = scmp.ne.s32.totalorder %s253, %s254
      %p266 = scmp.eq.s32.totalorder %s34, 1
      %p267 = por %p265, %p266
      %p269 = scmp.ne.s32.totalorder %s254, %s268
      %p270 = scmp.eq.s32.totalorder %s34, 0
      %p271 = por %p269, %p270
      %s273 = sadd.s32 %s272, 1
      %p276 = scmp.eq.s32.totalorder %s28, 1
      %p277 = scmp.ne.s32.totalorder %s272, %s274
      %p278 = scmp.eq.s32.totalorder %s28, 0
      %p279 = por %p277, %p278
      %p280 = scmp.ne.s32.totalorder %s272, %s274
      %p281 = scmp.eq.s32.totalorder %s33, 1
      %p282 = por %p280, %p281
      %p283 = scmp.ne.s32.totalorder %s274, %s275
      %p284 = scmp.eq.s32.totalorder %s33, 0
      %p285 = por %p283, %p284
      %p286 = scmp.ne.s32.totalorder %s274, %s275
      %p287 = scmp.eq.s32.totalorder %s34, 1
      %p288 = por %p286, %p287
      %p290 = scmp.ne.s32.totalorder %s275, %s289
      %p291 = scmp.eq.s32.totalorder %s34, 0
      %p292 = por %p290, %p291
      %s294 = sadd.s32 %s293, 1
      %p297 = scmp.eq.s32.totalorder %s28, 1
      %p298 = scmp.ne.s32.totalorder %s293, %s295
      %p299 = scmp.eq.s32.totalorder %s28, 0
      %p300 = por %p298, %p299
      %p301 = scmp.ne.s32.totalorder %s293, %s295
      %p302 = scmp.eq.s32.totalorder %s33, 1
      %p303 = por %p301, %p302
      %p304 = scmp.ne.s32.totalorder %s295, %s296
      %p305 = scmp.eq.s32.totalorder %s33, 0
      %p306 = por %p304, %p305
      %p307 = scmp.ne.s32.totalorder %s295, %s296
      %p308 = scmp.eq.s32.totalorder %s34, 1
      %p309 = por %p307, %p308
      %p311 = scmp.ne.s32.totalorder %s296, %s310
      %p312 = scmp.eq.s32.totalorder %s34, 0
      %p313 = por %p311, %p312
      %s314 = ssub.s32 %s28, %s35
      %p315 = scmp.eq.s32.totalorder %s314, 0
      %s317 = sadd.s32 %s316, 1
      %s318 = scalar_select %p315, %s316, %s317
      %p321 = pneg %p315
      %p322 = scmp.eq.s32.totalorder %s28, 1
      %p323 = por %p321, %p322
      %p324 = scmp.ne.s32.totalorder %s316, %s319
      %p325 = scmp.eq.s32.totalorder %s28, 0
      %p326 = por %p324, %p325
      %p327 = scmp.ne.s32.totalorder %s316, %s319
      %p328 = scmp.eq.s32.totalorder %s33, 1
      %p329 = por %p327, %p328
      %p330 = scmp.ne.s32.totalorder %s319, %s320
      %p331 = scmp.eq.s32.totalorder %s33, 0
      %p332 = por %p330, %p331
      %p333 = scmp.ne.s32.totalorder %s319, %s320
      %p334 = scmp.eq.s32.totalorder %s34, 1
      %p335 = por %p333, %p334
      %p337 = scmp.ne.s32.totalorder %s320, %s336
      %p338 = scmp.eq.s32.totalorder %s34, 0
      %p339 = por %p337, %p338
      %p340 = scmp.le.s32.totalorder 1, %s28
      %p341 = scmp.lt.s32.totalorder %s28, 3
      %p342 = pnand %p340, %p341
      %p343 = pneg %p342
      // Predicated region
      $region9: #{tpu_custom_call.1} parent=5 // pred_check
        _
      $region10: #{tpu_custom_call.1} parent=5 // pred_check_branch
        %345 = sbr.rel (%p342) target = $region12
      $region11: #{tpu_custom_call.1} parent=5 // pred_region
        %s346 = ssub.s32 %s28, 1
        // Predicated region
        $region13: #{tpu_custom_call.1} parent=11 // pred_check
          %p347 = pneg %p75
        $region14: #{tpu_custom_call.1} parent=11 // pred_check_branch
          %349 = sbr.rel (%p347) target = $region16
        $region15: #{tpu_custom_call.1} parent=11 // pred_region
          %s351 = ssub.s32 16, 16
          %352 = vsyncadd [#allocation6], %s351
          %s354 = sshll.u32 [#allocation5], 4
          %s355 = int_to_ptr.vmem [resolvable:$true] %s354
          %357 = dma.hbm_to_vmem [thread:$0]  %s1, 16, %s355, [#allocation6]
        $region16: #{tpu_custom_call.1} parent=11 // pred_fallthru
          _
        // Predicated region
        $region17: #{tpu_custom_call.1} parent=11 // pred_check
          %p358 = pneg %p96
        $region18: #{tpu_custom_call.1} parent=11 // pred_check_branch
          %360 = sbr.rel (%p358) target = $region20
        $region19: #{tpu_custom_call.1} parent=11 // pred_region
          %s362 = ssub.s32 16, 16
          %363 = vsyncadd [#allocation6], %s362
          %s365 = sshll.u32 [#allocation7], 4
          %s366 = int_to_ptr.vmem [resolvable:$true] %s365
          %368 = dma.hbm_to_vmem [thread:$0]  %s2, 16, %s366, [#allocation6]
        $region20: #{tpu_custom_call.1} parent=11 // pred_fallthru
          _
        // Predicated region
        $region21: #{tpu_custom_call.1} parent=11 // pred_check
          %p369 = pneg %p117
        $region22: #{tpu_custom_call.1} parent=11 // pred_check_branch
          %371 = sbr.rel (%p369) target = $region24
        $region23: #{tpu_custom_call.1} parent=11 // pred_region
          %s373 = ssub.s32 3072, 3072
          %374 = vsyncadd [#allocation9], %s373
          %s375 = sshll.u32 [#allocation8], 4
          %s376 = int_to_ptr.vmem [resolvable:$true] %s375
          %381 = dma.hbm_to_vmem [thread:$0]  %s3, 3072, %s376, [#allocation9], 192, 192, 12
        $region24: #{tpu_custom_call.1} parent=11 // pred_fallthru
          _
        // Predicated region
        $region25: #{tpu_custom_call.1} parent=11 // pred_check
          %p382 = pneg %p138
        $region26: #{tpu_custom_call.1} parent=11 // pred_check_branch
          %384 = sbr.rel (%p382) target = $region28
        $region27: #{tpu_custom_call.1} parent=11 // pred_region
          _
        $region28: #{tpu_custom_call.1} parent=11 // pred_fallthru
          _
        // Predicated region
        $region29: #{tpu_custom_call.1} parent=11 // pred_check
          %p385 = pneg %p159
        $region30: #{tpu_custom_call.1} parent=11 // pred_check_branch
          %387 = sbr.rel (%p385) target = $region32
        $region31: #{tpu_custom_call.1} parent=11 // pred_region
          %s389 = ssub.s32 1024, 1024
          %390 = vsyncadd [#allocation9], %s389
          %s391 = sshll.u32 [#allocation10], 4
          %s392 = int_to_ptr.vmem [resolvable:$true] %s391
          %397 = dma.hbm_to_vmem [thread:$0]  %s5, 1024, %s392, [#allocation9], 64, 64, 4
        $region32: #{tpu_custom_call.1} parent=11 // pred_fallthru
          _
        // Predicated region
        $region33: #{tpu_custom_call.1} parent=11 // pred_check
          %p398 = pneg %p180
        $region34: #{tpu_custom_call.1} parent=11 // pred_check_branch
          %400 = sbr.rel (%p398) target = $region36
        $region35: #{tpu_custom_call.1} parent=11 // pred_region
          _
        $region36: #{tpu_custom_call.1} parent=11 // pred_fallthru
          _
        // Predicated region
        $region37: #{tpu_custom_call.1} parent=11 // pred_check
          %p401 = pneg %p201
        $region38: #{tpu_custom_call.1} parent=11 // pred_check_branch
          %403 = sbr.rel (%p401) target = $region40
        $region39: #{tpu_custom_call.1} parent=11 // pred_region
          _
        $region40: #{tpu_custom_call.1} parent=11 // pred_fallthru
          _
        // Predicated region
        $region41: #{tpu_custom_call.1} parent=11 // pred_check
          %p404 = pneg %p222
        $region42: #{tpu_custom_call.1} parent=11 // pred_check_branch
          %406 = sbr.rel (%p404) target = $region44
        $region43: #{tpu_custom_call.1} parent=11 // pred_region
          _
        $region44: #{tpu_custom_call.1} parent=11 // pred_fallthru
          _
        // Predicated region
        $region45: #{tpu_custom_call.1} parent=11 // pred_check
          %p407 = pneg %p243
        $region46: #{tpu_custom_call.1} parent=11 // pred_check_branch
          %409 = sbr.rel (%p407) target = $region48
        $region47: #{tpu_custom_call.1} parent=11 // pred_region
          %s411 = ssub.s32 4096, 4096
          %412 = vsyncadd [#allocation12], %s411
          %s413 = sshll.u32 [#allocation11], 4
          %s414 = int_to_ptr.vmem [resolvable:$true] %s413
          %419 = dma.hbm_to_vmem [thread:$0]  %s9, 4096, %s414, [#allocation12], 256, 256, 16
        $region48: #{tpu_custom_call.1} parent=11 // pred_fallthru
          _
        // Predicated region
        $region49: #{tpu_custom_call.1} parent=11 // pred_check
          %p420 = pneg %p264
        $region50: #{tpu_custom_call.1} parent=11 // pred_check_branch
          %422 = sbr.rel (%p420) target = $region52
        $region51: #{tpu_custom_call.1} parent=11 // pred_region
          _
        $region52: #{tpu_custom_call.1} parent=11 // pred_fallthru
          _
        // Predicated region
        $region53: #{tpu_custom_call.1} parent=11 // pred_check
          %p423 = pneg %p285
        $region54: #{tpu_custom_call.1} parent=11 // pred_check_branch
          %425 = sbr.rel (%p423) target = $region56
        $region55: #{tpu_custom_call.1} parent=11 // pred_region
          %s427 = ssub.s32 4096, 4096
          %428 = vsyncadd [#allocation12], %s427
          %s429 = sshll.u32 [#allocation13], 4
          %s430 = int_to_ptr.vmem [resolvable:$true] %s429
          %435 = dma.hbm_to_vmem [thread:$0]  %s11, 4096, %s430, [#allocation12], 64, 64, 4
        $region56: #{tpu_custom_call.1} parent=11 // pred_fallthru
          _
        // Predicated region
        $region57: #{tpu_custom_call.1} parent=11 // pred_check
          %p436 = pneg %p306
        $region58: #{tpu_custom_call.1} parent=11 // pred_check_branch
          %438 = sbr.rel (%p436) target = $region60
        $region59: #{tpu_custom_call.1} parent=11 // pred_region
          _
        $region60: #{tpu_custom_call.1} parent=11 // pred_fallthru
          _
      $region12: #{tpu_custom_call.1} parent=5 // pred_fallthru
        _
      %p439 = scmp.lt.s32.totalorder %s28, 2
      // Predicated region
      $region61: #{tpu_custom_call.1} parent=5 // pred_check
        %p440 = pneg %p439
      $region62: #{tpu_custom_call.1} parent=5 // pred_check_branch
        %442 = sbr.rel (%p440) target = $region64
      $region63: #{tpu_custom_call.1} parent=5 // pred_region
        // Predicated region
        $region65: #{tpu_custom_call.1} parent=63 // pred_check
          %p443 = pneg %p48
        $region66: #{tpu_custom_call.1} parent=63 // pred_check_branch
          %445 = sbr.rel (%p443) target = $region68
        $region67: #{tpu_custom_call.1} parent=63 // pred_region
          %s446 = sand.u32 %s38, 1
          %s447 = scalar_lea.sflag [#allocation3], %s446
          %s448 = sand.u32 %s38, 1
          %s449 = smul.addr %s448, 256
          %s450 = scalar_lea.vmem [#allocation2], %s449
          %s451 = smul.u32 2, %s28
          %s453 = ssub.s32 4096, 4096
          %454 = vsyncadd %s447, %s453
          %s455 = smul.addr %s451, 16
          %s456 = smul.addr %s455, 128
          %s457 = scalar_lea.hbm %s0, %s456
          %s458 = sshll.u32 %s450, 4
          %s459 = int_to_ptr.vmem [resolvable:$true] %s458
          %464 = dma.hbm_to_vmem [thread:$0]  %s457, 4096, %s459, %s447, 128, 128, 8
        $region68: #{tpu_custom_call.1} parent=63 // pred_fallthru
          _
      $region64: #{tpu_custom_call.1} parent=5 // pred_fallthru
        _
      %p465 = scmp.le.s32.totalorder 1, %s28
      %p466 = scmp.lt.s32.totalorder %s28, 3
      %p467 = pnand %p465, %p466
      %p468 = pneg %p467
      // Predicated region
      $region69: #{tpu_custom_call.1} parent=5 // pred_check
        _
      $region70: #{tpu_custom_call.1} parent=5 // pred_check_branch
        %470 = sbr.rel (%p467) target = $region72
      $region71: #{tpu_custom_call.1} parent=5 // pred_region
        %s471 = ssub.s32 %s28, 1
        %s472 = sand.u32 %s41, 1
        %s473 = scalar_lea.sflag [#allocation3], %s472
        %s474 = sand.u32 %s41, 1
        %s475 = smul.addr %s474, 256
        %s476 = scalar_lea.vmem [#allocation2], %s475
        // Predicated region
        $region73: #{tpu_custom_call.1} parent=71 // pred_check
          %p477 = pneg %p54
        $region74: #{tpu_custom_call.1} parent=71 // pred_check_branch
          %479 = sbr.rel (%p477) target = $region76
        $region75: #{tpu_custom_call.1} parent=71 // pred_region
          %480 = dma.done %s473, 4096
        $region76: #{tpu_custom_call.1} parent=71 // pred_fallthru
          _
        // Predicated region
        $region77: #{tpu_custom_call.1} parent=71 // pred_check
          %p481 = pneg %p75
        $region78: #{tpu_custom_call.1} parent=71 // pred_check_branch
          %483 = sbr.rel (%p481) target = $region80
        $region79: #{tpu_custom_call.1} parent=71 // pred_region
          %484 = dma.done [#allocation6], 16
        $region80: #{tpu_custom_call.1} parent=71 // pred_fallthru
          _
        // Predicated region
        $region81: #{tpu_custom_call.1} parent=71 // pred_check
          %p485 = pneg %p96
        $region82: #{tpu_custom_call.1} parent=71 // pred_check_branch
          %487 = sbr.rel (%p485) target = $region84
        $region83: #{tpu_custom_call.1} parent=71 // pred_region
          %488 = dma.done [#allocation6], 16
        $region84: #{tpu_custom_call.1} parent=71 // pred_fallthru
          _
        // Predicated region
        $region85: #{tpu_custom_call.1} parent=71 // pred_check
          %p489 = pneg %p117
        $region86: #{tpu_custom_call.1} parent=71 // pred_check_branch
          %491 = sbr.rel (%p489) target = $region88
        $region87: #{tpu_custom_call.1} parent=71 // pred_region
          %492 = dma.done [#allocation9], 3072
        $region88: #{tpu_custom_call.1} parent=71 // pred_fallthru
          _
        // Predicated region
        $region89: #{tpu_custom_call.1} parent=71 // pred_check
          %p493 = pneg %p159
        $region90: #{tpu_custom_call.1} parent=71 // pred_check_branch
          %495 = sbr.rel (%p493) target = $region92
        $region91: #{tpu_custom_call.1} parent=71 // pred_region
          %496 = dma.done [#allocation9], 1024
        $region92: #{tpu_custom_call.1} parent=71 // pred_fallthru
          _
        // Predicated region
        $region93: #{tpu_custom_call.1} parent=71 // pred_check
          %p497 = pneg %p243
        $region94: #{tpu_custom_call.1} parent=71 // pred_check_branch
          %499 = sbr.rel (%p497) target = $region96
        $region95: #{tpu_custom_call.1} parent=71 // pred_region
          %500 = dma.done [#allocation12], 4096
        $region96: #{tpu_custom_call.1} parent=71 // pred_fallthru
          _
        // Predicated region
        $region97: #{tpu_custom_call.1} parent=71 // pred_check
          %p501 = pneg %p285
        $region98: #{tpu_custom_call.1} parent=71 // pred_check_branch
          %503 = sbr.rel (%p501) target = $region100
        $region99: #{tpu_custom_call.1} parent=71 // pred_region
          %504 = dma.done [#allocation12], 4096
        $region100: #{tpu_custom_call.1} parent=71 // pred_fallthru
          _
        %s505 = sand.u32 %s41, 1
        %s506 = scalar_lea.sflag [#allocation3], %s505
        %s507 = sand.u32 %s41, 1
        %s508 = smul.addr %s507, 256
        %s509 = scalar_lea.vmem [#allocation2], %s508
        %p510 = pneg %p54
        %p511 = pneg %p51
        %p512 = pneg %p75
        %p513 = pneg %p72
        %p514 = pneg %p96
        %p515 = pneg %p93
        %p516 = pneg %p117
        %p517 = pneg %p114
        %p518 = pneg %p138
        %p519 = pneg %p135
        %p520 = pneg %p159
        %p521 = pneg %p156
        %p522 = pneg %p180
        %p523 = pneg %p177
        %p524 = pneg %p201
        %p525 = pneg %p198
        %p526 = pneg %p222
        %p527 = pneg %p219
        %p528 = pneg %p243
        %p529 = pneg %p240
        %p530 = pneg %p264
        %p531 = pneg %p261
        %p532 = pneg %p285
        %p533 = pneg %p282
        %p534 = pneg %p306
        %p535 = pneg %p303
        %p536 = pneg %p332
        %p537 = pneg %p329
        %s538 = sand.u32 %s319, 1
        %s539 = scalar_lea.sflag [#allocation4], %s538
        %s540 = sand.u32 %s319, 1
        %s541 = smul.addr %s540, 256
        %s542 = scalar_lea.vmem [#allocation14], %s541
        %s543 = smul.u32 2, %s33
        %s544 = smul.u32 2, %s33
        %v546 = vld [vmem:[%s476] sm:$0xff]
        %v547 = vld [vmem:[%s476 + $0x8] sm:$0xff]
        %v548 = vld [vmem:[%s476 + $0x10] sm:$0xff]
        %v549 = vld [vmem:[%s476 + $0x18] sm:$0xff]
        %v550 = vld [vmem:[%s476 + $0x20] sm:$0xff]
        %v551 = vld [vmem:[%s476 + $0x28] sm:$0xff]
        %v552 = vld [vmem:[%s476 + $0x30] sm:$0xff]
        %v553 = vld [vmem:[%s476 + $0x38] sm:$0xff]
        %v554 = vld [vmem:[%s476 + $0x40] sm:$0xff]
        %v555 = vld [vmem:[%s476 + $0x48] sm:$0xff]
        %v556 = vld [vmem:[%s476 + $0x50] sm:$0xff]
        %v557 = vld [vmem:[%s476 + $0x58] sm:$0xff]
        %v558 = vld [vmem:[%s476 + $0x60] sm:$0xff]
        %v559 = vld [vmem:[%s476 + $0x68] sm:$0xff]
        %v560 = vld [vmem:[%s476 + $0x70] sm:$0xff]
        %v561 = vld [vmem:[%s476 + $0x78] sm:$0xff]
        %v562 = vld [vmem:[%s476 + $0x80] sm:$0xff]
        %v563 = vld [vmem:[%s476 + $0x88] sm:$0xff]
        %v564 = vld [vmem:[%s476 + $0x90] sm:$0xff]
        %v565 = vld [vmem:[%s476 + $0x98] sm:$0xff]
        %v566 = vld [vmem:[%s476 + $0xa0] sm:$0xff]
        %v567 = vld [vmem:[%s476 + $0xa8] sm:$0xff]
        %v568 = vld [vmem:[%s476 + $0xb0] sm:$0xff]
        %v569 = vld [vmem:[%s476 + $0xb8] sm:$0xff]
        %v570 = vld [vmem:[%s476 + $0xc0] sm:$0xff]
        %v571 = vld [vmem:[%s476 + $0xc8] sm:$0xff]
        %v572 = vld [vmem:[%s476 + $0xd0] sm:$0xff]
        %v573 = vld [vmem:[%s476 + $0xd8] sm:$0xff]
        %v574 = vld [vmem:[%s476 + $0xe0] sm:$0xff]
        %v575 = vld [vmem:[%s476 + $0xe8] sm:$0xff]
        %v576 = vld [vmem:[%s476 + $0xf0] sm:$0xff]
        %v577 = vld [vmem:[%s476 + $0xf8] sm:$0xff]
        %v578 = vlaneseq
        %v579 = vshrl.u32 %v578, 7
        %v580 = vadd.s32 %v579, 8
        %v581 = vadd.s32 %v579, 16
        %v582 = vadd.s32 %v579, 24
        %v583 = vadd.s32 %v579, 32
        %v584 = vadd.s32 %v579, 40
        %v585 = vadd.s32 %v579, 48
        %v586 = vadd.s32 %v579, 56
        %v587 = vadd.s32 %v579, 64
        %v588 = vadd.s32 %v579, 72
        %v589 = vadd.s32 %v579, 80
        %v590 = vadd.s32 %v579, 88
        %v591 = vadd.s32 %v579, 96
        %v592 = vadd.s32 %v579, 104
        %v593 = vadd.s32 %v579, 112
        %v594 = vadd.s32 %v579, 120
        %v595 = vlaneseq
        %v596 = vand.u32 %v595, 127
        %vm597 = vcmp.le.s32.totalorder %v596, %v579
        %vm598 = vcmp.le.s32.totalorder %v596, %v580
        %vm599 = vcmp.le.s32.totalorder %v596, %v581
        %vm600 = vcmp.le.s32.totalorder %v596, %v582
        %vm601 = vcmp.le.s32.totalorder %v596, %v583
        %vm602 = vcmp.le.s32.totalorder %v596, %v584
        %vm603 = vcmp.le.s32.totalorder %v596, %v585
        %vm604 = vcmp.le.s32.totalorder %v596, %v586
        %vm605 = vcmp.le.s32.totalorder %v596, %v587
        %vm606 = vcmp.le.s32.totalorder %v596, %v588
        %vm607 = vcmp.le.s32.totalorder %v596, %v589
        %vm608 = vcmp.le.s32.totalorder %v596, %v590
        %vm609 = vcmp.le.s32.totalorder %v596, %v591
        %vm610 = vcmp.le.s32.totalorder %v596, %v592
        %vm611 = vcmp.le.s32.totalorder %v596, %v593
        %vm612 = vcmp.le.s32.totalorder %v596, %v594
        %v613 = vld [vmem:[#allocation5] sm:$0x1]
        %v614 = vld [vmem:[#allocation7] sm:$0x1]
        %615 = vadd.xlane.f32.xlu0 %v546
        %v616 = vpop.xlane.xlu0 %615
        %617 = vadd.xlane.f32.xlu0 %v547
        %v618 = vpop.xlane.xlu0 %617
        %619 = vadd.xlane.f32.xlu0 %v548
        %v620 = vpop.xlane.xlu0 %619
        %621 = vadd.xlane.f32.xlu0 %v549
        %v622 = vpop.xlane.xlu0 %621
        %623 = vadd.xlane.f32.xlu0 %v550
        %v624 = vpop.xlane.xlu0 %623
        %625 = vadd.xlane.f32.xlu0 %v551
        %v626 = vpop.xlane.xlu0 %625
        %627 = vadd.xlane.f32.xlu0 %v552
        %v628 = vpop.xlane.xlu0 %627
        %629 = vadd.xlane.f32.xlu0 %v553
        %v630 = vpop.xlane.xlu0 %629
        %631 = vadd.xlane.f32.xlu0 %v554
        %v632 = vpop.xlane.xlu0 %631
        %633 = vadd.xlane.f32.xlu0 %v555
        %v634 = vpop.xlane.xlu0 %633
        %635 = vadd.xlane.f32.xlu0 %v556
        %v636 = vpop.xlane.xlu0 %635
        %637 = vadd.xlane.f32.xlu0 %v557
        %v638 = vpop.xlane.xlu0 %637
        %639 = vadd.xlane.f32.xlu0 %v558
        %v640 = vpop.xlane.xlu0 %639
        %641 = vadd.xlane.f32.xlu0 %v559
        %v642 = vpop.xlane.xlu0 %641
        %643 = vadd.xlane.f32.xlu0 %v560
        %v644 = vpop.xlane.xlu0 %643
        %645 = vadd.xlane.f32.xlu0 %v561
        %v646 = vpop.xlane.xlu0 %645
        %647 = vadd.xlane.f32.xlu0 %v562
        %v648 = vpop.xlane.xlu0 %647
        %649 = vadd.xlane.f32.xlu0 %v563
        %v650 = vpop.xlane.xlu0 %649
        %651 = vadd.xlane.f32.xlu0 %v564
        %v652 = vpop.xlane.xlu0 %651
        %653 = vadd.xlane.f32.xlu0 %v565
        %v654 = vpop.xlane.xlu0 %653
        %655 = vadd.xlane.f32.xlu0 %v566
        %v656 = vpop.xlane.xlu0 %655
        %657 = vadd.xlane.f32.xlu0 %v567
        %v658 = vpop.xlane.xlu0 %657
        %659 = vadd.xlane.f32.xlu0 %v568
        %v660 = vpop.xlane.xlu0 %659
        %661 = vadd.xlane.f32.xlu0 %v569
        %v662 = vpop.xlane.xlu0 %661
        %663 = vadd.xlane.f32.xlu0 %v570
        %v664 = vpop.xlane.xlu0 %663
        %665 = vadd.xlane.f32.xlu0 %v571
        %v666 = vpop.xlane.xlu0 %665
        %667 = vadd.xlane.f32.xlu0 %v572
        %v668 = vpop.xlane.xlu0 %667
        %669 = vadd.xlane.f32.xlu0 %v573
        %v670 = vpop.xlane.xlu0 %669
        %671 = vadd.xlane.f32.xlu0 %v574
        %v672 = vpop.xlane.xlu0 %671
        %673 = vadd.xlane.f32.xlu0 %v575
        %v674 = vpop.xlane.xlu0 %673
        %675 = vadd.xlane.f32.xlu0 %v576
        %v676 = vpop.xlane.xlu0 %675
        %677 = vadd.xlane.f32.xlu0 %v577
        %v678 = vpop.xlane.xlu0 %677
        %v679 = vrcp.pop 128.0
        %v680 = vmul.f32 %v616, %v679
        %v681 = vmul.f32 %v618, %v679
        %v682 = vmul.f32 %v620, %v679
        %v683 = vmul.f32 %v622, %v679
        %v684 = vmul.f32 %v624, %v679
        %v685 = vmul.f32 %v626, %v679
        %v686 = vmul.f32 %v628, %v679
        %v687 = vmul.f32 %v630, %v679
        %v688 = vmul.f32 %v632, %v679
        %v689 = vmul.f32 %v634, %v679
        %v690 = vmul.f32 %v636, %v679
        %v691 = vmul.f32 %v638, %v679
        %v692 = vmul.f32 %v640, %v679
        %v693 = vmul.f32 %v642, %v679
        %v694 = vmul.f32 %v644, %v679
        %v695 = vmul.f32 %v646, %v679
        %v696 = vmul.f32 %v648, %v679
        %v697 = vmul.f32 %v650, %v679
        %v698 = vmul.f32 %v652, %v679
        %v699 = vmul.f32 %v654, %v679
        %v700 = vmul.f32 %v656, %v679
        %v701 = vmul.f32 %v658, %v679
        %v702 = vmul.f32 %v660, %v679
        %v703 = vmul.f32 %v662, %v679
        %v704 = vmul.f32 %v664, %v679
        %v705 = vmul.f32 %v666, %v679
        %v706 = vmul.f32 %v668, %v679
        %v707 = vmul.f32 %v670, %v679
        %v708 = vmul.f32 %v672, %v679
        %v709 = vmul.f32 %v674, %v679
        %v710 = vmul.f32 %v676, %v679
        %v711 = vmul.f32 %v678, %v679
        %v712 = vsub.f32 %v546, %v680
        %v713 = vsub.f32 %v547, %v681
        %v714 = vsub.f32 %v548, %v682
        %v715 = vsub.f32 %v549, %v683
        %v716 = vsub.f32 %v550, %v684
        %v717 = vsub.f32 %v551, %v685
        %v718 = vsub.f32 %v552, %v686
        %v719 = vsub.f32 %v553, %v687
        %v720 = vsub.f32 %v554, %v688
        %v721 = vsub.f32 %v555, %v689
        %v722 = vsub.f32 %v556, %v690
        %v723 = vsub.f32 %v557, %v691
        %v724 = vsub.f32 %v558, %v692
        %v725 = vsub.f32 %v559, %v693
        %v726 = vsub.f32 %v560, %v694
        %v727 = vsub.f32 %v561, %v695
        %v728 = vsub.f32 %v562, %v696
        %v729 = vsub.f32 %v563, %v697
        %v730 = vsub.f32 %v564, %v698
        %v731 = vsub.f32 %v565, %v699
        %v732 = vsub.f32 %v566, %v700
        %v733 = vsub.f32 %v567, %v701
        %v734 = vsub.f32 %v568, %v702
        %v735 = vsub.f32 %v569, %v703
        %v736 = vsub.f32 %v570, %v704
        %v737 = vsub.f32 %v571, %v705
        %v738 = vsub.f32 %v572, %v706
        %v739 = vsub.f32 %v573, %v707
        %v740 = vsub.f32 %v574, %v708
        %v741 = vsub.f32 %v575, %v709
        %v742 = vsub.f32 %v576, %v710
        %v743 = vsub.f32 %v577, %v711
        %v744 = vmul.f32 %v712, %v712
        %v745 = vmul.f32 %v713, %v713
        %v746 = vmul.f32 %v714, %v714
        %v747 = vmul.f32 %v715, %v715
        %v748 = vmul.f32 %v716, %v716
        %v749 = vmul.f32 %v717, %v717
        %v750 = vmul.f32 %v718, %v718
        %v751 = vmul.f32 %v719, %v719
        %v752 = vmul.f32 %v720, %v720
        %v753 = vmul.f32 %v721, %v721
        %v754 = vmul.f32 %v722, %v722
        %v755 = vmul.f32 %v723, %v723
        %v756 = vmul.f32 %v724, %v724
        %v757 = vmul.f32 %v725, %v725
        %v758 = vmul.f32 %v726, %v726
        %v759 = vmul.f32 %v727, %v727
        %v760 = vmul.f32 %v728, %v728
        %v761 = vmul.f32 %v729, %v729
        %v762 = vmul.f32 %v730, %v730
        %v763 = vmul.f32 %v731, %v731
        %v764 = vmul.f32 %v732, %v732
        %v765 = vmul.f32 %v733, %v733
        %v766 = vmul.f32 %v734, %v734
        %v767 = vmul.f32 %v735, %v735
        %v768 = vmul.f32 %v736, %v736
        %v769 = vmul.f32 %v737, %v737
        %v770 = vmul.f32 %v738, %v738
        %v771 = vmul.f32 %v739, %v739
        %v772 = vmul.f32 %v740, %v740
        %v773 = vmul.f32 %v741, %v741
        %v774 = vmul.f32 %v742, %v742
        %v775 = vmul.f32 %v743, %v743
        %776 = vadd.xlane.f32.xlu0 %v744
        %v777 = vpop.xlane.xlu0 %776
        %778 = vadd.xlane.f32.xlu0 %v745
        %v779 = vpop.xlane.xlu0 %778
        %780 = vadd.xlane.f32.xlu0 %v746
        %v781 = vpop.xlane.xlu0 %780
        %782 = vadd.xlane.f32.xlu0 %v747
        %v783 = vpop.xlane.xlu0 %782
        %784 = vadd.xlane.f32.xlu0 %v748
        %v785 = vpop.xlane.xlu0 %784
        %786 = vadd.xlane.f32.xlu0 %v749
        %v787 = vpop.xlane.xlu0 %786
        %788 = vadd.xlane.f32.xlu0 %v750
        %v789 = vpop.xlane.xlu0 %788
        %790 = vadd.xlane.f32.xlu0 %v751
        %v791 = vpop.xlane.xlu0 %790
        %792 = vadd.xlane.f32.xlu0 %v752
        %v793 = vpop.xlane.xlu0 %792
        %794 = vadd.xlane.f32.xlu0 %v753
        %v795 = vpop.xlane.xlu0 %794
        %796 = vadd.xlane.f32.xlu0 %v754
        %v797 = vpop.xlane.xlu0 %796
        %798 = vadd.xlane.f32.xlu0 %v755
        %v799 = vpop.xlane.xlu0 %798
        %800 = vadd.xlane.f32.xlu0 %v756
        %v801 = vpop.xlane.xlu0 %800
        %802 = vadd.xlane.f32.xlu0 %v757
        %v803 = vpop.xlane.xlu0 %802
        %804 = vadd.xlane.f32.xlu0 %v758
        %v805 = vpop.xlane.xlu0 %804
        %806 = vadd.xlane.f32.xlu0 %v759
        %v807 = vpop.xlane.xlu0 %806
        %808 = vadd.xlane.f32.xlu0 %v760
        %v809 = vpop.xlane.xlu0 %808
        %810 = vadd.xlane.f32.xlu0 %v761
        %v811 = vpop.xlane.xlu0 %810
        %812 = vadd.xlane.f32.xlu0 %v762
        %v813 = vpop.xlane.xlu0 %812
        %814 = vadd.xlane.f32.xlu0 %v763
        %v815 = vpop.xlane.xlu0 %814
        %816 = vadd.xlane.f32.xlu0 %v764
        %v817 = vpop.xlane.xlu0 %816
        %818 = vadd.xlane.f32.xlu0 %v765
        %v819 = vpop.xlane.xlu0 %818
        %820 = vadd.xlane.f32.xlu0 %v766
        %v821 = vpop.xlane.xlu0 %820
        %822 = vadd.xlane.f32.xlu0 %v767
        %v823 = vpop.xlane.xlu0 %822
        %824 = vadd.xlane.f32.xlu0 %v768
        %v825 = vpop.xlane.xlu0 %824
        %826 = vadd.xlane.f32.xlu0 %v769
        %v827 = vpop.xlane.xlu0 %826
        %828 = vadd.xlane.f32.xlu0 %v770
        %v829 = vpop.xlane.xlu0 %828
        %830 = vadd.xlane.f32.xlu0 %v771
        %v831 = vpop.xlane.xlu0 %830
        %832 = vadd.xlane.f32.xlu0 %v772
        %v833 = vpop.xlane.xlu0 %832
        %834 = vadd.xlane.f32.xlu0 %v773
        %v835 = vpop.xlane.xlu0 %834
        %836 = vadd.xlane.f32.xlu0 %v774
        %v837 = vpop.xlane.xlu0 %836
        %838 = vadd.xlane.f32.xlu0 %v775
        %v839 = vpop.xlane.xlu0 %838
        %v840 = vmul.f32 %v777, %v679
        %v841 = vmul.f32 %v779, %v679
        %v842 = vmul.f32 %v781, %v679
        %v843 = vmul.f32 %v783, %v679
        %v844 = vmul.f32 %v785, %v679
        %v845 = vmul.f32 %v787, %v679
        %v846 = vmul.f32 %v789, %v679
        %v847 = vmul.f32 %v791, %v679
        %v848 = vmul.f32 %v793, %v679
        %v849 = vmul.f32 %v795, %v679
        %v850 = vmul.f32 %v797, %v679
        %v851 = vmul.f32 %v799, %v679
        %v852 = vmul.f32 %v801, %v679
        %v853 = vmul.f32 %v803, %v679
        %v854 = vmul.f32 %v805, %v679
        %v855 = vmul.f32 %v807, %v679
        %v856 = vmul.f32 %v809, %v679
        %v857 = vmul.f32 %v811, %v679
        %v858 = vmul.f32 %v813, %v679
        %v859 = vmul.f32 %v815, %v679
        %v860 = vmul.f32 %v817, %v679
        %v861 = vmul.f32 %v819, %v679
        %v862 = vmul.f32 %v821, %v679
        %v863 = vmul.f32 %v823, %v679
        %v864 = vmul.f32 %v825, %v679
        %v865 = vmul.f32 %v827, %v679
        %v866 = vmul.f32 %v829, %v679
        %v867 = vmul.f32 %v831, %v679
        %v868 = vmul.f32 %v833, %v679
        %v869 = vmul.f32 %v835, %v679
        %v870 = vmul.f32 %v837, %v679
        %v871 = vmul.f32 %v839, %v679
        %v872 = vadd.f32 %v840, 1e-05
        %v873 = vadd.f32 %v841, 1e-05
        %v874 = vadd.f32 %v842, 1e-05
        %v875 = vadd.f32 %v843, 1e-05
        %v876 = vadd.f32 %v844, 1e-05
        %v877 = vadd.f32 %v845, 1e-05
        %v878 = vadd.f32 %v846, 1e-05
        %v879 = vadd.f32 %v847, 1e-05
        %v880 = vadd.f32 %v848, 1e-05
        %v881 = vadd.f32 %v849, 1e-05
        %v882 = vadd.f32 %v850, 1e-05
        %v883 = vadd.f32 %v851, 1e-05
        %v884 = vadd.f32 %v852, 1e-05
        %v885 = vadd.f32 %v853, 1e-05
        %v886 = vadd.f32 %v854, 1e-05
        %v887 = vadd.f32 %v855, 1e-05
        %v888 = vadd.f32 %v856, 1e-05
        %v889 = vadd.f32 %v857, 1e-05
        %v890 = vadd.f32 %v858, 1e-05
        %v891 = vadd.f32 %v859, 1e-05
        %v892 = vadd.f32 %v860, 1e-05
        %v893 = vadd.f32 %v861, 1e-05
        %v894 = vadd.f32 %v862, 1e-05
        %v895 = vadd.f32 %v863, 1e-05
        %v896 = vadd.f32 %v864, 1e-05
        %v897 = vadd.f32 %v865, 1e-05
        %v898 = vadd.f32 %v866, 1e-05
        %v899 = vadd.f32 %v867, 1e-05
        %v900 = vadd.f32 %v868, 1e-05
        %v901 = vadd.f32 %v869, 1e-05
        %v902 = vadd.f32 %v870, 1e-05
        %v903 = vadd.f32 %v871, 1e-05
        %v904 = vrsqrt.pop %v872
        %v905 = vrsqrt.pop %v873
        %v906 = vrsqrt.pop %v874
        %v907 = vrsqrt.pop %v875
        %v908 = vrsqrt.pop %v876
        %v909 = vrsqrt.pop %v877
        %v910 = vrsqrt.pop %v878
        %v911 = vrsqrt.pop %v879
        %v912 = vrsqrt.pop %v880
        %v913 = vrsqrt.pop %v881
        %v914 = vrsqrt.pop %v882
        %v915 = vrsqrt.pop %v883
        %v916 = vrsqrt.pop %v884
        %v917 = vrsqrt.pop %v885
        %v918 = vrsqrt.pop %v886
        %v919 = vrsqrt.pop %v887
        %v920 = vrsqrt.pop %v888
        %v921 = vrsqrt.pop %v889
        %v922 = vrsqrt.pop %v890
        %v923 = vrsqrt.pop %v891
        %v924 = vrsqrt.pop %v892
        %v925 = vrsqrt.pop %v893
        %v926 = vrsqrt.pop %v894
        %v927 = vrsqrt.pop %v895
        %v928 = vrsqrt.pop %v896
        %v929 = vrsqrt.pop %v897
        %v930 = vrsqrt.pop %v898
        %v931 = vrsqrt.pop %v899
        %v932 = vrsqrt.pop %v900
        %v933 = vrsqrt.pop %v901
        %v934 = vrsqrt.pop %v902
        %v935 = vrsqrt.pop %v903
        %v936 = vmul.f32 %v712, %v904
        %v937 = vmul.f32 %v713, %v905
        %v938 = vmul.f32 %v714, %v906
        %v939 = vmul.f32 %v715, %v907
        %v940 = vmul.f32 %v716, %v908
        %v941 = vmul.f32 %v717, %v909
        %v942 = vmul.f32 %v718, %v910
        %v943 = vmul.f32 %v719, %v911
        %v944 = vmul.f32 %v720, %v912
        %v945 = vmul.f32 %v721, %v913
        %v946 = vmul.f32 %v722, %v914
        %v947 = vmul.f32 %v723, %v915
        %v948 = vmul.f32 %v724, %v916
        %v949 = vmul.f32 %v725, %v917
        %v950 = vmul.f32 %v726, %v918
        %v951 = vmul.f32 %v727, %v919
        %v952 = vmul.f32 %v728, %v920
        %v953 = vmul.f32 %v729, %v921
        %v954 = vmul.f32 %v730, %v922
        %v955 = vmul.f32 %v731, %v923
        %v956 = vmul.f32 %v732, %v924
        %v957 = vmul.f32 %v733, %v925
        %v958 = vmul.f32 %v734, %v926
        %v959 = vmul.f32 %v735, %v927
        %v960 = vmul.f32 %v736, %v928
        %v961 = vmul.f32 %v737, %v929
        %v962 = vmul.f32 %v738, %v930
        %v963 = vmul.f32 %v739, %v931
        %v964 = vmul.f32 %v740, %v932
        %v965 = vmul.f32 %v741, %v933
        %v966 = vmul.f32 %v742, %v934
        %v967 = vmul.f32 %v743, %v935
        %v969 = vlaneseq
        %v970 = vshrl.u32 %v969, 7
        %v971 = vsub.s32 0, %v970
        %v972 = vrot.slane %v613, %v971
        %v974 = vmul.f32 %v936, %v972
        %v975 = vmul.f32 %v937, %v972
        %v976 = vmul.f32 %v938, %v972
        %v977 = vmul.f32 %v939, %v972
        %v978 = vmul.f32 %v940, %v972
        %v979 = vmul.f32 %v941, %v972
        %v980 = vmul.f32 %v942, %v972
        %v981 = vmul.f32 %v943, %v972
        %v982 = vmul.f32 %v944, %v972
        %v983 = vmul.f32 %v945, %v972
        %v984 = vmul.f32 %v946, %v972
        %v985 = vmul.f32 %v947, %v972
        %v986 = vmul.f32 %v948, %v972
        %v987 = vmul.f32 %v949, %v972
        %v988 = vmul.f32 %v950, %v972
        %v989 = vmul.f32 %v951, %v972
        %v990 = vmul.f32 %v952, %v972
        %v991 = vmul.f32 %v953, %v972
        %v992 = vmul.f32 %v954, %v972
        %v993 = vmul.f32 %v955, %v972
        %v994 = vmul.f32 %v956, %v972
        %v995 = vmul.f32 %v957, %v972
        %v996 = vmul.f32 %v958, %v972
        %v997 = vmul.f32 %v959, %v972
        %v998 = vmul.f32 %v960, %v972
        %v999 = vmul.f32 %v961, %v972
        %v1000 = vmul.f32 %v962, %v972
        %v1001 = vmul.f32 %v963, %v972
        %v1002 = vmul.f32 %v964, %v972
        %v1003 = vmul.f32 %v965, %v972
        %v1004 = vmul.f32 %v966, %v972
        %v1005 = vmul.f32 %v967, %v972
        %v1007 = vlaneseq
        %v1008 = vshrl.u32 %v1007, 7
        %v1009 = vsub.s32 0, %v1008
        %v1010 = vrot.slane %v614, %v1009
        %v1012 = vadd.f32 %v974, %v1010
        %v1013 = vadd.f32 %v975, %v1010
        %v1014 = vadd.f32 %v976, %v1010
        %v1015 = vadd.f32 %v977, %v1010
        %v1016 = vadd.f32 %v978, %v1010
        %v1017 = vadd.f32 %v979, %v1010
        %v1018 = vadd.f32 %v980, %v1010
        %v1019 = vadd.f32 %v981, %v1010
        %v1020 = vadd.f32 %v982, %v1010
        %v1021 = vadd.f32 %v983, %v1010
        %v1022 = vadd.f32 %v984, %v1010
        %v1023 = vadd.f32 %v985, %v1010
        %v1024 = vadd.f32 %v986, %v1010
        %v1025 = vadd.f32 %v987, %v1010
        %v1026 = vadd.f32 %v988, %v1010
        %v1027 = vadd.f32 %v989, %v1010
        %v1028 = vadd.f32 %v990, %v1010
        %v1029 = vadd.f32 %v991, %v1010
        %v1030 = vadd.f32 %v992, %v1010
        %v1031 = vadd.f32 %v993, %v1010
        %v1032 = vadd.f32 %v994, %v1010
        %v1033 = vadd.f32 %v995, %v1010
        %v1034 = vadd.f32 %v996, %v1010
        %v1035 = vadd.f32 %v997, %v1010
        %v1036 = vadd.f32 %v998, %v1010
        %v1037 = vadd.f32 %v999, %v1010
        %v1038 = vadd.f32 %v1000, %v1010
        %v1039 = vadd.f32 %v1001, %v1010
        %v1040 = vadd.f32 %v1002, %v1010
        %v1041 = vadd.f32 %v1003, %v1010
        %v1042 = vadd.f32 %v1004, %v1010
        %v1043 = vadd.f32 %v1005, %v1010
        %v1044 = vpack.c.bf16 %v1013, %v1012
        %v1045 = vpack.c.bf16 %v1015, %v1014
        %v1046 = vpack.c.bf16 %v1017, %v1016
        %v1047 = vpack.c.bf16 %v1019, %v1018
        %v1048 = vpack.c.bf16 %v1021, %v1020
        %v1049 = vpack.c.bf16 %v1023, %v1022
        %v1050 = vpack.c.bf16 %v1025, %v1024
        %v1051 = vpack.c.bf16 %v1027, %v1026
        %v1052 = vpack.c.bf16 %v1029, %v1028
        %v1053 = vpack.c.bf16 %v1031, %v1030
        %v1054 = vpack.c.bf16 %v1033, %v1032
        %v1055 = vpack.c.bf16 %v1035, %v1034
        %v1056 = vpack.c.bf16 %v1037, %v1036
        %v1057 = vpack.c.bf16 %v1039, %v1038
        %v1058 = vpack.c.bf16 %v1041, %v1040
        %v1059 = vpack.c.bf16 %v1043, %v1042
        %v1060 = vld [vmem:[#allocation8] sm:$0xff]
        %v1061 = vld [vmem:[#allocation8 + $0x8] sm:$0xf]
        %v1062 = vld [vmem:[#allocation8 + $0xc] sm:$0xff]
        %v1063 = vld [vmem:[#allocation8 + $0x14] sm:$0xf]
        %v1064 = vld [vmem:[#allocation8 + $0x18] sm:$0xff]
        %v1065 = vld [vmem:[#allocation8 + $0x20] sm:$0xf]
        %v1066 = vld [vmem:[#allocation8 + $0x24] sm:$0xff]
        %v1067 = vld [vmem:[#allocation8 + $0x2c] sm:$0xf]
        %v1068 = vld [vmem:[#allocation8 + $0x30] sm:$0xff]
        %v1069 = vld [vmem:[#allocation8 + $0x38] sm:$0xf]
        %v1070 = vld [vmem:[#allocation8 + $0x3c] sm:$0xff]
        %v1071 = vld [vmem:[#allocation8 + $0x44] sm:$0xf]
        %v1072 = vld [vmem:[#allocation8 + $0x48] sm:$0xff]
        %v1073 = vld [vmem:[#allocation8 + $0x50] sm:$0xf]
        %v1074 = vld [vmem:[#allocation8 + $0x54] sm:$0xff]
        %v1075 = vld [vmem:[#allocation8 + $0x5c] sm:$0xf]
        %v1076 = vld [vmem:[#allocation8 + $0x60] sm:$0xff]
        %v1077 = vld [vmem:[#allocation8 + $0x68] sm:$0xf]
        %v1078 = vld [vmem:[#allocation8 + $0x6c] sm:$0xff]
        %v1079 = vld [vmem:[#allocation8 + $0x74] sm:$0xf]
        %v1080 = vld [vmem:[#allocation8 + $0x78] sm:$0xff]
        %v1081 = vld [vmem:[#allocation8 + $0x80] sm:$0xf]
        %v1082 = vld [vmem:[#allocation8 + $0x84] sm:$0xff]
        %v1083 = vld [vmem:[#allocation8 + $0x8c] sm:$0xf]
        %v1084 = vld [vmem:[#allocation8 + $0x90] sm:$0xff]
        %v1085 = vld [vmem:[#allocation8 + $0x98] sm:$0xf]
        %v1086 = vld [vmem:[#allocation8 + $0x9c] sm:$0xff]
        %v1087 = vld [vmem:[#allocation8 + $0xa4] sm:$0xf]
        %v1088 = vld [vmem:[#allocation8 + $0xa8] sm:$0xff]
        %v1089 = vld [vmem:[#allocation8 + $0xb0] sm:$0xf]
        %v1090 = vld [vmem:[#allocation8 + $0xb4] sm:$0xff]
        %v1091 = vld [vmem:[#allocation8 + $0xbc] sm:$0xf]
        %v1092 = vld [vmem:[%s4] sm:$0x7]
        %v1094 = vlaneseq
        %v1095 = vshrl.u32 %v1094, 7
        %v1096 = vsub.s32 0, %v1095
        %v1097 = vrot.slane %v1092, %v1096
        %v1098 = vlaneseq
        %v1099 = vshrl.u32 %v1098, 7
        %v1100 = vsub.s32 1, %v1099
        %v1101 = vrot.slane %v1092, %v1100
        %v1102 = vlaneseq
        %v1103 = vshrl.u32 %v1102, 7
        %v1104 = vsub.s32 2, %v1103
        %v1105 = vrot.slane %v1092, %v1104
        %v1141 = vunpack.c.l.b16 %v1060
        %v1142 = vunpack.c.h.b16 %v1060
        %v1143 = vunpack.c.l.b16 %v1061
        %v1144 = vunpack.c.l.b16 %v1062
        %v1145 = vunpack.c.h.b16 %v1062
        %v1146 = vunpack.c.l.b16 %v1063
        %v1147 = vunpack.c.l.b16 %v1064
        %v1148 = vunpack.c.h.b16 %v1064
        %v1149 = vunpack.c.l.b16 %v1065
        %v1150 = vunpack.c.l.b16 %v1066
        %v1151 = vunpack.c.h.b16 %v1066
        %v1152 = vunpack.c.l.b16 %v1067
        %v1153 = vunpack.c.l.b16 %v1068
        %v1154 = vunpack.c.h.b16 %v1068
        %v1155 = vunpack.c.l.b16 %v1069
        %v1156 = vunpack.c.l.b16 %v1070
        %v1157 = vunpack.c.h.b16 %v1070
        %v1158 = vunpack.c.l.b16 %v1071
        %v1159 = vunpack.c.l.b16 %v1072
        %v1160 = vunpack.c.h.b16 %v1072
        %v1161 = vunpack.c.l.b16 %v1073
        %v1162 = vunpack.c.l.b16 %v1074
        %v1163 = vunpack.c.h.b16 %v1074
        %v1164 = vunpack.c.l.b16 %v1075
        %v1165 = vunpack.c.l.b16 %v1076
        %v1166 = vunpack.c.h.b16 %v1076
        %v1167 = vunpack.c.l.b16 %v1077
        %v1168 = vunpack.c.l.b16 %v1078
        %v1169 = vunpack.c.h.b16 %v1078
        %v1170 = vunpack.c.l.b16 %v1079
        %v1171 = vunpack.c.l.b16 %v1080
        %v1172 = vunpack.c.h.b16 %v1080
        %v1173 = vunpack.c.l.b16 %v1081
        %v1174 = vunpack.c.l.b16 %v1082
        %v1175 = vunpack.c.h.b16 %v1082
        %v1176 = vunpack.c.l.b16 %v1083
        %v1177 = vunpack.c.l.b16 %v1084
        %v1178 = vunpack.c.h.b16 %v1084
        %v1179 = vunpack.c.l.b16 %v1085
        %v1180 = vunpack.c.l.b16 %v1086
        %v1181 = vunpack.c.h.b16 %v1086
        %v1182 = vunpack.c.l.b16 %v1087
        %v1183 = vunpack.c.l.b16 %v1088
        %v1184 = vunpack.c.h.b16 %v1088
        %v1185 = vunpack.c.l.b16 %v1089
        %v1186 = vunpack.c.l.b16 %v1090
        %v1187 = vunpack.c.h.b16 %v1090
        %v1188 = vunpack.c.l.b16 %v1091
        %v1189 = vpack.c.b16 %v1144, %v1141
        %v1190 = vpack.c.b16 %v1145, %v1142
        %v1191 = vpack.c.b16 %v1146, %v1143
        %v1192 = vpack.c.b16 %v1150, %v1147
        %v1193 = vpack.c.b16 %v1151, %v1148
        %v1194 = vpack.c.b16 %v1152, %v1149
        %v1195 = vpack.c.b16 %v1156, %v1153
        %v1196 = vpack.c.b16 %v1157, %v1154
        %v1197 = vpack.c.b16 %v1158, %v1155
        %v1198 = vpack.c.b16 %v1162, %v1159
        %v1199 = vpack.c.b16 %v1163, %v1160
        %v1200 = vpack.c.b16 %v1164, %v1161
        %v1201 = vpack.c.b16 %v1168, %v1165
        %v1202 = vpack.c.b16 %v1169, %v1166
        %v1203 = vpack.c.b16 %v1170, %v1167
        %v1204 = vpack.c.b16 %v1174, %v1171
        %v1205 = vpack.c.b16 %v1175, %v1172
        %v1206 = vpack.c.b16 %v1176, %v1173
        %v1207 = vpack.c.b16 %v1180, %v1177
        %v1208 = vpack.c.b16 %v1181, %v1178
        %v1209 = vpack.c.b16 %v1182, %v1179
        %v1210 = vpack.c.b16 %v1186, %v1183
        %v1211 = vpack.c.b16 %v1187, %v1184
        %v1212 = vpack.c.b16 %v1188, %v1185
        %1237 = vmatprep.subr.bf16.mxu0 %v1190
        %1238 = vmatpush1.bf16.msra.mxu0 %v1189
        %1239 = vmatprep.subr.bf16.mxu0 %v1193
        %1240 = vmatpush1.bf16.msra.mxu0 %v1192
        %1241 = vmatprep.subr.bf16.mxu0 %v1196
        %1242 = vmatpush1.bf16.msra.mxu0 %v1195
        %1243 = vmatprep.subr.bf16.mxu0 %v1199
        %1244 = vmatpush1.bf16.msra.mxu0 %v1198
        %1245 = vmatprep.subr.bf16.mxu0 %v1202
        %1246 = vmatpush1.bf16.msra.mxu0 %v1201
        %1247 = vmatprep.subr.bf16.mxu0 %v1205
        %1248 = vmatpush1.bf16.msra.mxu0 %v1204
        %1249 = vmatprep.subr.bf16.mxu0 %v1208
        %1250 = vmatpush1.bf16.msra.mxu0 %v1207
        %1251 = vmatprep.subr.bf16.mxu0 %v1211
        %1252 = vmatpush1.bf16.msra.mxu0 %v1210
        %1253 = vmatprep.subr.bf16.mxu0 0
        %1254 = vmatpush1.bf16.msra.mxu0 0
        %1255 = vmatprep.subr.bf16.mxu0 0
        %1256 = vmatpush1.bf16.msra.mxu0 0
        %1257 = vmatprep.subr.bf16.mxu0 0
        %1258 = vmatpush1.bf16.msra.mxu0 0
        %1259 = vmatprep.subr.bf16.mxu0 0
        %1260 = vmatpush1.bf16.msra.mxu0 0
        %1261 = vmatprep.subr.bf16.mxu0 0
        %1262 = vmatpush1.bf16.msra.mxu0 0
        %1263 = vmatprep.subr.bf16.mxu0 0
        %1264 = vmatpush1.bf16.msra.mxu0 0
        %1265 = vmatprep.subr.bf16.mxu0 0
        %1266 = vmatpush1.bf16.msra.mxu0 0
        %1267 = vmatprep.subr.bf16.mxu0 0
        %1268 = vmatpush1.bf16.msra.mxu0 0
        %1269 = vmatprep.mubr.bf16.mxu0 0
        %1270 = vmatmul.mubr.bf16.gmra.mrb[0].mxu0 %v1044
        %v1271 = vpop.f32.mrb[0].mxu0
        %v1272 = vadd.f32 %v1097, %v1271
        %v1273 = vpop.f32.mrb[0].mxu0
        %v1274 = vadd.f32 %v1101, %v1273
        %v1275 = vpop.f32.mrb[0].mxu0
        %v1276 = vadd.f32 %v1097, %v1275
        %v1277 = vpop.f32.mrb[0].mxu0
        %v1278 = vadd.f32 %v1101, %v1277
        %1279 = vmatprep.mubr.bf16.mxu0 0
        %1280 = vmatmul.mubr.bf16.gmra.mrb[0].mxu0 %v1045
        %v1281 = vpop.f32.mrb[0].mxu0
        %v1282 = vadd.f32 %v1097, %v1281
        %v1283 = vpop.f32.mrb[0].mxu0
        %v1284 = vadd.f32 %v1101, %v1283
        %v1285 = vpop.f32.mrb[0].mxu0
        %v1286 = vadd.f32 %v1097, %v1285
        %v1287 = vpop.f32.mrb[0].mxu0
        %v1288 = vadd.f32 %v1101, %v1287
        %1289 = vmatprep.mubr.bf16.mxu0 0
        %1290 = vmatmul.mubr.bf16.gmra.mrb[0].mxu0 %v1046
        %v1291 = vpop.f32.mrb[0].mxu0
        %v1292 = vadd.f32 %v1097, %v1291
        %v1293 = vpop.f32.mrb[0].mxu0
        %v1294 = vadd.f32 %v1101, %v1293
        %v1295 = vpop.f32.mrb[0].mxu0
        %v1296 = vadd.f32 %v1097, %v1295
        %v1297 = vpop.f32.mrb[0].mxu0
        %v1298 = vadd.f32 %v1101, %v1297
        %1299 = vmatprep.mubr.bf16.mxu0 0
        %1300 = vmatmul.mubr.bf16.gmra.mrb[0].mxu0 %v1047
        %v1301 = vpop.f32.mrb[0].mxu0
        %v1302 = vadd.f32 %v1097, %v1301
        %v1303 = vpop.f32.mrb[0].mxu0
        %v1304 = vadd.f32 %v1101, %v1303
        %v1305 = vpop.f32.mrb[0].mxu0
        %v1306 = vadd.f32 %v1097, %v1305
        %v1307 = vpop.f32.mrb[0].mxu0
        %v1308 = vadd.f32 %v1101, %v1307
        %1309 = vmatprep.mubr.bf16.mxu0 0
        %1310 = vmatmul.mubr.bf16.gmra.mrb[0].mxu0 %v1048
        %v1311 = vpop.f32.mrb[0].mxu0
        %v1312 = vadd.f32 %v1097, %v1311
        %v1313 = vpop.f32.mrb[0].mxu0
        %v1314 = vadd.f32 %v1101, %v1313
        %v1315 = vpop.f32.mrb[0].mxu0
        %v1316 = vadd.f32 %v1097, %v1315
        %v1317 = vpop.f32.mrb[0].mxu0
        %v1318 = vadd.f32 %v1101, %v1317
        %1319 = vmatprep.mubr.bf16.mxu0 0
        %1320 = vmatmul.mubr.bf16.gmra.mrb[0].mxu0 %v1049
        %v1321 = vpop.f32.mrb[0].mxu0
        %v1322 = vadd.f32 %v1097, %v1321
        %v1323 = vpop.f32.mrb[0].mxu0
        %v1324 = vadd.f32 %v1101, %v1323
        %v1325 = vpop.f32.mrb[0].mxu0
        %v1326 = vadd.f32 %v1097, %v1325
        %v1327 = vpop.f32.mrb[0].mxu0
        %v1328 = vadd.f32 %v1101, %v1327
        %1329 = vmatprep.mubr.bf16.mxu0 0
        %1330 = vmatmul.mubr.bf16.gmra.mrb[0].mxu0 %v1050
        %v1331 = vpop.f32.mrb[0].mxu0
        %v1332 = vadd.f32 %v1097, %v1331
        %v1333 = vpop.f32.mrb[0].mxu0
        %v1334 = vadd.f32 %v1101, %v1333
        %v1335 = vpop.f32.mrb[0].mxu0
        %v1336 = vadd.f32 %v1097, %v1335
        %v1337 = vpop.f32.mrb[0].mxu0
        %v1338 = vadd.f32 %v1101, %v1337
        %1339 = vmatprep.mubr.bf16.mxu0 0
        %1340 = vmatmul.mubr.bf16.gmra.mrb[0].mxu0 %v1051
        %v1341 = vpop.f32.mrb[0].mxu0
        %v1342 = vadd.f32 %v1097, %v1341
        %v1343 = vpop.f32.mrb[0].mxu0
        %v1344 = vadd.f32 %v1101, %v1343
        %v1345 = vpop.f32.mrb[0].mxu0
        %v1346 = vadd.f32 %v1097, %v1345
        %v1347 = vpop.f32.mrb[0].mxu0
        %v1348 = vadd.f32 %v1101, %v1347
        %1349 = vmatprep.mubr.bf16.mxu0 0
        %1350 = vmatmul.mubr.bf16.gmra.mrb[0].mxu0 %v1052
        %v1351 = vpop.f32.mrb[0].mxu0
        %v1352 = vadd.f32 %v1097, %v1351
        %v1353 = vpop.f32.mrb[0].mxu0
        %v1354 = vadd.f32 %v1101, %v1353
        %v1355 = vpop.f32.mrb[0].mxu0
        %v1356 = vadd.f32 %v1097, %v1355
        %v1357 = vpop.f32.mrb[0].mxu0
        %v1358 = vadd.f32 %v1101, %v1357
        %1359 = vmatprep.mubr.bf16.mxu0 0
        %1360 = vmatmul.mubr.bf16.gmra.mrb[0].mxu0 %v1053
        %v1361 = vpop.f32.mrb[0].mxu0
        %v1362 = vadd.f32 %v1097, %v1361
        %v1363 = vpop.f32.mrb[0].mxu0
        %v1364 = vadd.f32 %v1101, %v1363
        %v1365 = vpop.f32.mrb[0].mxu0
        %v1366 = vadd.f32 %v1097, %v1365
        %v1367 = vpop.f32.mrb[0].mxu0
        %v1368 = vadd.f32 %v1101, %v1367
        %1369 = vmatprep.mubr.bf16.mxu0 0
        %1370 = vmatmul.mubr.bf16.gmra.mrb[0].mxu0 %v1054
        %v1371 = vpop.f32.mrb[0].mxu0
        %v1372 = vadd.f32 %v1097, %v1371
        %v1373 = vpop.f32.mrb[0].mxu0
        %v1374 = vadd.f32 %v1101, %v1373
        %v1375 = vpop.f32.mrb[0].mxu0
        %v1376 = vadd.f32 %v1097, %v1375
        %v1377 = vpop.f32.mrb[0].mxu0
        %v1378 = vadd.f32 %v1101, %v1377
        %1379 = vmatprep.mubr.bf16.mxu0 0
        %1380 = vmatmul.mubr.bf16.gmra.mrb[0].mxu0 %v1055
        %v1381 = vpop.f32.mrb[0].mxu0
        %v1382 = vadd.f32 %v1097, %v1381
        %v1383 = vpop.f32.mrb[0].mxu0
        %v1384 = vadd.f32 %v1101, %v1383
        %v1385 = vpop.f32.mrb[0].mxu0
        %v1386 = vadd.f32 %v1097, %v1385
        %v1387 = vpop.f32.mrb[0].mxu0
        %v1388 = vadd.f32 %v1101, %v1387
        %1389 = vmatprep.mubr.bf16.mxu0 0
        %1390 = vmatmul.mubr.bf16.gmra.mrb[0].mxu0 %v1056
        %v1391 = vpop.f32.mrb[0].mxu0
        %v1392 = vadd.f32 %v1097, %v1391
        %v1393 = vpop.f32.mrb[0].mxu0
        %v1394 = vadd.f32 %v1101, %v1393
        %v1395 = vpop.f32.mrb[0].mxu0
        %v1396 = vadd.f32 %v1097, %v1395
        %v1397 = vpop.f32.mrb[0].mxu0
        %v1398 = vadd.f32 %v1101, %v1397
        %1399 = vmatprep.mubr.bf16.mxu0 0
        %1400 = vmatmul.mubr.bf16.gmra.mrb[0].mxu0 %v1057
        %v1401 = vpop.f32.mrb[0].mxu0
        %v1402 = vadd.f32 %v1097, %v1401
        %v1403 = vpop.f32.mrb[0].mxu0
        %v1404 = vadd.f32 %v1101, %v1403
        %v1405 = vpop.f32.mrb[0].mxu0
        %v1406 = vadd.f32 %v1097, %v1405
        %v1407 = vpop.f32.mrb[0].mxu0
        %v1408 = vadd.f32 %v1101, %v1407
        %1409 = vmatprep.mubr.bf16.mxu0 0
        %1410 = vmatmul.mubr.bf16.gmra.mrb[0].mxu0 %v1058
        %v1411 = vpop.f32.mrb[0].mxu0
        %v1412 = vadd.f32 %v1097, %v1411
        %v1413 = vpop.f32.mrb[0].mxu0
        %v1414 = vadd.f32 %v1101, %v1413
        %v1415 = vpop.f32.mrb[0].mxu0
        %v1416 = vadd.f32 %v1097, %v1415
        %v1417 = vpop.f32.mrb[0].mxu0
        %v1418 = vadd.f32 %v1101, %v1417
        %1419 = vmatprep.mubr.bf16.mxu0 0
        %1420 = vmatmul.mubr.bf16.gmra.mrb[0].mxu0 %v1059
        %v1421 = vpop.f32.mrb[0].mxu0
        %v1422 = vadd.f32 %v1097, %v1421
        %v1423 = vpop.f32.mrb[0].mxu0
        %v1424 = vadd.f32 %v1101, %v1423
        %v1425 = vpop.f32.mrb[0].mxu0
        %v1426 = vadd.f32 %v1097, %v1425
        %v1427 = vpop.f32.mrb[0].mxu0
        %v1428 = vadd.f32 %v1101, %v1427
        %1429 = vdwg.mxu0
        %1430 = vmatprep.subr.bf16.mxu0 0
        %1431 = vmatpush1.bf16.msra.mxu0 %v1191
        %1432 = vmatprep.subr.bf16.mxu0 0
        %1433 = vmatpush1.bf16.msra.mxu0 %v1194
        %1434 = vmatprep.subr.bf16.mxu0 0
        %1435 = vmatpush1.bf16.msra.mxu0 %v1197
        %1436 = vmatprep.subr.bf16.mxu0 0
        %1437 = vmatpush1.bf16.msra.mxu0 %v1200
        %1438 = vmatprep.subr.bf16.mxu0 0
        %1439 = vmatpush1.bf16.msra.mxu0 %v1203
        %1440 = vmatprep.subr.bf16.mxu0 0
        %1441 = vmatpush1.bf16.msra.mxu0 %v1206
        %1442 = vmatprep.subr.bf16.mxu0 0
        %1443 = vmatpush1.bf16.msra.mxu0 %v1209
        %1444 = vmatprep.subr.bf16.mxu0 0
        %1445 = vmatpush1.bf16.msra.mxu0 %v1212
        %1446 = vmatprep.subr.bf16.mxu0 0
        %1447 = vmatpush1.bf16.msra.mxu0 0
        %1448 = vmatprep.subr.bf16.mxu0 0
        %1449 = vmatpush1.bf16.msra.mxu0 0
        %1450 = vmatprep.subr.bf16.mxu0 0
        %1451 = vmatpush1.bf16.msra.mxu0 0
        %1452 = vmatprep.subr.bf16.mxu0 0
        %1453 = vmatpush1.bf16.msra.mxu0 0
        %1454 = vmatprep.subr.bf16.mxu0 0
        %1455 = vmatpush1.bf16.msra.mxu0 0
        %1456 = vmatprep.subr.bf16.mxu0 0
        %1457 = vmatpush1.bf16.msra.mxu0 0
        %1458 = vmatprep.subr.bf16.mxu0 0
        %1459 = vmatpush1.bf16.msra.mxu0 0
        %1460 = vmatprep.subr.bf16.mxu0 0
        %1461 = vmatpush1.bf16.msra.mxu0 0
        %1462 = vmatprep.mubr.bf16.mxu0 0
        %1463 = vmatmul.mubr.bf16.gmra.mrb[0].mxu0 %v1044
        %v1464 = vpop.f32.mrb[0].mxu0
        %v1465 = vadd.f32 %v1105, %v1464
        %v1466 = vpop.f32.mrb[0].mxu0
        %v1467 = vpop.f32.mrb[0].mxu0
        %v1468 = vadd.f32 %v1105, %v1467
        %v1469 = vpop.f32.mrb[0].mxu0
        %1470 = vmatprep.mubr.bf16.mxu0 0
        %1471 = vmatmul.mubr.bf16.gmra.mrb[0].mxu0 %v1045
        %v1472 = vpop.f32.mrb[0].mxu0
        %v1473 = vadd.f32 %v1105, %v1472
        %v1474 = vpop.f32.mrb[0].mxu0
        %v1475 = vpop.f32.mrb[0].mxu0
        %v1476 = vadd.f32 %v1105, %v1475
        %v1477 = vpop.f32.mrb[0].mxu0
        %1478 = vmatprep.mubr.bf16.mxu0 0
        %1479 = vmatmul.mubr.bf16.gmra.mrb[0].mxu0 %v1046
        %v1480 = vpop.f32.mrb[0].mxu0
        %v1481 = vadd.f32 %v1105, %v1480
        %v1482 = vpop.f32.mrb[0].mxu0
        %v1483 = vpop.f32.mrb[0].mxu0
        %v1484 = vadd.f32 %v1105, %v1483
        %v1485 = vpop.f32.mrb[0].mxu0
        %1486 = vmatprep.mubr.bf16.mxu0 0
        %1487 = vmatmul.mubr.bf16.gmra.mrb[0].mxu0 %v1047
        %v1488 = vpop.f32.mrb[0].mxu0
        %v1489 = vadd.f32 %v1105, %v1488
        %v1490 = vpop.f32.mrb[0].mxu0
        %v1491 = vpop.f32.mrb[0].mxu0
        %v1492 = vadd.f32 %v1105, %v1491
        %v1493 = vpop.f32.mrb[0].mxu0
        %1494 = vmatprep.mubr.bf16.mxu0 0
        %1495 = vmatmul.mubr.bf16.gmra.mrb[0].mxu0 %v1048
        %v1496 = vpop.f32.mrb[0].mxu0
        %v1497 = vadd.f32 %v1105, %v1496
        %v1498 = vpop.f32.mrb[0].mxu0
        %v1499 = vpop.f32.mrb[0].mxu0
        %v1500 = vadd.f32 %v1105, %v1499
        %v1501 = vpop.f32.mrb[0].mxu0
        %1502 = vmatprep.mubr.bf16.mxu0 0
        %1503 = vmatmul.mubr.bf16.gmra.mrb[0].mxu0 %v1049
        %v1504 = vpop.f32.mrb[0].mxu0
        %v1505 = vadd.f32 %v1105, %v1504
        %v1506 = vpop.f32.mrb[0].mxu0
        %v1507 = vpop.f32.mrb[0].mxu0
        %v1508 = vadd.f32 %v1105, %v1507
        %v1509 = vpop.f32.mrb[0].mxu0
        %1510 = vmatprep.mubr.bf16.mxu0 0
        %1511 = vmatmul.mubr.bf16.gmra.mrb[0].mxu0 %v1050
        %v1512 = vpop.f32.mrb[0].mxu0
        %v1513 = vadd.f32 %v1105, %v1512
        %v1514 = vpop.f32.mrb[0].mxu0
        %v1515 = vpop.f32.mrb[0].mxu0
        %v1516 = vadd.f32 %v1105, %v1515
        %v1517 = vpop.f32.mrb[0].mxu0
        %1518 = vmatprep.mubr.bf16.mxu0 0
        %1519 = vmatmul.mubr.bf16.gmra.mrb[0].mxu0 %v1051
        %v1520 = vpop.f32.mrb[0].mxu0
        %v1521 = vadd.f32 %v1105, %v1520
        %v1522 = vpop.f32.mrb[0].mxu0
        %v1523 = vpop.f32.mrb[0].mxu0
        %v1524 = vadd.f32 %v1105, %v1523
        %v1525 = vpop.f32.mrb[0].mxu0
        %1526 = vmatprep.mubr.bf16.mxu0 0
        %1527 = vmatmul.mubr.bf16.gmra.mrb[0].mxu0 %v1052
        %v1528 = vpop.f32.mrb[0].mxu0
        %v1529 = vadd.f32 %v1105, %v1528
        %v1530 = vpop.f32.mrb[0].mxu0
        %v1531 = vpop.f32.mrb[0].mxu0
        %v1532 = vadd.f32 %v1105, %v1531
        %v1533 = vpop.f32.mrb[0].mxu0
        %1534 = vmatprep.mubr.bf16.mxu0 0
        %1535 = vmatmul.mubr.bf16.gmra.mrb[0].mxu0 %v1053
        %v1536 = vpop.f32.mrb[0].mxu0
        %v1537 = vadd.f32 %v1105, %v1536
        %v1538 = vpop.f32.mrb[0].mxu0
        %v1539 = vpop.f32.mrb[0].mxu0
        %v1540 = vadd.f32 %v1105, %v1539
        %v1541 = vpop.f32.mrb[0].mxu0
        %1542 = vmatprep.mubr.bf16.mxu0 0
        %1543 = vmatmul.mubr.bf16.gmra.mrb[0].mxu0 %v1054
        %v1544 = vpop.f32.mrb[0].mxu0
        %v1545 = vadd.f32 %v1105, %v1544
        %v1546 = vpop.f32.mrb[0].mxu0
        %v1547 = vpop.f32.mrb[0].mxu0
        %v1548 = vadd.f32 %v1105, %v1547
        %v1549 = vpop.f32.mrb[0].mxu0
        %1550 = vmatprep.mubr.bf16.mxu0 0
        %1551 = vmatmul.mubr.bf16.gmra.mrb[0].mxu0 %v1055
        %v1552 = vpop.f32.mrb[0].mxu0
        %v1553 = vadd.f32 %v1105, %v1552
        %v1554 = vpop.f32.mrb[0].mxu0
        %v1555 = vpop.f32.mrb[0].mxu0
        %v1556 = vadd.f32 %v1105, %v1555
        %v1557 = vpop.f32.mrb[0].mxu0
        %1558 = vmatprep.mubr.bf16.mxu0 0
        %1559 = vmatmul.mubr.bf16.gmra.mrb[0].mxu0 %v1056
        %v1560 = vpop.f32.mrb[0].mxu0
        %v1561 = vadd.f32 %v1105, %v1560
        %v1562 = vpop.f32.mrb[0].mxu0
        %v1563 = vpop.f32.mrb[0].mxu0
        %v1564 = vadd.f32 %v1105, %v1563
        %v1565 = vpop.f32.mrb[0].mxu0
        %1566 = vmatprep.mubr.bf16.mxu0 0
        %1567 = vmatmul.mubr.bf16.gmra.mrb[0].mxu0 %v1057
        %v1568 = vpop.f32.mrb[0].mxu0
        %v1569 = vadd.f32 %v1105, %v1568
        %v1570 = vpop.f32.mrb[0].mxu0
        %v1571 = vpop.f32.mrb[0].mxu0
        %v1572 = vadd.f32 %v1105, %v1571
        %v1573 = vpop.f32.mrb[0].mxu0
        %1574 = vmatprep.mubr.bf16.mxu0 0
        %1575 = vmatmul.mubr.bf16.gmra.mrb[0].mxu0 %v1058
        %v1576 = vpop.f32.mrb[0].mxu0
        %v1577 = vadd.f32 %v1105, %v1576
        %v1578 = vpop.f32.mrb[0].mxu0
        %v1579 = vpop.f32.mrb[0].mxu0
        %v1580 = vadd.f32 %v1105, %v1579
        %v1581 = vpop.f32.mrb[0].mxu0
        %1582 = vmatprep.mubr.bf16.mxu0 0
        %1583 = vmatmul.mubr.bf16.gmra.mrb[0].mxu0 %v1059
        %v1584 = vpop.f32.mrb[0].mxu0
        %v1585 = vadd.f32 %v1105, %v1584
        %v1586 = vpop.f32.mrb[0].mxu0
        %v1587 = vpop.f32.mrb[0].mxu0
        %v1588 = vadd.f32 %v1105, %v1587
        %v1589 = vpop.f32.mrb[0].mxu0
        %1590 = vdwg.mxu0
        %v1591 = vpack.c.bf16 %v1276, %v1272
        %v1592 = vpack.c.bf16 %v1278, %v1274
        %v1593 = vpack.c.bf16 %v1468, %v1465
        %v1594 = vpack.c.bf16 %v1286, %v1282
        %v1595 = vpack.c.bf16 %v1288, %v1284
        %v1596 = vpack.c.bf16 %v1476, %v1473
        %v1597 = vpack.c.bf16 %v1296, %v1292
        %v1598 = vpack.c.bf16 %v1298, %v1294
        %v1599 = vpack.c.bf16 %v1484, %v1481
        %v1600 = vpack.c.bf16 %v1306, %v1302
        %v1601 = vpack.c.bf16 %v1308, %v1304
        %v1602 = vpack.c.bf16 %v1492, %v1489
        %v1603 = vpack.c.bf16 %v1316, %v1312
        %v1604 = vpack.c.bf16 %v1318, %v1314
        %v1605 = vpack.c.bf16 %v1500, %v1497
        %v1606 = vpack.c.bf16 %v1326, %v1322
        %v1607 = vpack.c.bf16 %v1328, %v1324
        %v1608 = vpack.c.bf16 %v1508, %v1505
        %v1609 = vpack.c.bf16 %v1336, %v1332
        %v1610 = vpack.c.bf16 %v1338, %v1334
        %v1611 = vpack.c.bf16 %v1516, %v1513
        %v1612 = vpack.c.bf16 %v1346, %v1342
        %v1613 = vpack.c.bf16 %v1348, %v1344
        %v1614 = vpack.c.bf16 %v1524, %v1521
        %v1615 = vpack.c.bf16 %v1356, %v1352
        %v1616 = vpack.c.bf16 %v1358, %v1354
        %v1617 = vpack.c.bf16 %v1532, %v1529
        %v1618 = vpack.c.bf16 %v1366, %v1362
        %v1619 = vpack.c.bf16 %v1368, %v1364
        %v1620 = vpack.c.bf16 %v1540, %v1537
        %v1621 = vpack.c.bf16 %v1376, %v1372
        %v1622 = vpack.c.bf16 %v1378, %v1374
        %v1623 = vpack.c.bf16 %v1548, %v1545
        %v1624 = vpack.c.bf16 %v1386, %v1382
        %v1625 = vpack.c.bf16 %v1388, %v1384
        %v1626 = vpack.c.bf16 %v1556, %v1553
        %v1627 = vpack.c.bf16 %v1396, %v1392
        %v1628 = vpack.c.bf16 %v1398, %v1394
        %v1629 = vpack.c.bf16 %v1564, %v1561
        %v1630 = vpack.c.bf16 %v1406, %v1402
        %v1631 = vpack.c.bf16 %v1408, %v1404
        %v1632 = vpack.c.bf16 %v1572, %v1569
        %v1633 = vpack.c.bf16 %v1416, %v1412
        %v1634 = vpack.c.bf16 %v1418, %v1414
        %v1635 = vpack.c.bf16 %v1580, %v1577
        %v1636 = vpack.c.bf16 %v1426, %v1422
        %v1637 = vpack.c.bf16 %v1428, %v1424
        %v1638 = vpack.c.bf16 %v1588, %v1585
        %vm1639 = vcmask 523264
        %v1641 = vsel %vm1639, %v1591, 0
        %v1644 = vsel %vm1639, %v1594, 0
        %v1647 = vsel %vm1639, %v1597, 0
        %v1650 = vsel %vm1639, %v1600, 0
        %v1653 = vsel %vm1639, %v1603, 0
        %v1656 = vsel %vm1639, %v1606, 0
        %v1659 = vsel %vm1639, %v1609, 0
        %v1662 = vsel %vm1639, %v1612, 0
        %v1665 = vsel %vm1639, %v1592, 0
        %v1668 = vsel %vm1639, %v1595, 0
        %v1671 = vsel %vm1639, %v1598, 0
        %v1674 = vsel %vm1639, %v1601, 0
        %v1677 = vsel %vm1639, %v1604, 0
        %v1680 = vsel %vm1639, %v1607, 0
        %v1683 = vsel %vm1639, %v1610, 0
        %v1686 = vsel %vm1639, %v1613, 0
        %1688 = vmatprep.subr.bf16.mxu0 0
        %1689 = vmatpush1.bf16.xpose.msra.mxu0 %v1665
        %1690 = vmatprep.subr.bf16.mxu0 0
        %1691 = vmatpush1.bf16.xpose.msra.mxu0 %v1668
        %1692 = vmatprep.subr.bf16.mxu0 0
        %1693 = vmatpush1.bf16.xpose.msra.mxu0 %v1671
        %1694 = vmatprep.subr.bf16.mxu0 0
        %1695 = vmatpush1.bf16.xpose.msra.mxu0 %v1674
        %1696 = vmatprep.subr.bf16.mxu0 0
        %1697 = vmatpush1.bf16.xpose.msra.mxu0 %v1677
        %1698 = vmatprep.subr.bf16.mxu0 0
        %1699 = vmatpush1.bf16.xpose.msra.mxu0 %v1680
        %1700 = vmatprep.subr.bf16.mxu0 0
        %1701 = vmatpush1.bf16.xpose.msra.mxu0 %v1683
        %1702 = vmatprep.subr.bf16.mxu0 0
        %1703 = vmatpush1.bf16.xpose.msra.mxu0 %v1686
        %1704 = vmatprep.subr.bf16.mxu0 0
        %1705 = vmatpush1.bf16.xpose.msra.mxu0 0
        %1706 = vmatprep.subr.bf16.mxu0 0
        %1707 = vmatpush1.bf16.xpose.msra.mxu0 0
        %1708 = vmatprep.subr.bf16.mxu0 0
        %1709 = vmatpush1.bf16.xpose.msra.mxu0 0
        %1710 = vmatprep.subr.bf16.mxu0 0
        %1711 = vmatpush1.bf16.xpose.msra.mxu0 0
        %1712 = vmatprep.subr.bf16.mxu0 0
        %1713 = vmatpush1.bf16.xpose.msra.mxu0 0
        %1714 = vmatprep.subr.bf16.mxu0 0
        %1715 = vmatpush1.bf16.xpose.msra.mxu0 0
        %1716 = vmatprep.subr.bf16.mxu0 0
        %1717 = vmatpush1.bf16.xpose.msra.mxu0 0
        %1718 = vmatprep.subr.bf16.mxu0 0
        %1719 = vmatpush1.bf16.xpose.msra.mxu0 0
        %1720 = vmatprep.mubr.bf16.mxu0 0
        %1721 = vmatmul.mubr.bf16.gmra.mrb[0].mxu0 %v1641
        %v1722 = vpop.f32.mrb[0].mxu0
        %v1723 = vadd.f32 0.0, %v1722
        %v1724 = vpop.f32.mrb[0].mxu0
        %v1725 = vpop.f32.mrb[0].mxu0
        %v1726 = vadd.f32 0.0, %v1725
        %v1727 = vpop.f32.mrb[0].mxu0
        %1728 = vmatprep.mubr.bf16.mxu0 0
        %1729 = vmatmul.mubr.bf16.gmra.mrb[0].mxu0 %v1644
        %v1730 = vpop.f32.mrb[0].mxu0
        %v1731 = vadd.f32 0.0, %v1730
        %v1732 = vpop.f32.mrb[0].mxu0
        %v1733 = vpop.f32.mrb[0].mxu0
        %v1734 = vadd.f32 0.0, %v1733
        %v1735 = vpop.f32.mrb[0].mxu0
        %1736 = vmatprep.mubr.bf16.mxu0 0
        %1737 = vmatmul.mubr.bf16.gmra.mrb[0].mxu0 %v1647
        %v1738 = vpop.f32.mrb[0].mxu0
        %v1739 = vadd.f32 0.0, %v1738
        %v1740 = vpop.f32.mrb[0].mxu0
        %v1741 = vpop.f32.mrb[0].mxu0
        %v1742 = vadd.f32 0.0, %v1741
        %v1743 = vpop.f32.mrb[0].mxu0
        %1744 = vmatprep.mubr.bf16.mxu0 0
        %1745 = vmatmul.mubr.bf16.gmra.mrb[0].mxu0 %v1650
        %v1746 = vpop.f32.mrb[0].mxu0
        %v1747 = vadd.f32 0.0, %v1746
        %v1748 = vpop.f32.mrb[0].mxu0
        %v1749 = vpop.f32.mrb[0].mxu0
        %v1750 = vadd.f32 0.0, %v1749
        %v1751 = vpop.f32.mrb[0].mxu0
        %1752 = vmatprep.mubr.bf16.mxu0 0
        %1753 = vmatmul.mubr.bf16.gmra.mrb[0].mxu0 %v1653
        %v1754 = vpop.f32.mrb[0].mxu0
        %v1755 = vadd.f32 0.0, %v1754
        %v1756 = vpop.f32.mrb[0].mxu0
        %v1757 = vpop.f32.mrb[0].mxu0
        %v1758 = vadd.f32 0.0, %v1757
        %v1759 = vpop.f32.mrb[0].mxu0
        %1760 = vmatprep.mubr.bf16.mxu0 0
        %1761 = vmatmul.mubr.bf16.gmra.mrb[0].mxu0 %v1656
        %v1762 = vpop.f32.mrb[0].mxu0
        %v1763 = vadd.f32 0.0, %v1762
        %v1764 = vpop.f32.mrb[0].mxu0
        %v1765 = vpop.f32.mrb[0].mxu0
        %v1766 = vadd.f32 0.0, %v1765
        %v1767 = vpop.f32.mrb[0].mxu0
        %1768 = vmatprep.mubr.bf16.mxu0 0
        %1769 = vmatmul.mubr.bf16.gmra.mrb[0].mxu0 %v1659
        %v1770 = vpop.f32.mrb[0].mxu0
        %v1771 = vadd.f32 0.0, %v1770
        %v1772 = vpop.f32.mrb[0].mxu0
        %v1773 = vpop.f32.mrb[0].mxu0
        %v1774 = vadd.f32 0.0, %v1773
        %v1775 = vpop.f32.mrb[0].mxu0
        %1776 = vmatprep.mubr.bf16.mxu0 0
        %1777 = vmatmul.mubr.bf16.gmra.mrb[0].mxu0 %v1662
        %v1778 = vpop.f32.mrb[0].mxu0
        %v1779 = vadd.f32 0.0, %v1778
        %v1780 = vpop.f32.mrb[0].mxu0
        %v1781 = vpop.f32.mrb[0].mxu0
        %v1782 = vadd.f32 0.0, %v1781
        %v1783 = vpop.f32.mrb[0].mxu0
        %1784 = vdwg.mxu0
        %v1785 = vmul.f32 %v1723, 0.125
        %v1786 = vmul.f32 %v1726, 0.125
        %v1787 = vmul.f32 %v1731, 0.125
        %v1788 = vmul.f32 %v1734, 0.125
        %v1789 = vmul.f32 %v1739, 0.125
        %v1790 = vmul.f32 %v1742, 0.125
        %v1791 = vmul.f32 %v1747, 0.125
        %v1792 = vmul.f32 %v1750, 0.125
        %v1793 = vmul.f32 %v1755, 0.125
        %v1794 = vmul.f32 %v1758, 0.125
        %v1795 = vmul.f32 %v1763, 0.125
        %v1796 = vmul.f32 %v1766, 0.125
        %v1797 = vmul.f32 %v1771, 0.125
        %v1798 = vmul.f32 %v1774, 0.125
        %v1799 = vmul.f32 %v1779, 0.125
        %v1800 = vmul.f32 %v1782, 0.125
        %v1801 = vsel %vm597, %v1785, -1e+30
        %v1802 = vsel %vm598, %v1786, -1e+30
        %v1803 = vsel %vm599, %v1787, -1e+30
        %v1804 = vsel %vm600, %v1788, -1e+30
        %v1805 = vsel %vm601, %v1789, -1e+30
        %v1806 = vsel %vm602, %v1790, -1e+30
        %v1807 = vsel %vm603, %v1791, -1e+30
        %v1808 = vsel %vm604, %v1792, -1e+30
        %v1809 = vsel %vm605, %v1793, -1e+30
        %v1810 = vsel %vm606, %v1794, -1e+30
        %v1811 = vsel %vm607, %v1795, -1e+30
        %v1812 = vsel %vm608, %v1796, -1e+30
        %v1813 = vsel %vm609, %v1797, -1e+30
        %v1814 = vsel %vm610, %v1798, -1e+30
        %v1815 = vsel %vm611, %v1799, -1e+30
        %v1816 = vsel %vm612, %v1800, -1e+30
        %1817 = vmax.xlane.f32.xlu0 %v1801
        %v1818 = vpop.xlane.xlu0 %1817
        %1819 = vmax.xlane.f32.xlu0 %v1802
        %v1820 = vpop.xlane.xlu0 %1819
        %1821 = vmax.xlane.f32.xlu0 %v1803
        %v1822 = vpop.xlane.xlu0 %1821
        %1823 = vmax.xlane.f32.xlu0 %v1804
        %v1824 = vpop.xlane.xlu0 %1823
        %1825 = vmax.xlane.f32.xlu0 %v1805
        %v1826 = vpop.xlane.xlu0 %1825
        %1827 = vmax.xlane.f32.xlu0 %v1806
        %v1828 = vpop.xlane.xlu0 %1827
        %1829 = vmax.xlane.f32.xlu0 %v1807
        %v1830 = vpop.xlane.xlu0 %1829
        %1831 = vmax.xlane.f32.xlu0 %v1808
        %v1832 = vpop.xlane.xlu0 %1831
        %1833 = vmax.xlane.f32.xlu0 %v1809
        %v1834 = vpop.xlane.xlu0 %1833
        %1835 = vmax.xlane.f32.xlu0 %v1810
        %v1836 = vpop.xlane.xlu0 %1835
        %1837 = vmax.xlane.f32.xlu0 %v1811
        %v1838 = vpop.xlane.xlu0 %1837
        %1839 = vmax.xlane.f32.xlu0 %v1812
        %v1840 = vpop.xlane.xlu0 %1839
        %1841 = vmax.xlane.f32.xlu0 %v1813
        %v1842 = vpop.xlane.xlu0 %1841
        %1843 = vmax.xlane.f32.xlu0 %v1814
        %v1844 = vpop.xlane.xlu0 %1843
        %1845 = vmax.xlane.f32.xlu0 %v1815
        %v1846 = vpop.xlane.xlu0 %1845
        %1847 = vmax.xlane.f32.xlu0 %v1816
        %v1848 = vpop.xlane.xlu0 %1847
        %v1849 = vsub.f32 %v1801, %v1818
        %v1850 = vsub.f32 %v1802, %v1820
        %v1851 = vsub.f32 %v1803, %v1822
        %v1852 = vsub.f32 %v1804, %v1824
        %v1853 = vsub.f32 %v1805, %v1826
        %v1854 = vsub.f32 %v1806, %v1828
        %v1855 = vsub.f32 %v1807, %v1830
        %v1856 = vsub.f32 %v1808, %v1832
        %v1857 = vsub.f32 %v1809, %v1834
        %v1858 = vsub.f32 %v1810, %v1836
        %v1859 = vsub.f32 %v1811, %v1838
        %v1860 = vsub.f32 %v1812, %v1840
        %v1861 = vsub.f32 %v1813, %v1842
        %v1862 = vsub.f32 %v1814, %v1844
        %v1863 = vsub.f32 %v1815, %v1846
        %v1864 = vsub.f32 %v1816, %v1848
        %v1865 = vmul.f32 %v1849, 1.442695
        %v1866 = vpow.pop %v1865
        %v1867 = vmul.f32 %v1850, 1.442695
        %v1868 = vpow.pop %v1867
        %v1869 = vmul.f32 %v1851, 1.442695
        %v1870 = vpow.pop %v1869
        %v1871 = vmul.f32 %v1852, 1.442695
        %v1872 = vpow.pop %v1871
        %v1873 = vmul.f32 %v1853, 1.442695
        %v1874 = vpow.pop %v1873
        %v1875 = vmul.f32 %v1854, 1.442695
        %v1876 = vpow.pop %v1875
        %v1877 = vmul.f32 %v1855, 1.442695
        %v1878 = vpow.pop %v1877
        %v1879 = vmul.f32 %v1856, 1.442695
        %v1880 = vpow.pop %v1879
        %v1881 = vmul.f32 %v1857, 1.442695
        %v1882 = vpow.pop %v1881
        %v1883 = vmul.f32 %v1858, 1.442695
        %v1884 = vpow.pop %v1883
        %v1885 = vmul.f32 %v1859, 1.442695
        %v1886 = vpow.pop %v1885
        %v1887 = vmul.f32 %v1860, 1.442695
        %v1888 = vpow.pop %v1887
        %v1889 = vmul.f32 %v1861, 1.442695
        %v1890 = vpow.pop %v1889
        %v1891 = vmul.f32 %v1862, 1.442695
        %v1892 = vpow.pop %v1891
        %v1893 = vmul.f32 %v1863, 1.442695
        %v1894 = vpow.pop %v1893
        %v1895 = vmul.f32 %v1864, 1.442695
        %v1896 = vpow.pop %v1895
        %1897 = vadd.xlane.f32.xlu0 %v1866
        %v1898 = vpop.xlane.xlu0 %1897
        %1899 = vadd.xlane.f32.xlu0 %v1868
        %v1900 = vpop.xlane.xlu0 %1899
        %1901 = vadd.xlane.f32.xlu0 %v1870
        %v1902 = vpop.xlane.xlu0 %1901
        %1903 = vadd.xlane.f32.xlu0 %v1872
        %v1904 = vpop.xlane.xlu0 %1903
        %1905 = vadd.xlane.f32.xlu0 %v1874
        %v1906 = vpop.xlane.xlu0 %1905
        %1907 = vadd.xlane.f32.xlu0 %v1876
        %v1908 = vpop.xlane.xlu0 %1907
        %1909 = vadd.xlane.f32.xlu0 %v1878
        %v1910 = vpop.xlane.xlu0 %1909
        %1911 = vadd.xlane.f32.xlu0 %v1880
        %v1912 = vpop.xlane.xlu0 %1911
        %1913 = vadd.xlane.f32.xlu0 %v1882
        %v1914 = vpop.xlane.xlu0 %1913
        %1915 = vadd.xlane.f32.xlu0 %v1884
        %v1916 = vpop.xlane.xlu0 %1915
        %1917 = vadd.xlane.f32.xlu0 %v1886
        %v1918 = vpop.xlane.xlu0 %1917
        %1919 = vadd.xlane.f32.xlu0 %v1888
        %v1920 = vpop.xlane.xlu0 %1919
        %1921 = vadd.xlane.f32.xlu0 %v1890
        %v1922 = vpop.xlane.xlu0 %1921
        %1923 = vadd.xlane.f32.xlu0 %v1892
        %v1924 = vpop.xlane.xlu0 %1923
        %1925 = vadd.xlane.f32.xlu0 %v1894
        %v1926 = vpop.xlane.xlu0 %1925
        %1927 = vadd.xlane.f32.xlu0 %v1896
        %v1928 = vpop.xlane.xlu0 %1927
        %v1929 = vrcp.pop %v1898
        %v1930 = vrcp.pop %v1900
        %v1931 = vrcp.pop %v1902
        %v1932 = vrcp.pop %v1904
        %v1933 = vrcp.pop %v1906
        %v1934 = vrcp.pop %v1908
        %v1935 = vrcp.pop %v1910
        %v1936 = vrcp.pop %v1912
        %v1937 = vrcp.pop %v1914
        %v1938 = vrcp.pop %v1916
        %v1939 = vrcp.pop %v1918
        %v1940 = vrcp.pop %v1920
        %v1941 = vrcp.pop %v1922
        %v1942 = vrcp.pop %v1924
        %v1943 = vrcp.pop %v1926
        %v1944 = vrcp.pop %v1928
        %v1945 = vmul.f32 %v1866, %v1929
        %v1946 = vmul.f32 %v1868, %v1930
        %v1947 = vmul.f32 %v1870, %v1931
        %v1948 = vmul.f32 %v1872, %v1932
        %v1949 = vmul.f32 %v1874, %v1933
        %v1950 = vmul.f32 %v1876, %v1934
        %v1951 = vmul.f32 %v1878, %v1935
        %v1952 = vmul.f32 %v1880, %v1936
        %v1953 = vmul.f32 %v1882, %v1937
        %v1954 = vmul.f32 %v1884, %v1938
        %v1955 = vmul.f32 %v1886, %v1939
        %v1956 = vmul.f32 %v1888, %v1940
        %v1957 = vmul.f32 %v1890, %v1941
        %v1958 = vmul.f32 %v1892, %v1942
        %v1959 = vmul.f32 %v1894, %v1943
        %v1960 = vmul.f32 %v1896, %v1944
        %v1961 = vpack.c.bf16 %v1946, %v1945
        %v1962 = vpack.c.bf16 %v1948, %v1947
        %v1963 = vpack.c.bf16 %v1950, %v1949
        %v1964 = vpack.c.bf16 %v1952, %v1951
        %v1965 = vpack.c.bf16 %v1954, %v1953
        %v1966 = vpack.c.bf16 %v1956, %v1955
        %v1967 = vpack.c.bf16 %v1958, %v1957
        %v1968 = vpack.c.bf16 %v1960, %v1959
        %1969 = vmatprep.subr.bf16.mxu0 0
        %1970 = vmatpush1.bf16.msra.mxu0 %v1593
        %1971 = vmatprep.subr.bf16.mxu0 0
        %1972 = vmatpush1.bf16.msra.mxu0 %v1596
        %1973 = vmatprep.subr.bf16.mxu0 0
        %1974 = vmatpush1.bf16.msra.mxu0 %v1599
        %1975 = vmatprep.subr.bf16.mxu0 0
        %1976 = vmatpush1.bf16.msra.mxu0 %v1602
        %1977 = vmatprep.subr.bf16.mxu0 0
        %1978 = vmatpush1.bf16.msra.mxu0 %v1605
        %1979 = vmatprep.subr.bf16.mxu0 0
        %1980 = vmatpush1.bf16.msra.mxu0 %v1608
        %1981 = vmatprep.subr.bf16.mxu0 0
        %1982 = vmatpush1.bf16.msra.mxu0 %v1611
        %1983 = vmatprep.subr.bf16.mxu0 0
        %1984 = vmatpush1.bf16.msra.mxu0 %v1614
        %1985 = vmatprep.subr.bf16.mxu0 0
        %1986 = vmatpush1.bf16.msra.mxu0 0
        %1987 = vmatprep.subr.bf16.mxu0 0
        %1988 = vmatpush1.bf16.msra.mxu0 0
        %1989 = vmatprep.subr.bf16.mxu0 0
        %1990 = vmatpush1.bf16.msra.mxu0 0
        %1991 = vmatprep.subr.bf16.mxu0 0
        %1992 = vmatpush1.bf16.msra.mxu0 0
        %1993 = vmatprep.subr.bf16.mxu0 0
        %1994 = vmatpush1.bf16.msra.mxu0 0
        %1995 = vmatprep.subr.bf16.mxu0 0
        %1996 = vmatpush1.bf16.msra.mxu0 0
        %1997 = vmatprep.subr.bf16.mxu0 0
        %1998 = vmatpush1.bf16.msra.mxu0 0
        %1999 = vmatprep.subr.bf16.mxu0 0
        %2000 = vmatpush1.bf16.msra.mxu0 0
        %2001 = vmatprep.mubr.bf16.mxu0 0
        %2002 = vmatmul.mubr.bf16.gmra.mrb[0].mxu0 %v1961
        %v2003 = vpop.f32.mrb[0].mxu0
        %v2004 = vadd.f32 0.0, %v2003
        %v2005 = vpop.f32.mrb[0].mxu0
        %v2006 = vpop.f32.mrb[0].mxu0
        %v2007 = vadd.f32 0.0, %v2006
        %v2008 = vpop.f32.mrb[0].mxu0
        %2009 = vmatprep.mubr.bf16.mxu0 0
        %2010 = vmatmul.mubr.bf16.gmra.mrb[0].mxu0 %v1962
        %v2011 = vpop.f32.mrb[0].mxu0
        %v2012 = vadd.f32 0.0, %v2011
        %v2013 = vpop.f32.mrb[0].mxu0
        %v2014 = vpop.f32.mrb[0].mxu0
        %v2015 = vadd.f32 0.0, %v2014
        %v2016 = vpop.f32.mrb[0].mxu0
        %2017 = vmatprep.mubr.bf16.mxu0 0
        %2018 = vmatmul.mubr.bf16.gmra.mrb[0].mxu0 %v1963
        %v2019 = vpop.f32.mrb[0].mxu0
        %v2020 = vadd.f32 0.0, %v2019
        %v2021 = vpop.f32.mrb[0].mxu0
        %v2022 = vpop.f32.mrb[0].mxu0
        %v2023 = vadd.f32 0.0, %v2022
        %v2024 = vpop.f32.mrb[0].mxu0
        %2025 = vmatprep.mubr.bf16.mxu0 0
        %2026 = vmatmul.mubr.bf16.gmra.mrb[0].mxu0 %v1964
        %v2027 = vpop.f32.mrb[0].mxu0
        %v2028 = vadd.f32 0.0, %v2027
        %v2029 = vpop.f32.mrb[0].mxu0
        %v2030 = vpop.f32.mrb[0].mxu0
        %v2031 = vadd.f32 0.0, %v2030
        %v2032 = vpop.f32.mrb[0].mxu0
        %2033 = vmatprep.mubr.bf16.mxu0 0
        %2034 = vmatmul.mubr.bf16.gmra.mrb[0].mxu0 %v1965
        %v2035 = vpop.f32.mrb[0].mxu0
        %v2036 = vadd.f32 0.0, %v2035
        %v2037 = vpop.f32.mrb[0].mxu0
        %v2038 = vpop.f32.mrb[0].mxu0
        %v2039 = vadd.f32 0.0, %v2038
        %v2040 = vpop.f32.mrb[0].mxu0
        %2041 = vmatprep.mubr.bf16.mxu0 0
        %2042 = vmatmul.mubr.bf16.gmra.mrb[0].mxu0 %v1966
        %v2043 = vpop.f32.mrb[0].mxu0
        %v2044 = vadd.f32 0.0, %v2043
        %v2045 = vpop.f32.mrb[0].mxu0
        %v2046 = vpop.f32.mrb[0].mxu0
        %v2047 = vadd.f32 0.0, %v2046
        %v2048 = vpop.f32.mrb[0].mxu0
        %2049 = vmatprep.mubr.bf16.mxu0 0
        %2050 = vmatmul.mubr.bf16.gmra.mrb[0].mxu0 %v1967
        %v2051 = vpop.f32.mrb[0].mxu0
        %v2052 = vadd.f32 0.0, %v2051
        %v2053 = vpop.f32.mrb[0].mxu0
        %v2054 = vpop.f32.mrb[0].mxu0
        %v2055 = vadd.f32 0.0, %v2054
        %v2056 = vpop.f32.mrb[0].mxu0
        %2057 = vmatprep.mubr.bf16.mxu0 0
        %2058 = vmatmul.mubr.bf16.gmra.mrb[0].mxu0 %v1968
        %v2059 = vpop.f32.mrb[0].mxu0
        %v2060 = vadd.f32 0.0, %v2059
        %v2061 = vpop.f32.mrb[0].mxu0
        %v2062 = vpop.f32.mrb[0].mxu0
        %v2063 = vadd.f32 0.0, %v2062
        %v2064 = vpop.f32.mrb[0].mxu0
        %2065 = vdwg.mxu0
        %2074 = vrot.lane.b32.xlu0 %v1591, 64
        %v2075 = vpop.permute.xlu0 %2074
        %2076 = vrot.lane.b32.xlu0 %v1594, 64
        %v2077 = vpop.permute.xlu0 %2076
        %2078 = vrot.lane.b32.xlu0 %v1597, 64
        %v2079 = vpop.permute.xlu0 %2078
        %2080 = vrot.lane.b32.xlu0 %v1600, 64
        %v2081 = vpop.permute.xlu0 %2080
        %2082 = vrot.lane.b32.xlu0 %v1603, 64
        %v2083 = vpop.permute.xlu0 %2082
        %2084 = vrot.lane.b32.xlu0 %v1606, 64
        %v2085 = vpop.permute.xlu0 %2084
        %2086 = vrot.lane.b32.xlu0 %v1609, 64
        %v2087 = vpop.permute.xlu0 %2086
        %2088 = vrot.lane.b32.xlu0 %v1612, 64
        %v2089 = vpop.permute.xlu0 %2088
        %2098 = vrot.lane.b32.xlu0 %v1592, 64
        %v2099 = vpop.permute.xlu0 %2098
        %2100 = vrot.lane.b32.xlu0 %v1595, 64
        %v2101 = vpop.permute.xlu0 %2100
        %2102 = vrot.lane.b32.xlu0 %v1598, 64
        %v2103 = vpop.permute.xlu0 %2102
        %2104 = vrot.lane.b32.xlu0 %v1601, 64
        %v2105 = vpop.permute.xlu0 %2104
        %2106 = vrot.lane.b32.xlu0 %v1604, 64
        %v2107 = vpop.permute.xlu0 %2106
        %2108 = vrot.lane.b32.xlu0 %v1607, 64
        %v2109 = vpop.permute.xlu0 %2108
        %2110 = vrot.lane.b32.xlu0 %v1610, 64
        %v2111 = vpop.permute.xlu0 %2110
        %2112 = vrot.lane.b32.xlu0 %v1613, 64
        %v2113 = vpop.permute.xlu0 %2112
        %v2115 = vsel %vm1639, %v2075, 0
        %v2118 = vsel %vm1639, %v2077, 0
        %v2121 = vsel %vm1639, %v2079, 0
        %v2124 = vsel %vm1639, %v2081, 0
        %v2127 = vsel %vm1639, %v2083, 0
        %v2130 = vsel %vm1639, %v2085, 0
        %v2133 = vsel %vm1639, %v2087, 0
        %v2136 = vsel %vm1639, %v2089, 0
        %v2139 = vsel %vm1639, %v2099, 0
        %v2142 = vsel %vm1639, %v2101, 0
        %v2145 = vsel %vm1639, %v2103, 0
        %v2148 = vsel %vm1639, %v2105, 0
        %v2151 = vsel %vm1639, %v2107, 0
        %v2154 = vsel %vm1639, %v2109, 0
        %v2157 = vsel %vm1639, %v2111, 0
        %v2160 = vsel %vm1639, %v2113, 0
        %2162 = vmatprep.subr.bf16.mxu0 0
        %2163 = vmatpush1.bf16.xpose.msra.mxu0 %v2139
        %2164 = vmatprep.subr.bf16.mxu0 0
        %2165 = vmatpush1.bf16.xpose.msra.mxu0 %v2142
        %2166 = vmatprep.subr.bf16.mxu0 0
        %2167 = vmatpush1.bf16.xpose.msra.mxu0 %v2145
        %2168 = vmatprep.subr.bf16.mxu0 0
        %2169 = vmatpush1.bf16.xpose.msra.mxu0 %v2148
        %2170 = vmatprep.subr.bf16.mxu0 0
        %2171 = vmatpush1.bf16.xpose.msra.mxu0 %v2151
        %2172 = vmatprep.subr.bf16.mxu0 0
        %2173 = vmatpush1.bf16.xpose.msra.mxu0 %v2154
        %2174 = vmatprep.subr.bf16.mxu0 0
        %2175 = vmatpush1.bf16.xpose.msra.mxu0 %v2157
        %2176 = vmatprep.subr.bf16.mxu0 0
        %2177 = vmatpush1.bf16.xpose.msra.mxu0 %v2160
        %2178 = vmatprep.subr.bf16.mxu0 0
        %2179 = vmatpush1.bf16.xpose.msra.mxu0 0
        %2180 = vmatprep.subr.bf16.mxu0 0
        %2181 = vmatpush1.bf16.xpose.msra.mxu0 0
        %2182 = vmatprep.subr.bf16.mxu0 0
        %2183 = vmatpush1.bf16.xpose.msra.mxu0 0
        %2184 = vmatprep.subr.bf16.mxu0 0
        %2185 = vmatpush1.bf16.xpose.msra.mxu0 0
        %2186 = vmatprep.subr.bf16.mxu0 0
        %2187 = vmatpush1.bf16.xpose.msra.mxu0 0
        %2188 = vmatprep.subr.bf16.mxu0 0
        %2189 = vmatpush1.bf16.xpose.msra.mxu0 0
        %2190 = vmatprep.subr.bf16.mxu0 0
        %2191 = vmatpush1.bf16.xpose.msra.mxu0 0
        %2192 = vmatprep.subr.bf16.mxu0 0
        %2193 = vmatpush1.bf16.xpose.msra.mxu0 0
        %2194 = vmatprep.mubr.bf16.mxu0 0
        %2195 = vmatmul.mubr.bf16.gmra.mrb[0].mxu0 %v2115
        %v2196 = vpop.f32.mrb[0].mxu0
        %v2197 = vadd.f32 0.0, %v2196
        %v2198 = vpop.f32.mrb[0].mxu0
        %v2199 = vpop.f32.mrb[0].mxu0
        %v2200 = vadd.f32 0.0, %v2199
        %v2201 = vpop.f32.mrb[0].mxu0
        %2202 = vmatprep.mubr.bf16.mxu0 0
        %2203 = vmatmul.mubr.bf16.gmra.mrb[0].mxu0 %v2118
        %v2204 = vpop.f32.mrb[0].mxu0
        %v2205 = vadd.f32 0.0, %v2204
        %v2206 = vpop.f32.mrb[0].mxu0
        %v2207 = vpop.f32.mrb[0].mxu0
        %v2208 = vadd.f32 0.0, %v2207
        %v2209 = vpop.f32.mrb[0].mxu0
        %2210 = vmatprep.mubr.bf16.mxu0 0
        %2211 = vmatmul.mubr.bf16.gmra.mrb[0].mxu0 %v2121
        %v2212 = vpop.f32.mrb[0].mxu0
        %v2213 = vadd.f32 0.0, %v2212
        %v2214 = vpop.f32.mrb[0].mxu0
        %v2215 = vpop.f32.mrb[0].mxu0
        %v2216 = vadd.f32 0.0, %v2215
        %v2217 = vpop.f32.mrb[0].mxu0
        %2218 = vmatprep.mubr.bf16.mxu0 0
        %2219 = vmatmul.mubr.bf16.gmra.mrb[0].mxu0 %v2124
        %v2220 = vpop.f32.mrb[0].mxu0
        %v2221 = vadd.f32 0.0, %v2220
        %v2222 = vpop.f32.mrb[0].mxu0
        %v2223 = vpop.f32.mrb[0].mxu0
        %v2224 = vadd.f32 0.0, %v2223
        %v2225 = vpop.f32.mrb[0].mxu0
        %2226 = vmatprep.mubr.bf16.mxu0 0
        %2227 = vmatmul.mubr.bf16.gmra.mrb[0].mxu0 %v2127
        %v2228 = vpop.f32.mrb[0].mxu0
        %v2229 = vadd.f32 0.0, %v2228
        %v2230 = vpop.f32.mrb[0].mxu0
        %v2231 = vpop.f32.mrb[0].mxu0
        %v2232 = vadd.f32 0.0, %v2231
        %v2233 = vpop.f32.mrb[0].mxu0
        %2234 = vmatprep.mubr.bf16.mxu0 0
        %2235 = vmatmul.mubr.bf16.gmra.mrb[0].mxu0 %v2130
        %v2236 = vpop.f32.mrb[0].mxu0
        %v2237 = vadd.f32 0.0, %v2236
        %v2238 = vpop.f32.mrb[0].mxu0
        %v2239 = vpop.f32.mrb[0].mxu0
        %v2240 = vadd.f32 0.0, %v2239
        %v2241 = vpop.f32.mrb[0].mxu0
        %2242 = vmatprep.mubr.bf16.mxu0 0
        %2243 = vmatmul.mubr.bf16.gmra.mrb[0].mxu0 %v2133
        %v2244 = vpop.f32.mrb[0].mxu0
        %v2245 = vadd.f32 0.0, %v2244
        %v2246 = vpop.f32.mrb[0].mxu0
        %v2247 = vpop.f32.mrb[0].mxu0
        %v2248 = vadd.f32 0.0, %v2247
        %v2249 = vpop.f32.mrb[0].mxu0
        %2250 = vmatprep.mubr.bf16.mxu0 0
        %2251 = vmatmul.mubr.bf16.gmra.mrb[0].mxu0 %v2136
        %v2252 = vpop.f32.mrb[0].mxu0
        %v2253 = vadd.f32 0.0, %v2252
        %v2254 = vpop.f32.mrb[0].mxu0
        %v2255 = vpop.f32.mrb[0].mxu0
        %v2256 = vadd.f32 0.0, %v2255
        %v2257 = vpop.f32.mrb[0].mxu0
        %2258 = vdwg.mxu0
        %v2259 = vmul.f32 %v2197, 0.125
        %v2260 = vmul.f32 %v2200, 0.125
        %v2261 = vmul.f32 %v2205, 0.125
        %v2262 = vmul.f32 %v2208, 0.125
        %v2263 = vmul.f32 %v2213, 0.125
        %v2264 = vmul.f32 %v2216, 0.125
        %v2265 = vmul.f32 %v2221, 0.125
        %v2266 = vmul.f32 %v2224, 0.125
        %v2267 = vmul.f32 %v2229, 0.125
        %v2268 = vmul.f32 %v2232, 0.125
        %v2269 = vmul.f32 %v2237, 0.125
        %v2270 = vmul.f32 %v2240, 0.125
        %v2271 = vmul.f32 %v2245, 0.125
        %v2272 = vmul.f32 %v2248, 0.125
        %v2273 = vmul.f32 %v2253, 0.125
        %v2274 = vmul.f32 %v2256, 0.125
        %v2275 = vsel %vm597, %v2259, -1e+30
        %v2276 = vsel %vm598, %v2260, -1e+30
        %v2277 = vsel %vm599, %v2261, -1e+30
        %v2278 = vsel %vm600, %v2262, -1e+30
        %v2279 = vsel %vm601, %v2263, -1e+30
        %v2280 = vsel %vm602, %v2264, -1e+30
        %v2281 = vsel %vm603, %v2265, -1e+30
        %v2282 = vsel %vm604, %v2266, -1e+30
        %v2283 = vsel %vm605, %v2267, -1e+30
        %v2284 = vsel %vm606, %v2268, -1e+30
        %v2285 = vsel %vm607, %v2269, -1e+30
        %v2286 = vsel %vm608, %v2270, -1e+30
        %v2287 = vsel %vm609, %v2271, -1e+30
        %v2288 = vsel %vm610, %v2272, -1e+30
        %v2289 = vsel %vm611, %v2273, -1e+30
        %v2290 = vsel %vm612, %v2274, -1e+30
        %2291 = vmax.xlane.f32.xlu0 %v2275
        %v2292 = vpop.xlane.xlu0 %2291
        %2293 = vmax.xlane.f32.xlu0 %v2276
        %v2294 = vpop.xlane.xlu0 %2293
        %2295 = vmax.xlane.f32.xlu0 %v2277
        %v2296 = vpop.xlane.xlu0 %2295
        %2297 = vmax.xlane.f32.xlu0 %v2278
        %v2298 = vpop.xlane.xlu0 %2297
        %2299 = vmax.xlane.f32.xlu0 %v2279
        %v2300 = vpop.xlane.xlu0 %2299
        %2301 = vmax.xlane.f32.xlu0 %v2280
        %v2302 = vpop.xlane.xlu0 %2301
        %2303 = vmax.xlane.f32.xlu0 %v2281
        %v2304 = vpop.xlane.xlu0 %2303
        %2305 = vmax.xlane.f32.xlu0 %v2282
        %v2306 = vpop.xlane.xlu0 %2305
        %2307 = vmax.xlane.f32.xlu0 %v2283
        %v2308 = vpop.xlane.xlu0 %2307
        %2309 = vmax.xlane.f32.xlu0 %v2284
        %v2310 = vpop.xlane.xlu0 %2309
        %2311 = vmax.xlane.f32.xlu0 %v2285
        %v2312 = vpop.xlane.xlu0 %2311
        %2313 = vmax.xlane.f32.xlu0 %v2286
        %v2314 = vpop.xlane.xlu0 %2313
        %2315 = vmax.xlane.f32.xlu0 %v2287
        %v2316 = vpop.xlane.xlu0 %2315
        %2317 = vmax.xlane.f32.xlu0 %v2288
        %v2318 = vpop.xlane.xlu0 %2317
        %2319 = vmax.xlane.f32.xlu0 %v2289
        %v2320 = vpop.xlane.xlu0 %2319
        %2321 = vmax.xlane.f32.xlu0 %v2290
        %v2322 = vpop.xlane.xlu0 %2321
        %v2323 = vsub.f32 %v2275, %v2292
        %v2324 = vsub.f32 %v2276, %v2294
        %v2325 = vsub.f32 %v2277, %v2296
        %v2326 = vsub.f32 %v2278, %v2298
        %v2327 = vsub.f32 %v2279, %v2300
        %v2328 = vsub.f32 %v2280, %v2302
        %v2329 = vsub.f32 %v2281, %v2304
        %v2330 = vsub.f32 %v2282, %v2306
        %v2331 = vsub.f32 %v2283, %v2308
        %v2332 = vsub.f32 %v2284, %v2310
        %v2333 = vsub.f32 %v2285, %v2312
        %v2334 = vsub.f32 %v2286, %v2314
        %v2335 = vsub.f32 %v2287, %v2316
        %v2336 = vsub.f32 %v2288, %v2318
        %v2337 = vsub.f32 %v2289, %v2320
        %v2338 = vsub.f32 %v2290, %v2322
        %v2339 = vmul.f32 %v2323, 1.442695
        %v2340 = vpow.pop %v2339
        %v2341 = vmul.f32 %v2324, 1.442695
        %v2342 = vpow.pop %v2341
        %v2343 = vmul.f32 %v2325, 1.442695
        %v2344 = vpow.pop %v2343
        %v2345 = vmul.f32 %v2326, 1.442695
        %v2346 = vpow.pop %v2345
        %v2347 = vmul.f32 %v2327, 1.442695
        %v2348 = vpow.pop %v2347
        %v2349 = vmul.f32 %v2328, 1.442695
        %v2350 = vpow.pop %v2349
        %v2351 = vmul.f32 %v2329, 1.442695
        %v2352 = vpow.pop %v2351
        %v2353 = vmul.f32 %v2330, 1.442695
        %v2354 = vpow.pop %v2353
        %v2355 = vmul.f32 %v2331, 1.442695
        %v2356 = vpow.pop %v2355
        %v2357 = vmul.f32 %v2332, 1.442695
        %v2358 = vpow.pop %v2357
        %v2359 = vmul.f32 %v2333, 1.442695
        %v2360 = vpow.pop %v2359
        %v2361 = vmul.f32 %v2334, 1.442695
        %v2362 = vpow.pop %v2361
        %v2363 = vmul.f32 %v2335, 1.442695
        %v2364 = vpow.pop %v2363
        %v2365 = vmul.f32 %v2336, 1.442695
        %v2366 = vpow.pop %v2365
        %v2367 = vmul.f32 %v2337, 1.442695
        %v2368 = vpow.pop %v2367
        %v2369 = vmul.f32 %v2338, 1.442695
        %v2370 = vpow.pop %v2369
        %2371 = vadd.xlane.f32.xlu0 %v2340
        %v2372 = vpop.xlane.xlu0 %2371
        %2373 = vadd.xlane.f32.xlu0 %v2342
        %v2374 = vpop.xlane.xlu0 %2373
        %2375 = vadd.xlane.f32.xlu0 %v2344
        %v2376 = vpop.xlane.xlu0 %2375
        %2377 = vadd.xlane.f32.xlu0 %v2346
        %v2378 = vpop.xlane.xlu0 %2377
        %2379 = vadd.xlane.f32.xlu0 %v2348
        %v2380 = vpop.xlane.xlu0 %2379
        %2381 = vadd.xlane.f32.xlu0 %v2350
        %v2382 = vpop.xlane.xlu0 %2381
        %2383 = vadd.xlane.f32.xlu0 %v2352
        %v2384 = vpop.xlane.xlu0 %2383
        %2385 = vadd.xlane.f32.xlu0 %v2354
        %v2386 = vpop.xlane.xlu0 %2385
        %2387 = vadd.xlane.f32.xlu0 %v2356
        %v2388 = vpop.xlane.xlu0 %2387
        %2389 = vadd.xlane.f32.xlu0 %v2358
        %v2390 = vpop.xlane.xlu0 %2389
        %2391 = vadd.xlane.f32.xlu0 %v2360
        %v2392 = vpop.xlane.xlu0 %2391
        %2393 = vadd.xlane.f32.xlu0 %v2362
        %v2394 = vpop.xlane.xlu0 %2393
        %2395 = vadd.xlane.f32.xlu0 %v2364
        %v2396 = vpop.xlane.xlu0 %2395
        %2397 = vadd.xlane.f32.xlu0 %v2366
        %v2398 = vpop.xlane.xlu0 %2397
        %2399 = vadd.xlane.f32.xlu0 %v2368
        %v2400 = vpop.xlane.xlu0 %2399
        %2401 = vadd.xlane.f32.xlu0 %v2370
        %v2402 = vpop.xlane.xlu0 %2401
        %v2403 = vrcp.pop %v2372
        %v2404 = vrcp.pop %v2374
        %v2405 = vrcp.pop %v2376
        %v2406 = vrcp.pop %v2378
        %v2407 = vrcp.pop %v2380
        %v2408 = vrcp.pop %v2382
        %v2409 = vrcp.pop %v2384
        %v2410 = vrcp.pop %v2386
        %v2411 = vrcp.pop %v2388
        %v2412 = vrcp.pop %v2390
        %v2413 = vrcp.pop %v2392
        %v2414 = vrcp.pop %v2394
        %v2415 = vrcp.pop %v2396
        %v2416 = vrcp.pop %v2398
        %v2417 = vrcp.pop %v2400
        %v2418 = vrcp.pop %v2402
        %v2419 = vmul.f32 %v2340, %v2403
        %v2420 = vmul.f32 %v2342, %v2404
        %v2421 = vmul.f32 %v2344, %v2405
        %v2422 = vmul.f32 %v2346, %v2406
        %v2423 = vmul.f32 %v2348, %v2407
        %v2424 = vmul.f32 %v2350, %v2408
        %v2425 = vmul.f32 %v2352, %v2409
        %v2426 = vmul.f32 %v2354, %v2410
        %v2427 = vmul.f32 %v2356, %v2411
        %v2428 = vmul.f32 %v2358, %v2412
        %v2429 = vmul.f32 %v2360, %v2413
        %v2430 = vmul.f32 %v2362, %v2414
        %v2431 = vmul.f32 %v2364, %v2415
        %v2432 = vmul.f32 %v2366, %v2416
        %v2433 = vmul.f32 %v2368, %v2417
        %v2434 = vmul.f32 %v2370, %v2418
        %v2435 = vpack.c.bf16 %v2420, %v2419
        %v2436 = vpack.c.bf16 %v2422, %v2421
        %v2437 = vpack.c.bf16 %v2424, %v2423
        %v2438 = vpack.c.bf16 %v2426, %v2425
        %v2439 = vpack.c.bf16 %v2428, %v2427
        %v2440 = vpack.c.bf16 %v2430, %v2429
        %v2441 = vpack.c.bf16 %v2432, %v2431
        %v2442 = vpack.c.bf16 %v2434, %v2433
        %2451 = vrot.lane.b32.xlu0 %v1593, 64
        %v2452 = vpop.permute.xlu0 %2451
        %2453 = vrot.lane.b32.xlu0 %v1596, 64
        %v2454 = vpop.permute.xlu0 %2453
        %2455 = vrot.lane.b32.xlu0 %v1599, 64
        %v2456 = vpop.permute.xlu0 %2455
        %2457 = vrot.lane.b32.xlu0 %v1602, 64
        %v2458 = vpop.permute.xlu0 %2457
        %2459 = vrot.lane.b32.xlu0 %v1605, 64
        %v2460 = vpop.permute.xlu0 %2459
        %2461 = vrot.lane.b32.xlu0 %v1608, 64
        %v2462 = vpop.permute.xlu0 %2461
        %2463 = vrot.lane.b32.xlu0 %v1611, 64
        %v2464 = vpop.permute.xlu0 %2463
        %2465 = vrot.lane.b32.xlu0 %v1614, 64
        %v2466 = vpop.permute.xlu0 %2465
        %2475 = vmatprep.subr.bf16.mxu0 0
        %2476 = vmatpush1.bf16.msra.mxu0 %v2452
        %2477 = vmatprep.subr.bf16.mxu0 0
        %2478 = vmatpush1.bf16.msra.mxu0 %v2454
        %2479 = vmatprep.subr.bf16.mxu0 0
        %2480 = vmatpush1.bf16.msra.mxu0 %v2456
        %2481 = vmatprep.subr.bf16.mxu0 0
        %2482 = vmatpush1.bf16.msra.mxu0 %v2458
        %2483 = vmatprep.subr.bf16.mxu0 0
        %2484 = vmatpush1.bf16.msra.mxu0 %v2460
        %2485 = vmatprep.subr.bf16.mxu0 0
        %2486 = vmatpush1.bf16.msra.mxu0 %v2462
        %2487 = vmatprep.subr.bf16.mxu0 0
        %2488 = vmatpush1.bf16.msra.mxu0 %v2464
        %2489 = vmatprep.subr.bf16.mxu0 0
        %2490 = vmatpush1.bf16.msra.mxu0 %v2466
        %2491 = vmatprep.subr.bf16.mxu0 0
        %2492 = vmatpush1.bf16.msra.mxu0 0
        %2493 = vmatprep.subr.bf16.mxu0 0
        %2494 = vmatpush1.bf16.msra.mxu0 0
        %2495 = vmatprep.subr.bf16.mxu0 0
        %2496 = vmatpush1.bf16.msra.mxu0 0
        %2497 = vmatprep.subr.bf16.mxu0 0
        %2498 = vmatpush1.bf16.msra.mxu0 0
        %2499 = vmatprep.subr.bf16.mxu0 0
        %2500 = vmatpush1.bf16.msra.mxu0 0
        %2501 = vmatprep.subr.bf16.mxu0 0
        %2502 = vmatpush1.bf16.msra.mxu0 0
        %2503 = vmatprep.subr.bf16.mxu0 0
        %2504 = vmatpush1.bf16.msra.mxu0 0
        %2505 = vmatprep.subr.bf16.mxu0 0
        %2506 = vmatpush1.bf16.msra.mxu0 0
        %2507 = vmatprep.mubr.bf16.mxu0 0
        %2508 = vmatmul.mubr.bf16.gmra.mrb[0].mxu0 %v2435
        %v2509 = vpop.f32.mrb[0].mxu0
        %v2510 = vadd.f32 0.0, %v2509
        %v2511 = vpop.f32.mrb[0].mxu0
        %v2512 = vpop.f32.mrb[0].mxu0
        %v2513 = vadd.f32 0.0, %v2512
        %v2514 = vpop.f32.mrb[0].mxu0
        %2515 = vmatprep.mubr.bf16.mxu0 0
        %2516 = vmatmul.mubr.bf16.gmra.mrb[0].mxu0 %v2436
        %v2517 = vpop.f32.mrb[0].mxu0
        %v2518 = vadd.f32 0.0, %v2517
        %v2519 = vpop.f32.mrb[0].mxu0
        %v2520 = vpop.f32.mrb[0].mxu0
        %v2521 = vadd.f32 0.0, %v2520
        %v2522 = vpop.f32.mrb[0].mxu0
        %2523 = vmatprep.mubr.bf16.mxu0 0
        %2524 = vmatmul.mubr.bf16.gmra.mrb[0].mxu0 %v2437
        %v2525 = vpop.f32.mrb[0].mxu0
        %v2526 = vadd.f32 0.0, %v2525
        %v2527 = vpop.f32.mrb[0].mxu0
        %v2528 = vpop.f32.mrb[0].mxu0
        %v2529 = vadd.f32 0.0, %v2528
        %v2530 = vpop.f32.mrb[0].mxu0
        %2531 = vmatprep.mubr.bf16.mxu0 0
        %2532 = vmatmul.mubr.bf16.gmra.mrb[0].mxu0 %v2438
        %v2533 = vpop.f32.mrb[0].mxu0
        %v2534 = vadd.f32 0.0, %v2533
        %v2535 = vpop.f32.mrb[0].mxu0
        %v2536 = vpop.f32.mrb[0].mxu0
        %v2537 = vadd.f32 0.0, %v2536
        %v2538 = vpop.f32.mrb[0].mxu0
        %2539 = vmatprep.mubr.bf16.mxu0 0
        %2540 = vmatmul.mubr.bf16.gmra.mrb[0].mxu0 %v2439
        %v2541 = vpop.f32.mrb[0].mxu0
        %v2542 = vadd.f32 0.0, %v2541
        %v2543 = vpop.f32.mrb[0].mxu0
        %v2544 = vpop.f32.mrb[0].mxu0
        %v2545 = vadd.f32 0.0, %v2544
        %v2546 = vpop.f32.mrb[0].mxu0
        %2547 = vmatprep.mubr.bf16.mxu0 0
        %2548 = vmatmul.mubr.bf16.gmra.mrb[0].mxu0 %v2440
        %v2549 = vpop.f32.mrb[0].mxu0
        %v2550 = vadd.f32 0.0, %v2549
        %v2551 = vpop.f32.mrb[0].mxu0
        %v2552 = vpop.f32.mrb[0].mxu0
        %v2553 = vadd.f32 0.0, %v2552
        %v2554 = vpop.f32.mrb[0].mxu0
        %2555 = vmatprep.mubr.bf16.mxu0 0
        %2556 = vmatmul.mubr.bf16.gmra.mrb[0].mxu0 %v2441
        %v2557 = vpop.f32.mrb[0].mxu0
        %v2558 = vadd.f32 0.0, %v2557
        %v2559 = vpop.f32.mrb[0].mxu0
        %v2560 = vpop.f32.mrb[0].mxu0
        %v2561 = vadd.f32 0.0, %v2560
        %v2562 = vpop.f32.mrb[0].mxu0
        %2563 = vmatprep.mubr.bf16.mxu0 0
        %2564 = vmatmul.mubr.bf16.gmra.mrb[0].mxu0 %v2442
        %v2565 = vpop.f32.mrb[0].mxu0
        %v2566 = vadd.f32 0.0, %v2565
        %v2567 = vpop.f32.mrb[0].mxu0
        %v2568 = vpop.f32.mrb[0].mxu0
        %v2569 = vadd.f32 0.0, %v2568
        %v2570 = vpop.f32.mrb[0].mxu0
        %2571 = vdwg.mxu0
        %2588 = vrot.lane.b32.xlu0 %v2510, 64
        %v2589 = vpop.permute.xlu0 %2588
        %2590 = vrot.lane.b32.xlu0 %v2513, 64
        %v2591 = vpop.permute.xlu0 %2590
        %2592 = vrot.lane.b32.xlu0 %v2518, 64
        %v2593 = vpop.permute.xlu0 %2592
        %2594 = vrot.lane.b32.xlu0 %v2521, 64
        %v2595 = vpop.permute.xlu0 %2594
        %2596 = vrot.lane.b32.xlu0 %v2526, 64
        %v2597 = vpop.permute.xlu0 %2596
        %2598 = vrot.lane.b32.xlu0 %v2529, 64
        %v2599 = vpop.permute.xlu0 %2598
        %2600 = vrot.lane.b32.xlu0 %v2534, 64
        %v2601 = vpop.permute.xlu0 %2600
        %2602 = vrot.lane.b32.xlu0 %v2537, 64
        %v2603 = vpop.permute.xlu0 %2602
        %2604 = vrot.lane.b32.xlu0 %v2542, 64
        %v2605 = vpop.permute.xlu0 %2604
        %2606 = vrot.lane.b32.xlu0 %v2545, 64
        %v2607 = vpop.permute.xlu0 %2606
        %2608 = vrot.lane.b32.xlu0 %v2550, 64
        %v2609 = vpop.permute.xlu0 %2608
        %2610 = vrot.lane.b32.xlu0 %v2553, 64
        %v2611 = vpop.permute.xlu0 %2610
        %2612 = vrot.lane.b32.xlu0 %v2558, 64
        %v2613 = vpop.permute.xlu0 %2612
        %2614 = vrot.lane.b32.xlu0 %v2561, 64
        %v2615 = vpop.permute.xlu0 %2614
        %2616 = vrot.lane.b32.xlu0 %v2566, 64
        %v2617 = vpop.permute.xlu0 %2616
        %2618 = vrot.lane.b32.xlu0 %v2569, 64
        %v2619 = vpop.permute.xlu0 %2618
        %v2636 = vsel %vm1639, %v2004, %v2589
        %v2637 = vsel %vm1639, %v2007, %v2591
        %v2638 = vsel %vm1639, %v2012, %v2593
        %v2639 = vsel %vm1639, %v2015, %v2595
        %v2640 = vsel %vm1639, %v2020, %v2597
        %v2641 = vsel %vm1639, %v2023, %v2599
        %v2642 = vsel %vm1639, %v2028, %v2601
        %v2643 = vsel %vm1639, %v2031, %v2603
        %v2644 = vsel %vm1639, %v2036, %v2605
        %v2645 = vsel %vm1639, %v2039, %v2607
        %v2646 = vsel %vm1639, %v2044, %v2609
        %v2647 = vsel %vm1639, %v2047, %v2611
        %v2648 = vsel %vm1639, %v2052, %v2613
        %v2649 = vsel %vm1639, %v2055, %v2615
        %v2650 = vsel %vm1639, %v2060, %v2617
        %v2651 = vsel %vm1639, %v2063, %v2619
        %v2653 = vsel %vm1639, %v1615, 0
        %v2656 = vsel %vm1639, %v1618, 0
        %v2659 = vsel %vm1639, %v1621, 0
        %v2662 = vsel %vm1639, %v1624, 0
        %v2665 = vsel %vm1639, %v1627, 0
        %v2668 = vsel %vm1639, %v1630, 0
        %v2671 = vsel %vm1639, %v1633, 0
        %v2674 = vsel %vm1639, %v1636, 0
        %v2677 = vsel %vm1639, %v1616, 0
        %v2680 = vsel %vm1639, %v1619, 0
        %v2683 = vsel %vm1639, %v1622, 0
        %v2686 = vsel %vm1639, %v1625, 0
        %v2689 = vsel %vm1639, %v1628, 0
        %v2692 = vsel %vm1639, %v1631, 0
        %v2695 = vsel %vm1639, %v1634, 0
        %v2698 = vsel %vm1639, %v1637, 0
        %2700 = vmatprep.subr.bf16.mxu0 0
        %2701 = vmatpush1.bf16.xpose.msra.mxu0 %v2677
        %2702 = vmatprep.subr.bf16.mxu0 0
        %2703 = vmatpush1.bf16.xpose.msra.mxu0 %v2680
        %2704 = vmatprep.subr.bf16.mxu0 0
        %2705 = vmatpush1.bf16.xpose.msra.mxu0 %v2683
        %2706 = vmatprep.subr.bf16.mxu0 0
        %2707 = vmatpush1.bf16.xpose.msra.mxu0 %v2686
        %2708 = vmatprep.subr.bf16.mxu0 0
        %2709 = vmatpush1.bf16.xpose.msra.mxu0 %v2689
        %2710 = vmatprep.subr.bf16.mxu0 0
        %2711 = vmatpush1.bf16.xpose.msra.mxu0 %v2692
        %2712 = vmatprep.subr.bf16.mxu0 0
        %2713 = vmatpush1.bf16.xpose.msra.mxu0 %v2695
        %2714 = vmatprep.subr.bf16.mxu0 0
        %2715 = vmatpush1.bf16.xpose.msra.mxu0 %v2698
        %2716 = vmatprep.subr.bf16.mxu0 0
        %2717 = vmatpush1.bf16.xpose.msra.mxu0 0
        %2718 = vmatprep.subr.bf16.mxu0 0
        %2719 = vmatpush1.bf16.xpose.msra.mxu0 0
        %2720 = vmatprep.subr.bf16.mxu0 0
        %2721 = vmatpush1.bf16.xpose.msra.mxu0 0
        %2722 = vmatprep.subr.bf16.mxu0 0
        %2723 = vmatpush1.bf16.xpose.msra.mxu0 0
        %2724 = vmatprep.subr.bf16.mxu0 0
        %2725 = vmatpush1.bf16.xpose.msra.mxu0 0
        %2726 = vmatprep.subr.bf16.mxu0 0
        %2727 = vmatpush1.bf16.xpose.msra.mxu0 0
        %2728 = vmatprep.subr.bf16.mxu0 0
        %2729 = vmatpush1.bf16.xpose.msra.mxu0 0
        %2730 = vmatprep.subr.bf16.mxu0 0
        %2731 = vmatpush1.bf16.xpose.msra.mxu0 0
        %2732 = vmatprep.mubr.bf16.mxu0 0
        %2733 = vmatmul.mubr.bf16.gmra.mrb[0].mxu0 %v2653
        %v2734 = vpop.f32.mrb[0].mxu0
        %v2735 = vadd.f32 0.0, %v2734
        %v2736 = vpop.f32.mrb[0].mxu0
        %v2737 = vpop.f32.mrb[0].mxu0
        %v2738 = vadd.f32 0.0, %v2737
        %v2739 = vpop.f32.mrb[0].mxu0
        %2740 = vmatprep.mubr.bf16.mxu0 0
        %2741 = vmatmul.mubr.bf16.gmra.mrb[0].mxu0 %v2656
        %v2742 = vpop.f32.mrb[0].mxu0
        %v2743 = vadd.f32 0.0, %v2742
        %v2744 = vpop.f32.mrb[0].mxu0
        %v2745 = vpop.f32.mrb[0].mxu0
        %v2746 = vadd.f32 0.0, %v2745
        %v2747 = vpop.f32.mrb[0].mxu0
        %2748 = vmatprep.mubr.bf16.mxu0 0
        %2749 = vmatmul.mubr.bf16.gmra.mrb[0].mxu0 %v2659
        %v2750 = vpop.f32.mrb[0].mxu0
        %v2751 = vadd.f32 0.0, %v2750
        %v2752 = vpop.f32.mrb[0].mxu0
        %v2753 = vpop.f32.mrb[0].mxu0
        %v2754 = vadd.f32 0.0, %v2753
        %v2755 = vpop.f32.mrb[0].mxu0
        %2756 = vmatprep.mubr.bf16.mxu0 0
        %2757 = vmatmul.mubr.bf16.gmra.mrb[0].mxu0 %v2662
        %v2758 = vpop.f32.mrb[0].mxu0
        %v2759 = vadd.f32 0.0, %v2758
        %v2760 = vpop.f32.mrb[0].mxu0
        %v2761 = vpop.f32.mrb[0].mxu0
        %v2762 = vadd.f32 0.0, %v2761
        %v2763 = vpop.f32.mrb[0].mxu0
        %2764 = vmatprep.mubr.bf16.mxu0 0
        %2765 = vmatmul.mubr.bf16.gmra.mrb[0].mxu0 %v2665
        %v2766 = vpop.f32.mrb[0].mxu0
        %v2767 = vadd.f32 0.0, %v2766
        %v2768 = vpop.f32.mrb[0].mxu0
        %v2769 = vpop.f32.mrb[0].mxu0
        %v2770 = vadd.f32 0.0, %v2769
        %v2771 = vpop.f32.mrb[0].mxu0
        %2772 = vmatprep.mubr.bf16.mxu0 0
        %2773 = vmatmul.mubr.bf16.gmra.mrb[0].mxu0 %v2668
        %v2774 = vpop.f32.mrb[0].mxu0
        %v2775 = vadd.f32 0.0, %v2774
        %v2776 = vpop.f32.mrb[0].mxu0
        %v2777 = vpop.f32.mrb[0].mxu0
        %v2778 = vadd.f32 0.0, %v2777
        %v2779 = vpop.f32.mrb[0].mxu0
        %2780 = vmatprep.mubr.bf16.mxu0 0
        %2781 = vmatmul.mubr.bf16.gmra.mrb[0].mxu0 %v2671
        %v2782 = vpop.f32.mrb[0].mxu0
        %v2783 = vadd.f32 0.0, %v2782
        %v2784 = vpop.f32.mrb[0].mxu0
        %v2785 = vpop.f32.mrb[0].mxu0
        %v2786 = vadd.f32 0.0, %v2785
        %v2787 = vpop.f32.mrb[0].mxu0
        %2788 = vmatprep.mubr.bf16.mxu0 0
        %2789 = vmatmul.mubr.bf16.gmra.mrb[0].mxu0 %v2674
        %v2790 = vpop.f32.mrb[0].mxu0
        %v2791 = vadd.f32 0.0, %v2790
        %v2792 = vpop.f32.mrb[0].mxu0
        %v2793 = vpop.f32.mrb[0].mxu0
        %v2794 = vadd.f32 0.0, %v2793
        %v2795 = vpop.f32.mrb[0].mxu0
        %2796 = vdwg.mxu0
        %v2797 = vmul.f32 %v2735, 0.125
        %v2798 = vmul.f32 %v2738, 0.125
        %v2799 = vmul.f32 %v2743, 0.125
        %v2800 = vmul.f32 %v2746, 0.125
        %v2801 = vmul.f32 %v2751, 0.125
        %v2802 = vmul.f32 %v2754, 0.125
        %v2803 = vmul.f32 %v2759, 0.125
        %v2804 = vmul.f32 %v2762, 0.125
        %v2805 = vmul.f32 %v2767, 0.125
        %v2806 = vmul.f32 %v2770, 0.125
        %v2807 = vmul.f32 %v2775, 0.125
        %v2808 = vmul.f32 %v2778, 0.125
        %v2809 = vmul.f32 %v2783, 0.125
        %v2810 = vmul.f32 %v2786, 0.125
        %v2811 = vmul.f32 %v2791, 0.125
        %v2812 = vmul.f32 %v2794, 0.125
        %v2813 = vsel %vm597, %v2797, -1e+30
        %v2814 = vsel %vm598, %v2798, -1e+30
        %v2815 = vsel %vm599, %v2799, -1e+30
        %v2816 = vsel %vm600, %v2800, -1e+30
        %v2817 = vsel %vm601, %v2801, -1e+30
        %v2818 = vsel %vm602, %v2802, -1e+30
        %v2819 = vsel %vm603, %v2803, -1e+30
        %v2820 = vsel %vm604, %v2804, -1e+30
        %v2821 = vsel %vm605, %v2805, -1e+30
        %v2822 = vsel %vm606, %v2806, -1e+30
        %v2823 = vsel %vm607, %v2807, -1e+30
        %v2824 = vsel %vm608, %v2808, -1e+30
        %v2825 = vsel %vm609, %v2809, -1e+30
        %v2826 = vsel %vm610, %v2810, -1e+30
        %v2827 = vsel %vm611, %v2811, -1e+30
        %v2828 = vsel %vm612, %v2812, -1e+30
        %2829 = vmax.xlane.f32.xlu0 %v2813
        %v2830 = vpop.xlane.xlu0 %2829
        %2831 = vmax.xlane.f32.xlu0 %v2814
        %v2832 = vpop.xlane.xlu0 %2831
        %2833 = vmax.xlane.f32.xlu0 %v2815
        %v2834 = vpop.xlane.xlu0 %2833
        %2835 = vmax.xlane.f32.xlu0 %v2816
        %v2836 = vpop.xlane.xlu0 %2835
        %2837 = vmax.xlane.f32.xlu0 %v2817
        %v2838 = vpop.xlane.xlu0 %2837
        %2839 = vmax.xlane.f32.xlu0 %v2818
        %v2840 = vpop.xlane.xlu0 %2839
        %2841 = vmax.xlane.f32.xlu0 %v2819
        %v2842 = vpop.xlane.xlu0 %2841
        %2843 = vmax.xlane.f32.xlu0 %v2820
        %v2844 = vpop.xlane.xlu0 %2843
        %2845 = vmax.xlane.f32.xlu0 %v2821
        %v2846 = vpop.xlane.xlu0 %2845
        %2847 = vmax.xlane.f32.xlu0 %v2822
        %v2848 = vpop.xlane.xlu0 %2847
        %2849 = vmax.xlane.f32.xlu0 %v2823
        %v2850 = vpop.xlane.xlu0 %2849
        %2851 = vmax.xlane.f32.xlu0 %v2824
        %v2852 = vpop.xlane.xlu0 %2851
        %2853 = vmax.xlane.f32.xlu0 %v2825
        %v2854 = vpop.xlane.xlu0 %2853
        %2855 = vmax.xlane.f32.xlu0 %v2826
        %v2856 = vpop.xlane.xlu0 %2855
        %2857 = vmax.xlane.f32.xlu0 %v2827
        %v2858 = vpop.xlane.xlu0 %2857
        %2859 = vmax.xlane.f32.xlu0 %v2828
        %v2860 = vpop.xlane.xlu0 %2859
        %v2861 = vsub.f32 %v2813, %v2830
        %v2862 = vsub.f32 %v2814, %v2832
        %v2863 = vsub.f32 %v2815, %v2834
        %v2864 = vsub.f32 %v2816, %v2836
        %v2865 = vsub.f32 %v2817, %v2838
        %v2866 = vsub.f32 %v2818, %v2840
        %v2867 = vsub.f32 %v2819, %v2842
        %v2868 = vsub.f32 %v2820, %v2844
        %v2869 = vsub.f32 %v2821, %v2846
        %v2870 = vsub.f32 %v2822, %v2848
        %v2871 = vsub.f32 %v2823, %v2850
        %v2872 = vsub.f32 %v2824, %v2852
        %v2873 = vsub.f32 %v2825, %v2854
        %v2874 = vsub.f32 %v2826, %v2856
        %v2875 = vsub.f32 %v2827, %v2858
        %v2876 = vsub.f32 %v2828, %v2860
        %v2877 = vmul.f32 %v2861, 1.442695
        %v2878 = vpow.pop %v2877
        %v2879 = vmul.f32 %v2862, 1.442695
        %v2880 = vpow.pop %v2879
        %v2881 = vmul.f32 %v2863, 1.442695
        %v2882 = vpow.pop %v2881
        %v2883 = vmul.f32 %v2864, 1.442695
        %v2884 = vpow.pop %v2883
        %v2885 = vmul.f32 %v2865, 1.442695
        %v2886 = vpow.pop %v2885
        %v2887 = vmul.f32 %v2866, 1.442695
        %v2888 = vpow.pop %v2887
        %v2889 = vmul.f32 %v2867, 1.442695
        %v2890 = vpow.pop %v2889
        %v2891 = vmul.f32 %v2868, 1.442695
        %v2892 = vpow.pop %v2891
        %v2893 = vmul.f32 %v2869, 1.442695
        %v2894 = vpow.pop %v2893
        %v2895 = vmul.f32 %v2870, 1.442695
        %v2896 = vpow.pop %v2895
        %v2897 = vmul.f32 %v2871, 1.442695
        %v2898 = vpow.pop %v2897
        %v2899 = vmul.f32 %v2872, 1.442695
        %v2900 = vpow.pop %v2899
        %v2901 = vmul.f32 %v2873, 1.442695
        %v2902 = vpow.pop %v2901
        %v2903 = vmul.f32 %v2874, 1.442695
        %v2904 = vpow.pop %v2903
        %v2905 = vmul.f32 %v2875, 1.442695
        %v2906 = vpow.pop %v2905
        %v2907 = vmul.f32 %v2876, 1.442695
        %v2908 = vpow.pop %v2907
        %2909 = vadd.xlane.f32.xlu0 %v2878
        %v2910 = vpop.xlane.xlu0 %2909
        %2911 = vadd.xlane.f32.xlu0 %v2880
        %v2912 = vpop.xlane.xlu0 %2911
        %2913 = vadd.xlane.f32.xlu0 %v2882
        %v2914 = vpop.xlane.xlu0 %2913
        %2915 = vadd.xlane.f32.xlu0 %v2884
        %v2916 = vpop.xlane.xlu0 %2915
        %2917 = vadd.xlane.f32.xlu0 %v2886
        %v2918 = vpop.xlane.xlu0 %2917
        %2919 = vadd.xlane.f32.xlu0 %v2888
        %v2920 = vpop.xlane.xlu0 %2919
        %2921 = vadd.xlane.f32.xlu0 %v2890
        %v2922 = vpop.xlane.xlu0 %2921
        %2923 = vadd.xlane.f32.xlu0 %v2892
        %v2924 = vpop.xlane.xlu0 %2923
        %2925 = vadd.xlane.f32.xlu0 %v2894
        %v2926 = vpop.xlane.xlu0 %2925
        %2927 = vadd.xlane.f32.xlu0 %v2896
        %v2928 = vpop.xlane.xlu0 %2927
        %2929 = vadd.xlane.f32.xlu0 %v2898
        %v2930 = vpop.xlane.xlu0 %2929
        %2931 = vadd.xlane.f32.xlu0 %v2900
        %v2932 = vpop.xlane.xlu0 %2931
        %2933 = vadd.xlane.f32.xlu0 %v2902
        %v2934 = vpop.xlane.xlu0 %2933
        %2935 = vadd.xlane.f32.xlu0 %v2904
        %v2936 = vpop.xlane.xlu0 %2935
        %2937 = vadd.xlane.f32.xlu0 %v2906
        %v2938 = vpop.xlane.xlu0 %2937
        %2939 = vadd.xlane.f32.xlu0 %v2908
        %v2940 = vpop.xlane.xlu0 %2939
        %v2941 = vrcp.pop %v2910
        %v2942 = vrcp.pop %v2912
        %v2943 = vrcp.pop %v2914
        %v2944 = vrcp.pop %v2916
        %v2945 = vrcp.pop %v2918
        %v2946 = vrcp.pop %v2920
        %v2947 = vrcp.pop %v2922
        %v2948 = vrcp.pop %v2924
        %v2949 = vrcp.pop %v2926
        %v2950 = vrcp.pop %v2928
        %v2951 = vrcp.pop %v2930
        %v2952 = vrcp.pop %v2932
        %v2953 = vrcp.pop %v2934
        %v2954 = vrcp.pop %v2936
        %v2955 = vrcp.pop %v2938
        %v2956 = vrcp.pop %v2940
        %v2957 = vmul.f32 %v2878, %v2941
        %v2958 = vmul.f32 %v2880, %v2942
        %v2959 = vmul.f32 %v2882, %v2943
        %v2960 = vmul.f32 %v2884, %v2944
        %v2961 = vmul.f32 %v2886, %v2945
        %v2962 = vmul.f32 %v2888, %v2946
        %v2963 = vmul.f32 %v2890, %v2947
        %v2964 = vmul.f32 %v2892, %v2948
        %v2965 = vmul.f32 %v2894, %v2949
        %v2966 = vmul.f32 %v2896, %v2950
        %v2967 = vmul.f32 %v2898, %v2951
        %v2968 = vmul.f32 %v2900, %v2952
        %v2969 = vmul.f32 %v2902, %v2953
        %v2970 = vmul.f32 %v2904, %v2954
        %v2971 = vmul.f32 %v2906, %v2955
        %v2972 = vmul.f32 %v2908, %v2956
        %v2973 = vpack.c.bf16 %v2958, %v2957
        %v2974 = vpack.c.bf16 %v2960, %v2959
        %v2975 = vpack.c.bf16 %v2962, %v2961
        %v2976 = vpack.c.bf16 %v2964, %v2963
        %v2977 = vpack.c.bf16 %v2966, %v2965
        %v2978 = vpack.c.bf16 %v2968, %v2967
        %v2979 = vpack.c.bf16 %v2970, %v2969
        %v2980 = vpack.c.bf16 %v2972, %v2971
        %2981 = vmatprep.subr.bf16.mxu0 0
        %2982 = vmatpush1.bf16.msra.mxu0 %v1617
        %2983 = vmatprep.subr.bf16.mxu0 0
        %2984 = vmatpush1.bf16.msra.mxu0 %v1620
        %2985 = vmatprep.subr.bf16.mxu0 0
        %2986 = vmatpush1.bf16.msra.mxu0 %v1623
        %2987 = vmatprep.subr.bf16.mxu0 0
        %2988 = vmatpush1.bf16.msra.mxu0 %v1626
        %2989 = vmatprep.subr.bf16.mxu0 0
        %2990 = vmatpush1.bf16.msra.mxu0 %v1629
        %2991 = vmatprep.subr.bf16.mxu0 0
        %2992 = vmatpush1.bf16.msra.mxu0 %v1632
        %2993 = vmatprep.subr.bf16.mxu0 0
        %2994 = vmatpush1.bf16.msra.mxu0 %v1635
        %2995 = vmatprep.subr.bf16.mxu0 0
        %2996 = vmatpush1.bf16.msra.mxu0 %v1638
        %2997 = vmatprep.subr.bf16.mxu0 0
        %2998 = vmatpush1.bf16.msra.mxu0 0
        %2999 = vmatprep.subr.bf16.mxu0 0
        %3000 = vmatpush1.bf16.msra.mxu0 0
        %3001 = vmatprep.subr.bf16.mxu0 0
        %3002 = vmatpush1.bf16.msra.mxu0 0
        %3003 = vmatprep.subr.bf16.mxu0 0
        %3004 = vmatpush1.bf16.msra.mxu0 0
        %3005 = vmatprep.subr.bf16.mxu0 0
        %3006 = vmatpush1.bf16.msra.mxu0 0
        %3007 = vmatprep.subr.bf16.mxu0 0
        %3008 = vmatpush1.bf16.msra.mxu0 0
        %3009 = vmatprep.subr.bf16.mxu0 0
        %3010 = vmatpush1.bf16.msra.mxu0 0
        %3011 = vmatprep.subr.bf16.mxu0 0
        %3012 = vmatpush1.bf16.msra.mxu0 0
        %3013 = vmatprep.mubr.bf16.mxu0 0
        %3014 = vmatmul.mubr.bf16.gmra.mrb[0].mxu0 %v2973
        %v3015 = vpop.f32.mrb[0].mxu0
        %v3016 = vadd.f32 0.0, %v3015
        %v3017 = vpop.f32.mrb[0].mxu0
        %v3018 = vpop.f32.mrb[0].mxu0
        %v3019 = vadd.f32 0.0, %v3018
        %v3020 = vpop.f32.mrb[0].mxu0
        %3021 = vmatprep.mubr.bf16.mxu0 0
        %3022 = vmatmul.mubr.bf16.gmra.mrb[0].mxu0 %v2974
        %v3023 = vpop.f32.mrb[0].mxu0
        %v3024 = vadd.f32 0.0, %v3023
        %v3025 = vpop.f32.mrb[0].mxu0
        %v3026 = vpop.f32.mrb[0].mxu0
        %v3027 = vadd.f32 0.0, %v3026
        %v3028 = vpop.f32.mrb[0].mxu0
        %3029 = vmatprep.mubr.bf16.mxu0 0
        %3030 = vmatmul.mubr.bf16.gmra.mrb[0].mxu0 %v2975
        %v3031 = vpop.f32.mrb[0].mxu0
        %v3032 = vadd.f32 0.0, %v3031
        %v3033 = vpop.f32.mrb[0].mxu0
        %v3034 = vpop.f32.mrb[0].mxu0
        %v3035 = vadd.f32 0.0, %v3034
        %v3036 = vpop.f32.mrb[0].mxu0
        %3037 = vmatprep.mubr.bf16.mxu0 0
        %3038 = vmatmul.mubr.bf16.gmra.mrb[0].mxu0 %v2976
        %v3039 = vpop.f32.mrb[0].mxu0
        %v3040 = vadd.f32 0.0, %v3039
        %v3041 = vpop.f32.mrb[0].mxu0
        %v3042 = vpop.f32.mrb[0].mxu0
        %v3043 = vadd.f32 0.0, %v3042
        %v3044 = vpop.f32.mrb[0].mxu0
        %3045 = vmatprep.mubr.bf16.mxu0 0
        %3046 = vmatmul.mubr.bf16.gmra.mrb[0].mxu0 %v2977
        %v3047 = vpop.f32.mrb[0].mxu0
        %v3048 = vadd.f32 0.0, %v3047
        %v3049 = vpop.f32.mrb[0].mxu0
        %v3050 = vpop.f32.mrb[0].mxu0
        %v3051 = vadd.f32 0.0, %v3050
        %v3052 = vpop.f32.mrb[0].mxu0
        %3053 = vmatprep.mubr.bf16.mxu0 0
        %3054 = vmatmul.mubr.bf16.gmra.mrb[0].mxu0 %v2978
        %v3055 = vpop.f32.mrb[0].mxu0
        %v3056 = vadd.f32 0.0, %v3055
        %v3057 = vpop.f32.mrb[0].mxu0
        %v3058 = vpop.f32.mrb[0].mxu0
        %v3059 = vadd.f32 0.0, %v3058
        %v3060 = vpop.f32.mrb[0].mxu0
        %3061 = vmatprep.mubr.bf16.mxu0 0
        %3062 = vmatmul.mubr.bf16.gmra.mrb[0].mxu0 %v2979
        %v3063 = vpop.f32.mrb[0].mxu0
        %v3064 = vadd.f32 0.0, %v3063
        %v3065 = vpop.f32.mrb[0].mxu0
        %v3066 = vpop.f32.mrb[0].mxu0
        %v3067 = vadd.f32 0.0, %v3066
        %v3068 = vpop.f32.mrb[0].mxu0
        %3069 = vmatprep.mubr.bf16.mxu0 0
        %3070 = vmatmul.mubr.bf16.gmra.mrb[0].mxu0 %v2980
        %v3071 = vpop.f32.mrb[0].mxu0
        %v3072 = vadd.f32 0.0, %v3071
        %v3073 = vpop.f32.mrb[0].mxu0
        %v3074 = vpop.f32.mrb[0].mxu0
        %v3075 = vadd.f32 0.0, %v3074
        %v3076 = vpop.f32.mrb[0].mxu0
        %3077 = vdwg.mxu0
        %3086 = vrot.lane.b32.xlu0 %v1615, 64
        %v3087 = vpop.permute.xlu0 %3086
        %3088 = vrot.lane.b32.xlu0 %v1618, 64
        %v3089 = vpop.permute.xlu0 %3088
        %3090 = vrot.lane.b32.xlu0 %v1621, 64
        %v3091 = vpop.permute.xlu0 %3090
        %3092 = vrot.lane.b32.xlu0 %v1624, 64
        %v3093 = vpop.permute.xlu0 %3092
        %3094 = vrot.lane.b32.xlu0 %v1627, 64
        %v3095 = vpop.permute.xlu0 %3094
        %3096 = vrot.lane.b32.xlu0 %v1630, 64
        %v3097 = vpop.permute.xlu0 %3096
        %3098 = vrot.lane.b32.xlu0 %v1633, 64
        %v3099 = vpop.permute.xlu0 %3098
        %3100 = vrot.lane.b32.xlu0 %v1636, 64
        %v3101 = vpop.permute.xlu0 %3100
        %3110 = vrot.lane.b32.xlu0 %v1616, 64
        %v3111 = vpop.permute.xlu0 %3110
        %3112 = vrot.lane.b32.xlu0 %v1619, 64
        %v3113 = vpop.permute.xlu0 %3112
        %3114 = vrot.lane.b32.xlu0 %v1622, 64
        %v3115 = vpop.permute.xlu0 %3114
        %3116 = vrot.lane.b32.xlu0 %v1625, 64
        %v3117 = vpop.permute.xlu0 %3116
        %3118 = vrot.lane.b32.xlu0 %v1628, 64
        %v3119 = vpop.permute.xlu0 %3118
        %3120 = vrot.lane.b32.xlu0 %v1631, 64
        %v3121 = vpop.permute.xlu0 %3120
        %3122 = vrot.lane.b32.xlu0 %v1634, 64
        %v3123 = vpop.permute.xlu0 %3122
        %3124 = vrot.lane.b32.xlu0 %v1637, 64
        %v3125 = vpop.permute.xlu0 %3124
        %v3127 = vsel %vm1639, %v3087, 0
        %v3130 = vsel %vm1639, %v3089, 0
        %v3133 = vsel %vm1639, %v3091, 0
        %v3136 = vsel %vm1639, %v3093, 0
        %v3139 = vsel %vm1639, %v3095, 0
        %v3142 = vsel %vm1639, %v3097, 0
        %v3145 = vsel %vm1639, %v3099, 0
        %v3148 = vsel %vm1639, %v3101, 0
        %v3151 = vsel %vm1639, %v3111, 0
        %v3154 = vsel %vm1639, %v3113, 0
        %v3157 = vsel %vm1639, %v3115, 0
        %v3160 = vsel %vm1639, %v3117, 0
        %v3163 = vsel %vm1639, %v3119, 0
        %v3166 = vsel %vm1639, %v3121, 0
        %v3169 = vsel %vm1639, %v3123, 0
        %v3172 = vsel %vm1639, %v3125, 0
        %3174 = vmatprep.subr.bf16.mxu0 0
        %3175 = vmatpush1.bf16.xpose.msra.mxu0 %v3151
        %3176 = vmatprep.subr.bf16.mxu0 0
        %3177 = vmatpush1.bf16.xpose.msra.mxu0 %v3154
        %3178 = vmatprep.subr.bf16.mxu0 0
        %3179 = vmatpush1.bf16.xpose.msra.mxu0 %v3157
        %3180 = vmatprep.subr.bf16.mxu0 0
        %3181 = vmatpush1.bf16.xpose.msra.mxu0 %v3160
        %3182 = vmatprep.subr.bf16.mxu0 0
        %3183 = vmatpush1.bf16.xpose.msra.mxu0 %v3163
        %3184 = vmatprep.subr.bf16.mxu0 0
        %3185 = vmatpush1.bf16.xpose.msra.mxu0 %v3166
        %3186 = vmatprep.subr.bf16.mxu0 0
        %3187 = vmatpush1.bf16.xpose.msra.mxu0 %v3169
        %3188 = vmatprep.subr.bf16.mxu0 0
        %3189 = vmatpush1.bf16.xpose.msra.mxu0 %v3172
        %3190 = vmatprep.subr.bf16.mxu0 0
        %3191 = vmatpush1.bf16.xpose.msra.mxu0 0
        %3192 = vmatprep.subr.bf16.mxu0 0
        %3193 = vmatpush1.bf16.xpose.msra.mxu0 0
        %3194 = vmatprep.subr.bf16.mxu0 0
        %3195 = vmatpush1.bf16.xpose.msra.mxu0 0
        %3196 = vmatprep.subr.bf16.mxu0 0
        %3197 = vmatpush1.bf16.xpose.msra.mxu0 0
        %3198 = vmatprep.subr.bf16.mxu0 0
        %3199 = vmatpush1.bf16.xpose.msra.mxu0 0
        %3200 = vmatprep.subr.bf16.mxu0 0
        %3201 = vmatpush1.bf16.xpose.msra.mxu0 0
        %3202 = vmatprep.subr.bf16.mxu0 0
        %3203 = vmatpush1.bf16.xpose.msra.mxu0 0
        %3204 = vmatprep.subr.bf16.mxu0 0
        %3205 = vmatpush1.bf16.xpose.msra.mxu0 0
        %3206 = vmatprep.mubr.bf16.mxu0 0
        %3207 = vmatmul.mubr.bf16.gmra.mrb[0].mxu0 %v3127
        %v3208 = vpop.f32.mrb[0].mxu0
        %v3209 = vadd.f32 0.0, %v3208
        %v3210 = vpop.f32.mrb[0].mxu0
        %v3211 = vpop.f32.mrb[0].mxu0
        %v3212 = vadd.f32 0.0, %v3211
        %v3213 = vpop.f32.mrb[0].mxu0
        %3214 = vmatprep.mubr.bf16.mxu0 0
        %3215 = vmatmul.mubr.bf16.gmra.mrb[0].mxu0 %v3130
        %v3216 = vpop.f32.mrb[0].mxu0
        %v3217 = vadd.f32 0.0, %v3216
        %v3218 = vpop.f32.mrb[0].mxu0
        %v3219 = vpop.f32.mrb[0].mxu0
        %v3220 = vadd.f32 0.0, %v3219
        %v3221 = vpop.f32.mrb[0].mxu0
        %3222 = vmatprep.mubr.bf16.mxu0 0
        %3223 = vmatmul.mubr.bf16.gmra.mrb[0].mxu0 %v3133
        %v3224 = vpop.f32.mrb[0].mxu0
        %v3225 = vadd.f32 0.0, %v3224
        %v3226 = vpop.f32.mrb[0].mxu0
        %v3227 = vpop.f32.mrb[0].mxu0
        %v3228 = vadd.f32 0.0, %v3227
        %v3229 = vpop.f32.mrb[0].mxu0
        %3230 = vmatprep.mubr.bf16.mxu0 0
        %3231 = vmatmul.mubr.bf16.gmra.mrb[0].mxu0 %v3136
        %v3232 = vpop.f32.mrb[0].mxu0
        %v3233 = vadd.f32 0.0, %v3232
        %v3234 = vpop.f32.mrb[0].mxu0
        %v3235 = vpop.f32.mrb[0].mxu0
        %v3236 = vadd.f32 0.0, %v3235
        %v3237 = vpop.f32.mrb[0].mxu0
        %3238 = vmatprep.mubr.bf16.mxu0 0
        %3239 = vmatmul.mubr.bf16.gmra.mrb[0].mxu0 %v3139
        %v3240 = vpop.f32.mrb[0].mxu0
        %v3241 = vadd.f32 0.0, %v3240
        %v3242 = vpop.f32.mrb[0].mxu0
        %v3243 = vpop.f32.mrb[0].mxu0
        %v3244 = vadd.f32 0.0, %v3243
        %v3245 = vpop.f32.mrb[0].mxu0
        %3246 = vmatprep.mubr.bf16.mxu0 0
        %3247 = vmatmul.mubr.bf16.gmra.mrb[0].mxu0 %v3142
        %v3248 = vpop.f32.mrb[0].mxu0
        %v3249 = vadd.f32 0.0, %v3248
        %v3250 = vpop.f32.mrb[0].mxu0
        %v3251 = vpop.f32.mrb[0].mxu0
        %v3252 = vadd.f32 0.0, %v3251
        %v3253 = vpop.f32.mrb[0].mxu0
        %3254 = vmatprep.mubr.bf16.mxu0 0
        %3255 = vmatmul.mubr.bf16.gmra.mrb[0].mxu0 %v3145
        %v3256 = vpop.f32.mrb[0].mxu0
        %v3257 = vadd.f32 0.0, %v3256
        %v3258 = vpop.f32.mrb[0].mxu0
        %v3259 = vpop.f32.mrb[0].mxu0
        %v3260 = vadd.f32 0.0, %v3259
        %v3261 = vpop.f32.mrb[0].mxu0
        %3262 = vmatprep.mubr.bf16.mxu0 0
        %3263 = vmatmul.mubr.bf16.gmra.mrb[0].mxu0 %v3148
        %v3264 = vpop.f32.mrb[0].mxu0
        %v3265 = vadd.f32 0.0, %v3264
        %v3266 = vpop.f32.mrb[0].mxu0
        %v3267 = vpop.f32.mrb[0].mxu0
        %v3268 = vadd.f32 0.0, %v3267
        %v3269 = vpop.f32.mrb[0].mxu0
        %3270 = vdwg.mxu0
        %v3271 = vmul.f32 %v3209, 0.125
        %v3272 = vmul.f32 %v3212, 0.125
        %v3273 = vmul.f32 %v3217, 0.125
        %v3274 = vmul.f32 %v3220, 0.125
        %v3275 = vmul.f32 %v3225, 0.125
        %v3276 = vmul.f32 %v3228, 0.125
        %v3277 = vmul.f32 %v3233, 0.125
        %v3278 = vmul.f32 %v3236, 0.125
        %v3279 = vmul.f32 %v3241, 0.125
        %v3280 = vmul.f32 %v3244, 0.125
        %v3281 = vmul.f32 %v3249, 0.125
        %v3282 = vmul.f32 %v3252, 0.125
        %v3283 = vmul.f32 %v3257, 0.125
        %v3284 = vmul.f32 %v3260, 0.125
        %v3285 = vmul.f32 %v3265, 0.125
        %v3286 = vmul.f32 %v3268, 0.125
        %v3287 = vsel %vm597, %v3271, -1e+30
        %v3288 = vsel %vm598, %v3272, -1e+30
        %v3289 = vsel %vm599, %v3273, -1e+30
        %v3290 = vsel %vm600, %v3274, -1e+30
        %v3291 = vsel %vm601, %v3275, -1e+30
        %v3292 = vsel %vm602, %v3276, -1e+30
        %v3293 = vsel %vm603, %v3277, -1e+30
        %v3294 = vsel %vm604, %v3278, -1e+30
        %v3295 = vsel %vm605, %v3279, -1e+30
        %v3296 = vsel %vm606, %v3280, -1e+30
        %v3297 = vsel %vm607, %v3281, -1e+30
        %v3298 = vsel %vm608, %v3282, -1e+30
        %v3299 = vsel %vm609, %v3283, -1e+30
        %v3300 = vsel %vm610, %v3284, -1e+30
        %v3301 = vsel %vm611, %v3285, -1e+30
        %v3302 = vsel %vm612, %v3286, -1e+30
        %3303 = vmax.xlane.f32.xlu0 %v3287
        %v3304 = vpop.xlane.xlu0 %3303
        %3305 = vmax.xlane.f32.xlu0 %v3288
        %v3306 = vpop.xlane.xlu0 %3305
        %3307 = vmax.xlane.f32.xlu0 %v3289
        %v3308 = vpop.xlane.xlu0 %3307
        %3309 = vmax.xlane.f32.xlu0 %v3290
        %v3310 = vpop.xlane.xlu0 %3309
        %3311 = vmax.xlane.f32.xlu0 %v3291
        %v3312 = vpop.xlane.xlu0 %3311
        %3313 = vmax.xlane.f32.xlu0 %v3292
        %v3314 = vpop.xlane.xlu0 %3313
        %3315 = vmax.xlane.f32.xlu0 %v3293
        %v3316 = vpop.xlane.xlu0 %3315
        %3317 = vmax.xlane.f32.xlu0 %v3294
        %v3318 = vpop.xlane.xlu0 %3317
        %3319 = vmax.xlane.f32.xlu0 %v3295
        %v3320 = vpop.xlane.xlu0 %3319
        %3321 = vmax.xlane.f32.xlu0 %v3296
        %v3322 = vpop.xlane.xlu0 %3321
        %3323 = vmax.xlane.f32.xlu0 %v3297
        %v3324 = vpop.xlane.xlu0 %3323
        %3325 = vmax.xlane.f32.xlu0 %v3298
        %v3326 = vpop.xlane.xlu0 %3325
        %3327 = vmax.xlane.f32.xlu0 %v3299
        %v3328 = vpop.xlane.xlu0 %3327
        %3329 = vmax.xlane.f32.xlu0 %v3300
        %v3330 = vpop.xlane.xlu0 %3329
        %3331 = vmax.xlane.f32.xlu0 %v3301
        %v3332 = vpop.xlane.xlu0 %3331
        %3333 = vmax.xlane.f32.xlu0 %v3302
        %v3334 = vpop.xlane.xlu0 %3333
        %v3335 = vsub.f32 %v3287, %v3304
        %v3336 = vsub.f32 %v3288, %v3306
        %v3337 = vsub.f32 %v3289, %v3308
        %v3338 = vsub.f32 %v3290, %v3310
        %v3339 = vsub.f32 %v3291, %v3312
        %v3340 = vsub.f32 %v3292, %v3314
        %v3341 = vsub.f32 %v3293, %v3316
        %v3342 = vsub.f32 %v3294, %v3318
        %v3343 = vsub.f32 %v3295, %v3320
        %v3344 = vsub.f32 %v3296, %v3322
        %v3345 = vsub.f32 %v3297, %v3324
        %v3346 = vsub.f32 %v3298, %v3326
        %v3347 = vsub.f32 %v3299, %v3328
        %v3348 = vsub.f32 %v3300, %v3330
        %v3349 = vsub.f32 %v3301, %v3332
        %v3350 = vsub.f32 %v3302, %v3334
        %v3351 = vmul.f32 %v3335, 1.442695
        %v3352 = vpow.pop %v3351
        %v3353 = vmul.f32 %v3336, 1.442695
        %v3354 = vpow.pop %v3353
        %v3355 = vmul.f32 %v3337, 1.442695
        %v3356 = vpow.pop %v3355
        %v3357 = vmul.f32 %v3338, 1.442695
        %v3358 = vpow.pop %v3357
        %v3359 = vmul.f32 %v3339, 1.442695
        %v3360 = vpow.pop %v3359
        %v3361 = vmul.f32 %v3340, 1.442695
        %v3362 = vpow.pop %v3361
        %v3363 = vmul.f32 %v3341, 1.442695
        %v3364 = vpow.pop %v3363
        %v3365 = vmul.f32 %v3342, 1.442695
        %v3366 = vpow.pop %v3365
        %v3367 = vmul.f32 %v3343, 1.442695
        %v3368 = vpow.pop %v3367
        %v3369 = vmul.f32 %v3344, 1.442695
        %v3370 = vpow.pop %v3369
        %v3371 = vmul.f32 %v3345, 1.442695
        %v3372 = vpow.pop %v3371
        %v3373 = vmul.f32 %v3346, 1.442695
        %v3374 = vpow.pop %v3373
        %v3375 = vmul.f32 %v3347, 1.442695
        %v3376 = vpow.pop %v3375
        %v3377 = vmul.f32 %v3348, 1.442695
        %v3378 = vpow.pop %v3377
        %v3379 = vmul.f32 %v3349, 1.442695
        %v3380 = vpow.pop %v3379
        %v3381 = vmul.f32 %v3350, 1.442695
        %v3382 = vpow.pop %v3381
        %3383 = vadd.xlane.f32.xlu0 %v3352
        %v3384 = vpop.xlane.xlu0 %3383
        %3385 = vadd.xlane.f32.xlu0 %v3354
        %v3386 = vpop.xlane.xlu0 %3385
        %3387 = vadd.xlane.f32.xlu0 %v3356
        %v3388 = vpop.xlane.xlu0 %3387
        %3389 = vadd.xlane.f32.xlu0 %v3358
        %v3390 = vpop.xlane.xlu0 %3389
        %3391 = vadd.xlane.f32.xlu0 %v3360
        %v3392 = vpop.xlane.xlu0 %3391
        %3393 = vadd.xlane.f32.xlu0 %v3362
        %v3394 = vpop.xlane.xlu0 %3393
        %3395 = vadd.xlane.f32.xlu0 %v3364
        %v3396 = vpop.xlane.xlu0 %3395
        %3397 = vadd.xlane.f32.xlu0 %v3366
        %v3398 = vpop.xlane.xlu0 %3397
        %3399 = vadd.xlane.f32.xlu0 %v3368
        %v3400 = vpop.xlane.xlu0 %3399
        %3401 = vadd.xlane.f32.xlu0 %v3370
        %v3402 = vpop.xlane.xlu0 %3401
        %3403 = vadd.xlane.f32.xlu0 %v3372
        %v3404 = vpop.xlane.xlu0 %3403
        %3405 = vadd.xlane.f32.xlu0 %v3374
        %v3406 = vpop.xlane.xlu0 %3405
        %3407 = vadd.xlane.f32.xlu0 %v3376
        %v3408 = vpop.xlane.xlu0 %3407
        %3409 = vadd.xlane.f32.xlu0 %v3378
        %v3410 = vpop.xlane.xlu0 %3409
        %3411 = vadd.xlane.f32.xlu0 %v3380
        %v3412 = vpop.xlane.xlu0 %3411
        %3413 = vadd.xlane.f32.xlu0 %v3382
        %v3414 = vpop.xlane.xlu0 %3413
        %v3415 = vrcp.pop %v3384
        %v3416 = vrcp.pop %v3386
        %v3417 = vrcp.pop %v3388
        %v3418 = vrcp.pop %v3390
        %v3419 = vrcp.pop %v3392
        %v3420 = vrcp.pop %v3394
        %v3421 = vrcp.pop %v3396
        %v3422 = vrcp.pop %v3398
        %v3423 = vrcp.pop %v3400
        %v3424 = vrcp.pop %v3402
        %v3425 = vrcp.pop %v3404
        %v3426 = vrcp.pop %v3406
        %v3427 = vrcp.pop %v3408
        %v3428 = vrcp.pop %v3410
        %v3429 = vrcp.pop %v3412
        %v3430 = vrcp.pop %v3414
        %v3431 = vmul.f32 %v3352, %v3415
        %v3432 = vmul.f32 %v3354, %v3416
        %v3433 = vmul.f32 %v3356, %v3417
        %v3434 = vmul.f32 %v3358, %v3418
        %v3435 = vmul.f32 %v3360, %v3419
        %v3436 = vmul.f32 %v3362, %v3420
        %v3437 = vmul.f32 %v3364, %v3421
        %v3438 = vmul.f32 %v3366, %v3422
        %v3439 = vmul.f32 %v3368, %v3423
        %v3440 = vmul.f32 %v3370, %v3424
        %v3441 = vmul.f32 %v3372, %v3425
        %v3442 = vmul.f32 %v3374, %v3426
        %v3443 = vmul.f32 %v3376, %v3427
        %v3444 = vmul.f32 %v3378, %v3428
        %v3445 = vmul.f32 %v3380, %v3429
        %v3446 = vmul.f32 %v3382, %v3430
        %v3447 = vpack.c.bf16 %v3432, %v3431
        %v3448 = vpack.c.bf16 %v3434, %v3433
        %v3449 = vpack.c.bf16 %v3436, %v3435
        %v3450 = vpack.c.bf16 %v3438, %v3437
        %v3451 = vpack.c.bf16 %v3440, %v3439
        %v3452 = vpack.c.bf16 %v3442, %v3441
        %v3453 = vpack.c.bf16 %v3444, %v3443
        %v3454 = vpack.c.bf16 %v3446, %v3445
        %3463 = vrot.lane.b32.xlu0 %v1617, 64
        %v3464 = vpop.permute.xlu0 %3463
        %3465 = vrot.lane.b32.xlu0 %v1620, 64
        %v3466 = vpop.permute.xlu0 %3465
        %3467 = vrot.lane.b32.xlu0 %v1623, 64
        %v3468 = vpop.permute.xlu0 %3467
        %3469 = vrot.lane.b32.xlu0 %v1626, 64
        %v3470 = vpop.permute.xlu0 %3469
        %3471 = vrot.lane.b32.xlu0 %v1629, 64
        %v3472 = vpop.permute.xlu0 %3471
        %3473 = vrot.lane.b32.xlu0 %v1632, 64
        %v3474 = vpop.permute.xlu0 %3473
        %3475 = vrot.lane.b32.xlu0 %v1635, 64
        %v3476 = vpop.permute.xlu0 %3475
        %3477 = vrot.lane.b32.xlu0 %v1638, 64
        %v3478 = vpop.permute.xlu0 %3477
        %3487 = vmatprep.subr.bf16.mxu0 0
        %3488 = vmatpush1.bf16.msra.mxu0 %v3464
        %3489 = vmatprep.subr.bf16.mxu0 0
        %3490 = vmatpush1.bf16.msra.mxu0 %v3466
        %3491 = vmatprep.subr.bf16.mxu0 0
        %3492 = vmatpush1.bf16.msra.mxu0 %v3468
        %3493 = vmatprep.subr.bf16.mxu0 0
        %3494 = vmatpush1.bf16.msra.mxu0 %v3470
        %3495 = vmatprep.subr.bf16.mxu0 0
        %3496 = vmatpush1.bf16.msra.mxu0 %v3472
        %3497 = vmatprep.subr.bf16.mxu0 0
        %3498 = vmatpush1.bf16.msra.mxu0 %v3474
        %3499 = vmatprep.subr.bf16.mxu0 0
        %3500 = vmatpush1.bf16.msra.mxu0 %v3476
        %3501 = vmatprep.subr.bf16.mxu0 0
        %3502 = vmatpush1.bf16.msra.mxu0 %v3478
        %3503 = vmatprep.subr.bf16.mxu0 0
        %3504 = vmatpush1.bf16.msra.mxu0 0
        %3505 = vmatprep.subr.bf16.mxu0 0
        %3506 = vmatpush1.bf16.msra.mxu0 0
        %3507 = vmatprep.subr.bf16.mxu0 0
        %3508 = vmatpush1.bf16.msra.mxu0 0
        %3509 = vmatprep.subr.bf16.mxu0 0
        %3510 = vmatpush1.bf16.msra.mxu0 0
        %3511 = vmatprep.subr.bf16.mxu0 0
        %3512 = vmatpush1.bf16.msra.mxu0 0
        %3513 = vmatprep.subr.bf16.mxu0 0
        %3514 = vmatpush1.bf16.msra.mxu0 0
        %3515 = vmatprep.subr.bf16.mxu0 0
        %3516 = vmatpush1.bf16.msra.mxu0 0
        %3517 = vmatprep.subr.bf16.mxu0 0
        %3518 = vmatpush1.bf16.msra.mxu0 0
        %3519 = vmatprep.mubr.bf16.mxu0 0
        %3520 = vmatmul.mubr.bf16.gmra.mrb[0].mxu0 %v3447
        %v3521 = vpop.f32.mrb[0].mxu0
        %v3522 = vadd.f32 0.0, %v3521
        %v3523 = vpop.f32.mrb[0].mxu0
        %v3524 = vpop.f32.mrb[0].mxu0
        %v3525 = vadd.f32 0.0, %v3524
        %v3526 = vpop.f32.mrb[0].mxu0
        %3527 = vmatprep.mubr.bf16.mxu0 0
        %3528 = vmatmul.mubr.bf16.gmra.mrb[0].mxu0 %v3448
        %v3529 = vpop.f32.mrb[0].mxu0
        %v3530 = vadd.f32 0.0, %v3529
        %v3531 = vpop.f32.mrb[0].mxu0
        %v3532 = vpop.f32.mrb[0].mxu0
        %v3533 = vadd.f32 0.0, %v3532
        %v3534 = vpop.f32.mrb[0].mxu0
        %3535 = vmatprep.mubr.bf16.mxu0 0
        %3536 = vmatmul.mubr.bf16.gmra.mrb[0].mxu0 %v3449
        %v3537 = vpop.f32.mrb[0].mxu0
        %v3538 = vadd.f32 0.0, %v3537
        %v3539 = vpop.f32.mrb[0].mxu0
        %v3540 = vpop.f32.mrb[0].mxu0
        %v3541 = vadd.f32 0.0, %v3540
        %v3542 = vpop.f32.mrb[0].mxu0
        %3543 = vmatprep.mubr.bf16.mxu0 0
        %3544 = vmatmul.mubr.bf16.gmra.mrb[0].mxu0 %v3450
        %v3545 = vpop.f32.mrb[0].mxu0
        %v3546 = vadd.f32 0.0, %v3545
        %v3547 = vpop.f32.mrb[0].mxu0
        %v3548 = vpop.f32.mrb[0].mxu0
        %v3549 = vadd.f32 0.0, %v3548
        %v3550 = vpop.f32.mrb[0].mxu0
        %3551 = vmatprep.mubr.bf16.mxu0 0
        %3552 = vmatmul.mubr.bf16.gmra.mrb[0].mxu0 %v3451
        %v3553 = vpop.f32.mrb[0].mxu0
        %v3554 = vadd.f32 0.0, %v3553
        %v3555 = vpop.f32.mrb[0].mxu0
        %v3556 = vpop.f32.mrb[0].mxu0
        %v3557 = vadd.f32 0.0, %v3556
        %v3558 = vpop.f32.mrb[0].mxu0
        %3559 = vmatprep.mubr.bf16.mxu0 0
        %3560 = vmatmul.mubr.bf16.gmra.mrb[0].mxu0 %v3452
        %v3561 = vpop.f32.mrb[0].mxu0
        %v3562 = vadd.f32 0.0, %v3561
        %v3563 = vpop.f32.mrb[0].mxu0
        %v3564 = vpop.f32.mrb[0].mxu0
        %v3565 = vadd.f32 0.0, %v3564
        %v3566 = vpop.f32.mrb[0].mxu0
        %3567 = vmatprep.mubr.bf16.mxu0 0
        %3568 = vmatmul.mubr.bf16.gmra.mrb[0].mxu0 %v3453
        %v3569 = vpop.f32.mrb[0].mxu0
        %v3570 = vadd.f32 0.0, %v3569
        %v3571 = vpop.f32.mrb[0].mxu0
        %v3572 = vpop.f32.mrb[0].mxu0
        %v3573 = vadd.f32 0.0, %v3572
        %v3574 = vpop.f32.mrb[0].mxu0
        %3575 = vmatprep.mubr.bf16.mxu0 0
        %3576 = vmatmul.mubr.bf16.gmra.mrb[0].mxu0 %v3454
        %v3577 = vpop.f32.mrb[0].mxu0
        %v3578 = vadd.f32 0.0, %v3577
        %v3579 = vpop.f32.mrb[0].mxu0
        %v3580 = vpop.f32.mrb[0].mxu0
        %v3581 = vadd.f32 0.0, %v3580
        %v3582 = vpop.f32.mrb[0].mxu0
        %3583 = vdwg.mxu0
        %3600 = vrot.lane.b32.xlu0 %v3522, 64
        %v3601 = vpop.permute.xlu0 %3600
        %3602 = vrot.lane.b32.xlu0 %v3525, 64
        %v3603 = vpop.permute.xlu0 %3602
        %3604 = vrot.lane.b32.xlu0 %v3530, 64
        %v3605 = vpop.permute.xlu0 %3604
        %3606 = vrot.lane.b32.xlu0 %v3533, 64
        %v3607 = vpop.permute.xlu0 %3606
        %3608 = vrot.lane.b32.xlu0 %v3538, 64
        %v3609 = vpop.permute.xlu0 %3608
        %3610 = vrot.lane.b32.xlu0 %v3541, 64
        %v3611 = vpop.permute.xlu0 %3610
        %3612 = vrot.lane.b32.xlu0 %v3546, 64
        %v3613 = vpop.permute.xlu0 %3612
        %3614 = vrot.lane.b32.xlu0 %v3549, 64
        %v3615 = vpop.permute.xlu0 %3614
        %3616 = vrot.lane.b32.xlu0 %v3554, 64
        %v3617 = vpop.permute.xlu0 %3616
        %3618 = vrot.lane.b32.xlu0 %v3557, 64
        %v3619 = vpop.permute.xlu0 %3618
        %3620 = vrot.lane.b32.xlu0 %v3562, 64
        %v3621 = vpop.permute.xlu0 %3620
        %3622 = vrot.lane.b32.xlu0 %v3565, 64
        %v3623 = vpop.permute.xlu0 %3622
        %3624 = vrot.lane.b32.xlu0 %v3570, 64
        %v3625 = vpop.permute.xlu0 %3624
        %3626 = vrot.lane.b32.xlu0 %v3573, 64
        %v3627 = vpop.permute.xlu0 %3626
        %3628 = vrot.lane.b32.xlu0 %v3578, 64
        %v3629 = vpop.permute.xlu0 %3628
        %3630 = vrot.lane.b32.xlu0 %v3581, 64
        %v3631 = vpop.permute.xlu0 %3630
        %v3648 = vsel %vm1639, %v3016, %v3601
        %v3649 = vsel %vm1639, %v3019, %v3603
        %v3650 = vsel %vm1639, %v3024, %v3605
        %v3651 = vsel %vm1639, %v3027, %v3607
        %v3652 = vsel %vm1639, %v3032, %v3609
        %v3653 = vsel %vm1639, %v3035, %v3611
        %v3654 = vsel %vm1639, %v3040, %v3613
        %v3655 = vsel %vm1639, %v3043, %v3615
        %v3656 = vsel %vm1639, %v3048, %v3617
        %v3657 = vsel %vm1639, %v3051, %v3619
        %v3658 = vsel %vm1639, %v3056, %v3621
        %v3659 = vsel %vm1639, %v3059, %v3623
        %v3660 = vsel %vm1639, %v3064, %v3625
        %v3661 = vsel %vm1639, %v3067, %v3627
        %v3662 = vsel %vm1639, %v3072, %v3629
        %v3663 = vsel %vm1639, %v3075, %v3631
        %v3664 = vpack.c.bf16 %v2637, %v2636
        %v3665 = vpack.c.bf16 %v2639, %v2638
        %v3666 = vpack.c.bf16 %v2641, %v2640
        %v3667 = vpack.c.bf16 %v2643, %v2642
        %v3668 = vpack.c.bf16 %v2645, %v2644
        %v3669 = vpack.c.bf16 %v2647, %v2646
        %v3670 = vpack.c.bf16 %v2649, %v2648
        %v3671 = vpack.c.bf16 %v2651, %v2650
        %v3672 = vpack.c.bf16 %v3649, %v3648
        %v3673 = vpack.c.bf16 %v3651, %v3650
        %v3674 = vpack.c.bf16 %v3653, %v3652
        %v3675 = vpack.c.bf16 %v3655, %v3654
        %v3676 = vpack.c.bf16 %v3657, %v3656
        %v3677 = vpack.c.bf16 %v3659, %v3658
        %v3678 = vpack.c.bf16 %v3661, %v3660
        %v3679 = vpack.c.bf16 %v3663, %v3662
        %v3680 = vld [vmem:[#allocation10] sm:$0xf]
        %v3681 = vld [vmem:[#allocation10 + $0x4] sm:$0xf]
        %v3682 = vld [vmem:[#allocation10 + $0x8] sm:$0xf]
        %v3683 = vld [vmem:[#allocation10 + $0xc] sm:$0xf]
        %v3684 = vld [vmem:[#allocation10 + $0x10] sm:$0xf]
        %v3685 = vld [vmem:[#allocation10 + $0x14] sm:$0xf]
        %v3686 = vld [vmem:[#allocation10 + $0x18] sm:$0xf]
        %v3687 = vld [vmem:[#allocation10 + $0x1c] sm:$0xf]
        %v3688 = vld [vmem:[#allocation10 + $0x20] sm:$0xf]
        %v3689 = vld [vmem:[#allocation10 + $0x24] sm:$0xf]
        %v3690 = vld [vmem:[#allocation10 + $0x28] sm:$0xf]
        %v3691 = vld [vmem:[#allocation10 + $0x2c] sm:$0xf]
        %v3692 = vld [vmem:[#allocation10 + $0x30] sm:$0xf]
        %v3693 = vld [vmem:[#allocation10 + $0x34] sm:$0xf]
        %v3694 = vld [vmem:[#allocation10 + $0x38] sm:$0xf]
        %v3695 = vld [vmem:[#allocation10 + $0x3c] sm:$0xf]
        %v3712 = vunpack.c.l.b16 %v3680
        %v3713 = vunpack.c.l.b16 %v3681
        %v3714 = vunpack.c.l.b16 %v3682
        %v3715 = vunpack.c.l.b16 %v3683
        %v3716 = vunpack.c.l.b16 %v3684
        %v3717 = vunpack.c.l.b16 %v3685
        %v3718 = vunpack.c.l.b16 %v3686
        %v3719 = vunpack.c.l.b16 %v3687
        %v3720 = vunpack.c.l.b16 %v3688
        %v3721 = vunpack.c.l.b16 %v3689
        %v3722 = vunpack.c.l.b16 %v3690
        %v3723 = vunpack.c.l.b16 %v3691
        %v3724 = vunpack.c.l.b16 %v3692
        %v3725 = vunpack.c.l.b16 %v3693
        %v3726 = vunpack.c.l.b16 %v3694
        %v3727 = vunpack.c.l.b16 %v3695
        %v3728 = vpack.c.b16 %v3713, %v3712
        %v3729 = vpack.c.b16 %v3715, %v3714
        %v3730 = vpack.c.b16 %v3717, %v3716
        %v3731 = vpack.c.b16 %v3719, %v3718
        %v3732 = vpack.c.b16 %v3721, %v3720
        %v3733 = vpack.c.b16 %v3723, %v3722
        %v3734 = vpack.c.b16 %v3725, %v3724
        %v3735 = vpack.c.b16 %v3727, %v3726
        %3744 = vmatprep.subr.bf16.mxu0 0
        %3745 = vmatpush1.bf16.msra.mxu0 %v3728
        %3746 = vmatprep.subr.bf16.mxu0 0
        %3747 = vmatpush1.bf16.msra.mxu0 %v3729
        %3748 = vmatprep.subr.bf16.mxu0 0
        %3749 = vmatpush1.bf16.msra.mxu0 %v3730
        %3750 = vmatprep.subr.bf16.mxu0 0
        %3751 = vmatpush1.bf16.msra.mxu0 %v3731
        %3752 = vmatprep.subr.bf16.mxu0 0
        %3753 = vmatpush1.bf16.msra.mxu0 %v3732
        %3754 = vmatprep.subr.bf16.mxu0 0
        %3755 = vmatpush1.bf16.msra.mxu0 %v3733
        %3756 = vmatprep.subr.bf16.mxu0 0
        %3757 = vmatpush1.bf16.msra.mxu0 %v3734
        %3758 = vmatprep.subr.bf16.mxu0 0
        %3759 = vmatpush1.bf16.msra.mxu0 %v3735
        %3760 = vmatprep.subr.bf16.mxu0 0
        %3761 = vmatpush1.bf16.msra.mxu0 0
        %3762 = vmatprep.subr.bf16.mxu0 0
        %3763 = vmatpush1.bf16.msra.mxu0 0
        %3764 = vmatprep.subr.bf16.mxu0 0
        %3765 = vmatpush1.bf16.msra.mxu0 0
        %3766 = vmatprep.subr.bf16.mxu0 0
        %3767 = vmatpush1.bf16.msra.mxu0 0
        %3768 = vmatprep.subr.bf16.mxu0 0
        %3769 = vmatpush1.bf16.msra.mxu0 0
        %3770 = vmatprep.subr.bf16.mxu0 0
        %3771 = vmatpush1.bf16.msra.mxu0 0
        %3772 = vmatprep.subr.bf16.mxu0 0
        %3773 = vmatpush1.bf16.msra.mxu0 0
        %3774 = vmatprep.subr.bf16.mxu0 0
        %3775 = vmatpush1.bf16.msra.mxu0 0
        %3776 = vmatprep.mubr.bf16.mxu0 0
        %3777 = vmatmul.mubr.bf16.gmra.mrb[0].mxu0 %v3664
        %v3778 = vpop.f32.mrb[0].mxu0
        %v3779 = vadd.f32 0.0, %v3778
        %v3780 = vpop.f32.mrb[0].mxu0
        %v3781 = vpop.f32.mrb[0].mxu0
        %v3782 = vadd.f32 0.0, %v3781
        %v3783 = vpop.f32.mrb[0].mxu0
        %3784 = vmatprep.mubr.bf16.mxu0 0
        %3785 = vmatmul.mubr.bf16.gmra.mrb[0].mxu0 %v3665
        %v3786 = vpop.f32.mrb[0].mxu0
        %v3787 = vadd.f32 0.0, %v3786
        %v3788 = vpop.f32.mrb[0].mxu0
        %v3789 = vpop.f32.mrb[0].mxu0
        %v3790 = vadd.f32 0.0, %v3789
        %v3791 = vpop.f32.mrb[0].mxu0
        %3792 = vmatprep.mubr.bf16.mxu0 0
        %3793 = vmatmul.mubr.bf16.gmra.mrb[0].mxu0 %v3666
        %v3794 = vpop.f32.mrb[0].mxu0
        %v3795 = vadd.f32 0.0, %v3794
        %v3796 = vpop.f32.mrb[0].mxu0
        %v3797 = vpop.f32.mrb[0].mxu0
        %v3798 = vadd.f32 0.0, %v3797
        %v3799 = vpop.f32.mrb[0].mxu0
        %3800 = vmatprep.mubr.bf16.mxu0 0
        %3801 = vmatmul.mubr.bf16.gmra.mrb[0].mxu0 %v3667
        %v3802 = vpop.f32.mrb[0].mxu0
        %v3803 = vadd.f32 0.0, %v3802
        %v3804 = vpop.f32.mrb[0].mxu0
        %v3805 = vpop.f32.mrb[0].mxu0
        %v3806 = vadd.f32 0.0, %v3805
        %v3807 = vpop.f32.mrb[0].mxu0
        %3808 = vmatprep.mubr.bf16.mxu0 0
        %3809 = vmatmul.mubr.bf16.gmra.mrb[0].mxu0 %v3668
        %v3810 = vpop.f32.mrb[0].mxu0
        %v3811 = vadd.f32 0.0, %v3810
        %v3812 = vpop.f32.mrb[0].mxu0
        %v3813 = vpop.f32.mrb[0].mxu0
        %v3814 = vadd.f32 0.0, %v3813
        %v3815 = vpop.f32.mrb[0].mxu0
        %3816 = vmatprep.mubr.bf16.mxu0 0
        %3817 = vmatmul.mubr.bf16.gmra.mrb[0].mxu0 %v3669
        %v3818 = vpop.f32.mrb[0].mxu0
        %v3819 = vadd.f32 0.0, %v3818
        %v3820 = vpop.f32.mrb[0].mxu0
        %v3821 = vpop.f32.mrb[0].mxu0
        %v3822 = vadd.f32 0.0, %v3821
        %v3823 = vpop.f32.mrb[0].mxu0
        %3824 = vmatprep.mubr.bf16.mxu0 0
        %3825 = vmatmul.mubr.bf16.gmra.mrb[0].mxu0 %v3670
        %v3826 = vpop.f32.mrb[0].mxu0
        %v3827 = vadd.f32 0.0, %v3826
        %v3828 = vpop.f32.mrb[0].mxu0
        %v3829 = vpop.f32.mrb[0].mxu0
        %v3830 = vadd.f32 0.0, %v3829
        %v3831 = vpop.f32.mrb[0].mxu0
        %3832 = vmatprep.mubr.bf16.mxu0 0
        %3833 = vmatmul.mubr.bf16.gmra.mrb[0].mxu0 %v3671
        %v3834 = vpop.f32.mrb[0].mxu0
        %v3835 = vadd.f32 0.0, %v3834
        %v3836 = vpop.f32.mrb[0].mxu0
        %v3837 = vpop.f32.mrb[0].mxu0
        %v3838 = vadd.f32 0.0, %v3837
        %v3839 = vpop.f32.mrb[0].mxu0
        %3840 = vmatprep.mubr.bf16.mxu0 0
        %3841 = vmatmul.mubr.bf16.gmra.mrb[0].mxu0 %v3672
        %v3842 = vpop.f32.mrb[0].mxu0
        %v3843 = vadd.f32 0.0, %v3842
        %v3844 = vpop.f32.mrb[0].mxu0
        %v3845 = vpop.f32.mrb[0].mxu0
        %v3846 = vadd.f32 0.0, %v3845
        %v3847 = vpop.f32.mrb[0].mxu0
        %3848 = vmatprep.mubr.bf16.mxu0 0
        %3849 = vmatmul.mubr.bf16.gmra.mrb[0].mxu0 %v3673
        %v3850 = vpop.f32.mrb[0].mxu0
        %v3851 = vadd.f32 0.0, %v3850
        %v3852 = vpop.f32.mrb[0].mxu0
        %v3853 = vpop.f32.mrb[0].mxu0
        %v3854 = vadd.f32 0.0, %v3853
        %v3855 = vpop.f32.mrb[0].mxu0
        %3856 = vmatprep.mubr.bf16.mxu0 0
        %3857 = vmatmul.mubr.bf16.gmra.mrb[0].mxu0 %v3674
        %v3858 = vpop.f32.mrb[0].mxu0
        %v3859 = vadd.f32 0.0, %v3858
        %v3860 = vpop.f32.mrb[0].mxu0
        %v3861 = vpop.f32.mrb[0].mxu0
        %v3862 = vadd.f32 0.0, %v3861
        %v3863 = vpop.f32.mrb[0].mxu0
        %3864 = vmatprep.mubr.bf16.mxu0 0
        %3865 = vmatmul.mubr.bf16.gmra.mrb[0].mxu0 %v3675
        %v3866 = vpop.f32.mrb[0].mxu0
        %v3867 = vadd.f32 0.0, %v3866
        %v3868 = vpop.f32.mrb[0].mxu0
        %v3869 = vpop.f32.mrb[0].mxu0
        %v3870 = vadd.f32 0.0, %v3869
        %v3871 = vpop.f32.mrb[0].mxu0
        %3872 = vmatprep.mubr.bf16.mxu0 0
        %3873 = vmatmul.mubr.bf16.gmra.mrb[0].mxu0 %v3676
        %v3874 = vpop.f32.mrb[0].mxu0
        %v3875 = vadd.f32 0.0, %v3874
        %v3876 = vpop.f32.mrb[0].mxu0
        %v3877 = vpop.f32.mrb[0].mxu0
        %v3878 = vadd.f32 0.0, %v3877
        %v3879 = vpop.f32.mrb[0].mxu0
        %3880 = vmatprep.mubr.bf16.mxu0 0
        %3881 = vmatmul.mubr.bf16.gmra.mrb[0].mxu0 %v3677
        %v3882 = vpop.f32.mrb[0].mxu0
        %v3883 = vadd.f32 0.0, %v3882
        %v3884 = vpop.f32.mrb[0].mxu0
        %v3885 = vpop.f32.mrb[0].mxu0
        %v3886 = vadd.f32 0.0, %v3885
        %v3887 = vpop.f32.mrb[0].mxu0
        %3888 = vmatprep.mubr.bf16.mxu0 0
        %3889 = vmatmul.mubr.bf16.gmra.mrb[0].mxu0 %v3678
        %v3890 = vpop.f32.mrb[0].mxu0
        %v3891 = vadd.f32 0.0, %v3890
        %v3892 = vpop.f32.mrb[0].mxu0
        %v3893 = vpop.f32.mrb[0].mxu0
        %v3894 = vadd.f32 0.0, %v3893
        %v3895 = vpop.f32.mrb[0].mxu0
        %3896 = vmatprep.mubr.bf16.mxu0 0
        %3897 = vmatmul.mubr.bf16.gmra.mrb[0].mxu0 %v3679
        %v3898 = vpop.f32.mrb[0].mxu0
        %v3899 = vadd.f32 0.0, %v3898
        %v3900 = vpop.f32.mrb[0].mxu0
        %v3901 = vpop.f32.mrb[0].mxu0
        %v3902 = vadd.f32 0.0, %v3901
        %v3903 = vpop.f32.mrb[0].mxu0
        %3904 = vdwg.mxu0
        %v3905 = vadd.f32 %v546, %v3779
        %v3906 = vadd.f32 %v547, %v3782
        %v3907 = vadd.f32 %v548, %v3787
        %v3908 = vadd.f32 %v549, %v3790
        %v3909 = vadd.f32 %v550, %v3795
        %v3910 = vadd.f32 %v551, %v3798
        %v3911 = vadd.f32 %v552, %v3803
        %v3912 = vadd.f32 %v553, %v3806
        %v3913 = vadd.f32 %v554, %v3811
        %v3914 = vadd.f32 %v555, %v3814
        %v3915 = vadd.f32 %v556, %v3819
        %v3916 = vadd.f32 %v557, %v3822
        %v3917 = vadd.f32 %v558, %v3827
        %v3918 = vadd.f32 %v559, %v3830
        %v3919 = vadd.f32 %v560, %v3835
        %v3920 = vadd.f32 %v561, %v3838
        %v3921 = vadd.f32 %v562, %v3843
        %v3922 = vadd.f32 %v563, %v3846
        %v3923 = vadd.f32 %v564, %v3851
        %v3924 = vadd.f32 %v565, %v3854
        %v3925 = vadd.f32 %v566, %v3859
        %v3926 = vadd.f32 %v567, %v3862
        %v3927 = vadd.f32 %v568, %v3867
        %v3928 = vadd.f32 %v569, %v3870
        %v3929 = vadd.f32 %v570, %v3875
        %v3930 = vadd.f32 %v571, %v3878
        %v3931 = vadd.f32 %v572, %v3883
        %v3932 = vadd.f32 %v573, %v3886
        %v3933 = vadd.f32 %v574, %v3891
        %v3934 = vadd.f32 %v575, %v3894
        %v3935 = vadd.f32 %v576, %v3899
        %v3936 = vadd.f32 %v577, %v3902
        %v3937 = vld [vmem:[%s6] sm:$0x1]
        %v3939 = vlaneseq
        %v3940 = vshrl.u32 %v3939, 7
        %v3941 = vsub.s32 0, %v3940
        %v3942 = vrot.slane %v3937, %v3941
        %v3944 = vadd.f32 %v3905, %v3942
        %v3945 = vadd.f32 %v3906, %v3942
        %v3946 = vadd.f32 %v3907, %v3942
        %v3947 = vadd.f32 %v3908, %v3942
        %v3948 = vadd.f32 %v3909, %v3942
        %v3949 = vadd.f32 %v3910, %v3942
        %v3950 = vadd.f32 %v3911, %v3942
        %v3951 = vadd.f32 %v3912, %v3942
        %v3952 = vadd.f32 %v3913, %v3942
        %v3953 = vadd.f32 %v3914, %v3942
        %v3954 = vadd.f32 %v3915, %v3942
        %v3955 = vadd.f32 %v3916, %v3942
        %v3956 = vadd.f32 %v3917, %v3942
        %v3957 = vadd.f32 %v3918, %v3942
        %v3958 = vadd.f32 %v3919, %v3942
        %v3959 = vadd.f32 %v3920, %v3942
        %v3960 = vadd.f32 %v3921, %v3942
        %v3961 = vadd.f32 %v3922, %v3942
        %v3962 = vadd.f32 %v3923, %v3942
        %v3963 = vadd.f32 %v3924, %v3942
        %v3964 = vadd.f32 %v3925, %v3942
        %v3965 = vadd.f32 %v3926, %v3942
        %v3966 = vadd.f32 %v3927, %v3942
        %v3967 = vadd.f32 %v3928, %v3942
        %v3968 = vadd.f32 %v3929, %v3942
        %v3969 = vadd.f32 %v3930, %v3942
        %v3970 = vadd.f32 %v3931, %v3942
        %v3971 = vadd.f32 %v3932, %v3942
        %v3972 = vadd.f32 %v3933, %v3942
        %v3973 = vadd.f32 %v3934, %v3942
        %v3974 = vadd.f32 %v3935, %v3942
        %v3975 = vadd.f32 %v3936, %v3942
        %v3976 = vld [vmem:[%s7] sm:$0x1]
        %v3977 = vld [vmem:[%s8] sm:$0x1]
        %3978 = vadd.xlane.f32.xlu0 %v3944
        %v3979 = vpop.xlane.xlu0 %3978
        %3980 = vadd.xlane.f32.xlu0 %v3945
        %v3981 = vpop.xlane.xlu0 %3980
        %3982 = vadd.xlane.f32.xlu0 %v3946
        %v3983 = vpop.xlane.xlu0 %3982
        %3984 = vadd.xlane.f32.xlu0 %v3947
        %v3985 = vpop.xlane.xlu0 %3984
        %3986 = vadd.xlane.f32.xlu0 %v3948
        %v3987 = vpop.xlane.xlu0 %3986
        %3988 = vadd.xlane.f32.xlu0 %v3949
        %v3989 = vpop.xlane.xlu0 %3988
        %3990 = vadd.xlane.f32.xlu0 %v3950
        %v3991 = vpop.xlane.xlu0 %3990
        %3992 = vadd.xlane.f32.xlu0 %v3951
        %v3993 = vpop.xlane.xlu0 %3992
        %3994 = vadd.xlane.f32.xlu0 %v3952
        %v3995 = vpop.xlane.xlu0 %3994
        %3996 = vadd.xlane.f32.xlu0 %v3953
        %v3997 = vpop.xlane.xlu0 %3996
        %3998 = vadd.xlane.f32.xlu0 %v3954
        %v3999 = vpop.xlane.xlu0 %3998
        %4000 = vadd.xlane.f32.xlu0 %v3955
        %v4001 = vpop.xlane.xlu0 %4000
        %4002 = vadd.xlane.f32.xlu0 %v3956
        %v4003 = vpop.xlane.xlu0 %4002
        %4004 = vadd.xlane.f32.xlu0 %v3957
        %v4005 = vpop.xlane.xlu0 %4004
        %4006 = vadd.xlane.f32.xlu0 %v3958
        %v4007 = vpop.xlane.xlu0 %4006
        %4008 = vadd.xlane.f32.xlu0 %v3959
        %v4009 = vpop.xlane.xlu0 %4008
        %4010 = vadd.xlane.f32.xlu0 %v3960
        %v4011 = vpop.xlane.xlu0 %4010
        %4012 = vadd.xlane.f32.xlu0 %v3961
        %v4013 = vpop.xlane.xlu0 %4012
        %4014 = vadd.xlane.f32.xlu0 %v3962
        %v4015 = vpop.xlane.xlu0 %4014
        %4016 = vadd.xlane.f32.xlu0 %v3963
        %v4017 = vpop.xlane.xlu0 %4016
        %4018 = vadd.xlane.f32.xlu0 %v3964
        %v4019 = vpop.xlane.xlu0 %4018
        %4020 = vadd.xlane.f32.xlu0 %v3965
        %v4021 = vpop.xlane.xlu0 %4020
        %4022 = vadd.xlane.f32.xlu0 %v3966
        %v4023 = vpop.xlane.xlu0 %4022
        %4024 = vadd.xlane.f32.xlu0 %v3967
        %v4025 = vpop.xlane.xlu0 %4024
        %4026 = vadd.xlane.f32.xlu0 %v3968
        %v4027 = vpop.xlane.xlu0 %4026
        %4028 = vadd.xlane.f32.xlu0 %v3969
        %v4029 = vpop.xlane.xlu0 %4028
        %4030 = vadd.xlane.f32.xlu0 %v3970
        %v4031 = vpop.xlane.xlu0 %4030
        %4032 = vadd.xlane.f32.xlu0 %v3971
        %v4033 = vpop.xlane.xlu0 %4032
        %4034 = vadd.xlane.f32.xlu0 %v3972
        %v4035 = vpop.xlane.xlu0 %4034
        %4036 = vadd.xlane.f32.xlu0 %v3973
        %v4037 = vpop.xlane.xlu0 %4036
        %4038 = vadd.xlane.f32.xlu0 %v3974
        %v4039 = vpop.xlane.xlu0 %4038
        %4040 = vadd.xlane.f32.xlu0 %v3975
        %v4041 = vpop.xlane.xlu0 %4040
        %v4042 = vmul.f32 %v3979, %v679
        %v4043 = vmul.f32 %v3981, %v679
        %v4044 = vmul.f32 %v3983, %v679
        %v4045 = vmul.f32 %v3985, %v679
        %v4046 = vmul.f32 %v3987, %v679
        %v4047 = vmul.f32 %v3989, %v679
        %v4048 = vmul.f32 %v3991, %v679
        %v4049 = vmul.f32 %v3993, %v679
        %v4050 = vmul.f32 %v3995, %v679
        %v4051 = vmul.f32 %v3997, %v679
        %v4052 = vmul.f32 %v3999, %v679
        %v4053 = vmul.f32 %v4001, %v679
        %v4054 = vmul.f32 %v4003, %v679
        %v4055 = vmul.f32 %v4005, %v679
        %v4056 = vmul.f32 %v4007, %v679
        %v4057 = vmul.f32 %v4009, %v679
        %v4058 = vmul.f32 %v4011, %v679
        %v4059 = vmul.f32 %v4013, %v679
        %v4060 = vmul.f32 %v4015, %v679
        %v4061 = vmul.f32 %v4017, %v679
        %v4062 = vmul.f32 %v4019, %v679
        %v4063 = vmul.f32 %v4021, %v679
        %v4064 = vmul.f32 %v4023, %v679
        %v4065 = vmul.f32 %v4025, %v679
        %v4066 = vmul.f32 %v4027, %v679
        %v4067 = vmul.f32 %v4029, %v679
        %v4068 = vmul.f32 %v4031, %v679
        %v4069 = vmul.f32 %v4033, %v679
        %v4070 = vmul.f32 %v4035, %v679
        %v4071 = vmul.f32 %v4037, %v679
        %v4072 = vmul.f32 %v4039, %v679
        %v4073 = vmul.f32 %v4041, %v679
        %v4074 = vsub.f32 %v3944, %v4042
        %v4075 = vsub.f32 %v3945, %v4043
        %v4076 = vsub.f32 %v3946, %v4044
        %v4077 = vsub.f32 %v3947, %v4045
        %v4078 = vsub.f32 %v3948, %v4046
        %v4079 = vsub.f32 %v3949, %v4047
        %v4080 = vsub.f32 %v3950, %v4048
        %v4081 = vsub.f32 %v3951, %v4049
        %v4082 = vsub.f32 %v3952, %v4050
        %v4083 = vsub.f32 %v3953, %v4051
        %v4084 = vsub.f32 %v3954, %v4052
        %v4085 = vsub.f32 %v3955, %v4053
        %v4086 = vsub.f32 %v3956, %v4054
        %v4087 = vsub.f32 %v3957, %v4055
        %v4088 = vsub.f32 %v3958, %v4056
        %v4089 = vsub.f32 %v3959, %v4057
        %v4090 = vsub.f32 %v3960, %v4058
        %v4091 = vsub.f32 %v3961, %v4059
        %v4092 = vsub.f32 %v3962, %v4060
        %v4093 = vsub.f32 %v3963, %v4061
        %v4094 = vsub.f32 %v3964, %v4062
        %v4095 = vsub.f32 %v3965, %v4063
        %v4096 = vsub.f32 %v3966, %v4064
        %v4097 = vsub.f32 %v3967, %v4065
        %v4098 = vsub.f32 %v3968, %v4066
        %v4099 = vsub.f32 %v3969, %v4067
        %v4100 = vsub.f32 %v3970, %v4068
        %v4101 = vsub.f32 %v3971, %v4069
        %v4102 = vsub.f32 %v3972, %v4070
        %v4103 = vsub.f32 %v3973, %v4071
        %v4104 = vsub.f32 %v3974, %v4072
        %v4105 = vsub.f32 %v3975, %v4073
        %v4106 = vmul.f32 %v4074, %v4074
        %v4107 = vmul.f32 %v4075, %v4075
        %v4108 = vmul.f32 %v4076, %v4076
        %v4109 = vmul.f32 %v4077, %v4077
        %v4110 = vmul.f32 %v4078, %v4078
        %v4111 = vmul.f32 %v4079, %v4079
        %v4112 = vmul.f32 %v4080, %v4080
        %v4113 = vmul.f32 %v4081, %v4081
        %v4114 = vmul.f32 %v4082, %v4082
        %v4115 = vmul.f32 %v4083, %v4083
        %v4116 = vmul.f32 %v4084, %v4084
        %v4117 = vmul.f32 %v4085, %v4085
        %v4118 = vmul.f32 %v4086, %v4086
        %v4119 = vmul.f32 %v4087, %v4087
        %v4120 = vmul.f32 %v4088, %v4088
        %v4121 = vmul.f32 %v4089, %v4089
        %v4122 = vmul.f32 %v4090, %v4090
        %v4123 = vmul.f32 %v4091, %v4091
        %v4124 = vmul.f32 %v4092, %v4092
        %v4125 = vmul.f32 %v4093, %v4093
        %v4126 = vmul.f32 %v4094, %v4094
        %v4127 = vmul.f32 %v4095, %v4095
        %v4128 = vmul.f32 %v4096, %v4096
        %v4129 = vmul.f32 %v4097, %v4097
        %v4130 = vmul.f32 %v4098, %v4098
        %v4131 = vmul.f32 %v4099, %v4099
        %v4132 = vmul.f32 %v4100, %v4100
        %v4133 = vmul.f32 %v4101, %v4101
        %v4134 = vmul.f32 %v4102, %v4102
        %v4135 = vmul.f32 %v4103, %v4103
        %v4136 = vmul.f32 %v4104, %v4104
        %v4137 = vmul.f32 %v4105, %v4105
        %4138 = vadd.xlane.f32.xlu0 %v4106
        %v4139 = vpop.xlane.xlu0 %4138
        %4140 = vadd.xlane.f32.xlu0 %v4107
        %v4141 = vpop.xlane.xlu0 %4140
        %4142 = vadd.xlane.f32.xlu0 %v4108
        %v4143 = vpop.xlane.xlu0 %4142
        %4144 = vadd.xlane.f32.xlu0 %v4109
        %v4145 = vpop.xlane.xlu0 %4144
        %4146 = vadd.xlane.f32.xlu0 %v4110
        %v4147 = vpop.xlane.xlu0 %4146
        %4148 = vadd.xlane.f32.xlu0 %v4111
        %v4149 = vpop.xlane.xlu0 %4148
        %4150 = vadd.xlane.f32.xlu0 %v4112
        %v4151 = vpop.xlane.xlu0 %4150
        %4152 = vadd.xlane.f32.xlu0 %v4113
        %v4153 = vpop.xlane.xlu0 %4152
        %4154 = vadd.xlane.f32.xlu0 %v4114
        %v4155 = vpop.xlane.xlu0 %4154
        %4156 = vadd.xlane.f32.xlu0 %v4115
        %v4157 = vpop.xlane.xlu0 %4156
        %4158 = vadd.xlane.f32.xlu0 %v4116
        %v4159 = vpop.xlane.xlu0 %4158
        %4160 = vadd.xlane.f32.xlu0 %v4117
        %v4161 = vpop.xlane.xlu0 %4160
        %4162 = vadd.xlane.f32.xlu0 %v4118
        %v4163 = vpop.xlane.xlu0 %4162
        %4164 = vadd.xlane.f32.xlu0 %v4119
        %v4165 = vpop.xlane.xlu0 %4164
        %4166 = vadd.xlane.f32.xlu0 %v4120
        %v4167 = vpop.xlane.xlu0 %4166
        %4168 = vadd.xlane.f32.xlu0 %v4121
        %v4169 = vpop.xlane.xlu0 %4168
        %4170 = vadd.xlane.f32.xlu0 %v4122
        %v4171 = vpop.xlane.xlu0 %4170
        %4172 = vadd.xlane.f32.xlu0 %v4123
        %v4173 = vpop.xlane.xlu0 %4172
        %4174 = vadd.xlane.f32.xlu0 %v4124
        %v4175 = vpop.xlane.xlu0 %4174
        %4176 = vadd.xlane.f32.xlu0 %v4125
        %v4177 = vpop.xlane.xlu0 %4176
        %4178 = vadd.xlane.f32.xlu0 %v4126
        %v4179 = vpop.xlane.xlu0 %4178
        %4180 = vadd.xlane.f32.xlu0 %v4127
        %v4181 = vpop.xlane.xlu0 %4180
        %4182 = vadd.xlane.f32.xlu0 %v4128
        %v4183 = vpop.xlane.xlu0 %4182
        %4184 = vadd.xlane.f32.xlu0 %v4129
        %v4185 = vpop.xlane.xlu0 %4184
        %4186 = vadd.xlane.f32.xlu0 %v4130
        %v4187 = vpop.xlane.xlu0 %4186
        %4188 = vadd.xlane.f32.xlu0 %v4131
        %v4189 = vpop.xlane.xlu0 %4188
        %4190 = vadd.xlane.f32.xlu0 %v4132
        %v4191 = vpop.xlane.xlu0 %4190
        %4192 = vadd.xlane.f32.xlu0 %v4133
        %v4193 = vpop.xlane.xlu0 %4192
        %4194 = vadd.xlane.f32.xlu0 %v4134
        %v4195 = vpop.xlane.xlu0 %4194
        %4196 = vadd.xlane.f32.xlu0 %v4135
        %v4197 = vpop.xlane.xlu0 %4196
        %4198 = vadd.xlane.f32.xlu0 %v4136
        %v4199 = vpop.xlane.xlu0 %4198
        %4200 = vadd.xlane.f32.xlu0 %v4137
        %v4201 = vpop.xlane.xlu0 %4200
        %v4202 = vmul.f32 %v4139, %v679
        %v4203 = vmul.f32 %v4141, %v679
        %v4204 = vmul.f32 %v4143, %v679
        %v4205 = vmul.f32 %v4145, %v679
        %v4206 = vmul.f32 %v4147, %v679
        %v4207 = vmul.f32 %v4149, %v679
        %v4208 = vmul.f32 %v4151, %v679
        %v4209 = vmul.f32 %v4153, %v679
        %v4210 = vmul.f32 %v4155, %v679
        %v4211 = vmul.f32 %v4157, %v679
        %v4212 = vmul.f32 %v4159, %v679
        %v4213 = vmul.f32 %v4161, %v679
        %v4214 = vmul.f32 %v4163, %v679
        %v4215 = vmul.f32 %v4165, %v679
        %v4216 = vmul.f32 %v4167, %v679
        %v4217 = vmul.f32 %v4169, %v679
        %v4218 = vmul.f32 %v4171, %v679
        %v4219 = vmul.f32 %v4173, %v679
        %v4220 = vmul.f32 %v4175, %v679
        %v4221 = vmul.f32 %v4177, %v679
        %v4222 = vmul.f32 %v4179, %v679
        %v4223 = vmul.f32 %v4181, %v679
        %v4224 = vmul.f32 %v4183, %v679
        %v4225 = vmul.f32 %v4185, %v679
        %v4226 = vmul.f32 %v4187, %v679
        %v4227 = vmul.f32 %v4189, %v679
        %v4228 = vmul.f32 %v4191, %v679
        %v4229 = vmul.f32 %v4193, %v679
        %v4230 = vmul.f32 %v4195, %v679
        %v4231 = vmul.f32 %v4197, %v679
        %v4232 = vmul.f32 %v4199, %v679
        %v4233 = vmul.f32 %v4201, %v679
        %v4234 = vadd.f32 %v4202, 1e-05
        %v4235 = vadd.f32 %v4203, 1e-05
        %v4236 = vadd.f32 %v4204, 1e-05
        %v4237 = vadd.f32 %v4205, 1e-05
        %v4238 = vadd.f32 %v4206, 1e-05
        %v4239 = vadd.f32 %v4207, 1e-05
        %v4240 = vadd.f32 %v4208, 1e-05
        %v4241 = vadd.f32 %v4209, 1e-05
        %v4242 = vadd.f32 %v4210, 1e-05
        %v4243 = vadd.f32 %v4211, 1e-05
        %v4244 = vadd.f32 %v4212, 1e-05
        %v4245 = vadd.f32 %v4213, 1e-05
        %v4246 = vadd.f32 %v4214, 1e-05
        %v4247 = vadd.f32 %v4215, 1e-05
        %v4248 = vadd.f32 %v4216, 1e-05
        %v4249 = vadd.f32 %v4217, 1e-05
        %v4250 = vadd.f32 %v4218, 1e-05
        %v4251 = vadd.f32 %v4219, 1e-05
        %v4252 = vadd.f32 %v4220, 1e-05
        %v4253 = vadd.f32 %v4221, 1e-05
        %v4254 = vadd.f32 %v4222, 1e-05
        %v4255 = vadd.f32 %v4223, 1e-05
        %v4256 = vadd.f32 %v4224, 1e-05
        %v4257 = vadd.f32 %v4225, 1e-05
        %v4258 = vadd.f32 %v4226, 1e-05
        %v4259 = vadd.f32 %v4227, 1e-05
        %v4260 = vadd.f32 %v4228, 1e-05
        %v4261 = vadd.f32 %v4229, 1e-05
        %v4262 = vadd.f32 %v4230, 1e-05
        %v4263 = vadd.f32 %v4231, 1e-05
        %v4264 = vadd.f32 %v4232, 1e-05
        %v4265 = vadd.f32 %v4233, 1e-05
        %v4266 = vrsqrt.pop %v4234
        %v4267 = vrsqrt.pop %v4235
        %v4268 = vrsqrt.pop %v4236
        %v4269 = vrsqrt.pop %v4237
        %v4270 = vrsqrt.pop %v4238
        %v4271 = vrsqrt.pop %v4239
        %v4272 = vrsqrt.pop %v4240
        %v4273 = vrsqrt.pop %v4241
        %v4274 = vrsqrt.pop %v4242
        %v4275 = vrsqrt.pop %v4243
        %v4276 = vrsqrt.pop %v4244
        %v4277 = vrsqrt.pop %v4245
        %v4278 = vrsqrt.pop %v4246
        %v4279 = vrsqrt.pop %v4247
        %v4280 = vrsqrt.pop %v4248
        %v4281 = vrsqrt.pop %v4249
        %v4282 = vrsqrt.pop %v4250
        %v4283 = vrsqrt.pop %v4251
        %v4284 = vrsqrt.pop %v4252
        %v4285 = vrsqrt.pop %v4253
        %v4286 = vrsqrt.pop %v4254
        %v4287 = vrsqrt.pop %v4255
        %v4288 = vrsqrt.pop %v4256
        %v4289 = vrsqrt.pop %v4257
        %v4290 = vrsqrt.pop %v4258
        %v4291 = vrsqrt.pop %v4259
        %v4292 = vrsqrt.pop %v4260
        %v4293 = vrsqrt.pop %v4261
        %v4294 = vrsqrt.pop %v4262
        %v4295 = vrsqrt.pop %v4263
        %v4296 = vrsqrt.pop %v4264
        %v4297 = vrsqrt.pop %v4265
        %v4298 = vmul.f32 %v4074, %v4266
        %v4299 = vmul.f32 %v4075, %v4267
        %v4300 = vmul.f32 %v4076, %v4268
        %v4301 = vmul.f32 %v4077, %v4269
        %v4302 = vmul.f32 %v4078, %v4270
        %v4303 = vmul.f32 %v4079, %v4271
        %v4304 = vmul.f32 %v4080, %v4272
        %v4305 = vmul.f32 %v4081, %v4273
        %v4306 = vmul.f32 %v4082, %v4274
        %v4307 = vmul.f32 %v4083, %v4275
        %v4308 = vmul.f32 %v4084, %v4276
        %v4309 = vmul.f32 %v4085, %v4277
        %v4310 = vmul.f32 %v4086, %v4278
        %v4311 = vmul.f32 %v4087, %v4279
        %v4312 = vmul.f32 %v4088, %v4280
        %v4313 = vmul.f32 %v4089, %v4281
        %v4314 = vmul.f32 %v4090, %v4282
        %v4315 = vmul.f32 %v4091, %v4283
        %v4316 = vmul.f32 %v4092, %v4284
        %v4317 = vmul.f32 %v4093, %v4285
        %v4318 = vmul.f32 %v4094, %v4286
        %v4319 = vmul.f32 %v4095, %v4287
        %v4320 = vmul.f32 %v4096, %v4288
        %v4321 = vmul.f32 %v4097, %v4289
        %v4322 = vmul.f32 %v4098, %v4290
        %v4323 = vmul.f32 %v4099, %v4291
        %v4324 = vmul.f32 %v4100, %v4292
        %v4325 = vmul.f32 %v4101, %v4293
        %v4326 = vmul.f32 %v4102, %v4294
        %v4327 = vmul.f32 %v4103, %v4295
        %v4328 = vmul.f32 %v4104, %v4296
        %v4329 = vmul.f32 %v4105, %v4297
        %v4331 = vlaneseq
        %v4332 = vshrl.u32 %v4331, 7
        %v4333 = vsub.s32 0, %v4332
        %v4334 = vrot.slane %v3976, %v4333
        %v4336 = vmul.f32 %v4298, %v4334
        %v4337 = vmul.f32 %v4299, %v4334
        %v4338 = vmul.f32 %v4300, %v4334
        %v4339 = vmul.f32 %v4301, %v4334
        %v4340 = vmul.f32 %v4302, %v4334
        %v4341 = vmul.f32 %v4303, %v4334
        %v4342 = vmul.f32 %v4304, %v4334
        %v4343 = vmul.f32 %v4305, %v4334
        %v4344 = vmul.f32 %v4306, %v4334
        %v4345 = vmul.f32 %v4307, %v4334
        %v4346 = vmul.f32 %v4308, %v4334
        %v4347 = vmul.f32 %v4309, %v4334
        %v4348 = vmul.f32 %v4310, %v4334
        %v4349 = vmul.f32 %v4311, %v4334
        %v4350 = vmul.f32 %v4312, %v4334
        %v4351 = vmul.f32 %v4313, %v4334
        %v4352 = vmul.f32 %v4314, %v4334
        %v4353 = vmul.f32 %v4315, %v4334
        %v4354 = vmul.f32 %v4316, %v4334
        %v4355 = vmul.f32 %v4317, %v4334
        %v4356 = vmul.f32 %v4318, %v4334
        %v4357 = vmul.f32 %v4319, %v4334
        %v4358 = vmul.f32 %v4320, %v4334
        %v4359 = vmul.f32 %v4321, %v4334
        %v4360 = vmul.f32 %v4322, %v4334
        %v4361 = vmul.f32 %v4323, %v4334
        %v4362 = vmul.f32 %v4324, %v4334
        %v4363 = vmul.f32 %v4325, %v4334
        %v4364 = vmul.f32 %v4326, %v4334
        %v4365 = vmul.f32 %v4327, %v4334
        %v4366 = vmul.f32 %v4328, %v4334
        %v4367 = vmul.f32 %v4329, %v4334
        %v4369 = vlaneseq
        %v4370 = vshrl.u32 %v4369, 7
        %v4371 = vsub.s32 0, %v4370
        %v4372 = vrot.slane %v3977, %v4371
        %v4374 = vadd.f32 %v4336, %v4372
        %v4375 = vadd.f32 %v4337, %v4372
        %v4376 = vadd.f32 %v4338, %v4372
        %v4377 = vadd.f32 %v4339, %v4372
        %v4378 = vadd.f32 %v4340, %v4372
        %v4379 = vadd.f32 %v4341, %v4372
        %v4380 = vadd.f32 %v4342, %v4372
        %v4381 = vadd.f32 %v4343, %v4372
        %v4382 = vadd.f32 %v4344, %v4372
        %v4383 = vadd.f32 %v4345, %v4372
        %v4384 = vadd.f32 %v4346, %v4372
        %v4385 = vadd.f32 %v4347, %v4372
        %v4386 = vadd.f32 %v4348, %v4372
        %v4387 = vadd.f32 %v4349, %v4372
        %v4388 = vadd.f32 %v4350, %v4372
        %v4389 = vadd.f32 %v4351, %v4372
        %v4390 = vadd.f32 %v4352, %v4372
        %v4391 = vadd.f32 %v4353, %v4372
        %v4392 = vadd.f32 %v4354, %v4372
        %v4393 = vadd.f32 %v4355, %v4372
        %v4394 = vadd.f32 %v4356, %v4372
        %v4395 = vadd.f32 %v4357, %v4372
        %v4396 = vadd.f32 %v4358, %v4372
        %v4397 = vadd.f32 %v4359, %v4372
        %v4398 = vadd.f32 %v4360, %v4372
        %v4399 = vadd.f32 %v4361, %v4372
        %v4400 = vadd.f32 %v4362, %v4372
        %v4401 = vadd.f32 %v4363, %v4372
        %v4402 = vadd.f32 %v4364, %v4372
        %v4403 = vadd.f32 %v4365, %v4372
        %v4404 = vadd.f32 %v4366, %v4372
        %v4405 = vadd.f32 %v4367, %v4372
        %v4406 = vpack.c.bf16 %v4375, %v4374
        %v4407 = vpack.c.bf16 %v4377, %v4376
        %v4408 = vpack.c.bf16 %v4379, %v4378
        %v4409 = vpack.c.bf16 %v4381, %v4380
        %v4410 = vpack.c.bf16 %v4383, %v4382
        %v4411 = vpack.c.bf16 %v4385, %v4384
        %v4412 = vpack.c.bf16 %v4387, %v4386
        %v4413 = vpack.c.bf16 %v4389, %v4388
        %v4414 = vpack.c.bf16 %v4391, %v4390
        %v4415 = vpack.c.bf16 %v4393, %v4392
        %v4416 = vpack.c.bf16 %v4395, %v4394
        %v4417 = vpack.c.bf16 %v4397, %v4396
        %v4418 = vpack.c.bf16 %v4399, %v4398
        %v4419 = vpack.c.bf16 %v4401, %v4400
        %v4420 = vpack.c.bf16 %v4403, %v4402
        %v4421 = vpack.c.bf16 %v4405, %v4404
        %v4422 = vld [vmem:[#allocation11] sm:$0xff]
        %v4423 = vld [vmem:[#allocation11 + $0x8] sm:$0xff]
        %v4424 = vld [vmem:[#allocation11 + $0x10] sm:$0xff]
        %v4425 = vld [vmem:[#allocation11 + $0x18] sm:$0xff]
        %v4426 = vld [vmem:[#allocation11 + $0x20] sm:$0xff]
        %v4427 = vld [vmem:[#allocation11 + $0x28] sm:$0xff]
        %v4428 = vld [vmem:[#allocation11 + $0x30] sm:$0xff]
        %v4429 = vld [vmem:[#allocation11 + $0x38] sm:$0xff]
        %v4430 = vld [vmem:[#allocation11 + $0x40] sm:$0xff]
        %v4431 = vld [vmem:[#allocation11 + $0x48] sm:$0xff]
        %v4432 = vld [vmem:[#allocation11 + $0x50] sm:$0xff]
        %v4433 = vld [vmem:[#allocation11 + $0x58] sm:$0xff]
        %v4434 = vld [vmem:[#allocation11 + $0x60] sm:$0xff]
        %v4435 = vld [vmem:[#allocation11 + $0x68] sm:$0xff]
        %v4436 = vld [vmem:[#allocation11 + $0x70] sm:$0xff]
        %v4437 = vld [vmem:[#allocation11 + $0x78] sm:$0xff]
        %v4438 = vld [vmem:[#allocation11 + $0x80] sm:$0xff]
        %v4439 = vld [vmem:[#allocation11 + $0x88] sm:$0xff]
        %v4440 = vld [vmem:[#allocation11 + $0x90] sm:$0xff]
        %v4441 = vld [vmem:[#allocation11 + $0x98] sm:$0xff]
        %v4442 = vld [vmem:[#allocation11 + $0xa0] sm:$0xff]
        %v4443 = vld [vmem:[#allocation11 + $0xa8] sm:$0xff]
        %v4444 = vld [vmem:[#allocation11 + $0xb0] sm:$0xff]
        %v4445 = vld [vmem:[#allocation11 + $0xb8] sm:$0xff]
        %v4446 = vld [vmem:[#allocation11 + $0xc0] sm:$0xff]
        %v4447 = vld [vmem:[#allocation11 + $0xc8] sm:$0xff]
        %v4448 = vld [vmem:[#allocation11 + $0xd0] sm:$0xff]
        %v4449 = vld [vmem:[#allocation11 + $0xd8] sm:$0xff]
        %v4450 = vld [vmem:[#allocation11 + $0xe0] sm:$0xff]
        %v4451 = vld [vmem:[#allocation11 + $0xe8] sm:$0xff]
        %v4452 = vld [vmem:[#allocation11 + $0xf0] sm:$0xff]
        %v4453 = vld [vmem:[#allocation11 + $0xf8] sm:$0xff]
        %v4454 = vld [vmem:[%s10] sm:$0xf]
        %v4456 = vlaneseq
        %v4457 = vshrl.u32 %v4456, 7
        %v4458 = vsub.s32 0, %v4457
        %v4459 = vrot.slane %v4454, %v4458
        %v4460 = vlaneseq
        %v4461 = vshrl.u32 %v4460, 7
        %v4462 = vsub.s32 1, %v4461
        %v4463 = vrot.slane %v4454, %v4462
        %v4464 = vlaneseq
        %v4465 = vshrl.u32 %v4464, 7
        %v4466 = vsub.s32 2, %v4465
        %v4467 = vrot.slane %v4454, %v4466
        %v4468 = vlaneseq
        %v4469 = vshrl.u32 %v4468, 7
        %v4470 = vsub.s32 3, %v4469
        %v4471 = vrot.slane %v4454, %v4470
        %v4508 = vunpack.c.l.b16 %v4422
        %v4509 = vunpack.c.h.b16 %v4422
        %v4510 = vunpack.c.l.b16 %v4423
        %v4511 = vunpack.c.h.b16 %v4423
        %v4512 = vunpack.c.l.b16 %v4424
        %v4513 = vunpack.c.h.b16 %v4424
        %v4514 = vunpack.c.l.b16 %v4425
        %v4515 = vunpack.c.h.b16 %v4425
        %v4516 = vunpack.c.l.b16 %v4426
        %v4517 = vunpack.c.h.b16 %v4426
        %v4518 = vunpack.c.l.b16 %v4427
        %v4519 = vunpack.c.h.b16 %v4427
        %v4520 = vunpack.c.l.b16 %v4428
        %v4521 = vunpack.c.h.b16 %v4428
        %v4522 = vunpack.c.l.b16 %v4429
        %v4523 = vunpack.c.h.b16 %v4429
        %v4524 = vunpack.c.l.b16 %v4430
        %v4525 = vunpack.c.h.b16 %v4430
        %v4526 = vunpack.c.l.b16 %v4431
        %v4527 = vunpack.c.h.b16 %v4431
        %v4528 = vunpack.c.l.b16 %v4432
        %v4529 = vunpack.c.h.b16 %v4432
        %v4530 = vunpack.c.l.b16 %v4433
        %v4531 = vunpack.c.h.b16 %v4433
        %v4532 = vunpack.c.l.b16 %v4434
        %v4533 = vunpack.c.h.b16 %v4434
        %v4534 = vunpack.c.l.b16 %v4435
        %v4535 = vunpack.c.h.b16 %v4435
        %v4536 = vunpack.c.l.b16 %v4436
        %v4537 = vunpack.c.h.b16 %v4436
        %v4538 = vunpack.c.l.b16 %v4437
        %v4539 = vunpack.c.h.b16 %v4437
        %v4540 = vunpack.c.l.b16 %v4438
        %v4541 = vunpack.c.h.b16 %v4438
        %v4542 = vunpack.c.l.b16 %v4439
        %v4543 = vunpack.c.h.b16 %v4439
        %v4544 = vunpack.c.l.b16 %v4440
        %v4545 = vunpack.c.h.b16 %v4440
        %v4546 = vunpack.c.l.b16 %v4441
        %v4547 = vunpack.c.h.b16 %v4441
        %v4548 = vunpack.c.l.b16 %v4442
        %v4549 = vunpack.c.h.b16 %v4442
        %v4550 = vunpack.c.l.b16 %v4443
        %v4551 = vunpack.c.h.b16 %v4443
        %v4552 = vunpack.c.l.b16 %v4444
        %v4553 = vunpack.c.h.b16 %v4444
        %v4554 = vunpack.c.l.b16 %v4445
        %v4555 = vunpack.c.h.b16 %v4445
        %v4556 = vunpack.c.l.b16 %v4446
        %v4557 = vunpack.c.h.b16 %v4446
        %v4558 = vunpack.c.l.b16 %v4447
        %v4559 = vunpack.c.h.b16 %v4447
        %v4560 = vunpack.c.l.b16 %v4448
        %v4561 = vunpack.c.h.b16 %v4448
        %v4562 = vunpack.c.l.b16 %v4449
        %v4563 = vunpack.c.h.b16 %v4449
        %v4564 = vunpack.c.l.b16 %v4450
        %v4565 = vunpack.c.h.b16 %v4450
        %v4566 = vunpack.c.l.b16 %v4451
        %v4567 = vunpack.c.h.b16 %v4451
        %v4568 = vunpack.c.l.b16 %v4452
        %v4569 = vunpack.c.h.b16 %v4452
        %v4570 = vunpack.c.l.b16 %v4453
        %v4571 = vunpack.c.h.b16 %v4453
        %v4572 = vpack.c.b16 %v4512, %v4508
        %v4573 = vpack.c.b16 %v4513, %v4509
        %v4574 = vpack.c.b16 %v4514, %v4510
        %v4575 = vpack.c.b16 %v4515, %v4511
        %v4576 = vpack.c.b16 %v4520, %v4516
        %v4577 = vpack.c.b16 %v4521, %v4517
        %v4578 = vpack.c.b16 %v4522, %v4518
        %v4579 = vpack.c.b16 %v4523, %v4519
        %v4580 = vpack.c.b16 %v4528, %v4524
        %v4581 = vpack.c.b16 %v4529, %v4525
        %v4582 = vpack.c.b16 %v4530, %v4526
        %v4583 = vpack.c.b16 %v4531, %v4527
        %v4584 = vpack.c.b16 %v4536, %v4532
        %v4585 = vpack.c.b16 %v4537, %v4533
        %v4586 = vpack.c.b16 %v4538, %v4534
        %v4587 = vpack.c.b16 %v4539, %v4535
        %v4588 = vpack.c.b16 %v4544, %v4540
        %v4589 = vpack.c.b16 %v4545, %v4541
        %v4590 = vpack.c.b16 %v4546, %v4542
        %v4591 = vpack.c.b16 %v4547, %v4543
        %v4592 = vpack.c.b16 %v4552, %v4548
        %v4593 = vpack.c.b16 %v4553, %v4549
        %v4594 = vpack.c.b16 %v4554, %v4550
        %v4595 = vpack.c.b16 %v4555, %v4551
        %v4596 = vpack.c.b16 %v4560, %v4556
        %v4597 = vpack.c.b16 %v4561, %v4557
        %v4598 = vpack.c.b16 %v4562, %v4558
        %v4599 = vpack.c.b16 %v4563, %v4559
        %v4600 = vpack.c.b16 %v4568, %v4564
        %v4601 = vpack.c.b16 %v4569, %v4565
        %v4602 = vpack.c.b16 %v4570, %v4566
        %v4603 = vpack.c.b16 %v4571, %v4567
        %4636 = vmatprep.subr.bf16.mxu0 %v4573
        %4637 = vmatpush1.bf16.msra.mxu0 %v4572
        %4638 = vmatprep.subr.bf16.mxu0 %v4577
        %4639 = vmatpush1.bf16.msra.mxu0 %v4576
        %4640 = vmatprep.subr.bf16.mxu0 %v4581
        %4641 = vmatpush1.bf16.msra.mxu0 %v4580
        %4642 = vmatprep.subr.bf16.mxu0 %v4585
        %4643 = vmatpush1.bf16.msra.mxu0 %v4584
        %4644 = vmatprep.subr.bf16.mxu0 %v4589
        %4645 = vmatpush1.bf16.msra.mxu0 %v4588
        %4646 = vmatprep.subr.bf16.mxu0 %v4593
        %4647 = vmatpush1.bf16.msra.mxu0 %v4592
        %4648 = vmatprep.subr.bf16.mxu0 %v4597
        %4649 = vmatpush1.bf16.msra.mxu0 %v4596
        %4650 = vmatprep.subr.bf16.mxu0 %v4601
        %4651 = vmatpush1.bf16.msra.mxu0 %v4600
        %4652 = vmatprep.subr.bf16.mxu0 0
        %4653 = vmatpush1.bf16.msra.mxu0 0
        %4654 = vmatprep.subr.bf16.mxu0 0
        %4655 = vmatpush1.bf16.msra.mxu0 0
        %4656 = vmatprep.subr.bf16.mxu0 0
        %4657 = vmatpush1.bf16.msra.mxu0 0
        %4658 = vmatprep.subr.bf16.mxu0 0
        %4659 = vmatpush1.bf16.msra.mxu0 0
        %4660 = vmatprep.subr.bf16.mxu0 0
        %4661 = vmatpush1.bf16.msra.mxu0 0
        %4662 = vmatprep.subr.bf16.mxu0 0
        %4663 = vmatpush1.bf16.msra.mxu0 0
        %4664 = vmatprep.subr.bf16.mxu0 0
        %4665 = vmatpush1.bf16.msra.mxu0 0
        %4666 = vmatprep.subr.bf16.mxu0 0
        %4667 = vmatpush1.bf16.msra.mxu0 0
        %4668 = vmatprep.mubr.bf16.mxu0 0
        %4669 = vmatmul.mubr.bf16.gmra.mrb[0].mxu0 %v4406
        %v4670 = vpop.f32.mrb[0].mxu0
        %v4671 = vadd.f32 %v4459, %v4670
        %v4672 = vpop.f32.mrb[0].mxu0
        %v4673 = vadd.f32 %v4463, %v4672
        %v4674 = vpop.f32.mrb[0].mxu0
        %v4675 = vadd.f32 %v4459, %v4674
        %v4676 = vpop.f32.mrb[0].mxu0
        %v4677 = vadd.f32 %v4463, %v4676
        %4678 = vmatprep.mubr.bf16.mxu0 0
        %4679 = vmatmul.mubr.bf16.gmra.mrb[0].mxu0 %v4407
        %v4680 = vpop.f32.mrb[0].mxu0
        %v4681 = vadd.f32 %v4459, %v4680
        %v4682 = vpop.f32.mrb[0].mxu0
        %v4683 = vadd.f32 %v4463, %v4682
        %v4684 = vpop.f32.mrb[0].mxu0
        %v4685 = vadd.f32 %v4459, %v4684
        %v4686 = vpop.f32.mrb[0].mxu0
        %v4687 = vadd.f32 %v4463, %v4686
        %4688 = vmatprep.mubr.bf16.mxu0 0
        %4689 = vmatmul.mubr.bf16.gmra.mrb[0].mxu0 %v4408
        %v4690 = vpop.f32.mrb[0].mxu0
        %v4691 = vadd.f32 %v4459, %v4690
        %v4692 = vpop.f32.mrb[0].mxu0
        %v4693 = vadd.f32 %v4463, %v4692
        %v4694 = vpop.f32.mrb[0].mxu0
        %v4695 = vadd.f32 %v4459, %v4694
        %v4696 = vpop.f32.mrb[0].mxu0
        %v4697 = vadd.f32 %v4463, %v4696
        %4698 = vmatprep.mubr.bf16.mxu0 0
        %4699 = vmatmul.mubr.bf16.gmra.mrb[0].mxu0 %v4409
        %v4700 = vpop.f32.mrb[0].mxu0
        %v4701 = vadd.f32 %v4459, %v4700
        %v4702 = vpop.f32.mrb[0].mxu0
        %v4703 = vadd.f32 %v4463, %v4702
        %v4704 = vpop.f32.mrb[0].mxu0
        %v4705 = vadd.f32 %v4459, %v4704
        %v4706 = vpop.f32.mrb[0].mxu0
        %v4707 = vadd.f32 %v4463, %v4706
        %4708 = vmatprep.mubr.bf16.mxu0 0
        %4709 = vmatmul.mubr.bf16.gmra.mrb[0].mxu0 %v4410
        %v4710 = vpop.f32.mrb[0].mxu0
        %v4711 = vadd.f32 %v4459, %v4710
        %v4712 = vpop.f32.mrb[0].mxu0
        %v4713 = vadd.f32 %v4463, %v4712
        %v4714 = vpop.f32.mrb[0].mxu0
        %v4715 = vadd.f32 %v4459, %v4714
        %v4716 = vpop.f32.mrb[0].mxu0
        %v4717 = vadd.f32 %v4463, %v4716
        %4718 = vmatprep.mubr.bf16.mxu0 0
        %4719 = vmatmul.mubr.bf16.gmra.mrb[0].mxu0 %v4411
        %v4720 = vpop.f32.mrb[0].mxu0
        %v4721 = vadd.f32 %v4459, %v4720
        %v4722 = vpop.f32.mrb[0].mxu0
        %v4723 = vadd.f32 %v4463, %v4722
        %v4724 = vpop.f32.mrb[0].mxu0
        %v4725 = vadd.f32 %v4459, %v4724
        %v4726 = vpop.f32.mrb[0].mxu0
        %v4727 = vadd.f32 %v4463, %v4726
        %4728 = vmatprep.mubr.bf16.mxu0 0
        %4729 = vmatmul.mubr.bf16.gmra.mrb[0].mxu0 %v4412
        %v4730 = vpop.f32.mrb[0].mxu0
        %v4731 = vadd.f32 %v4459, %v4730
        %v4732 = vpop.f32.mrb[0].mxu0
        %v4733 = vadd.f32 %v4463, %v4732
        %v4734 = vpop.f32.mrb[0].mxu0
        %v4735 = vadd.f32 %v4459, %v4734
        %v4736 = vpop.f32.mrb[0].mxu0
        %v4737 = vadd.f32 %v4463, %v4736
        %4738 = vmatprep.mubr.bf16.mxu0 0
        %4739 = vmatmul.mubr.bf16.gmra.mrb[0].mxu0 %v4413
        %v4740 = vpop.f32.mrb[0].mxu0
        %v4741 = vadd.f32 %v4459, %v4740
        %v4742 = vpop.f32.mrb[0].mxu0
        %v4743 = vadd.f32 %v4463, %v4742
        %v4744 = vpop.f32.mrb[0].mxu0
        %v4745 = vadd.f32 %v4459, %v4744
        %v4746 = vpop.f32.mrb[0].mxu0
        %v4747 = vadd.f32 %v4463, %v4746
        %4748 = vmatprep.mubr.bf16.mxu0 0
        %4749 = vmatmul.mubr.bf16.gmra.mrb[0].mxu0 %v4414
        %v4750 = vpop.f32.mrb[0].mxu0
        %v4751 = vadd.f32 %v4459, %v4750
        %v4752 = vpop.f32.mrb[0].mxu0
        %v4753 = vadd.f32 %v4463, %v4752
        %v4754 = vpop.f32.mrb[0].mxu0
        %v4755 = vadd.f32 %v4459, %v4754
        %v4756 = vpop.f32.mrb[0].mxu0
        %v4757 = vadd.f32 %v4463, %v4756
        %4758 = vmatprep.mubr.bf16.mxu0 0
        %4759 = vmatmul.mubr.bf16.gmra.mrb[0].mxu0 %v4415
        %v4760 = vpop.f32.mrb[0].mxu0
        %v4761 = vadd.f32 %v4459, %v4760
        %v4762 = vpop.f32.mrb[0].mxu0
        %v4763 = vadd.f32 %v4463, %v4762
        %v4764 = vpop.f32.mrb[0].mxu0
        %v4765 = vadd.f32 %v4459, %v4764
        %v4766 = vpop.f32.mrb[0].mxu0
        %v4767 = vadd.f32 %v4463, %v4766
        %4768 = vmatprep.mubr.bf16.mxu0 0
        %4769 = vmatmul.mubr.bf16.gmra.mrb[0].mxu0 %v4416
        %v4770 = vpop.f32.mrb[0].mxu0
        %v4771 = vadd.f32 %v4459, %v4770
        %v4772 = vpop.f32.mrb[0].mxu0
        %v4773 = vadd.f32 %v4463, %v4772
        %v4774 = vpop.f32.mrb[0].mxu0
        %v4775 = vadd.f32 %v4459, %v4774
        %v4776 = vpop.f32.mrb[0].mxu0
        %v4777 = vadd.f32 %v4463, %v4776
        %4778 = vmatprep.mubr.bf16.mxu0 0
        %4779 = vmatmul.mubr.bf16.gmra.mrb[0].mxu0 %v4417
        %v4780 = vpop.f32.mrb[0].mxu0
        %v4781 = vadd.f32 %v4459, %v4780
        %v4782 = vpop.f32.mrb[0].mxu0
        %v4783 = vadd.f32 %v4463, %v4782
        %v4784 = vpop.f32.mrb[0].mxu0
        %v4785 = vadd.f32 %v4459, %v4784
        %v4786 = vpop.f32.mrb[0].mxu0
        %v4787 = vadd.f32 %v4463, %v4786
        %4788 = vmatprep.mubr.bf16.mxu0 0
        %4789 = vmatmul.mubr.bf16.gmra.mrb[0].mxu0 %v4418
        %v4790 = vpop.f32.mrb[0].mxu0
        %v4791 = vadd.f32 %v4459, %v4790
        %v4792 = vpop.f32.mrb[0].mxu0
        %v4793 = vadd.f32 %v4463, %v4792
        %v4794 = vpop.f32.mrb[0].mxu0
        %v4795 = vadd.f32 %v4459, %v4794
        %v4796 = vpop.f32.mrb[0].mxu0
        %v4797 = vadd.f32 %v4463, %v4796
        %4798 = vmatprep.mubr.bf16.mxu0 0
        %4799 = vmatmul.mubr.bf16.gmra.mrb[0].mxu0 %v4419
        %v4800 = vpop.f32.mrb[0].mxu0
        %v4801 = vadd.f32 %v4459, %v4800
        %v4802 = vpop.f32.mrb[0].mxu0
        %v4803 = vadd.f32 %v4463, %v4802
        %v4804 = vpop.f32.mrb[0].mxu0
        %v4805 = vadd.f32 %v4459, %v4804
        %v4806 = vpop.f32.mrb[0].mxu0
        %v4807 = vadd.f32 %v4463, %v4806
        %4808 = vmatprep.mubr.bf16.mxu0 0
        %4809 = vmatmul.mubr.bf16.gmra.mrb[0].mxu0 %v4420
        %v4810 = vpop.f32.mrb[0].mxu0
        %v4811 = vadd.f32 %v4459, %v4810
        %v4812 = vpop.f32.mrb[0].mxu0
        %v4813 = vadd.f32 %v4463, %v4812
        %v4814 = vpop.f32.mrb[0].mxu0
        %v4815 = vadd.f32 %v4459, %v4814
        %v4816 = vpop.f32.mrb[0].mxu0
        %v4817 = vadd.f32 %v4463, %v4816
        %4818 = vmatprep.mubr.bf16.mxu0 0
        %4819 = vmatmul.mubr.bf16.gmra.mrb[0].mxu0 %v4421
        %v4820 = vpop.f32.mrb[0].mxu0
        %v4821 = vadd.f32 %v4459, %v4820
        %v4822 = vpop.f32.mrb[0].mxu0
        %v4823 = vadd.f32 %v4463, %v4822
        %v4824 = vpop.f32.mrb[0].mxu0
        %v4825 = vadd.f32 %v4459, %v4824
        %v4826 = vpop.f32.mrb[0].mxu0
        %v4827 = vadd.f32 %v4463, %v4826
        %4828 = vdwg.mxu0
        %4829 = vmatprep.subr.bf16.mxu0 %v4575
        %4830 = vmatpush1.bf16.msra.mxu0 %v4574
        %4831 = vmatprep.subr.bf16.mxu0 %v4579
        %4832 = vmatpush1.bf16.msra.mxu0 %v4578
        %4833 = vmatprep.subr.bf16.mxu0 %v4583
        %4834 = vmatpush1.bf16.msra.mxu0 %v4582
        %4835 = vmatprep.subr.bf16.mxu0 %v4587
        %4836 = vmatpush1.bf16.msra.mxu0 %v4586
        %4837 = vmatprep.subr.bf16.mxu0 %v4591
        %4838 = vmatpush1.bf16.msra.mxu0 %v4590
        %4839 = vmatprep.subr.bf16.mxu0 %v4595
        %4840 = vmatpush1.bf16.msra.mxu0 %v4594
        %4841 = vmatprep.subr.bf16.mxu0 %v4599
        %4842 = vmatpush1.bf16.msra.mxu0 %v4598
        %4843 = vmatprep.subr.bf16.mxu0 %v4603
        %4844 = vmatpush1.bf16.msra.mxu0 %v4602
        %4845 = vmatprep.subr.bf16.mxu0 0
        %4846 = vmatpush1.bf16.msra.mxu0 0
        %4847 = vmatprep.subr.bf16.mxu0 0
        %4848 = vmatpush1.bf16.msra.mxu0 0
        %4849 = vmatprep.subr.bf16.mxu0 0
        %4850 = vmatpush1.bf16.msra.mxu0 0
        %4851 = vmatprep.subr.bf16.mxu0 0
        %4852 = vmatpush1.bf16.msra.mxu0 0
        %4853 = vmatprep.subr.bf16.mxu0 0
        %4854 = vmatpush1.bf16.msra.mxu0 0
        %4855 = vmatprep.subr.bf16.mxu0 0
        %4856 = vmatpush1.bf16.msra.mxu0 0
        %4857 = vmatprep.subr.bf16.mxu0 0
        %4858 = vmatpush1.bf16.msra.mxu0 0
        %4859 = vmatprep.subr.bf16.mxu0 0
        %4860 = vmatpush1.bf16.msra.mxu0 0
        %4861 = vmatprep.mubr.bf16.mxu0 0
        %4862 = vmatmul.mubr.bf16.gmra.mrb[0].mxu0 %v4406
        %v4863 = vpop.f32.mrb[0].mxu0
        %v4864 = vadd.f32 %v4467, %v4863
        %v4865 = vpop.f32.mrb[0].mxu0
        %v4866 = vadd.f32 %v4471, %v4865
        %v4867 = vpop.f32.mrb[0].mxu0
        %v4868 = vadd.f32 %v4467, %v4867
        %v4869 = vpop.f32.mrb[0].mxu0
        %v4870 = vadd.f32 %v4471, %v4869
        %4871 = vmatprep.mubr.bf16.mxu0 0
        %4872 = vmatmul.mubr.bf16.gmra.mrb[0].mxu0 %v4407
        %v4873 = vpop.f32.mrb[0].mxu0
        %v4874 = vadd.f32 %v4467, %v4873
        %v4875 = vpop.f32.mrb[0].mxu0
        %v4876 = vadd.f32 %v4471, %v4875
        %v4877 = vpop.f32.mrb[0].mxu0
        %v4878 = vadd.f32 %v4467, %v4877
        %v4879 = vpop.f32.mrb[0].mxu0
        %v4880 = vadd.f32 %v4471, %v4879
        %4881 = vmatprep.mubr.bf16.mxu0 0
        %4882 = vmatmul.mubr.bf16.gmra.mrb[0].mxu0 %v4408
        %v4883 = vpop.f32.mrb[0].mxu0
        %v4884 = vadd.f32 %v4467, %v4883
        %v4885 = vpop.f32.mrb[0].mxu0
        %v4886 = vadd.f32 %v4471, %v4885
        %v4887 = vpop.f32.mrb[0].mxu0
        %v4888 = vadd.f32 %v4467, %v4887
        %v4889 = vpop.f32.mrb[0].mxu0
        %v4890 = vadd.f32 %v4471, %v4889
        %4891 = vmatprep.mubr.bf16.mxu0 0
        %4892 = vmatmul.mubr.bf16.gmra.mrb[0].mxu0 %v4409
        %v4893 = vpop.f32.mrb[0].mxu0
        %v4894 = vadd.f32 %v4467, %v4893
        %v4895 = vpop.f32.mrb[0].mxu0
        %v4896 = vadd.f32 %v4471, %v4895
        %v4897 = vpop.f32.mrb[0].mxu0
        %v4898 = vadd.f32 %v4467, %v4897
        %v4899 = vpop.f32.mrb[0].mxu0
        %v4900 = vadd.f32 %v4471, %v4899
        %4901 = vmatprep.mubr.bf16.mxu0 0
        %4902 = vmatmul.mubr.bf16.gmra.mrb[0].mxu0 %v4410
        %v4903 = vpop.f32.mrb[0].mxu0
        %v4904 = vadd.f32 %v4467, %v4903
        %v4905 = vpop.f32.mrb[0].mxu0
        %v4906 = vadd.f32 %v4471, %v4905
        %v4907 = vpop.f32.mrb[0].mxu0
        %v4908 = vadd.f32 %v4467, %v4907
        %v4909 = vpop.f32.mrb[0].mxu0
        %v4910 = vadd.f32 %v4471, %v4909
        %4911 = vmatprep.mubr.bf16.mxu0 0
        %4912 = vmatmul.mubr.bf16.gmra.mrb[0].mxu0 %v4411
        %v4913 = vpop.f32.mrb[0].mxu0
        %v4914 = vadd.f32 %v4467, %v4913
        %v4915 = vpop.f32.mrb[0].mxu0
        %v4916 = vadd.f32 %v4471, %v4915
        %v4917 = vpop.f32.mrb[0].mxu0
        %v4918 = vadd.f32 %v4467, %v4917
        %v4919 = vpop.f32.mrb[0].mxu0
        %v4920 = vadd.f32 %v4471, %v4919
        %4921 = vmatprep.mubr.bf16.mxu0 0
        %4922 = vmatmul.mubr.bf16.gmra.mrb[0].mxu0 %v4412
        %v4923 = vpop.f32.mrb[0].mxu0
        %v4924 = vadd.f32 %v4467, %v4923
        %v4925 = vpop.f32.mrb[0].mxu0
        %v4926 = vadd.f32 %v4471, %v4925
        %v4927 = vpop.f32.mrb[0].mxu0
        %v4928 = vadd.f32 %v4467, %v4927
        %v4929 = vpop.f32.mrb[0].mxu0
        %v4930 = vadd.f32 %v4471, %v4929
        %4931 = vmatprep.mubr.bf16.mxu0 0
        %4932 = vmatmul.mubr.bf16.gmra.mrb[0].mxu0 %v4413
        %v4933 = vpop.f32.mrb[0].mxu0
        %v4934 = vadd.f32 %v4467, %v4933
        %v4935 = vpop.f32.mrb[0].mxu0
        %v4936 = vadd.f32 %v4471, %v4935
        %v4937 = vpop.f32.mrb[0].mxu0
        %v4938 = vadd.f32 %v4467, %v4937
        %v4939 = vpop.f32.mrb[0].mxu0
        %v4940 = vadd.f32 %v4471, %v4939
        %4941 = vmatprep.mubr.bf16.mxu0 0
        %4942 = vmatmul.mubr.bf16.gmra.mrb[0].mxu0 %v4414
        %v4943 = vpop.f32.mrb[0].mxu0
        %v4944 = vadd.f32 %v4467, %v4943
        %v4945 = vpop.f32.mrb[0].mxu0
        %v4946 = vadd.f32 %v4471, %v4945
        %v4947 = vpop.f32.mrb[0].mxu0
        %v4948 = vadd.f32 %v4467, %v4947
        %v4949 = vpop.f32.mrb[0].mxu0
        %v4950 = vadd.f32 %v4471, %v4949
        %4951 = vmatprep.mubr.bf16.mxu0 0
        %4952 = vmatmul.mubr.bf16.gmra.mrb[0].mxu0 %v4415
        %v4953 = vpop.f32.mrb[0].mxu0
        %v4954 = vadd.f32 %v4467, %v4953
        %v4955 = vpop.f32.mrb[0].mxu0
        %v4956 = vadd.f32 %v4471, %v4955
        %v4957 = vpop.f32.mrb[0].mxu0
        %v4958 = vadd.f32 %v4467, %v4957
        %v4959 = vpop.f32.mrb[0].mxu0
        %v4960 = vadd.f32 %v4471, %v4959
        %4961 = vmatprep.mubr.bf16.mxu0 0
        %4962 = vmatmul.mubr.bf16.gmra.mrb[0].mxu0 %v4416
        %v4963 = vpop.f32.mrb[0].mxu0
        %v4964 = vadd.f32 %v4467, %v4963
        %v4965 = vpop.f32.mrb[0].mxu0
        %v4966 = vadd.f32 %v4471, %v4965
        %v4967 = vpop.f32.mrb[0].mxu0
        %v4968 = vadd.f32 %v4467, %v4967
        %v4969 = vpop.f32.mrb[0].mxu0
        %v4970 = vadd.f32 %v4471, %v4969
        %4971 = vmatprep.mubr.bf16.mxu0 0
        %4972 = vmatmul.mubr.bf16.gmra.mrb[0].mxu0 %v4417
        %v4973 = vpop.f32.mrb[0].mxu0
        %v4974 = vadd.f32 %v4467, %v4973
        %v4975 = vpop.f32.mrb[0].mxu0
        %v4976 = vadd.f32 %v4471, %v4975
        %v4977 = vpop.f32.mrb[0].mxu0
        %v4978 = vadd.f32 %v4467, %v4977
        %v4979 = vpop.f32.mrb[0].mxu0
        %v4980 = vadd.f32 %v4471, %v4979
        %4981 = vmatprep.mubr.bf16.mxu0 0
        %4982 = vmatmul.mubr.bf16.gmra.mrb[0].mxu0 %v4418
        %v4983 = vpop.f32.mrb[0].mxu0
        %v4984 = vadd.f32 %v4467, %v4983
        %v4985 = vpop.f32.mrb[0].mxu0
        %v4986 = vadd.f32 %v4471, %v4985
        %v4987 = vpop.f32.mrb[0].mxu0
        %v4988 = vadd.f32 %v4467, %v4987
        %v4989 = vpop.f32.mrb[0].mxu0
        %v4990 = vadd.f32 %v4471, %v4989
        %4991 = vmatprep.mubr.bf16.mxu0 0
        %4992 = vmatmul.mubr.bf16.gmra.mrb[0].mxu0 %v4419
        %v4993 = vpop.f32.mrb[0].mxu0
        %v4994 = vadd.f32 %v4467, %v4993
        %v4995 = vpop.f32.mrb[0].mxu0
        %v4996 = vadd.f32 %v4471, %v4995
        %v4997 = vpop.f32.mrb[0].mxu0
        %v4998 = vadd.f32 %v4467, %v4997
        %v4999 = vpop.f32.mrb[0].mxu0
        %v5000 = vadd.f32 %v4471, %v4999
        %5001 = vmatprep.mubr.bf16.mxu0 0
        %5002 = vmatmul.mubr.bf16.gmra.mrb[0].mxu0 %v4420
        %v5003 = vpop.f32.mrb[0].mxu0
        %v5004 = vadd.f32 %v4467, %v5003
        %v5005 = vpop.f32.mrb[0].mxu0
        %v5006 = vadd.f32 %v4471, %v5005
        %v5007 = vpop.f32.mrb[0].mxu0
        %v5008 = vadd.f32 %v4467, %v5007
        %v5009 = vpop.f32.mrb[0].mxu0
        %v5010 = vadd.f32 %v4471, %v5009
        %5011 = vmatprep.mubr.bf16.mxu0 0
        %5012 = vmatmul.mubr.bf16.gmra.mrb[0].mxu0 %v4421
        %v5013 = vpop.f32.mrb[0].mxu0
        %v5014 = vadd.f32 %v4467, %v5013
        %v5015 = vpop.f32.mrb[0].mxu0
        %v5016 = vadd.f32 %v4471, %v5015
        %v5017 = vpop.f32.mrb[0].mxu0
        %v5018 = vadd.f32 %v4467, %v5017
        %v5019 = vpop.f32.mrb[0].mxu0
        %v5020 = vadd.f32 %v4471, %v5019
        %5021 = vdwg.mxu0
        %v5022 = vmul.f32 %v4671, 1.702
        %v5023 = vmul.f32 %v4673, 1.702
        %v5024 = vmul.f32 %v4864, 1.702
        %v5025 = vmul.f32 %v4866, 1.702
        %v5026 = vmul.f32 %v4675, 1.702
        %v5027 = vmul.f32 %v4677, 1.702
        %v5028 = vmul.f32 %v4868, 1.702
        %v5029 = vmul.f32 %v4870, 1.702
        %v5030 = vmul.f32 %v4681, 1.702
        %v5031 = vmul.f32 %v4683, 1.702
        %v5032 = vmul.f32 %v4874, 1.702
        %v5033 = vmul.f32 %v4876, 1.702
        %v5034 = vmul.f32 %v4685, 1.702
        %v5035 = vmul.f32 %v4687, 1.702
        %v5036 = vmul.f32 %v4878, 1.702
        %v5037 = vmul.f32 %v4880, 1.702
        %v5038 = vmul.f32 %v4691, 1.702
        %v5039 = vmul.f32 %v4693, 1.702
        %v5040 = vmul.f32 %v4884, 1.702
        %v5041 = vmul.f32 %v4886, 1.702
        %v5042 = vmul.f32 %v4695, 1.702
        %v5043 = vmul.f32 %v4697, 1.702
        %v5044 = vmul.f32 %v4888, 1.702
        %v5045 = vmul.f32 %v4890, 1.702
        %v5046 = vmul.f32 %v4701, 1.702
        %v5047 = vmul.f32 %v4703, 1.702
        %v5048 = vmul.f32 %v4894, 1.702
        %v5049 = vmul.f32 %v4896, 1.702
        %v5050 = vmul.f32 %v4705, 1.702
        %v5051 = vmul.f32 %v4707, 1.702
        %v5052 = vmul.f32 %v4898, 1.702
        %v5053 = vmul.f32 %v4900, 1.702
        %v5054 = vmul.f32 %v4711, 1.702
        %v5055 = vmul.f32 %v4713, 1.702
        %v5056 = vmul.f32 %v4904, 1.702
        %v5057 = vmul.f32 %v4906, 1.702
        %v5058 = vmul.f32 %v4715, 1.702
        %v5059 = vmul.f32 %v4717, 1.702
        %v5060 = vmul.f32 %v4908, 1.702
        %v5061 = vmul.f32 %v4910, 1.702
        %v5062 = vmul.f32 %v4721, 1.702
        %v5063 = vmul.f32 %v4723, 1.702
        %v5064 = vmul.f32 %v4914, 1.702
        %v5065 = vmul.f32 %v4916, 1.702
        %v5066 = vmul.f32 %v4725, 1.702
        %v5067 = vmul.f32 %v4727, 1.702
        %v5068 = vmul.f32 %v4918, 1.702
        %v5069 = vmul.f32 %v4920, 1.702
        %v5070 = vmul.f32 %v4731, 1.702
        %v5071 = vmul.f32 %v4733, 1.702
        %v5072 = vmul.f32 %v4924, 1.702
        %v5073 = vmul.f32 %v4926, 1.702
        %v5074 = vmul.f32 %v4735, 1.702
        %v5075 = vmul.f32 %v4737, 1.702
        %v5076 = vmul.f32 %v4928, 1.702
        %v5077 = vmul.f32 %v4930, 1.702
        %v5078 = vmul.f32 %v4741, 1.702
        %v5079 = vmul.f32 %v4743, 1.702
        %v5080 = vmul.f32 %v4934, 1.702
        %v5081 = vmul.f32 %v4936, 1.702
        %v5082 = vmul.f32 %v4745, 1.702
        %v5083 = vmul.f32 %v4747, 1.702
        %v5084 = vmul.f32 %v4938, 1.702
        %v5085 = vmul.f32 %v4940, 1.702
        %v5086 = vmul.f32 %v4751, 1.702
        %v5087 = vmul.f32 %v4753, 1.702
        %v5088 = vmul.f32 %v4944, 1.702
        %v5089 = vmul.f32 %v4946, 1.702
        %v5090 = vmul.f32 %v4755, 1.702
        %v5091 = vmul.f32 %v4757, 1.702
        %v5092 = vmul.f32 %v4948, 1.702
        %v5093 = vmul.f32 %v4950, 1.702
        %v5094 = vmul.f32 %v4761, 1.702
        %v5095 = vmul.f32 %v4763, 1.702
        %v5096 = vmul.f32 %v4954, 1.702
        %v5097 = vmul.f32 %v4956, 1.702
        %v5098 = vmul.f32 %v4765, 1.702
        %v5099 = vmul.f32 %v4767, 1.702
        %v5100 = vmul.f32 %v4958, 1.702
        %v5101 = vmul.f32 %v4960, 1.702
        %v5102 = vmul.f32 %v4771, 1.702
        %v5103 = vmul.f32 %v4773, 1.702
        %v5104 = vmul.f32 %v4964, 1.702
        %v5105 = vmul.f32 %v4966, 1.702
        %v5106 = vmul.f32 %v4775, 1.702
        %v5107 = vmul.f32 %v4777, 1.702
        %v5108 = vmul.f32 %v4968, 1.702
        %v5109 = vmul.f32 %v4970, 1.702
        %v5110 = vmul.f32 %v4781, 1.702
        %v5111 = vmul.f32 %v4783, 1.702
        %v5112 = vmul.f32 %v4974, 1.702
        %v5113 = vmul.f32 %v4976, 1.702
        %v5114 = vmul.f32 %v4785, 1.702
        %v5115 = vmul.f32 %v4787, 1.702
        %v5116 = vmul.f32 %v4978, 1.702
        %v5117 = vmul.f32 %v4980, 1.702
        %v5118 = vmul.f32 %v4791, 1.702
        %v5119 = vmul.f32 %v4793, 1.702
        %v5120 = vmul.f32 %v4984, 1.702
        %v5121 = vmul.f32 %v4986, 1.702
        %v5122 = vmul.f32 %v4795, 1.702
        %v5123 = vmul.f32 %v4797, 1.702
        %v5124 = vmul.f32 %v4988, 1.702
        %v5125 = vmul.f32 %v4990, 1.702
        %v5126 = vmul.f32 %v4801, 1.702
        %v5127 = vmul.f32 %v4803, 1.702
        %v5128 = vmul.f32 %v4994, 1.702
        %v5129 = vmul.f32 %v4996, 1.702
        %v5130 = vmul.f32 %v4805, 1.702
        %v5131 = vmul.f32 %v4807, 1.702
        %v5132 = vmul.f32 %v4998, 1.702
        %v5133 = vmul.f32 %v5000, 1.702
        %v5134 = vmul.f32 %v4811, 1.702
        %v5135 = vmul.f32 %v4813, 1.702
        %v5136 = vmul.f32 %v5004, 1.702
        %v5137 = vmul.f32 %v5006, 1.702
        %v5138 = vmul.f32 %v4815, 1.702
        %v5139 = vmul.f32 %v4817, 1.702
        %v5140 = vmul.f32 %v5008, 1.702
        %v5141 = vmul.f32 %v5010, 1.702
        %v5142 = vmul.f32 %v4821, 1.702
        %v5143 = vmul.f32 %v4823, 1.702
        %v5144 = vmul.f32 %v5014, 1.702
        %v5145 = vmul.f32 %v5016, 1.702
        %v5146 = vmul.f32 %v4825, 1.702
        %v5147 = vmul.f32 %v4827, 1.702
        %v5148 = vmul.f32 %v5018, 1.702
        %v5149 = vmul.f32 %v5020, 1.702
        %v5150 = vxor.u32 %v5022, 2147483648
        %v5151 = vxor.u32 %v5023, 2147483648
        %v5152 = vxor.u32 %v5024, 2147483648
        %v5153 = vxor.u32 %v5025, 2147483648
        %v5154 = vxor.u32 %v5026, 2147483648
        %v5155 = vxor.u32 %v5027, 2147483648
        %v5156 = vxor.u32 %v5028, 2147483648
        %v5157 = vxor.u32 %v5029, 2147483648
        %v5158 = vxor.u32 %v5030, 2147483648
        %v5159 = vxor.u32 %v5031, 2147483648
        %v5160 = vxor.u32 %v5032, 2147483648
        %v5161 = vxor.u32 %v5033, 2147483648
        %v5162 = vxor.u32 %v5034, 2147483648
        %v5163 = vxor.u32 %v5035, 2147483648
        %v5164 = vxor.u32 %v5036, 2147483648
        %v5165 = vxor.u32 %v5037, 2147483648
        %v5166 = vxor.u32 %v5038, 2147483648
        %v5167 = vxor.u32 %v5039, 2147483648
        %v5168 = vxor.u32 %v5040, 2147483648
        %v5169 = vxor.u32 %v5041, 2147483648
        %v5170 = vxor.u32 %v5042, 2147483648
        %v5171 = vxor.u32 %v5043, 2147483648
        %v5172 = vxor.u32 %v5044, 2147483648
        %v5173 = vxor.u32 %v5045, 2147483648
        %v5174 = vxor.u32 %v5046, 2147483648
        %v5175 = vxor.u32 %v5047, 2147483648
        %v5176 = vxor.u32 %v5048, 2147483648
        %v5177 = vxor.u32 %v5049, 2147483648
        %v5178 = vxor.u32 %v5050, 2147483648
        %v5179 = vxor.u32 %v5051, 2147483648
        %v5180 = vxor.u32 %v5052, 2147483648
        %v5181 = vxor.u32 %v5053, 2147483648
        %v5182 = vxor.u32 %v5054, 2147483648
        %v5183 = vxor.u32 %v5055, 2147483648
        %v5184 = vxor.u32 %v5056, 2147483648
        %v5185 = vxor.u32 %v5057, 2147483648
        %v5186 = vxor.u32 %v5058, 2147483648
        %v5187 = vxor.u32 %v5059, 2147483648
        %v5188 = vxor.u32 %v5060, 2147483648
        %v5189 = vxor.u32 %v5061, 2147483648
        %v5190 = vxor.u32 %v5062, 2147483648
        %v5191 = vxor.u32 %v5063, 2147483648
        %v5192 = vxor.u32 %v5064, 2147483648
        %v5193 = vxor.u32 %v5065, 2147483648
        %v5194 = vxor.u32 %v5066, 2147483648
        %v5195 = vxor.u32 %v5067, 2147483648
        %v5196 = vxor.u32 %v5068, 2147483648
        %v5197 = vxor.u32 %v5069, 2147483648
        %v5198 = vxor.u32 %v5070, 2147483648
        %v5199 = vxor.u32 %v5071, 2147483648
        %v5200 = vxor.u32 %v5072, 2147483648
        %v5201 = vxor.u32 %v5073, 2147483648
        %v5202 = vxor.u32 %v5074, 2147483648
        %v5203 = vxor.u32 %v5075, 2147483648
        %v5204 = vxor.u32 %v5076, 2147483648
        %v5205 = vxor.u32 %v5077, 2147483648
        %v5206 = vxor.u32 %v5078, 2147483648
        %v5207 = vxor.u32 %v5079, 2147483648
        %v5208 = vxor.u32 %v5080, 2147483648
        %v5209 = vxor.u32 %v5081, 2147483648
        %v5210 = vxor.u32 %v5082, 2147483648
        %v5211 = vxor.u32 %v5083, 2147483648
        %v5212 = vxor.u32 %v5084, 2147483648
        %v5213 = vxor.u32 %v5085, 2147483648
        %v5214 = vxor.u32 %v5086, 2147483648
        %v5215 = vxor.u32 %v5087, 2147483648
        %v5216 = vxor.u32 %v5088, 2147483648
        %v5217 = vxor.u32 %v5089, 2147483648
        %v5218 = vxor.u32 %v5090, 2147483648
        %v5219 = vxor.u32 %v5091, 2147483648
        %v5220 = vxor.u32 %v5092, 2147483648
        %v5221 = vxor.u32 %v5093, 2147483648
        %v5222 = vxor.u32 %v5094, 2147483648
        %v5223 = vxor.u32 %v5095, 2147483648
        %v5224 = vxor.u32 %v5096, 2147483648
        %v5225 = vxor.u32 %v5097, 2147483648
        %v5226 = vxor.u32 %v5098, 2147483648
        %v5227 = vxor.u32 %v5099, 2147483648
        %v5228 = vxor.u32 %v5100, 2147483648
        %v5229 = vxor.u32 %v5101, 2147483648
        %v5230 = vxor.u32 %v5102, 2147483648
        %v5231 = vxor.u32 %v5103, 2147483648
        %v5232 = vxor.u32 %v5104, 2147483648
        %v5233 = vxor.u32 %v5105, 2147483648
        %v5234 = vxor.u32 %v5106, 2147483648
        %v5235 = vxor.u32 %v5107, 2147483648
        %v5236 = vxor.u32 %v5108, 2147483648
        %v5237 = vxor.u32 %v5109, 2147483648
        %v5238 = vxor.u32 %v5110, 2147483648
        %v5239 = vxor.u32 %v5111, 2147483648
        %v5240 = vxor.u32 %v5112, 2147483648
        %v5241 = vxor.u32 %v5113, 2147483648
        %v5242 = vxor.u32 %v5114, 2147483648
        %v5243 = vxor.u32 %v5115, 2147483648
        %v5244 = vxor.u32 %v5116, 2147483648
        %v5245 = vxor.u32 %v5117, 2147483648
        %v5246 = vxor.u32 %v5118, 2147483648
        %v5247 = vxor.u32 %v5119, 2147483648
        %v5248 = vxor.u32 %v5120, 2147483648
        %v5249 = vxor.u32 %v5121, 2147483648
        %v5250 = vxor.u32 %v5122, 2147483648
        %v5251 = vxor.u32 %v5123, 2147483648
        %v5252 = vxor.u32 %v5124, 2147483648
        %v5253 = vxor.u32 %v5125, 2147483648
        %v5254 = vxor.u32 %v5126, 2147483648
        %v5255 = vxor.u32 %v5127, 2147483648
        %v5256 = vxor.u32 %v5128, 2147483648
        %v5257 = vxor.u32 %v5129, 2147483648
        %v5258 = vxor.u32 %v5130, 2147483648
        %v5259 = vxor.u32 %v5131, 2147483648
        %v5260 = vxor.u32 %v5132, 2147483648
        %v5261 = vxor.u32 %v5133, 2147483648
        %v5262 = vxor.u32 %v5134, 2147483648
        %v5263 = vxor.u32 %v5135, 2147483648
        %v5264 = vxor.u32 %v5136, 2147483648
        %v5265 = vxor.u32 %v5137, 2147483648
        %v5266 = vxor.u32 %v5138, 2147483648
        %v5267 = vxor.u32 %v5139, 2147483648
        %v5268 = vxor.u32 %v5140, 2147483648
        %v5269 = vxor.u32 %v5141, 2147483648
        %v5270 = vxor.u32 %v5142, 2147483648
        %v5271 = vxor.u32 %v5143, 2147483648
        %v5272 = vxor.u32 %v5144, 2147483648
        %v5273 = vxor.u32 %v5145, 2147483648
        %v5274 = vxor.u32 %v5146, 2147483648
        %v5275 = vxor.u32 %v5147, 2147483648
        %v5276 = vxor.u32 %v5148, 2147483648
        %v5277 = vxor.u32 %v5149, 2147483648
        %v5278 = vmul.f32 %v5150, 1.442695
        %v5279 = vpow.pop %v5278
        %v5280 = vmul.f32 %v5151, 1.442695
        %v5281 = vpow.pop %v5280
        %v5282 = vmul.f32 %v5152, 1.442695
        %v5283 = vpow.pop %v5282
        %v5284 = vmul.f32 %v5153, 1.442695
        %v5285 = vpow.pop %v5284
        %v5286 = vmul.f32 %v5154, 1.442695
        %v5287 = vpow.pop %v5286
        %v5288 = vmul.f32 %v5155, 1.442695
        %v5289 = vpow.pop %v5288
        %v5290 = vmul.f32 %v5156, 1.442695
        %v5291 = vpow.pop %v5290
        %v5292 = vmul.f32 %v5157, 1.442695
        %v5293 = vpow.pop %v5292
        %v5294 = vmul.f32 %v5158, 1.442695
        %v5295 = vpow.pop %v5294
        %v5296 = vmul.f32 %v5159, 1.442695
        %v5297 = vpow.pop %v5296
        %v5298 = vmul.f32 %v5160, 1.442695
        %v5299 = vpow.pop %v5298
        %v5300 = vmul.f32 %v5161, 1.442695
        %v5301 = vpow.pop %v5300
        %v5302 = vmul.f32 %v5162, 1.442695
        %v5303 = vpow.pop %v5302
        %v5304 = vmul.f32 %v5163, 1.442695
        %v5305 = vpow.pop %v5304
        %v5306 = vmul.f32 %v5164, 1.442695
        %v5307 = vpow.pop %v5306
        %v5308 = vmul.f32 %v5165, 1.442695
        %v5309 = vpow.pop %v5308
        %v5310 = vmul.f32 %v5166, 1.442695
        %v5311 = vpow.pop %v5310
        %v5312 = vmul.f32 %v5167, 1.442695
        %v5313 = vpow.pop %v5312
        %v5314 = vmul.f32 %v5168, 1.442695
        %v5315 = vpow.pop %v5314
        %v5316 = vmul.f32 %v5169, 1.442695
        %v5317 = vpow.pop %v5316
        %v5318 = vmul.f32 %v5170, 1.442695
        %v5319 = vpow.pop %v5318
        %v5320 = vmul.f32 %v5171, 1.442695
        %v5321 = vpow.pop %v5320
        %v5322 = vmul.f32 %v5172, 1.442695
        %v5323 = vpow.pop %v5322
        %v5324 = vmul.f32 %v5173, 1.442695
        %v5325 = vpow.pop %v5324
        %v5326 = vmul.f32 %v5174, 1.442695
        %v5327 = vpow.pop %v5326
        %v5328 = vmul.f32 %v5175, 1.442695
        %v5329 = vpow.pop %v5328
        %v5330 = vmul.f32 %v5176, 1.442695
        %v5331 = vpow.pop %v5330
        %v5332 = vmul.f32 %v5177, 1.442695
        %v5333 = vpow.pop %v5332
        %v5334 = vmul.f32 %v5178, 1.442695
        %v5335 = vpow.pop %v5334
        %v5336 = vmul.f32 %v5179, 1.442695
        %v5337 = vpow.pop %v5336
        %v5338 = vmul.f32 %v5180, 1.442695
        %v5339 = vpow.pop %v5338
        %v5340 = vmul.f32 %v5181, 1.442695
        %v5341 = vpow.pop %v5340
        %v5342 = vmul.f32 %v5182, 1.442695
        %v5343 = vpow.pop %v5342
        %v5344 = vmul.f32 %v5183, 1.442695
        %v5345 = vpow.pop %v5344
        %v5346 = vmul.f32 %v5184, 1.442695
        %v5347 = vpow.pop %v5346
        %v5348 = vmul.f32 %v5185, 1.442695
        %v5349 = vpow.pop %v5348
        %v5350 = vmul.f32 %v5186, 1.442695
        %v5351 = vpow.pop %v5350
        %v5352 = vmul.f32 %v5187, 1.442695
        %v5353 = vpow.pop %v5352
        %v5354 = vmul.f32 %v5188, 1.442695
        %v5355 = vpow.pop %v5354
        %v5356 = vmul.f32 %v5189, 1.442695
        %v5357 = vpow.pop %v5356
        %v5358 = vmul.f32 %v5190, 1.442695
        %v5359 = vpow.pop %v5358
        %v5360 = vmul.f32 %v5191, 1.442695
        %v5361 = vpow.pop %v5360
        %v5362 = vmul.f32 %v5192, 1.442695
        %v5363 = vpow.pop %v5362
        %v5364 = vmul.f32 %v5193, 1.442695
        %v5365 = vpow.pop %v5364
        %v5366 = vmul.f32 %v5194, 1.442695
        %v5367 = vpow.pop %v5366
        %v5368 = vmul.f32 %v5195, 1.442695
        %v5369 = vpow.pop %v5368
        %v5370 = vmul.f32 %v5196, 1.442695
        %v5371 = vpow.pop %v5370
        %v5372 = vmul.f32 %v5197, 1.442695
        %v5373 = vpow.pop %v5372
        %v5374 = vmul.f32 %v5198, 1.442695
        %v5375 = vpow.pop %v5374
        %v5376 = vmul.f32 %v5199, 1.442695
        %v5377 = vpow.pop %v5376
        %v5378 = vmul.f32 %v5200, 1.442695
        %v5379 = vpow.pop %v5378
        %v5380 = vmul.f32 %v5201, 1.442695
        %v5381 = vpow.pop %v5380
        %v5382 = vmul.f32 %v5202, 1.442695
        %v5383 = vpow.pop %v5382
        %v5384 = vmul.f32 %v5203, 1.442695
        %v5385 = vpow.pop %v5384
        %v5386 = vmul.f32 %v5204, 1.442695
        %v5387 = vpow.pop %v5386
        %v5388 = vmul.f32 %v5205, 1.442695
        %v5389 = vpow.pop %v5388
        %v5390 = vmul.f32 %v5206, 1.442695
        %v5391 = vpow.pop %v5390
        %v5392 = vmul.f32 %v5207, 1.442695
        %v5393 = vpow.pop %v5392
        %v5394 = vmul.f32 %v5208, 1.442695
        %v5395 = vpow.pop %v5394
        %v5396 = vmul.f32 %v5209, 1.442695
        %v5397 = vpow.pop %v5396
        %v5398 = vmul.f32 %v5210, 1.442695
        %v5399 = vpow.pop %v5398
        %v5400 = vmul.f32 %v5211, 1.442695
        %v5401 = vpow.pop %v5400
        %v5402 = vmul.f32 %v5212, 1.442695
        %v5403 = vpow.pop %v5402
        %v5404 = vmul.f32 %v5213, 1.442695
        %v5405 = vpow.pop %v5404
        %v5406 = vmul.f32 %v5214, 1.442695
        %v5407 = vpow.pop %v5406
        %v5408 = vmul.f32 %v5215, 1.442695
        %v5409 = vpow.pop %v5408
        %v5410 = vmul.f32 %v5216, 1.442695
        %v5411 = vpow.pop %v5410
        %v5412 = vmul.f32 %v5217, 1.442695
        %v5413 = vpow.pop %v5412
        %v5414 = vmul.f32 %v5218, 1.442695
        %v5415 = vpow.pop %v5414
        %v5416 = vmul.f32 %v5219, 1.442695
        %v5417 = vpow.pop %v5416
        %v5418 = vmul.f32 %v5220, 1.442695
        %v5419 = vpow.pop %v5418
        %v5420 = vmul.f32 %v5221, 1.442695
        %v5421 = vpow.pop %v5420
        %v5422 = vmul.f32 %v5222, 1.442695
        %v5423 = vpow.pop %v5422
        %v5424 = vmul.f32 %v5223, 1.442695
        %v5425 = vpow.pop %v5424
        %v5426 = vmul.f32 %v5224, 1.442695
        %v5427 = vpow.pop %v5426
        %v5428 = vmul.f32 %v5225, 1.442695
        %v5429 = vpow.pop %v5428
        %v5430 = vmul.f32 %v5226, 1.442695
        %v5431 = vpow.pop %v5430
        %v5432 = vmul.f32 %v5227, 1.442695
        %v5433 = vpow.pop %v5432
        %v5434 = vmul.f32 %v5228, 1.442695
        %v5435 = vpow.pop %v5434
        %v5436 = vmul.f32 %v5229, 1.442695
        %v5437 = vpow.pop %v5436
        %v5438 = vmul.f32 %v5230, 1.442695
        %v5439 = vpow.pop %v5438
        %v5440 = vmul.f32 %v5231, 1.442695
        %v5441 = vpow.pop %v5440
        %v5442 = vmul.f32 %v5232, 1.442695
        %v5443 = vpow.pop %v5442
        %v5444 = vmul.f32 %v5233, 1.442695
        %v5445 = vpow.pop %v5444
        %v5446 = vmul.f32 %v5234, 1.442695
        %v5447 = vpow.pop %v5446
        %v5448 = vmul.f32 %v5235, 1.442695
        %v5449 = vpow.pop %v5448
        %v5450 = vmul.f32 %v5236, 1.442695
        %v5451 = vpow.pop %v5450
        %v5452 = vmul.f32 %v5237, 1.442695
        %v5453 = vpow.pop %v5452
        %v5454 = vmul.f32 %v5238, 1.442695
        %v5455 = vpow.pop %v5454
        %v5456 = vmul.f32 %v5239, 1.442695
        %v5457 = vpow.pop %v5456
        %v5458 = vmul.f32 %v5240, 1.442695
        %v5459 = vpow.pop %v5458
        %v5460 = vmul.f32 %v5241, 1.442695
        %v5461 = vpow.pop %v5460
        %v5462 = vmul.f32 %v5242, 1.442695
        %v5463 = vpow.pop %v5462
        %v5464 = vmul.f32 %v5243, 1.442695
        %v5465 = vpow.pop %v5464
        %v5466 = vmul.f32 %v5244, 1.442695
        %v5467 = vpow.pop %v5466
        %v5468 = vmul.f32 %v5245, 1.442695
        %v5469 = vpow.pop %v5468
        %v5470 = vmul.f32 %v5246, 1.442695
        %v5471 = vpow.pop %v5470
        %v5472 = vmul.f32 %v5247, 1.442695
        %v5473 = vpow.pop %v5472
        %v5474 = vmul.f32 %v5248, 1.442695
        %v5475 = vpow.pop %v5474
        %v5476 = vmul.f32 %v5249, 1.442695
        %v5477 = vpow.pop %v5476
        %v5478 = vmul.f32 %v5250, 1.442695
        %v5479 = vpow.pop %v5478
        %v5480 = vmul.f32 %v5251, 1.442695
        %v5481 = vpow.pop %v5480
        %v5482 = vmul.f32 %v5252, 1.442695
        %v5483 = vpow.pop %v5482
        %v5484 = vmul.f32 %v5253, 1.442695
        %v5485 = vpow.pop %v5484
        %v5486 = vmul.f32 %v5254, 1.442695
        %v5487 = vpow.pop %v5486
        %v5488 = vmul.f32 %v5255, 1.442695
        %v5489 = vpow.pop %v5488
        %v5490 = vmul.f32 %v5256, 1.442695
        %v5491 = vpow.pop %v5490
        %v5492 = vmul.f32 %v5257, 1.442695
        %v5493 = vpow.pop %v5492
        %v5494 = vmul.f32 %v5258, 1.442695
        %v5495 = vpow.pop %v5494
        %v5496 = vmul.f32 %v5259, 1.442695
        %v5497 = vpow.pop %v5496
        %v5498 = vmul.f32 %v5260, 1.442695
        %v5499 = vpow.pop %v5498
        %v5500 = vmul.f32 %v5261, 1.442695
        %v5501 = vpow.pop %v5500
        %v5502 = vmul.f32 %v5262, 1.442695
        %v5503 = vpow.pop %v5502
        %v5504 = vmul.f32 %v5263, 1.442695
        %v5505 = vpow.pop %v5504
        %v5506 = vmul.f32 %v5264, 1.442695
        %v5507 = vpow.pop %v5506
        %v5508 = vmul.f32 %v5265, 1.442695
        %v5509 = vpow.pop %v5508
        %v5510 = vmul.f32 %v5266, 1.442695
        %v5511 = vpow.pop %v5510
        %v5512 = vmul.f32 %v5267, 1.442695
        %v5513 = vpow.pop %v5512
        %v5514 = vmul.f32 %v5268, 1.442695
        %v5515 = vpow.pop %v5514
        %v5516 = vmul.f32 %v5269, 1.442695
        %v5517 = vpow.pop %v5516
        %v5518 = vmul.f32 %v5270, 1.442695
        %v5519 = vpow.pop %v5518
        %v5520 = vmul.f32 %v5271, 1.442695
        %v5521 = vpow.pop %v5520
        %v5522 = vmul.f32 %v5272, 1.442695
        %v5523 = vpow.pop %v5522
        %v5524 = vmul.f32 %v5273, 1.442695
        %v5525 = vpow.pop %v5524
        %v5526 = vmul.f32 %v5274, 1.442695
        %v5527 = vpow.pop %v5526
        %v5528 = vmul.f32 %v5275, 1.442695
        %v5529 = vpow.pop %v5528
        %v5530 = vmul.f32 %v5276, 1.442695
        %v5531 = vpow.pop %v5530
        %v5532 = vmul.f32 %v5277, 1.442695
        %v5533 = vpow.pop %v5532
        %v5534 = vadd.f32 %v5279, 1.0
        %v5535 = vadd.f32 %v5281, 1.0
        %v5536 = vadd.f32 %v5283, 1.0
        %v5537 = vadd.f32 %v5285, 1.0
        %v5538 = vadd.f32 %v5287, 1.0
        %v5539 = vadd.f32 %v5289, 1.0
        %v5540 = vadd.f32 %v5291, 1.0
        %v5541 = vadd.f32 %v5293, 1.0
        %v5542 = vadd.f32 %v5295, 1.0
        %v5543 = vadd.f32 %v5297, 1.0
        %v5544 = vadd.f32 %v5299, 1.0
        %v5545 = vadd.f32 %v5301, 1.0
        %v5546 = vadd.f32 %v5303, 1.0
        %v5547 = vadd.f32 %v5305, 1.0
        %v5548 = vadd.f32 %v5307, 1.0
        %v5549 = vadd.f32 %v5309, 1.0
        %v5550 = vadd.f32 %v5311, 1.0
        %v5551 = vadd.f32 %v5313, 1.0
        %v5552 = vadd.f32 %v5315, 1.0
        %v5553 = vadd.f32 %v5317, 1.0
        %v5554 = vadd.f32 %v5319, 1.0
        %v5555 = vadd.f32 %v5321, 1.0
        %v5556 = vadd.f32 %v5323, 1.0
        %v5557 = vadd.f32 %v5325, 1.0
        %v5558 = vadd.f32 %v5327, 1.0
        %v5559 = vadd.f32 %v5329, 1.0
        %v5560 = vadd.f32 %v5331, 1.0
        %v5561 = vadd.f32 %v5333, 1.0
        %v5562 = vadd.f32 %v5335, 1.0
        %v5563 = vadd.f32 %v5337, 1.0
        %v5564 = vadd.f32 %v5339, 1.0
        %v5565 = vadd.f32 %v5341, 1.0
        %v5566 = vadd.f32 %v5343, 1.0
        %v5567 = vadd.f32 %v5345, 1.0
        %v5568 = vadd.f32 %v5347, 1.0
        %v5569 = vadd.f32 %v5349, 1.0
        %v5570 = vadd.f32 %v5351, 1.0
        %v5571 = vadd.f32 %v5353, 1.0
        %v5572 = vadd.f32 %v5355, 1.0
        %v5573 = vadd.f32 %v5357, 1.0
        %v5574 = vadd.f32 %v5359, 1.0
        %v5575 = vadd.f32 %v5361, 1.0
        %v5576 = vadd.f32 %v5363, 1.0
        %v5577 = vadd.f32 %v5365, 1.0
        %v5578 = vadd.f32 %v5367, 1.0
        %v5579 = vadd.f32 %v5369, 1.0
        %v5580 = vadd.f32 %v5371, 1.0
        %v5581 = vadd.f32 %v5373, 1.0
        %v5582 = vadd.f32 %v5375, 1.0
        %v5583 = vadd.f32 %v5377, 1.0
        %v5584 = vadd.f32 %v5379, 1.0
        %v5585 = vadd.f32 %v5381, 1.0
        %v5586 = vadd.f32 %v5383, 1.0
        %v5587 = vadd.f32 %v5385, 1.0
        %v5588 = vadd.f32 %v5387, 1.0
        %v5589 = vadd.f32 %v5389, 1.0
        %v5590 = vadd.f32 %v5391, 1.0
        %v5591 = vadd.f32 %v5393, 1.0
        %v5592 = vadd.f32 %v5395, 1.0
        %v5593 = vadd.f32 %v5397, 1.0
        %v5594 = vadd.f32 %v5399, 1.0
        %v5595 = vadd.f32 %v5401, 1.0
        %v5596 = vadd.f32 %v5403, 1.0
        %v5597 = vadd.f32 %v5405, 1.0
        %v5598 = vadd.f32 %v5407, 1.0
        %v5599 = vadd.f32 %v5409, 1.0
        %v5600 = vadd.f32 %v5411, 1.0
        %v5601 = vadd.f32 %v5413, 1.0
        %v5602 = vadd.f32 %v5415, 1.0
        %v5603 = vadd.f32 %v5417, 1.0
        %v5604 = vadd.f32 %v5419, 1.0
        %v5605 = vadd.f32 %v5421, 1.0
        %v5606 = vadd.f32 %v5423, 1.0
        %v5607 = vadd.f32 %v5425, 1.0
        %v5608 = vadd.f32 %v5427, 1.0
        %v5609 = vadd.f32 %v5429, 1.0
        %v5610 = vadd.f32 %v5431, 1.0
        %v5611 = vadd.f32 %v5433, 1.0
        %v5612 = vadd.f32 %v5435, 1.0
        %v5613 = vadd.f32 %v5437, 1.0
        %v5614 = vadd.f32 %v5439, 1.0
        %v5615 = vadd.f32 %v5441, 1.0
        %v5616 = vadd.f32 %v5443, 1.0
        %v5617 = vadd.f32 %v5445, 1.0
        %v5618 = vadd.f32 %v5447, 1.0
        %v5619 = vadd.f32 %v5449, 1.0
        %v5620 = vadd.f32 %v5451, 1.0
        %v5621 = vadd.f32 %v5453, 1.0
        %v5622 = vadd.f32 %v5455, 1.0
        %v5623 = vadd.f32 %v5457, 1.0
        %v5624 = vadd.f32 %v5459, 1.0
        %v5625 = vadd.f32 %v5461, 1.0
        %v5626 = vadd.f32 %v5463, 1.0
        %v5627 = vadd.f32 %v5465, 1.0
        %v5628 = vadd.f32 %v5467, 1.0
        %v5629 = vadd.f32 %v5469, 1.0
        %v5630 = vadd.f32 %v5471, 1.0
        %v5631 = vadd.f32 %v5473, 1.0
        %v5632 = vadd.f32 %v5475, 1.0
        %v5633 = vadd.f32 %v5477, 1.0
        %v5634 = vadd.f32 %v5479, 1.0
        %v5635 = vadd.f32 %v5481, 1.0
        %v5636 = vadd.f32 %v5483, 1.0
        %v5637 = vadd.f32 %v5485, 1.0
        %v5638 = vadd.f32 %v5487, 1.0
        %v5639 = vadd.f32 %v5489, 1.0
        %v5640 = vadd.f32 %v5491, 1.0
        %v5641 = vadd.f32 %v5493, 1.0
        %v5642 = vadd.f32 %v5495, 1.0
        %v5643 = vadd.f32 %v5497, 1.0
        %v5644 = vadd.f32 %v5499, 1.0
        %v5645 = vadd.f32 %v5501, 1.0
        %v5646 = vadd.f32 %v5503, 1.0
        %v5647 = vadd.f32 %v5505, 1.0
        %v5648 = vadd.f32 %v5507, 1.0
        %v5649 = vadd.f32 %v5509, 1.0
        %v5650 = vadd.f32 %v5511, 1.0
        %v5651 = vadd.f32 %v5513, 1.0
        %v5652 = vadd.f32 %v5515, 1.0
        %v5653 = vadd.f32 %v5517, 1.0
        %v5654 = vadd.f32 %v5519, 1.0
        %v5655 = vadd.f32 %v5521, 1.0
        %v5656 = vadd.f32 %v5523, 1.0
        %v5657 = vadd.f32 %v5525, 1.0
        %v5658 = vadd.f32 %v5527, 1.0
        %v5659 = vadd.f32 %v5529, 1.0
        %v5660 = vadd.f32 %v5531, 1.0
        %v5661 = vadd.f32 %v5533, 1.0
        %v5662 = vrcp.pop %v5534
        %v5663 = vmul.f32 1.0, %v5662
        %v5664 = vrcp.pop %v5535
        %v5665 = vmul.f32 1.0, %v5664
        %v5666 = vrcp.pop %v5536
        %v5667 = vmul.f32 1.0, %v5666
        %v5668 = vrcp.pop %v5537
        %v5669 = vmul.f32 1.0, %v5668
        %v5670 = vrcp.pop %v5538
        %v5671 = vmul.f32 1.0, %v5670
        %v5672 = vrcp.pop %v5539
        %v5673 = vmul.f32 1.0, %v5672
        %v5674 = vrcp.pop %v5540
        %v5675 = vmul.f32 1.0, %v5674
        %v5676 = vrcp.pop %v5541
        %v5677 = vmul.f32 1.0, %v5676
        %v5678 = vrcp.pop %v5542
        %v5679 = vmul.f32 1.0, %v5678
        %v5680 = vrcp.pop %v5543
        %v5681 = vmul.f32 1.0, %v5680
        %v5682 = vrcp.pop %v5544
        %v5683 = vmul.f32 1.0, %v5682
        %v5684 = vrcp.pop %v5545
        %v5685 = vmul.f32 1.0, %v5684
        %v5686 = vrcp.pop %v5546
        %v5687 = vmul.f32 1.0, %v5686
        %v5688 = vrcp.pop %v5547
        %v5689 = vmul.f32 1.0, %v5688
        %v5690 = vrcp.pop %v5548
        %v5691 = vmul.f32 1.0, %v5690
        %v5692 = vrcp.pop %v5549
        %v5693 = vmul.f32 1.0, %v5692
        %v5694 = vrcp.pop %v5550
        %v5695 = vmul.f32 1.0, %v5694
        %v5696 = vrcp.pop %v5551
        %v5697 = vmul.f32 1.0, %v5696
        %v5698 = vrcp.pop %v5552
        %v5699 = vmul.f32 1.0, %v5698
        %v5700 = vrcp.pop %v5553
        %v5701 = vmul.f32 1.0, %v5700
        %v5702 = vrcp.pop %v5554
        %v5703 = vmul.f32 1.0, %v5702
        %v5704 = vrcp.pop %v5555
        %v5705 = vmul.f32 1.0, %v5704
        %v5706 = vrcp.pop %v5556
        %v5707 = vmul.f32 1.0, %v5706
        %v5708 = vrcp.pop %v5557
        %v5709 = vmul.f32 1.0, %v5708
        %v5710 = vrcp.pop %v5558
        %v5711 = vmul.f32 1.0, %v5710
        %v5712 = vrcp.pop %v5559
        %v5713 = vmul.f32 1.0, %v5712
        %v5714 = vrcp.pop %v5560
        %v5715 = vmul.f32 1.0, %v5714
        %v5716 = vrcp.pop %v5561
        %v5717 = vmul.f32 1.0, %v5716
        %v5718 = vrcp.pop %v5562
        %v5719 = vmul.f32 1.0, %v5718
        %v5720 = vrcp.pop %v5563
        %v5721 = vmul.f32 1.0, %v5720
        %v5722 = vrcp.pop %v5564
        %v5723 = vmul.f32 1.0, %v5722
        %v5724 = vrcp.pop %v5565
        %v5725 = vmul.f32 1.0, %v5724
        %v5726 = vrcp.pop %v5566
        %v5727 = vmul.f32 1.0, %v5726
        %v5728 = vrcp.pop %v5567
        %v5729 = vmul.f32 1.0, %v5728
        %v5730 = vrcp.pop %v5568
        %v5731 = vmul.f32 1.0, %v5730
        %v5732 = vrcp.pop %v5569
        %v5733 = vmul.f32 1.0, %v5732
        %v5734 = vrcp.pop %v5570
        %v5735 = vmul.f32 1.0, %v5734
        %v5736 = vrcp.pop %v5571
        %v5737 = vmul.f32 1.0, %v5736
        %v5738 = vrcp.pop %v5572
        %v5739 = vmul.f32 1.0, %v5738
        %v5740 = vrcp.pop %v5573
        %v5741 = vmul.f32 1.0, %v5740
        %v5742 = vrcp.pop %v5574
        %v5743 = vmul.f32 1.0, %v5742
        %v5744 = vrcp.pop %v5575
        %v5745 = vmul.f32 1.0, %v5744
        %v5746 = vrcp.pop %v5576
        %v5747 = vmul.f32 1.0, %v5746
        %v5748 = vrcp.pop %v5577
        %v5749 = vmul.f32 1.0, %v5748
        %v5750 = vrcp.pop %v5578
        %v5751 = vmul.f32 1.0, %v5750
        %v5752 = vrcp.pop %v5579
        %v5753 = vmul.f32 1.0, %v5752
        %v5754 = vrcp.pop %v5580
        %v5755 = vmul.f32 1.0, %v5754
        %v5756 = vrcp.pop %v5581
        %v5757 = vmul.f32 1.0, %v5756
        %v5758 = vrcp.pop %v5582
        %v5759 = vmul.f32 1.0, %v5758
        %v5760 = vrcp.pop %v5583
        %v5761 = vmul.f32 1.0, %v5760
        %v5762 = vrcp.pop %v5584
        %v5763 = vmul.f32 1.0, %v5762
        %v5764 = vrcp.pop %v5585
        %v5765 = vmul.f32 1.0, %v5764
        %v5766 = vrcp.pop %v5586
        %v5767 = vmul.f32 1.0, %v5766
        %v5768 = vrcp.pop %v5587
        %v5769 = vmul.f32 1.0, %v5768
        %v5770 = vrcp.pop %v5588
        %v5771 = vmul.f32 1.0, %v5770
        %v5772 = vrcp.pop %v5589
        %v5773 = vmul.f32 1.0, %v5772
        %v5774 = vrcp.pop %v5590
        %v5775 = vmul.f32 1.0, %v5774
        %v5776 = vrcp.pop %v5591
        %v5777 = vmul.f32 1.0, %v5776
        %v5778 = vrcp.pop %v5592
        %v5779 = vmul.f32 1.0, %v5778
        %v5780 = vrcp.pop %v5593
        %v5781 = vmul.f32 1.0, %v5780
        %v5782 = vrcp.pop %v5594
        %v5783 = vmul.f32 1.0, %v5782
        %v5784 = vrcp.pop %v5595
        %v5785 = vmul.f32 1.0, %v5784
        %v5786 = vrcp.pop %v5596
        %v5787 = vmul.f32 1.0, %v5786
        %v5788 = vrcp.pop %v5597
        %v5789 = vmul.f32 1.0, %v5788
        %v5790 = vrcp.pop %v5598
        %v5791 = vmul.f32 1.0, %v5790
        %v5792 = vrcp.pop %v5599
        %v5793 = vmul.f32 1.0, %v5792
        %v5794 = vrcp.pop %v5600
        %v5795 = vmul.f32 1.0, %v5794
        %v5796 = vrcp.pop %v5601
        %v5797 = vmul.f32 1.0, %v5796
        %v5798 = vrcp.pop %v5602
        %v5799 = vmul.f32 1.0, %v5798
        %v5800 = vrcp.pop %v5603
        %v5801 = vmul.f32 1.0, %v5800
        %v5802 = vrcp.pop %v5604
        %v5803 = vmul.f32 1.0, %v5802
        %v5804 = vrcp.pop %v5605
        %v5805 = vmul.f32 1.0, %v5804
        %v5806 = vrcp.pop %v5606
        %v5807 = vmul.f32 1.0, %v5806
        %v5808 = vrcp.pop %v5607
        %v5809 = vmul.f32 1.0, %v5808
        %v5810 = vrcp.pop %v5608
        %v5811 = vmul.f32 1.0, %v5810
        %v5812 = vrcp.pop %v5609
        %v5813 = vmul.f32 1.0, %v5812
        %v5814 = vrcp.pop %v5610
        %v5815 = vmul.f32 1.0, %v5814
        %v5816 = vrcp.pop %v5611
        %v5817 = vmul.f32 1.0, %v5816
        %v5818 = vrcp.pop %v5612
        %v5819 = vmul.f32 1.0, %v5818
        %v5820 = vrcp.pop %v5613
        %v5821 = vmul.f32 1.0, %v5820
        %v5822 = vrcp.pop %v5614
        %v5823 = vmul.f32 1.0, %v5822
        %v5824 = vrcp.pop %v5615
        %v5825 = vmul.f32 1.0, %v5824
        %v5826 = vrcp.pop %v5616
        %v5827 = vmul.f32 1.0, %v5826
        %v5828 = vrcp.pop %v5617
        %v5829 = vmul.f32 1.0, %v5828
        %v5830 = vrcp.pop %v5618
        %v5831 = vmul.f32 1.0, %v5830
        %v5832 = vrcp.pop %v5619
        %v5833 = vmul.f32 1.0, %v5832
        %v5834 = vrcp.pop %v5620
        %v5835 = vmul.f32 1.0, %v5834
        %v5836 = vrcp.pop %v5621
        %v5837 = vmul.f32 1.0, %v5836
        %v5838 = vrcp.pop %v5622
        %v5839 = vmul.f32 1.0, %v5838
        %v5840 = vrcp.pop %v5623
        %v5841 = vmul.f32 1.0, %v5840
        %v5842 = vrcp.pop %v5624
        %v5843 = vmul.f32 1.0, %v5842
        %v5844 = vrcp.pop %v5625
        %v5845 = vmul.f32 1.0, %v5844
        %v5846 = vrcp.pop %v5626
        %v5847 = vmul.f32 1.0, %v5846
        %v5848 = vrcp.pop %v5627
        %v5849 = vmul.f32 1.0, %v5848
        %v5850 = vrcp.pop %v5628
        %v5851 = vmul.f32 1.0, %v5850
        %v5852 = vrcp.pop %v5629
        %v5853 = vmul.f32 1.0, %v5852
        %v5854 = vrcp.pop %v5630
        %v5855 = vmul.f32 1.0, %v5854
        %v5856 = vrcp.pop %v5631
        %v5857 = vmul.f32 1.0, %v5856
        %v5858 = vrcp.pop %v5632
        %v5859 = vmul.f32 1.0, %v5858
        %v5860 = vrcp.pop %v5633
        %v5861 = vmul.f32 1.0, %v5860
        %v5862 = vrcp.pop %v5634
        %v5863 = vmul.f32 1.0, %v5862
        %v5864 = vrcp.pop %v5635
        %v5865 = vmul.f32 1.0, %v5864
        %v5866 = vrcp.pop %v5636
        %v5867 = vmul.f32 1.0, %v5866
        %v5868 = vrcp.pop %v5637
        %v5869 = vmul.f32 1.0, %v5868
        %v5870 = vrcp.pop %v5638
        %v5871 = vmul.f32 1.0, %v5870
        %v5872 = vrcp.pop %v5639
        %v5873 = vmul.f32 1.0, %v5872
        %v5874 = vrcp.pop %v5640
        %v5875 = vmul.f32 1.0, %v5874
        %v5876 = vrcp.pop %v5641
        %v5877 = vmul.f32 1.0, %v5876
        %v5878 = vrcp.pop %v5642
        %v5879 = vmul.f32 1.0, %v5878
        %v5880 = vrcp.pop %v5643
        %v5881 = vmul.f32 1.0, %v5880
        %v5882 = vrcp.pop %v5644
        %v5883 = vmul.f32 1.0, %v5882
        %v5884 = vrcp.pop %v5645
        %v5885 = vmul.f32 1.0, %v5884
        %v5886 = vrcp.pop %v5646
        %v5887 = vmul.f32 1.0, %v5886
        %v5888 = vrcp.pop %v5647
        %v5889 = vmul.f32 1.0, %v5888
        %v5890 = vrcp.pop %v5648
        %v5891 = vmul.f32 1.0, %v5890
        %v5892 = vrcp.pop %v5649
        %v5893 = vmul.f32 1.0, %v5892
        %v5894 = vrcp.pop %v5650
        %v5895 = vmul.f32 1.0, %v5894
        %v5896 = vrcp.pop %v5651
        %v5897 = vmul.f32 1.0, %v5896
        %v5898 = vrcp.pop %v5652
        %v5899 = vmul.f32 1.0, %v5898
        %v5900 = vrcp.pop %v5653
        %v5901 = vmul.f32 1.0, %v5900
        %v5902 = vrcp.pop %v5654
        %v5903 = vmul.f32 1.0, %v5902
        %v5904 = vrcp.pop %v5655
        %v5905 = vmul.f32 1.0, %v5904
        %v5906 = vrcp.pop %v5656
        %v5907 = vmul.f32 1.0, %v5906
        %v5908 = vrcp.pop %v5657
        %v5909 = vmul.f32 1.0, %v5908
        %v5910 = vrcp.pop %v5658
        %v5911 = vmul.f32 1.0, %v5910
        %v5912 = vrcp.pop %v5659
        %v5913 = vmul.f32 1.0, %v5912
        %v5914 = vrcp.pop %v5660
        %v5915 = vmul.f32 1.0, %v5914
        %v5916 = vrcp.pop %v5661
        %v5917 = vmul.f32 1.0, %v5916
        %v5918 = vmul.f32 %v4671, %v5663
        %v5919 = vmul.f32 %v4673, %v5665
        %v5920 = vmul.f32 %v4864, %v5667
        %v5921 = vmul.f32 %v4866, %v5669
        %v5922 = vmul.f32 %v4675, %v5671
        %v5923 = vmul.f32 %v4677, %v5673
        %v5924 = vmul.f32 %v4868, %v5675
        %v5925 = vmul.f32 %v4870, %v5677
        %v5926 = vmul.f32 %v4681, %v5679
        %v5927 = vmul.f32 %v4683, %v5681
        %v5928 = vmul.f32 %v4874, %v5683
        %v5929 = vmul.f32 %v4876, %v5685
        %v5930 = vmul.f32 %v4685, %v5687
        %v5931 = vmul.f32 %v4687, %v5689
        %v5932 = vmul.f32 %v4878, %v5691
        %v5933 = vmul.f32 %v4880, %v5693
        %v5934 = vmul.f32 %v4691, %v5695
        %v5935 = vmul.f32 %v4693, %v5697
        %v5936 = vmul.f32 %v4884, %v5699
        %v5937 = vmul.f32 %v4886, %v5701
        %v5938 = vmul.f32 %v4695, %v5703
        %v5939 = vmul.f32 %v4697, %v5705
        %v5940 = vmul.f32 %v4888, %v5707
        %v5941 = vmul.f32 %v4890, %v5709
        %v5942 = vmul.f32 %v4701, %v5711
        %v5943 = vmul.f32 %v4703, %v5713
        %v5944 = vmul.f32 %v4894, %v5715
        %v5945 = vmul.f32 %v4896, %v5717
        %v5946 = vmul.f32 %v4705, %v5719
        %v5947 = vmul.f32 %v4707, %v5721
        %v5948 = vmul.f32 %v4898, %v5723
        %v5949 = vmul.f32 %v4900, %v5725
        %v5950 = vmul.f32 %v4711, %v5727
        %v5951 = vmul.f32 %v4713, %v5729
        %v5952 = vmul.f32 %v4904, %v5731
        %v5953 = vmul.f32 %v4906, %v5733
        %v5954 = vmul.f32 %v4715, %v5735
        %v5955 = vmul.f32 %v4717, %v5737
        %v5956 = vmul.f32 %v4908, %v5739
        %v5957 = vmul.f32 %v4910, %v5741
        %v5958 = vmul.f32 %v4721, %v5743
        %v5959 = vmul.f32 %v4723, %v5745
        %v5960 = vmul.f32 %v4914, %v5747
        %v5961 = vmul.f32 %v4916, %v5749
        %v5962 = vmul.f32 %v4725, %v5751
        %v5963 = vmul.f32 %v4727, %v5753
        %v5964 = vmul.f32 %v4918, %v5755
        %v5965 = vmul.f32 %v4920, %v5757
        %v5966 = vmul.f32 %v4731, %v5759
        %v5967 = vmul.f32 %v4733, %v5761
        %v5968 = vmul.f32 %v4924, %v5763
        %v5969 = vmul.f32 %v4926, %v5765
        %v5970 = vmul.f32 %v4735, %v5767
        %v5971 = vmul.f32 %v4737, %v5769
        %v5972 = vmul.f32 %v4928, %v5771
        %v5973 = vmul.f32 %v4930, %v5773
        %v5974 = vmul.f32 %v4741, %v5775
        %v5975 = vmul.f32 %v4743, %v5777
        %v5976 = vmul.f32 %v4934, %v5779
        %v5977 = vmul.f32 %v4936, %v5781
        %v5978 = vmul.f32 %v4745, %v5783
        %v5979 = vmul.f32 %v4747, %v5785
        %v5980 = vmul.f32 %v4938, %v5787
        %v5981 = vmul.f32 %v4940, %v5789
        %v5982 = vmul.f32 %v4751, %v5791
        %v5983 = vmul.f32 %v4753, %v5793
        %v5984 = vmul.f32 %v4944, %v5795
        %v5985 = vmul.f32 %v4946, %v5797
        %v5986 = vmul.f32 %v4755, %v5799
        %v5987 = vmul.f32 %v4757, %v5801
        %v5988 = vmul.f32 %v4948, %v5803
        %v5989 = vmul.f32 %v4950, %v5805
        %v5990 = vmul.f32 %v4761, %v5807
        %v5991 = vmul.f32 %v4763, %v5809
        %v5992 = vmul.f32 %v4954, %v5811
        %v5993 = vmul.f32 %v4956, %v5813
        %v5994 = vmul.f32 %v4765, %v5815
        %v5995 = vmul.f32 %v4767, %v5817
        %v5996 = vmul.f32 %v4958, %v5819
        %v5997 = vmul.f32 %v4960, %v5821
        %v5998 = vmul.f32 %v4771, %v5823
        %v5999 = vmul.f32 %v4773, %v5825
        %v6000 = vmul.f32 %v4964, %v5827
        %v6001 = vmul.f32 %v4966, %v5829
        %v6002 = vmul.f32 %v4775, %v5831
        %v6003 = vmul.f32 %v4777, %v5833
        %v6004 = vmul.f32 %v4968, %v5835
        %v6005 = vmul.f32 %v4970, %v5837
        %v6006 = vmul.f32 %v4781, %v5839
        %v6007 = vmul.f32 %v4783, %v5841
        %v6008 = vmul.f32 %v4974, %v5843
        %v6009 = vmul.f32 %v4976, %v5845
        %v6010 = vmul.f32 %v4785, %v5847
        %v6011 = vmul.f32 %v4787, %v5849
        %v6012 = vmul.f32 %v4978, %v5851
        %v6013 = vmul.f32 %v4980, %v5853
        %v6014 = vmul.f32 %v4791, %v5855
        %v6015 = vmul.f32 %v4793, %v5857
        %v6016 = vmul.f32 %v4984, %v5859
        %v6017 = vmul.f32 %v4986, %v5861
        %v6018 = vmul.f32 %v4795, %v5863
        %v6019 = vmul.f32 %v4797, %v5865
        %v6020 = vmul.f32 %v4988, %v5867
        %v6021 = vmul.f32 %v4990, %v5869
        %v6022 = vmul.f32 %v4801, %v5871
        %v6023 = vmul.f32 %v4803, %v5873
        %v6024 = vmul.f32 %v4994, %v5875
        %v6025 = vmul.f32 %v4996, %v5877
        %v6026 = vmul.f32 %v4805, %v5879
        %v6027 = vmul.f32 %v4807, %v5881
        %v6028 = vmul.f32 %v4998, %v5883
        %v6029 = vmul.f32 %v5000, %v5885
        %v6030 = vmul.f32 %v4811, %v5887
        %v6031 = vmul.f32 %v4813, %v5889
        %v6032 = vmul.f32 %v5004, %v5891
        %v6033 = vmul.f32 %v5006, %v5893
        %v6034 = vmul.f32 %v4815, %v5895
        %v6035 = vmul.f32 %v4817, %v5897
        %v6036 = vmul.f32 %v5008, %v5899
        %v6037 = vmul.f32 %v5010, %v5901
        %v6038 = vmul.f32 %v4821, %v5903
        %v6039 = vmul.f32 %v4823, %v5905
        %v6040 = vmul.f32 %v5014, %v5907
        %v6041 = vmul.f32 %v5016, %v5909
        %v6042 = vmul.f32 %v4825, %v5911
        %v6043 = vmul.f32 %v4827, %v5913
        %v6044 = vmul.f32 %v5018, %v5915
        %v6045 = vmul.f32 %v5020, %v5917
        %v6046 = vpack.c.bf16 %v5922, %v5918
        %v6047 = vpack.c.bf16 %v5923, %v5919
        %v6048 = vpack.c.bf16 %v5924, %v5920
        %v6049 = vpack.c.bf16 %v5925, %v5921
        %v6050 = vpack.c.bf16 %v5930, %v5926
        %v6051 = vpack.c.bf16 %v5931, %v5927
        %v6052 = vpack.c.bf16 %v5932, %v5928
        %v6053 = vpack.c.bf16 %v5933, %v5929
        %v6054 = vpack.c.bf16 %v5938, %v5934
        %v6055 = vpack.c.bf16 %v5939, %v5935
        %v6056 = vpack.c.bf16 %v5940, %v5936
        %v6057 = vpack.c.bf16 %v5941, %v5937
        %v6058 = vpack.c.bf16 %v5946, %v5942
        %v6059 = vpack.c.bf16 %v5947, %v5943
        %v6060 = vpack.c.bf16 %v5948, %v5944
        %v6061 = vpack.c.bf16 %v5949, %v5945
        %v6062 = vpack.c.bf16 %v5954, %v5950
        %v6063 = vpack.c.bf16 %v5955, %v5951
        %v6064 = vpack.c.bf16 %v5956, %v5952
        %v6065 = vpack.c.bf16 %v5957, %v5953
        %v6066 = vpack.c.bf16 %v5962, %v5958
        %v6067 = vpack.c.bf16 %v5963, %v5959
        %v6068 = vpack.c.bf16 %v5964, %v5960
        %v6069 = vpack.c.bf16 %v5965, %v5961
        %v6070 = vpack.c.bf16 %v5970, %v5966
        %v6071 = vpack.c.bf16 %v5971, %v5967
        %v6072 = vpack.c.bf16 %v5972, %v5968
        %v6073 = vpack.c.bf16 %v5973, %v5969
        %v6074 = vpack.c.bf16 %v5978, %v5974
        %v6075 = vpack.c.bf16 %v5979, %v5975
        %v6076 = vpack.c.bf16 %v5980, %v5976
        %v6077 = vpack.c.bf16 %v5981, %v5977
        %v6078 = vpack.c.bf16 %v5986, %v5982
        %v6079 = vpack.c.bf16 %v5987, %v5983
        %v6080 = vpack.c.bf16 %v5988, %v5984
        %v6081 = vpack.c.bf16 %v5989, %v5985
        %v6082 = vpack.c.bf16 %v5994, %v5990
        %v6083 = vpack.c.bf16 %v5995, %v5991
        %v6084 = vpack.c.bf16 %v5996, %v5992
        %v6085 = vpack.c.bf16 %v5997, %v5993
        %v6086 = vpack.c.bf16 %v6002, %v5998
        %v6087 = vpack.c.bf16 %v6003, %v5999
        %v6088 = vpack.c.bf16 %v6004, %v6000
        %v6089 = vpack.c.bf16 %v6005, %v6001
        %v6090 = vpack.c.bf16 %v6010, %v6006
        %v6091 = vpack.c.bf16 %v6011, %v6007
        %v6092 = vpack.c.bf16 %v6012, %v6008
        %v6093 = vpack.c.bf16 %v6013, %v6009
        %v6094 = vpack.c.bf16 %v6018, %v6014
        %v6095 = vpack.c.bf16 %v6019, %v6015
        %v6096 = vpack.c.bf16 %v6020, %v6016
        %v6097 = vpack.c.bf16 %v6021, %v6017
        %v6098 = vpack.c.bf16 %v6026, %v6022
        %v6099 = vpack.c.bf16 %v6027, %v6023
        %v6100 = vpack.c.bf16 %v6028, %v6024
        %v6101 = vpack.c.bf16 %v6029, %v6025
        %v6102 = vpack.c.bf16 %v6034, %v6030
        %v6103 = vpack.c.bf16 %v6035, %v6031
        %v6104 = vpack.c.bf16 %v6036, %v6032
        %v6105 = vpack.c.bf16 %v6037, %v6033
        %v6106 = vpack.c.bf16 %v6042, %v6038
        %v6107 = vpack.c.bf16 %v6043, %v6039
        %v6108 = vpack.c.bf16 %v6044, %v6040
        %v6109 = vpack.c.bf16 %v6045, %v6041
        %v6110 = vld [vmem:[#allocation13] sm:$0xf]
        %v6111 = vld [vmem:[#allocation13 + $0x4] sm:$0xf]
        %v6112 = vld [vmem:[#allocation13 + $0x8] sm:$0xf]
        %v6113 = vld [vmem:[#allocation13 + $0xc] sm:$0xf]
        %v6114 = vld [vmem:[#allocation13 + $0x10] sm:$0xf]
        %v6115 = vld [vmem:[#allocation13 + $0x14] sm:$0xf]
        %v6116 = vld [vmem:[#allocation13 + $0x18] sm:$0xf]
        %v6117 = vld [vmem:[#allocation13 + $0x1c] sm:$0xf]
        %v6118 = vld [vmem:[#allocation13 + $0x20] sm:$0xf]
        %v6119 = vld [vmem:[#allocation13 + $0x24] sm:$0xf]
        %v6120 = vld [vmem:[#allocation13 + $0x28] sm:$0xf]
        %v6121 = vld [vmem:[#allocation13 + $0x2c] sm:$0xf]
        %v6122 = vld [vmem:[#allocation13 + $0x30] sm:$0xf]
        %v6123 = vld [vmem:[#allocation13 + $0x34] sm:$0xf]
        %v6124 = vld [vmem:[#allocation13 + $0x38] sm:$0xf]
        %v6125 = vld [vmem:[#allocation13 + $0x3c] sm:$0xf]
        %v6126 = vld [vmem:[#allocation13 + $0x40] sm:$0xf]
        %v6127 = vld [vmem:[#allocation13 + $0x44] sm:$0xf]
        %v6128 = vld [vmem:[#allocation13 + $0x48] sm:$0xf]
        %v6129 = vld [vmem:[#allocation13 + $0x4c] sm:$0xf]
        %v6130 = vld [vmem:[#allocation13 + $0x50] sm:$0xf]
        %v6131 = vld [vmem:[#allocation13 + $0x54] sm:$0xf]
        %v6132 = vld [vmem:[#allocation13 + $0x58] sm:$0xf]
        %v6133 = vld [vmem:[#allocation13 + $0x5c] sm:$0xf]
        %v6134 = vld [vmem:[#allocation13 + $0x60] sm:$0xf]
        %v6135 = vld [vmem:[#allocation13 + $0x64] sm:$0xf]
        %v6136 = vld [vmem:[#allocation13 + $0x68] sm:$0xf]
        %v6137 = vld [vmem:[#allocation13 + $0x6c] sm:$0xf]
        %v6138 = vld [vmem:[#allocation13 + $0x70] sm:$0xf]
        %v6139 = vld [vmem:[#allocation13 + $0x74] sm:$0xf]
        %v6140 = vld [vmem:[#allocation13 + $0x78] sm:$0xf]
        %v6141 = vld [vmem:[#allocation13 + $0x7c] sm:$0xf]
        %v6142 = vld [vmem:[#allocation13 + $0x80] sm:$0xf]
        %v6143 = vld [vmem:[#allocation13 + $0x84] sm:$0xf]
        %v6144 = vld [vmem:[#allocation13 + $0x88] sm:$0xf]
        %v6145 = vld [vmem:[#allocation13 + $0x8c] sm:$0xf]
        %v6146 = vld [vmem:[#allocation13 + $0x90] sm:$0xf]
        %v6147 = vld [vmem:[#allocation13 + $0x94] sm:$0xf]
        %v6148 = vld [vmem:[#allocation13 + $0x98] sm:$0xf]
        %v6149 = vld [vmem:[#allocation13 + $0x9c] sm:$0xf]
        %v6150 = vld [vmem:[#allocation13 + $0xa0] sm:$0xf]
        %v6151 = vld [vmem:[#allocation13 + $0xa4] sm:$0xf]
        %v6152 = vld [vmem:[#allocation13 + $0xa8] sm:$0xf]
        %v6153 = vld [vmem:[#allocation13 + $0xac] sm:$0xf]
        %v6154 = vld [vmem:[#allocation13 + $0xb0] sm:$0xf]
        %v6155 = vld [vmem:[#allocation13 + $0xb4] sm:$0xf]
        %v6156 = vld [vmem:[#allocation13 + $0xb8] sm:$0xf]
        %v6157 = vld [vmem:[#allocation13 + $0xbc] sm:$0xf]
        %v6158 = vld [vmem:[#allocation13 + $0xc0] sm:$0xf]
        %v6159 = vld [vmem:[#allocation13 + $0xc4] sm:$0xf]
        %v6160 = vld [vmem:[#allocation13 + $0xc8] sm:$0xf]
        %v6161 = vld [vmem:[#allocation13 + $0xcc] sm:$0xf]
        %v6162 = vld [vmem:[#allocation13 + $0xd0] sm:$0xf]
        %v6163 = vld [vmem:[#allocation13 + $0xd4] sm:$0xf]
        %v6164 = vld [vmem:[#allocation13 + $0xd8] sm:$0xf]
        %v6165 = vld [vmem:[#allocation13 + $0xdc] sm:$0xf]
        %v6166 = vld [vmem:[#allocation13 + $0xe0] sm:$0xf]
        %v6167 = vld [vmem:[#allocation13 + $0xe4] sm:$0xf]
        %v6168 = vld [vmem:[#allocation13 + $0xe8] sm:$0xf]
        %v6169 = vld [vmem:[#allocation13 + $0xec] sm:$0xf]
        %v6170 = vld [vmem:[#allocation13 + $0xf0] sm:$0xf]
        %v6171 = vld [vmem:[#allocation13 + $0xf4] sm:$0xf]
        %v6172 = vld [vmem:[#allocation13 + $0xf8] sm:$0xf]
        %v6173 = vld [vmem:[#allocation13 + $0xfc] sm:$0xf]
        %v6174 = vld [vmem:[%s12] sm:$0x1]
        %v6176 = vlaneseq
        %v6177 = vshrl.u32 %v6176, 7
        %v6178 = vsub.s32 0, %v6177
        %v6179 = vrot.slane %v6174, %v6178
        %v6245 = vunpack.c.l.b16 %v6110
        %v6246 = vunpack.c.l.b16 %v6111
        %v6247 = vunpack.c.l.b16 %v6112
        %v6248 = vunpack.c.l.b16 %v6113
        %v6249 = vunpack.c.l.b16 %v6114
        %v6250 = vunpack.c.l.b16 %v6115
        %v6251 = vunpack.c.l.b16 %v6116
        %v6252 = vunpack.c.l.b16 %v6117
        %v6253 = vunpack.c.l.b16 %v6118
        %v6254 = vunpack.c.l.b16 %v6119
        %v6255 = vunpack.c.l.b16 %v6120
        %v6256 = vunpack.c.l.b16 %v6121
        %v6257 = vunpack.c.l.b16 %v6122
        %v6258 = vunpack.c.l.b16 %v6123
        %v6259 = vunpack.c.l.b16 %v6124
        %v6260 = vunpack.c.l.b16 %v6125
        %v6261 = vunpack.c.l.b16 %v6126
        %v6262 = vunpack.c.l.b16 %v6127
        %v6263 = vunpack.c.l.b16 %v6128
        %v6264 = vunpack.c.l.b16 %v6129
        %v6265 = vunpack.c.l.b16 %v6130
        %v6266 = vunpack.c.l.b16 %v6131
        %v6267 = vunpack.c.l.b16 %v6132
        %v6268 = vunpack.c.l.b16 %v6133
        %v6269 = vunpack.c.l.b16 %v6134
        %v6270 = vunpack.c.l.b16 %v6135
        %v6271 = vunpack.c.l.b16 %v6136
        %v6272 = vunpack.c.l.b16 %v6137
        %v6273 = vunpack.c.l.b16 %v6138
        %v6274 = vunpack.c.l.b16 %v6139
        %v6275 = vunpack.c.l.b16 %v6140
        %v6276 = vunpack.c.l.b16 %v6141
        %v6277 = vunpack.c.l.b16 %v6142
        %v6278 = vunpack.c.l.b16 %v6143
        %v6279 = vunpack.c.l.b16 %v6144
        %v6280 = vunpack.c.l.b16 %v6145
        %v6281 = vunpack.c.l.b16 %v6146
        %v6282 = vunpack.c.l.b16 %v6147
        %v6283 = vunpack.c.l.b16 %v6148
        %v6284 = vunpack.c.l.b16 %v6149
        %v6285 = vunpack.c.l.b16 %v6150
        %v6286 = vunpack.c.l.b16 %v6151
        %v6287 = vunpack.c.l.b16 %v6152
        %v6288 = vunpack.c.l.b16 %v6153
        %v6289 = vunpack.c.l.b16 %v6154
        %v6290 = vunpack.c.l.b16 %v6155
        %v6291 = vunpack.c.l.b16 %v6156
        %v6292 = vunpack.c.l.b16 %v6157
        %v6293 = vunpack.c.l.b16 %v6158
        %v6294 = vunpack.c.l.b16 %v6159
        %v6295 = vunpack.c.l.b16 %v6160
        %v6296 = vunpack.c.l.b16 %v6161
        %v6297 = vunpack.c.l.b16 %v6162
        %v6298 = vunpack.c.l.b16 %v6163
        %v6299 = vunpack.c.l.b16 %v6164
        %v6300 = vunpack.c.l.b16 %v6165
        %v6301 = vunpack.c.l.b16 %v6166
        %v6302 = vunpack.c.l.b16 %v6167
        %v6303 = vunpack.c.l.b16 %v6168
        %v6304 = vunpack.c.l.b16 %v6169
        %v6305 = vunpack.c.l.b16 %v6170
        %v6306 = vunpack.c.l.b16 %v6171
        %v6307 = vunpack.c.l.b16 %v6172
        %v6308 = vunpack.c.l.b16 %v6173
        %v6309 = vpack.c.b16 %v6246, %v6245
        %v6310 = vpack.c.b16 %v6248, %v6247
        %v6311 = vpack.c.b16 %v6250, %v6249
        %v6312 = vpack.c.b16 %v6252, %v6251
        %v6313 = vpack.c.b16 %v6254, %v6253
        %v6314 = vpack.c.b16 %v6256, %v6255
        %v6315 = vpack.c.b16 %v6258, %v6257
        %v6316 = vpack.c.b16 %v6260, %v6259
        %v6317 = vpack.c.b16 %v6262, %v6261
        %v6318 = vpack.c.b16 %v6264, %v6263
        %v6319 = vpack.c.b16 %v6266, %v6265
        %v6320 = vpack.c.b16 %v6268, %v6267
        %v6321 = vpack.c.b16 %v6270, %v6269
        %v6322 = vpack.c.b16 %v6272, %v6271
        %v6323 = vpack.c.b16 %v6274, %v6273
        %v6324 = vpack.c.b16 %v6276, %v6275
        %v6325 = vpack.c.b16 %v6278, %v6277
        %v6326 = vpack.c.b16 %v6280, %v6279
        %v6327 = vpack.c.b16 %v6282, %v6281
        %v6328 = vpack.c.b16 %v6284, %v6283
        %v6329 = vpack.c.b16 %v6286, %v6285
        %v6330 = vpack.c.b16 %v6288, %v6287
        %v6331 = vpack.c.b16 %v6290, %v6289
        %v6332 = vpack.c.b16 %v6292, %v6291
        %v6333 = vpack.c.b16 %v6294, %v6293
        %v6334 = vpack.c.b16 %v6296, %v6295
        %v6335 = vpack.c.b16 %v6298, %v6297
        %v6336 = vpack.c.b16 %v6300, %v6299
        %v6337 = vpack.c.b16 %v6302, %v6301
        %v6338 = vpack.c.b16 %v6304, %v6303
        %v6339 = vpack.c.b16 %v6306, %v6305
        %v6340 = vpack.c.b16 %v6308, %v6307
        %6373 = vmatprep.subr.bf16.mxu0 0
        %6374 = vmatpush1.bf16.msra.mxu0 %v6309
        %6375 = vmatprep.subr.bf16.mxu0 0
        %6376 = vmatpush1.bf16.msra.mxu0 %v6310
        %6377 = vmatprep.subr.bf16.mxu0 0
        %6378 = vmatpush1.bf16.msra.mxu0 %v6311
        %6379 = vmatprep.subr.bf16.mxu0 0
        %6380 = vmatpush1.bf16.msra.mxu0 %v6312
        %6381 = vmatprep.subr.bf16.mxu0 0
        %6382 = vmatpush1.bf16.msra.mxu0 %v6313
        %6383 = vmatprep.subr.bf16.mxu0 0
        %6384 = vmatpush1.bf16.msra.mxu0 %v6314
        %6385 = vmatprep.subr.bf16.mxu0 0
        %6386 = vmatpush1.bf16.msra.mxu0 %v6315
        %6387 = vmatprep.subr.bf16.mxu0 0
        %6388 = vmatpush1.bf16.msra.mxu0 %v6316
        %6389 = vmatprep.subr.bf16.mxu0 0
        %6390 = vmatpush1.bf16.msra.mxu0 %v6317
        %6391 = vmatprep.subr.bf16.mxu0 0
        %6392 = vmatpush1.bf16.msra.mxu0 %v6318
        %6393 = vmatprep.subr.bf16.mxu0 0
        %6394 = vmatpush1.bf16.msra.mxu0 %v6319
        %6395 = vmatprep.subr.bf16.mxu0 0
        %6396 = vmatpush1.bf16.msra.mxu0 %v6320
        %6397 = vmatprep.subr.bf16.mxu0 0
        %6398 = vmatpush1.bf16.msra.mxu0 %v6321
        %6399 = vmatprep.subr.bf16.mxu0 0
        %6400 = vmatpush1.bf16.msra.mxu0 %v6322
        %6401 = vmatprep.subr.bf16.mxu0 0
        %6402 = vmatpush1.bf16.msra.mxu0 %v6323
        %6403 = vmatprep.subr.bf16.mxu0 0
        %6404 = vmatpush1.bf16.msra.mxu0 %v6324
        %6405 = vmatprep.mubr.bf16.mxu0 %v6047
        %6406 = vmatmul.mubr.bf16.gmra.mrb[0].mxu0 %v6046
        %v6407 = vpop.f32.mrb[0].mxu0
        %v6408 = vadd.f32 %v6179, %v6407
        %v6409 = vpop.f32.mrb[0].mxu0
        %v6410 = vpop.f32.mrb[0].mxu0
        %v6411 = vadd.f32 %v6179, %v6410
        %v6412 = vpop.f32.mrb[0].mxu0
        %6413 = vmatprep.mubr.bf16.mxu0 %v6051
        %6414 = vmatmul.mubr.bf16.gmra.mrb[0].mxu0 %v6050
        %v6415 = vpop.f32.mrb[0].mxu0
        %v6416 = vadd.f32 %v6179, %v6415
        %v6417 = vpop.f32.mrb[0].mxu0
        %v6418 = vpop.f32.mrb[0].mxu0
        %v6419 = vadd.f32 %v6179, %v6418
        %v6420 = vpop.f32.mrb[0].mxu0
        %6421 = vmatprep.mubr.bf16.mxu0 %v6055
        %6422 = vmatmul.mubr.bf16.gmra.mrb[0].mxu0 %v6054
        %v6423 = vpop.f32.mrb[0].mxu0
        %v6424 = vadd.f32 %v6179, %v6423
        %v6425 = vpop.f32.mrb[0].mxu0
        %v6426 = vpop.f32.mrb[0].mxu0
        %v6427 = vadd.f32 %v6179, %v6426
        %v6428 = vpop.f32.mrb[0].mxu0
        %6429 = vmatprep.mubr.bf16.mxu0 %v6059
        %6430 = vmatmul.mubr.bf16.gmra.mrb[0].mxu0 %v6058
        %v6431 = vpop.f32.mrb[0].mxu0
        %v6432 = vadd.f32 %v6179, %v6431
        %v6433 = vpop.f32.mrb[0].mxu0
        %v6434 = vpop.f32.mrb[0].mxu0
        %v6435 = vadd.f32 %v6179, %v6434
        %v6436 = vpop.f32.mrb[0].mxu0
        %6437 = vmatprep.mubr.bf16.mxu0 %v6063
        %6438 = vmatmul.mubr.bf16.gmra.mrb[0].mxu0 %v6062
        %v6439 = vpop.f32.mrb[0].mxu0
        %v6440 = vadd.f32 %v6179, %v6439
        %v6441 = vpop.f32.mrb[0].mxu0
        %v6442 = vpop.f32.mrb[0].mxu0
        %v6443 = vadd.f32 %v6179, %v6442
        %v6444 = vpop.f32.mrb[0].mxu0
        %6445 = vmatprep.mubr.bf16.mxu0 %v6067
        %6446 = vmatmul.mubr.bf16.gmra.mrb[0].mxu0 %v6066
        %v6447 = vpop.f32.mrb[0].mxu0
        %v6448 = vadd.f32 %v6179, %v6447
        %v6449 = vpop.f32.mrb[0].mxu0
        %v6450 = vpop.f32.mrb[0].mxu0
        %v6451 = vadd.f32 %v6179, %v6450
        %v6452 = vpop.f32.mrb[0].mxu0
        %6453 = vmatprep.mubr.bf16.mxu0 %v6071
        %6454 = vmatmul.mubr.bf16.gmra.mrb[0].mxu0 %v6070
        %v6455 = vpop.f32.mrb[0].mxu0
        %v6456 = vadd.f32 %v6179, %v6455
        %v6457 = vpop.f32.mrb[0].mxu0
        %v6458 = vpop.f32.mrb[0].mxu0
        %v6459 = vadd.f32 %v6179, %v6458
        %v6460 = vpop.f32.mrb[0].mxu0
        %6461 = vmatprep.mubr.bf16.mxu0 %v6075
        %6462 = vmatmul.mubr.bf16.gmra.mrb[0].mxu0 %v6074
        %v6463 = vpop.f32.mrb[0].mxu0
        %v6464 = vadd.f32 %v6179, %v6463
        %v6465 = vpop.f32.mrb[0].mxu0
        %v6466 = vpop.f32.mrb[0].mxu0
        %v6467 = vadd.f32 %v6179, %v6466
        %v6468 = vpop.f32.mrb[0].mxu0
        %6469 = vmatprep.mubr.bf16.mxu0 %v6079
        %6470 = vmatmul.mubr.bf16.gmra.mrb[0].mxu0 %v6078
        %v6471 = vpop.f32.mrb[0].mxu0
        %v6472 = vadd.f32 %v6179, %v6471
        %v6473 = vpop.f32.mrb[0].mxu0
        %v6474 = vpop.f32.mrb[0].mxu0
        %v6475 = vadd.f32 %v6179, %v6474
        %v6476 = vpop.f32.mrb[0].mxu0
        %6477 = vmatprep.mubr.bf16.mxu0 %v6083
        %6478 = vmatmul.mubr.bf16.gmra.mrb[0].mxu0 %v6082
        %v6479 = vpop.f32.mrb[0].mxu0
        %v6480 = vadd.f32 %v6179, %v6479
        %v6481 = vpop.f32.mrb[0].mxu0
        %v6482 = vpop.f32.mrb[0].mxu0
        %v6483 = vadd.f32 %v6179, %v6482
        %v6484 = vpop.f32.mrb[0].mxu0
        %6485 = vmatprep.mubr.bf16.mxu0 %v6087
        %6486 = vmatmul.mubr.bf16.gmra.mrb[0].mxu0 %v6086
        %v6487 = vpop.f32.mrb[0].mxu0
        %v6488 = vadd.f32 %v6179, %v6487
        %v6489 = vpop.f32.mrb[0].mxu0
        %v6490 = vpop.f32.mrb[0].mxu0
        %v6491 = vadd.f32 %v6179, %v6490
        %v6492 = vpop.f32.mrb[0].mxu0
        %6493 = vmatprep.mubr.bf16.mxu0 %v6091
        %6494 = vmatmul.mubr.bf16.gmra.mrb[0].mxu0 %v6090
        %v6495 = vpop.f32.mrb[0].mxu0
        %v6496 = vadd.f32 %v6179, %v6495
        %v6497 = vpop.f32.mrb[0].mxu0
        %v6498 = vpop.f32.mrb[0].mxu0
        %v6499 = vadd.f32 %v6179, %v6498
        %v6500 = vpop.f32.mrb[0].mxu0
        %6501 = vmatprep.mubr.bf16.mxu0 %v6095
        %6502 = vmatmul.mubr.bf16.gmra.mrb[0].mxu0 %v6094
        %v6503 = vpop.f32.mrb[0].mxu0
        %v6504 = vadd.f32 %v6179, %v6503
        %v6505 = vpop.f32.mrb[0].mxu0
        %v6506 = vpop.f32.mrb[0].mxu0
        %v6507 = vadd.f32 %v6179, %v6506
        %v6508 = vpop.f32.mrb[0].mxu0
        %6509 = vmatprep.mubr.bf16.mxu0 %v6099
        %6510 = vmatmul.mubr.bf16.gmra.mrb[0].mxu0 %v6098
        %v6511 = vpop.f32.mrb[0].mxu0
        %v6512 = vadd.f32 %v6179, %v6511
        %v6513 = vpop.f32.mrb[0].mxu0
        %v6514 = vpop.f32.mrb[0].mxu0
        %v6515 = vadd.f32 %v6179, %v6514
        %v6516 = vpop.f32.mrb[0].mxu0
        %6517 = vmatprep.mubr.bf16.mxu0 %v6103
        %6518 = vmatmul.mubr.bf16.gmra.mrb[0].mxu0 %v6102
        %v6519 = vpop.f32.mrb[0].mxu0
        %v6520 = vadd.f32 %v6179, %v6519
        %v6521 = vpop.f32.mrb[0].mxu0
        %v6522 = vpop.f32.mrb[0].mxu0
        %v6523 = vadd.f32 %v6179, %v6522
        %v6524 = vpop.f32.mrb[0].mxu0
        %6525 = vmatprep.mubr.bf16.mxu0 %v6107
        %6526 = vmatmul.mubr.bf16.gmra.mrb[0].mxu0 %v6106
        %v6527 = vpop.f32.mrb[0].mxu0
        %v6528 = vadd.f32 %v6179, %v6527
        %v6529 = vpop.f32.mrb[0].mxu0
        %v6530 = vpop.f32.mrb[0].mxu0
        %v6531 = vadd.f32 %v6179, %v6530
        %v6532 = vpop.f32.mrb[0].mxu0
        %6533 = vdwg.mxu0
        %6534 = vmatprep.subr.bf16.mxu0 0
        %6535 = vmatpush1.bf16.msra.mxu0 %v6325
        %6536 = vmatprep.subr.bf16.mxu0 0
        %6537 = vmatpush1.bf16.msra.mxu0 %v6326
        %6538 = vmatprep.subr.bf16.mxu0 0
        %6539 = vmatpush1.bf16.msra.mxu0 %v6327
        %6540 = vmatprep.subr.bf16.mxu0 0
        %6541 = vmatpush1.bf16.msra.mxu0 %v6328
        %6542 = vmatprep.subr.bf16.mxu0 0
        %6543 = vmatpush1.bf16.msra.mxu0 %v6329
        %6544 = vmatprep.subr.bf16.mxu0 0
        %6545 = vmatpush1.bf16.msra.mxu0 %v6330
        %6546 = vmatprep.subr.bf16.mxu0 0
        %6547 = vmatpush1.bf16.msra.mxu0 %v6331
        %6548 = vmatprep.subr.bf16.mxu0 0
        %6549 = vmatpush1.bf16.msra.mxu0 %v6332
        %6550 = vmatprep.subr.bf16.mxu0 0
        %6551 = vmatpush1.bf16.msra.mxu0 %v6333
        %6552 = vmatprep.subr.bf16.mxu0 0
        %6553 = vmatpush1.bf16.msra.mxu0 %v6334
        %6554 = vmatprep.subr.bf16.mxu0 0
        %6555 = vmatpush1.bf16.msra.mxu0 %v6335
        %6556 = vmatprep.subr.bf16.mxu0 0
        %6557 = vmatpush1.bf16.msra.mxu0 %v6336
        %6558 = vmatprep.subr.bf16.mxu0 0
        %6559 = vmatpush1.bf16.msra.mxu0 %v6337
        %6560 = vmatprep.subr.bf16.mxu0 0
        %6561 = vmatpush1.bf16.msra.mxu0 %v6338
        %6562 = vmatprep.subr.bf16.mxu0 0
        %6563 = vmatpush1.bf16.msra.mxu0 %v6339
        %6564 = vmatprep.subr.bf16.mxu0 0
        %6565 = vmatpush1.bf16.msra.mxu0 %v6340
        %6566 = vmatprep.mubr.bf16.mxu0 %v6049
        %6567 = vmatmul.mubr.bf16.gmra.mrb[0].mxu0 %v6048
        %v6568 = vpop.f32.mrb[0].mxu0
        %v6569 = vadd.f32 %v6408, %v6568
        %v6570 = vpop.f32.mrb[0].mxu0
        %v6571 = vpop.f32.mrb[0].mxu0
        %v6572 = vadd.f32 %v6411, %v6571
        %v6573 = vpop.f32.mrb[0].mxu0
        %6574 = vmatprep.mubr.bf16.mxu0 %v6053
        %6575 = vmatmul.mubr.bf16.gmra.mrb[0].mxu0 %v6052
        %v6576 = vpop.f32.mrb[0].mxu0
        %v6577 = vadd.f32 %v6416, %v6576
        %v6578 = vpop.f32.mrb[0].mxu0
        %v6579 = vpop.f32.mrb[0].mxu0
        %v6580 = vadd.f32 %v6419, %v6579
        %v6581 = vpop.f32.mrb[0].mxu0
        %6582 = vmatprep.mubr.bf16.mxu0 %v6057
        %6583 = vmatmul.mubr.bf16.gmra.mrb[0].mxu0 %v6056
        %v6584 = vpop.f32.mrb[0].mxu0
        %v6585 = vadd.f32 %v6424, %v6584
        %v6586 = vpop.f32.mrb[0].mxu0
        %v6587 = vpop.f32.mrb[0].mxu0
        %v6588 = vadd.f32 %v6427, %v6587
        %v6589 = vpop.f32.mrb[0].mxu0
        %6590 = vmatprep.mubr.bf16.mxu0 %v6061
        %6591 = vmatmul.mubr.bf16.gmra.mrb[0].mxu0 %v6060
        %v6592 = vpop.f32.mrb[0].mxu0
        %v6593 = vadd.f32 %v6432, %v6592
        %v6594 = vpop.f32.mrb[0].mxu0
        %v6595 = vpop.f32.mrb[0].mxu0
        %v6596 = vadd.f32 %v6435, %v6595
        %v6597 = vpop.f32.mrb[0].mxu0
        %6598 = vmatprep.mubr.bf16.mxu0 %v6065
        %6599 = vmatmul.mubr.bf16.gmra.mrb[0].mxu0 %v6064
        %v6600 = vpop.f32.mrb[0].mxu0
        %v6601 = vadd.f32 %v6440, %v6600
        %v6602 = vpop.f32.mrb[0].mxu0
        %v6603 = vpop.f32.mrb[0].mxu0
        %v6604 = vadd.f32 %v6443, %v6603
        %v6605 = vpop.f32.mrb[0].mxu0
        %6606 = vmatprep.mubr.bf16.mxu0 %v6069
        %6607 = vmatmul.mubr.bf16.gmra.mrb[0].mxu0 %v6068
        %v6608 = vpop.f32.mrb[0].mxu0
        %v6609 = vadd.f32 %v6448, %v6608
        %v6610 = vpop.f32.mrb[0].mxu0
        %v6611 = vpop.f32.mrb[0].mxu0
        %v6612 = vadd.f32 %v6451, %v6611
        %v6613 = vpop.f32.mrb[0].mxu0
        %6614 = vmatprep.mubr.bf16.mxu0 %v6073
        %6615 = vmatmul.mubr.bf16.gmra.mrb[0].mxu0 %v6072
        %v6616 = vpop.f32.mrb[0].mxu0
        %v6617 = vadd.f32 %v6456, %v6616
        %v6618 = vpop.f32.mrb[0].mxu0
        %v6619 = vpop.f32.mrb[0].mxu0
        %v6620 = vadd.f32 %v6459, %v6619
        %v6621 = vpop.f32.mrb[0].mxu0
        %6622 = vmatprep.mubr.bf16.mxu0 %v6077
        %6623 = vmatmul.mubr.bf16.gmra.mrb[0].mxu0 %v6076
        %v6624 = vpop.f32.mrb[0].mxu0
        %v6625 = vadd.f32 %v6464, %v6624
        %v6626 = vpop.f32.mrb[0].mxu0
        %v6627 = vpop.f32.mrb[0].mxu0
        %v6628 = vadd.f32 %v6467, %v6627
        %v6629 = vpop.f32.mrb[0].mxu0
        %6630 = vmatprep.mubr.bf16.mxu0 %v6081
        %6631 = vmatmul.mubr.bf16.gmra.mrb[0].mxu0 %v6080
        %v6632 = vpop.f32.mrb[0].mxu0
        %v6633 = vadd.f32 %v6472, %v6632
        %v6634 = vpop.f32.mrb[0].mxu0
        %v6635 = vpop.f32.mrb[0].mxu0
        %v6636 = vadd.f32 %v6475, %v6635
        %v6637 = vpop.f32.mrb[0].mxu0
        %6638 = vmatprep.mubr.bf16.mxu0 %v6085
        %6639 = vmatmul.mubr.bf16.gmra.mrb[0].mxu0 %v6084
        %v6640 = vpop.f32.mrb[0].mxu0
        %v6641 = vadd.f32 %v6480, %v6640
        %v6642 = vpop.f32.mrb[0].mxu0
        %v6643 = vpop.f32.mrb[0].mxu0
        %v6644 = vadd.f32 %v6483, %v6643
        %v6645 = vpop.f32.mrb[0].mxu0
        %6646 = vmatprep.mubr.bf16.mxu0 %v6089
        %6647 = vmatmul.mubr.bf16.gmra.mrb[0].mxu0 %v6088
        %v6648 = vpop.f32.mrb[0].mxu0
        %v6649 = vadd.f32 %v6488, %v6648
        %v6650 = vpop.f32.mrb[0].mxu0
        %v6651 = vpop.f32.mrb[0].mxu0
        %v6652 = vadd.f32 %v6491, %v6651
        %v6653 = vpop.f32.mrb[0].mxu0
        %6654 = vmatprep.mubr.bf16.mxu0 %v6093
        %6655 = vmatmul.mubr.bf16.gmra.mrb[0].mxu0 %v6092
        %v6656 = vpop.f32.mrb[0].mxu0
        %v6657 = vadd.f32 %v6496, %v6656
        %v6658 = vpop.f32.mrb[0].mxu0
        %v6659 = vpop.f32.mrb[0].mxu0
        %v6660 = vadd.f32 %v6499, %v6659
        %v6661 = vpop.f32.mrb[0].mxu0
        %6662 = vmatprep.mubr.bf16.mxu0 %v6097
        %6663 = vmatmul.mubr.bf16.gmra.mrb[0].mxu0 %v6096
        %v6664 = vpop.f32.mrb[0].mxu0
        %v6665 = vadd.f32 %v6504, %v6664
        %v6666 = vpop.f32.mrb[0].mxu0
        %v6667 = vpop.f32.mrb[0].mxu0
        %v6668 = vadd.f32 %v6507, %v6667
        %v6669 = vpop.f32.mrb[0].mxu0
        %6670 = vmatprep.mubr.bf16.mxu0 %v6101
        %6671 = vmatmul.mubr.bf16.gmra.mrb[0].mxu0 %v6100
        %v6672 = vpop.f32.mrb[0].mxu0
        %v6673 = vadd.f32 %v6512, %v6672
        %v6674 = vpop.f32.mrb[0].mxu0
        %v6675 = vpop.f32.mrb[0].mxu0
        %v6676 = vadd.f32 %v6515, %v6675
        %v6677 = vpop.f32.mrb[0].mxu0
        %6678 = vmatprep.mubr.bf16.mxu0 %v6105
        %6679 = vmatmul.mubr.bf16.gmra.mrb[0].mxu0 %v6104
        %v6680 = vpop.f32.mrb[0].mxu0
        %v6681 = vadd.f32 %v6520, %v6680
        %v6682 = vpop.f32.mrb[0].mxu0
        %v6683 = vpop.f32.mrb[0].mxu0
        %v6684 = vadd.f32 %v6523, %v6683
        %v6685 = vpop.f32.mrb[0].mxu0
        %6686 = vmatprep.mubr.bf16.mxu0 %v6109
        %6687 = vmatmul.mubr.bf16.gmra.mrb[0].mxu0 %v6108
        %v6688 = vpop.f32.mrb[0].mxu0
        %v6689 = vadd.f32 %v6528, %v6688
        %v6690 = vpop.f32.mrb[0].mxu0
        %v6691 = vpop.f32.mrb[0].mxu0
        %v6692 = vadd.f32 %v6531, %v6691
        %v6693 = vpop.f32.mrb[0].mxu0
        %6694 = vdwg.mxu0
        %v6695 = vadd.f32 %v3944, %v6569
        %v6696 = vadd.f32 %v3945, %v6572
        %v6697 = vadd.f32 %v3946, %v6577
        %v6698 = vadd.f32 %v3947, %v6580
        %v6699 = vadd.f32 %v3948, %v6585
        %v6700 = vadd.f32 %v3949, %v6588
        %v6701 = vadd.f32 %v3950, %v6593
        %v6702 = vadd.f32 %v3951, %v6596
        %v6703 = vadd.f32 %v3952, %v6601
        %v6704 = vadd.f32 %v3953, %v6604
        %v6705 = vadd.f32 %v3954, %v6609
        %v6706 = vadd.f32 %v3955, %v6612
        %v6707 = vadd.f32 %v3956, %v6617
        %v6708 = vadd.f32 %v3957, %v6620
        %v6709 = vadd.f32 %v3958, %v6625
        %v6710 = vadd.f32 %v3959, %v6628
        %v6711 = vadd.f32 %v3960, %v6633
        %v6712 = vadd.f32 %v3961, %v6636
        %v6713 = vadd.f32 %v3962, %v6641
        %v6714 = vadd.f32 %v3963, %v6644
        %v6715 = vadd.f32 %v3964, %v6649
        %v6716 = vadd.f32 %v3965, %v6652
        %v6717 = vadd.f32 %v3966, %v6657
        %v6718 = vadd.f32 %v3967, %v6660
        %v6719 = vadd.f32 %v3968, %v6665
        %v6720 = vadd.f32 %v3969, %v6668
        %v6721 = vadd.f32 %v3970, %v6673
        %v6722 = vadd.f32 %v3971, %v6676
        %v6723 = vadd.f32 %v3972, %v6681
        %v6724 = vadd.f32 %v3973, %v6684
        %v6725 = vadd.f32 %v3974, %v6689
        %v6726 = vadd.f32 %v3975, %v6692
        %6727 = vst [vmem:[%s542] sm:$0xff] %v6695
        %6728 = vst [vmem:[%s542 + $0x8] sm:$0xff] %v6696
        %6729 = vst [vmem:[%s542 + $0x10] sm:$0xff] %v6697
        %6730 = vst [vmem:[%s542 + $0x18] sm:$0xff] %v6698
        %6731 = vst [vmem:[%s542 + $0x20] sm:$0xff] %v6699
        %6732 = vst [vmem:[%s542 + $0x28] sm:$0xff] %v6700
        %6733 = vst [vmem:[%s542 + $0x30] sm:$0xff] %v6701
        %6734 = vst [vmem:[%s542 + $0x38] sm:$0xff] %v6702
        %6735 = vst [vmem:[%s542 + $0x40] sm:$0xff] %v6703
        %6736 = vst [vmem:[%s542 + $0x48] sm:$0xff] %v6704
        %6737 = vst [vmem:[%s542 + $0x50] sm:$0xff] %v6705
        %6738 = vst [vmem:[%s542 + $0x58] sm:$0xff] %v6706
        %6739 = vst [vmem:[%s542 + $0x60] sm:$0xff] %v6707
        %6740 = vst [vmem:[%s542 + $0x68] sm:$0xff] %v6708
        %6741 = vst [vmem:[%s542 + $0x70] sm:$0xff] %v6709
        %6742 = vst [vmem:[%s542 + $0x78] sm:$0xff] %v6710
        %6743 = vst [vmem:[%s542 + $0x80] sm:$0xff] %v6711
        %6744 = vst [vmem:[%s542 + $0x88] sm:$0xff] %v6712
        %6745 = vst [vmem:[%s542 + $0x90] sm:$0xff] %v6713
        %6746 = vst [vmem:[%s542 + $0x98] sm:$0xff] %v6714
        %6747 = vst [vmem:[%s542 + $0xa0] sm:$0xff] %v6715
        %6748 = vst [vmem:[%s542 + $0xa8] sm:$0xff] %v6716
        %6749 = vst [vmem:[%s542 + $0xb0] sm:$0xff] %v6717
        %6750 = vst [vmem:[%s542 + $0xb8] sm:$0xff] %v6718
        %6751 = vst [vmem:[%s542 + $0xc0] sm:$0xff] %v6719
        %6752 = vst [vmem:[%s542 + $0xc8] sm:$0xff] %v6720
        %6753 = vst [vmem:[%s542 + $0xd0] sm:$0xff] %v6721
        %6754 = vst [vmem:[%s542 + $0xd8] sm:$0xff] %v6722
        %6755 = vst [vmem:[%s542 + $0xe0] sm:$0xff] %v6723
        %6756 = vst [vmem:[%s542 + $0xe8] sm:$0xff] %v6724
        %6757 = vst [vmem:[%s542 + $0xf0] sm:$0xff] %v6725
        %6758 = vst [vmem:[%s542 + $0xf8] sm:$0xff] %v6726
        %s6759 = sand.u32 %s319, 1
        %s6760 = scalar_lea.sflag [#allocation4], %s6759
        %s6761 = sand.u32 %s319, 1
        %s6762 = smul.addr %s6761, 256
        %s6763 = scalar_lea.vmem [#allocation14], %s6762
        // Predicated region
        $region101: #{tpu_custom_call.1} parent=71 // pred_check
          %p6764 = pneg %p329
        $region102: #{tpu_custom_call.1} parent=71 // pred_check_branch
          %6766 = sbr.rel (%p6764) target = $region104
        $region103: #{tpu_custom_call.1} parent=71 // pred_region
          %s6767 = smul.u32 2, %s33
          %s6769 = ssub.s32 4096, 4096
          %6770 = vsyncadd %s6760, %s6769
          %s6771 = smul.addr %s6767, 16
          %s6772 = smul.addr %s6771, 128
          %s6773 = scalar_lea.hbm %s13, %s6772
          %s6774 = sshll.u32 %s6763, 4
          %s6775 = int_to_ptr.vmem [resolvable:$true] %s6774
          %6780 = dma.vmem_to_hbm [thread:$0]  %s6775, 4096, %s6773, %s6760, 128, 128, 8
        $region104: #{tpu_custom_call.1} parent=71 // pred_fallthru
          _
      $region72: #{tpu_custom_call.1} parent=5 // pred_fallthru
        _
      %p6781 = scmp.le.s32.totalorder 2, %s28
      // Predicated region
      $region105: #{tpu_custom_call.1} parent=5 // pred_check
        %p6782 = pneg %p6781
      $region106: #{tpu_custom_call.1} parent=5 // pred_check_branch
        %6784 = sbr.rel (%p6782) target = $region108
      $region107: #{tpu_custom_call.1} parent=5 // pred_region
        %s6785 = ssub.s32 %s28, 2
        // Predicated region
        $region109: #{tpu_custom_call.1} parent=107 // pred_check
          %p6786 = pneg %p335
        $region110: #{tpu_custom_call.1} parent=107 // pred_check_branch
          %6788 = sbr.rel (%p6786) target = $region112
        $region111: #{tpu_custom_call.1} parent=107 // pred_region
          %s6789 = sand.u32 %s320, 1
          %s6790 = scalar_lea.sflag [#allocation4], %s6789
          %s6791 = sand.u32 %s320, 1
          %s6792 = smul.addr %s6791, 256
          %s6793 = scalar_lea.vmem [#allocation14], %s6792
          %6794 = dma.done %s6790, 4096
        $region112: #{tpu_custom_call.1} parent=107 // pred_fallthru
          _
      $region108: #{tpu_custom_call.1} parent=5 // pred_fallthru
        _
    $region6: #{tpu_custom_call.1} parent=1 // loop_footer
      %s32 = sadd.s32 1, %s28
    $region7: #{tpu_custom_call.1} parent=1 // loop_footer_branch
      %27 = sbr.rel target = $region3
    $region8: #{tpu_custom_call.1} parent=1 // loop_exit
      _
    %6795 = vsyncpa [#allocation3], 1
    %s6796 = scalar_lea.sflag [#allocation3], 1
    %6797 = vsyncpa %s6796, 1
    %6798 = vsyncpa [#allocation6], 1
    %6799 = vsyncpa [#allocation9], 1
    %6800 = vsyncpa [#allocation12], 1
    %6801 = vsyncpa [#allocation4], 1
    %s6802 = scalar_lea.sflag [#allocation4], 1
    %6803 = vsyncpa %s6802, 1

</llo_original>
